<compile_context>
chip_gen: v6e
topology: v6e:2x2x1
jax: 0.10.0
libtpu: 0.0.40
codegen_flags: <defaults>
</compile_context>

<pallas_src>
import functools

import jax
import jax.numpy as jnp
from jax import lax
from jax.experimental import pallas as pl
from jax.experimental.pallas import tpu as pltpu


def _round_up(x, m):
    return (x + m - 1) // m * m


# ---------------------------------------------------------------------------
# Fused residual-group kernel factory.
# ---------------------------------------------------------------------------
def _make_group_kernel(C, H, W, batch_tile, n_resblocks, use_fori):
    Wp = W + 2
    Rp = batch_tile * (H + 2)              # stacked padded rows (images along rows)
    SPAN = (Rp - 2) * Wp                   # semi-padded output window (lane-dense)
    c0 = _round_up(Wp + 1, 128)            # 128-aligned start of the output window
    lead = c0 - (Wp + 1)                   # leading zero pad of the flat buffer
    c1 = c0 + SPAN
    BUF_LEN = _round_up(lead + Rp * Wp + 2, 128)
    offsets = [lead + dy * Wp + dx for dy in range(3) for dx in range(3)]
    n_layers = 2 * n_resblocks + 1

    def kernel(x_ref, w_ref, b_ref, mask_ref, o_ref, res_ref, t_ref):
        # Hoisted once per grid step (JAX does not CSE broadcast_in_dim).
        mask_b = jnp.broadcast_to(mask_ref[...], (C, SPAN))

        # res gets the (zero-padded) input; for t only the border lanes are
        # cleared — the window is always fully (masked-)written before any read.
        res_ref[...] = x_ref[0].astype(res_ref.dtype)
        t_ref[:, :c0] = jnp.zeros((C, c0), t_ref.dtype)
        t_ref[:, c1:] = jnp.zeros((C, BUF_LEN - c1), t_ref.dtype)

        def conv(src_ref, layer):
            # 3x3 conv == 9 accumulating MXU matmuls (K = C each); RHS is a
            # static lane-offset slice of the flat padded activation buffer
            # (no materialized im2col); accumulation stays f32.
            acc = jnp.dot(w_ref[layer * 9],
                          src_ref[:, offsets[0]:offsets[0] + SPAN],
                          preferred_element_type=jnp.float32)
            for k in range(1, 9):
                off = offsets[k]
                acc = acc + jnp.dot(w_ref[layer * 9 + k],
                                    src_ref[:, off:off + SPAN],
                                    preferred_element_type=jnp.float32)
            return acc + b_ref[layer]                        # (C, SPAN) f32

        def block(blk):
            # My_Block: conv -> ReLU -> conv (*res_scale folded into weights)
            # + skip.  Window stores are 128-aligned (c0 % 128 == 0) and masked.
            t = jnp.maximum(conv(res_ref, 2 * blk), 0.0) * mask_b
            t_ref[:, c0:c1] = t.astype(t_ref.dtype)
            r = conv(t_ref, 2 * blk + 1) + res_ref[:, c0:c1].astype(jnp.float32)
            res_ref[:, c0:c1] = (r * mask_b).astype(res_ref.dtype)

        if use_fori:
            # Realistic depths (12-20 blocks): dynamic layer indexing keeps
            # instruction memory and vreg live ranges bounded.
            lax.fori_loop(0, n_resblocks,
                          lambda blk, carry: (block(blk), carry)[1], 0)
        else:
            for blk in range(n_resblocks):
                block(blk)

        # Tail conv of the group body fused with the group-level skip (+ x).
        tail = (conv(res_ref, 2 * n_resblocks)
                + x_ref[0, :, c0:c1].astype(jnp.float32))
        o_ref[0] = (tail * mask_b).astype(o_ref.dtype)

    layout = dict(Wp=Wp, Rp=Rp, SPAN=SPAN, c0=c0, lead=lead,
                  BUF_LEN=BUF_LEN, n_layers=n_layers)
    return kernel, layout


def _pack_conv_weight(w):
    # (3, 3, Cin, Cout) HWIO -> (9, Cout, Cin); tap index k = dy*3 + dx.
    _, _, cin, cout = w.shape
    return jnp.transpose(w, (0, 1, 3, 2)).reshape(9, cout, cin)


# ---------------------------------------------------------------------------
# My_ResidualGroup forward:  res = body(x); res += x
# ---------------------------------------------------------------------------
def residual_group_forward(x_nchw, params, res_scale, *,
                           use_bf16_matmul=True, batch_tile=None):
    B, C, H, W = x_nchw.shape
    n_resblocks = len(params["blocks"])
    assert C % 8 == 0, "channel count must be a multiple of 8 (sublane tiling)"
    if use_bf16_matmul:
        assert C % 16 == 0, "bf16 activations require C % 16 == 0 (sublane packing)"

    if batch_tile is None:
        batch_tile = 1
        for cand in (4, 2):          # widen matmul N, but keep >= 2 grid steps
            if B % cand == 0 and B // cand >= 2:
                batch_tile = cand
                break
    assert B % batch_tile == 0
    G = B // batch_tile
    use_fori = n_resblocks >= 4

    kernel, L = _make_group_kernel(C, H, W, batch_tile, n_resblocks, use_fori)
    Wp, Rp, SPAN = L["Wp"], L["Rp"], L["SPAN"]
    lead, BUF_LEN, n_layers = L["lead"], L["BUF_LEN"], L["n_layers"]

    act_dtype = jnp.bfloat16 if use_bf16_matmul else jnp.float32

    # ---- pack all conv weights/biases once; fold res_scale into conv2 -------
    ws, bs = [], []
    for (w1, b1, w2, b2) in params["blocks"]:
        ws.append(_pack_conv_weight(w1));              bs.append(b1)
        ws.append(_pack_conv_weight(w2) * res_scale);  bs.append(b2 * res_scale)
    ws.append(_pack_conv_weight(params["tail_w"]));    bs.append(params["tail_b"])
    w_stk = jnp.concatenate(ws, axis=0).astype(act_dtype)      # (L*9, C, C)
    b_stk = jnp.stack(bs)[:, :, None].astype(jnp.float32)      # (L, C, 1)

    # ---- stack batch_tile padded images along rows, pad ONCE, flatten -------
    xp = jnp.pad(x_nchw, ((0, 0), (0, 0), (1, 1), (1, 1)))     # (B, C, H+2, Wp)
    xp = xp.reshape(G, batch_tile, C, H + 2, Wp)
    xp = jnp.transpose(xp, (0, 2, 1, 3, 4)).reshape(G, C, Rp * Wp)
    xp = jnp.pad(xp, ((0, 0), (0, 0), (lead, BUF_LEN - lead - Rp * Wp)))

    # validity mask over the semi-padded window (0 at pad cols / pad rows).
    m = jnp.zeros((batch_tile, H + 2, Wp), jnp.float32)
    m = m.at[:, 1:H + 1, 1:W + 1].set(1.0)
    mask = m.reshape(-1)[Wp + 1: Wp + 1 + SPAN].reshape(1, SPAN)

    # ---- explicit scoped-VMEM budget -----------------------------------------
    def _nbytes(shape, dt):
        n = 1
        for s in shape:
            n *= s
        return n * jnp.dtype(dt).itemsize
    est = (2 * _nbytes((C, BUF_LEN), act_dtype)                       # res + t
           + 2 * _nbytes((C, BUF_LEN), x_nchw.dtype)                  # x  (dbl-buf)
           + 2 * _nbytes((C, _round_up(SPAN, 128)), x_nchw.dtype)     # out (dbl-buf)
           + 2 * _nbytes((n_layers * 9, C, max(C, 128)), act_dtype)   # weights
           + 2 * _nbytes((n_layers, C, 128), jnp.float32)             # biases
           + 2 * _nbytes((8, _round_up(SPAN, 128)), jnp.float32))     # mask
    vmem_limit = int(max(32 * 2 ** 20, min(96 * 2 ** 20, est + 8 * 2 ** 20)))

    out_semi = pl.pallas_call(
        kernel,
        out_shape=jax.ShapeDtypeStruct((G, C, SPAN), x_nchw.dtype),
        grid=(G,),
        in_specs=[
            pl.BlockSpec((1, C, BUF_LEN), lambda g: (g, 0, 0)),        # x (padded)
            pl.BlockSpec((n_layers * 9, C, C), lambda g: (0, 0, 0)),   # weights
            pl.BlockSpec((n_layers, C, 1), lambda g: (0, 0, 0)),       # biases
            pl.BlockSpec((1, SPAN), lambda g: (0, 0)),                 # window mask
        ],
        out_specs=pl.BlockSpec((1, C, SPAN), lambda g: (g, 0, 0)),
        scratch_shapes=[
            pltpu.VMEM((C, BUF_LEN), act_dtype),    # res activation
            pltpu.VMEM((C, BUF_LEN), act_dtype),    # block-intermediate t
        ],
        compiler_params=pltpu.CompilerParams(
            dimension_semantics=("parallel",),
            vmem_limit_bytes=vmem_limit),
    )(xp, w_stk, b_stk, mask)

    # ---- unpack the semi-padded window back to NCHW (toy-size convenience) ---
    full = jnp.pad(out_semi, ((0, 0), (0, 0), (Wp + 1, Wp - 1)))   # (G, C, Rp*Wp)
    full = full.reshape(G, C, batch_tile, H + 2, Wp)
    out = full[:, :, :, 1:H + 1, 1:W + 1]                          # (G, C, BT, H, W)
    return jnp.transpose(out, (0, 2, 1, 3, 4)).reshape(B, C, H, W)


# ---------------------------------------------------------------------------
# Pure-JAX reference (lax.conv) for correctness checking.
# ---------------------------------------------------------------------------
def _ref_conv(x, w, b):
    y = jax.lax.conv_general_dilated(
        x, w, window_strides=(1, 1), padding="SAME",
        dimension_numbers=("NCHW", "HWIO", "NCHW"))
    return y + b[None, :, None, None]


def residual_group_reference(x, params, res_scale):
    res = x
    for (w1, b1, w2, b2) in params["blocks"]:
        t = jnp.maximum(_ref_conv(res, w1, b1), 0.0)
        res = _ref_conv(t, w2, b2) * res_scale + res
    return _ref_conv(res, params["tail_w"], params["tail_b"]) + x


# ---------------------------------------------------------------------------
def init_params(key, n_feat, n_resblocks):
    params = {"blocks": []}
    for _ in range(n_resblocks):
        key, k1, k2, k3, k4 = jax.random.split(key, 5)
        w1 = 0.05 * jax.random.normal(k1, (3, 3, n_feat, n_feat), jnp.float32)
        b1 = 0.01 * jax.random.normal(k2, (n_feat,), jnp.float32)
        w2 = 0.05 * jax.random.normal(k3, (3, 3, n_feat, n_feat), jnp.float32)
        b2 = 0.01 * jax.random.normal(k4, (n_feat,), jnp.float32)
        params["blocks"].append((w1, b1, w2, b2))
    key, kt1, kt2 = jax.random.split(key, 3)
    params["tail_w"] = 0.05 * jax.random.normal(
        kt1, (3, 3, n_feat, n_feat), jnp.float32)
    params["tail_b"] = 0.01 * jax.random.normal(kt2, (n_feat,), jnp.float32)
    return params


if __name__ == "__main__":
    key = jax.random.PRNGKey(0)

    # ---- config A: shallow group (unrolled body) -----------------------------
    B, n_feat, H, W = 2, 16, 16, 16
    n_resblocks, res_scale = 2, 0.1
    key, kx, kp = jax.random.split(key, 3)
    x = jax.random.normal(kx, (B, n_feat, H, W), jnp.float32)   # NCHW, like PyTorch
    params = init_params(kp, n_feat, n_resblocks)
    ref = residual_group_reference(x, params, res_scale)

    # strict f32 path, one image per grid step
    fwd_f32 = jax.jit(functools.partial(residual_group_forward,
                                        res_scale=res_scale,
                                        use_bf16_matmul=False, batch_tile=1))
    out = jax.block_until_ready(fwd_f32(x, params))
    assert out.shape == x.shape and out.dtype == x.dtype
    assert jnp.allclose(out, ref, atol=5e-4, rtol=5e-4), "f32 (bt=1) mismatch"

    # strict f32 path, both images stacked into one grid step (wide-N matmuls)
    fwd_f32_b2 = jax.jit(functools.partial(residual_group_forward,
                                           res_scale=res_scale,
                                           use_bf16_matmul=False, batch_tile=2))
    out_b2 = jax.block_until_ready(fwd_f32_b2(x, params))
    assert jnp.allclose(out_b2, ref, atol=5e-4, rtol=5e-4), "f32 (bt=2) mismatch"

    # default path: bf16 activations/weights on the MXU, f32 accumulation
    fwd_bf16 = jax.jit(functools.partial(residual_group_forward,
                                         res_scale=res_scale, batch_tile=2))
    out_bf16 = jax.block_until_ready(fwd_bf16(x, params))
    assert float(jnp.max(jnp.abs(out_bf16 - ref))) < 0.1, "bf16 path diverged"

    # ---- config B: deeper group exercising the lax.fori_loop body ------------
    B2, H2, W2, n_rb2 = 2, 8, 8, 6
    key, kx2, kp2 = jax.random.split(key, 3)
    x2 = jax.random.normal(kx2, (B2, n_feat, H2, W2), jnp.float32)
    params2 = init_params(kp2, n_feat, n_rb2)
    ref2 = residual_group_reference(x2, params2, res_scale)
    fwd2 = jax.jit(functools.partial(residual_group_forward,
                                     res_scale=res_scale,
                                     use_bf16_matmul=False, batch_tile=1))
    out2 = jax.block_until_ready(fwd2(x2, params2))
    assert jnp.allclose(out2, ref2, atol=1e-3, rtol=1e-3), "fori path mismatch"

    print("KERNEL_OK")
</pallas_src>

<mosaic_0001>
module attributes {stable_mosaic.version = 11 : i64} {
  func.func @kernel(%arg0: i32, %arg1: memref<1x16x512xf32, #tpu.memory_space<vmem>>, %arg2: memref<45x16x16xf32, #tpu.memory_space<vmem>>, %arg3: memref<5x16x1xf32, #tpu.memory_space<vmem>>, %arg4: memref<1x288xf32, #tpu.memory_space<vmem>>, %arg5: memref<1x16x288xf32, #tpu.memory_space<vmem>>, %arg6: memref<16x512xf32, #tpu.memory_space<vmem>>, %arg7: memref<16x512xf32, #tpu.memory_space<vmem>>) attributes {dimension_semantics = [#tpu.dimension_semantics<parallel>], iteration_bounds = array<i64: 2>, scalar_prefetch = 0 : i64, scratch_operands = 2 : i64, tpu.core_type = #tpu.core_type<tc>, window_params = [{transform_indices = @transform_0, window_bounds = array<i64: 1, 16, 512>}, {pipeline_mode = #tpu.pipeline_mode<synchronous>, transform_indices = @transform_1, window_bounds = array<i64: 45, 16, 16>}, {pipeline_mode = #tpu.pipeline_mode<synchronous>, transform_indices = @transform_2, window_bounds = array<i64: 5, 16, 1>}, {pipeline_mode = #tpu.pipeline_mode<synchronous>, transform_indices = @transform_3, window_bounds = array<i64: 1, 288>}, {transform_indices = @transform_4, window_bounds = array<i64: 1, 16, 288>}]} {
    %c0 = arith.constant 0 : index
    %c0_0 = arith.constant 0 : index
    %0 = vector.load %arg4[%c0, %c0_0] : memref<1x288xf32, #tpu.memory_space<vmem>>, vector<1x288xf32>
    %1 = vector.shape_cast %0 : vector<1x288xf32> to vector<1x288xf32>
    %2 = vector.broadcast %1 : vector<1x288xf32> to vector<16x288xf32>
    %c0_1 = arith.constant 0 : index
    %c0_2 = arith.constant 0 : index
    %c0_3 = arith.constant 0 : index
    %3 = vector.load %arg1[%c0_1, %c0_2, %c0_3] : memref<1x16x512xf32, #tpu.memory_space<vmem>>, vector<1x16x512xf32>
    %4 = vector.shape_cast %3 : vector<1x16x512xf32> to vector<16x512xf32>
    %c0_4 = arith.constant 0 : index
    %c0_5 = arith.constant 0 : index
    %5 = vector.load %arg6[%c0_4, %c0_5] : memref<16x512xf32, #tpu.memory_space<vmem>>, vector<16x512xf32>
    tpu.vector_store %arg6[%c0_4, %c0_5], %4 {strides = array<i32>} : memref<16x512xf32, #tpu.memory_space<vmem>>, vector<16x512xf32>,
    %cst = arith.constant 0.000000e+00 : f32
    %6 = vector.broadcast %cst : f32 to vector<16x128xf32>
    %c0_6 = arith.constant 0 : index
    %c0_7 = arith.constant 0 : index
    %7 = vector.load %arg7[%c0_6, %c0_7] : memref<16x512xf32, #tpu.memory_space<vmem>>, vector<16x128xf32>
    tpu.vector_store %arg7[%c0_6, %c0_7], %6 {strides = array<i32>} : memref<16x512xf32, #tpu.memory_space<vmem>>, vector<16x128xf32>,
    %cst_8 = arith.constant 0.000000e+00 : f32
    %8 = vector.broadcast %cst_8 : f32 to vector<16x96xf32>
    %c0_9 = arith.constant 0 : index
    %c416 = arith.constant 416 : index
    %9 = vector.load %arg7[%c0_9, %c416] : memref<16x512xf32, #tpu.memory_space<vmem>>, vector<16x96xf32>
    tpu.vector_store %arg7[%c0_9, %c416], %8 {strides = array<i32>} : memref<16x512xf32, #tpu.memory_space<vmem>>, vector<16x96xf32>,
    %c0_10 = arith.constant 0 : index
    %c0_11 = arith.constant 0 : index
    %c0_12 = arith.constant 0 : index
    %10 = vector.load %arg2[%c0_10, %c0_11, %c0_12] : memref<45x16x16xf32, #tpu.memory_space<vmem>>, vector<1x16x16xf32>
    %11 = vector.shape_cast %10 : vector<1x16x16xf32> to vector<16x16xf32>
    %c0_13 = arith.constant 0 : index
    %c109 = arith.constant 109 : index
    %12 = vector.load %arg6[%c0_13, %c109] : memref<16x512xf32, #tpu.memory_space<vmem>>, vector<16x288xf32>
    %cst_14 = arith.constant dense<0.000000e+00> : vector<16x288xf32>
    %13 = tpu.matmul %11, %12, %cst_14 {dimension_numbers = #tpu.dot_dimension_numbers<[1], [0], [0], [1], [0, 0, 1, 1], [], []>} : vector<16x16xf32>, vector<16x288xf32>, vector<16x288xf32> -> vector<16x288xf32>
    %c1 = arith.constant 1 : index
    %c0_15 = arith.constant 0 : index
    %c0_16 = arith.constant 0 : index
    %14 = vector.load %arg2[%c1, %c0_15, %c0_16] : memref<45x16x16xf32, #tpu.memory_space<vmem>>, vector<1x16x16xf32>
    %15 = vector.shape_cast %14 : vector<1x16x16xf32> to vector<16x16xf32>
    %c0_17 = arith.constant 0 : index
    %c110 = arith.constant 110 : index
    %16 = vector.load %arg6[%c0_17, %c110] : memref<16x512xf32, #tpu.memory_space<vmem>>, vector<16x288xf32>
    %cst_18 = arith.constant dense<0.000000e+00> : vector<16x288xf32>
    %17 = tpu.matmul %15, %16, %cst_18 {dimension_numbers = #tpu.dot_dimension_numbers<[1], [0], [0], [1], [0, 0, 1, 1], [], []>} : vector<16x16xf32>, vector<16x288xf32>, vector<16x288xf32> -> vector<16x288xf32>
    %18 = arith.addf %13, %17 : vector<16x288xf32>
    %c2 = arith.constant 2 : index
    %c0_19 = arith.constant 0 : index
    %c0_20 = arith.constant 0 : index
    %19 = vector.load %arg2[%c2, %c0_19, %c0_20] : memref<45x16x16xf32, #tpu.memory_space<vmem>>, vector<1x16x16xf32>
    %20 = vector.shape_cast %19 : vector<1x16x16xf32> to vector<16x16xf32>
    %c0_21 = arith.constant 0 : index
    %c111 = arith.constant 111 : index
    %21 = vector.load %arg6[%c0_21, %c111] : memref<16x512xf32, #tpu.memory_space<vmem>>, vector<16x288xf32>
    %cst_22 = arith.constant dense<0.000000e+00> : vector<16x288xf32>
    %22 = tpu.matmul %20, %21, %cst_22 {dimension_numbers = #tpu.dot_dimension_numbers<[1], [0], [0], [1], [0, 0, 1, 1], [], []>} : vector<16x16xf32>, vector<16x288xf32>, vector<16x288xf32> -> vector<16x288xf32>
    %23 = arith.addf %18, %22 : vector<16x288xf32>
    %c3 = arith.constant 3 : index
    %c0_23 = arith.constant 0 : index
    %c0_24 = arith.constant 0 : index
    %24 = vector.load %arg2[%c3, %c0_23, %c0_24] : memref<45x16x16xf32, #tpu.memory_space<vmem>>, vector<1x16x16xf32>
    %25 = vector.shape_cast %24 : vector<1x16x16xf32> to vector<16x16xf32>
    %c0_25 = arith.constant 0 : index
    %c127 = arith.constant 127 : index
    %26 = vector.load %arg6[%c0_25, %c127] : memref<16x512xf32, #tpu.memory_space<vmem>>, vector<16x288xf32>
    %cst_26 = arith.constant dense<0.000000e+00> : vector<16x288xf32>
    %27 = tpu.matmul %25, %26, %cst_26 {dimension_numbers = #tpu.dot_dimension_numbers<[1], [0], [0], [1], [0, 0, 1, 1], [], []>} : vector<16x16xf32>, vector<16x288xf32>, vector<16x288xf32> -> vector<16x288xf32>
    %28 = arith.addf %23, %27 : vector<16x288xf32>
    %c4 = arith.constant 4 : index
    %c0_27 = arith.constant 0 : index
    %c0_28 = arith.constant 0 : index
    %29 = vector.load %arg2[%c4, %c0_27, %c0_28] : memref<45x16x16xf32, #tpu.memory_space<vmem>>, vector<1x16x16xf32>
    %30 = vector.shape_cast %29 : vector<1x16x16xf32> to vector<16x16xf32>
    %c0_29 = arith.constant 0 : index
    %c128 = arith.constant 128 : index
    %31 = vector.load %arg6[%c0_29, %c128] : memref<16x512xf32, #tpu.memory_space<vmem>>, vector<16x288xf32>
    %cst_30 = arith.constant dense<0.000000e+00> : vector<16x288xf32>
    %32 = tpu.matmul %30, %31, %cst_30 {dimension_numbers = #tpu.dot_dimension_numbers<[1], [0], [0], [1], [0, 0, 1, 1], [], []>} : vector<16x16xf32>, vector<16x288xf32>, vector<16x288xf32> -> vector<16x288xf32>
    %33 = arith.addf %28, %32 : vector<16x288xf32>
    %c5 = arith.constant 5 : index
    %c0_31 = arith.constant 0 : index
    %c0_32 = arith.constant 0 : index
    %34 = vector.load %arg2[%c5, %c0_31, %c0_32] : memref<45x16x16xf32, #tpu.memory_space<vmem>>, vector<1x16x16xf32>
    %35 = vector.shape_cast %34 : vector<1x16x16xf32> to vector<16x16xf32>
    %c0_33 = arith.constant 0 : index
    %c129 = arith.constant 129 : index
    %36 = vector.load %arg6[%c0_33, %c129] : memref<16x512xf32, #tpu.memory_space<vmem>>, vector<16x288xf32>
    %cst_34 = arith.constant dense<0.000000e+00> : vector<16x288xf32>
    %37 = tpu.matmul %35, %36, %cst_34 {dimension_numbers = #tpu.dot_dimension_numbers<[1], [0], [0], [1], [0, 0, 1, 1], [], []>} : vector<16x16xf32>, vector<16x288xf32>, vector<16x288xf32> -> vector<16x288xf32>
    %38 = arith.addf %33, %37 : vector<16x288xf32>
    %c6 = arith.constant 6 : index
    %c0_35 = arith.constant 0 : index
    %c0_36 = arith.constant 0 : index
    %39 = vector.load %arg2[%c6, %c0_35, %c0_36] : memref<45x16x16xf32, #tpu.memory_space<vmem>>, vector<1x16x16xf32>
    %40 = vector.shape_cast %39 : vector<1x16x16xf32> to vector<16x16xf32>
    %c0_37 = arith.constant 0 : index
    %c145 = arith.constant 145 : index
    %41 = vector.load %arg6[%c0_37, %c145] : memref<16x512xf32, #tpu.memory_space<vmem>>, vector<16x288xf32>
    %cst_38 = arith.constant dense<0.000000e+00> : vector<16x288xf32>
    %42 = tpu.matmul %40, %41, %cst_38 {dimension_numbers = #tpu.dot_dimension_numbers<[1], [0], [0], [1], [0, 0, 1, 1], [], []>} : vector<16x16xf32>, vector<16x288xf32>, vector<16x288xf32> -> vector<16x288xf32>
    %43 = arith.addf %38, %42 : vector<16x288xf32>
    %c7 = arith.constant 7 : index
    %c0_39 = arith.constant 0 : index
    %c0_40 = arith.constant 0 : index
    %44 = vector.load %arg2[%c7, %c0_39, %c0_40] : memref<45x16x16xf32, #tpu.memory_space<vmem>>, vector<1x16x16xf32>
    %45 = vector.shape_cast %44 : vector<1x16x16xf32> to vector<16x16xf32>
    %c0_41 = arith.constant 0 : index
    %c146 = arith.constant 146 : index
    %46 = vector.load %arg6[%c0_41, %c146] : memref<16x512xf32, #tpu.memory_space<vmem>>, vector<16x288xf32>
    %cst_42 = arith.constant dense<0.000000e+00> : vector<16x288xf32>
    %47 = tpu.matmul %45, %46, %cst_42 {dimension_numbers = #tpu.dot_dimension_numbers<[1], [0], [0], [1], [0, 0, 1, 1], [], []>} : vector<16x16xf32>, vector<16x288xf32>, vector<16x288xf32> -> vector<16x288xf32>
    %48 = arith.addf %43, %47 : vector<16x288xf32>
    %c8 = arith.constant 8 : index
    %c0_43 = arith.constant 0 : index
    %c0_44 = arith.constant 0 : index
    %49 = vector.load %arg2[%c8, %c0_43, %c0_44] : memref<45x16x16xf32, #tpu.memory_space<vmem>>, vector<1x16x16xf32>
    %50 = vector.shape_cast %49 : vector<1x16x16xf32> to vector<16x16xf32>
    %c0_45 = arith.constant 0 : index
    %c147 = arith.constant 147 : index
    %51 = vector.load %arg6[%c0_45, %c147] : memref<16x512xf32, #tpu.memory_space<vmem>>, vector<16x288xf32>
    %cst_46 = arith.constant dense<0.000000e+00> : vector<16x288xf32>
    %52 = tpu.matmul %50, %51, %cst_46 {dimension_numbers = #tpu.dot_dimension_numbers<[1], [0], [0], [1], [0, 0, 1, 1], [], []>} : vector<16x16xf32>, vector<16x288xf32>, vector<16x288xf32> -> vector<16x288xf32>
    %53 = arith.addf %48, %52 : vector<16x288xf32>
    %c0_47 = arith.constant 0 : index
    %c0_48 = arith.constant 0 : index
    %c0_49 = arith.constant 0 : index
    %54 = vector.load %arg3[%c0_47, %c0_48, %c0_49] : memref<5x16x1xf32, #tpu.memory_space<vmem>>, vector<1x16x1xf32>
    %55 = vector.shape_cast %54 : vector<1x16x1xf32> to vector<16x1xf32>
    %56 = vector.broadcast %55 : vector<16x1xf32> to vector<16x288xf32>
    %57 = arith.addf %53, %56 : vector<16x288xf32>
    %cst_50 = arith.constant 0.000000e+00 : f32
    %58 = vector.broadcast %cst_50 : f32 to vector<16x288xf32>
    %59 = arith.maximumf %57, %58 : vector<16x288xf32>
    %60 = arith.mulf %59, %2 : vector<16x288xf32>
    %c0_51 = arith.constant 0 : index
    %c128_52 = arith.constant 128 : index
    %61 = vector.load %arg7[%c0_51, %c128_52] : memref<16x512xf32, #tpu.memory_space<vmem>>, vector<16x288xf32>
    tpu.vector_store %arg7[%c0_51, %c128_52], %60 {strides = array<i32>} : memref<16x512xf32, #tpu.memory_space<vmem>>, vector<16x288xf32>,
    %c9 = arith.constant 9 : index
    %c0_53 = arith.constant 0 : index
    %c0_54 = arith.constant 0 : index
    %62 = vector.load %arg2[%c9, %c0_53, %c0_54] : memref<45x16x16xf32, #tpu.memory_space<vmem>>, vector<1x16x16xf32>
    %63 = vector.shape_cast %62 : vector<1x16x16xf32> to vector<16x16xf32>
    %c0_55 = arith.constant 0 : index
    %c109_56 = arith.constant 109 : index
    %64 = vector.load %arg7[%c0_55, %c109_56] : memref<16x512xf32, #tpu.memory_space<vmem>>, vector<16x288xf32>
    %cst_57 = arith.constant dense<0.000000e+00> : vector<16x288xf32>
    %65 = tpu.matmul %63, %64, %cst_57 {dimension_numbers = #tpu.dot_dimension_numbers<[1], [0], [0], [1], [0, 0, 1, 1], [], []>} : vector<16x16xf32>, vector<16x288xf32>, vector<16x288xf32> -> vector<16x288xf32>
    %c10 = arith.constant 10 : index
    %c0_58 = arith.constant 0 : index
    %c0_59 = arith.constant 0 : index
    %66 = vector.load %arg2[%c10, %c0_58, %c0_59] : memref<45x16x16xf32, #tpu.memory_space<vmem>>, vector<1x16x16xf32>
    %67 = vector.shape_cast %66 : vector<1x16x16xf32> to vector<16x16xf32>
    %c0_60 = arith.constant 0 : index
    %c110_61 = arith.constant 110 : index
    %68 = vector.load %arg7[%c0_60, %c110_61] : memref<16x512xf32, #tpu.memory_space<vmem>>, vector<16x288xf32>
    %cst_62 = arith.constant dense<0.000000e+00> : vector<16x288xf32>
    %69 = tpu.matmul %67, %68, %cst_62 {dimension_numbers = #tpu.dot_dimension_numbers<[1], [0], [0], [1], [0, 0, 1, 1], [], []>} : vector<16x16xf32>, vector<16x288xf32>, vector<16x288xf32> -> vector<16x288xf32>
    %70 = arith.addf %65, %69 : vector<16x288xf32>
    %c11 = arith.constant 11 : index
    %c0_63 = arith.constant 0 : index
    %c0_64 = arith.constant 0 : index
    %71 = vector.load %arg2[%c11, %c0_63, %c0_64] : memref<45x16x16xf32, #tpu.memory_space<vmem>>, vector<1x16x16xf32>
    %72 = vector.shape_cast %71 : vector<1x16x16xf32> to vector<16x16xf32>
    %c0_65 = arith.constant 0 : index
    %c111_66 = arith.constant 111 : index
    %73 = vector.load %arg7[%c0_65, %c111_66] : memref<16x512xf32, #tpu.memory_space<vmem>>, vector<16x288xf32>
    %cst_67 = arith.constant dense<0.000000e+00> : vector<16x288xf32>
    %74 = tpu.matmul %72, %73, %cst_67 {dimension_numbers = #tpu.dot_dimension_numbers<[1], [0], [0], [1], [0, 0, 1, 1], [], []>} : vector<16x16xf32>, vector<16x288xf32>, vector<16x288xf32> -> vector<16x288xf32>
    %75 = arith.addf %70, %74 : vector<16x288xf32>
    %c12 = arith.constant 12 : index
    %c0_68 = arith.constant 0 : index
    %c0_69 = arith.constant 0 : index
    %76 = vector.load %arg2[%c12, %c0_68, %c0_69] : memref<45x16x16xf32, #tpu.memory_space<vmem>>, vector<1x16x16xf32>
    %77 = vector.shape_cast %76 : vector<1x16x16xf32> to vector<16x16xf32>
    %c0_70 = arith.constant 0 : index
    %c127_71 = arith.constant 127 : index
    %78 = vector.load %arg7[%c0_70, %c127_71] : memref<16x512xf32, #tpu.memory_space<vmem>>, vector<16x288xf32>
    %cst_72 = arith.constant dense<0.000000e+00> : vector<16x288xf32>
    %79 = tpu.matmul %77, %78, %cst_72 {dimension_numbers = #tpu.dot_dimension_numbers<[1], [0], [0], [1], [0, 0, 1, 1], [], []>} : vector<16x16xf32>, vector<16x288xf32>, vector<16x288xf32> -> vector<16x288xf32>
    %80 = arith.addf %75, %79 : vector<16x288xf32>
    %c13 = arith.constant 13 : index
    %c0_73 = arith.constant 0 : index
    %c0_74 = arith.constant 0 : index
    %81 = vector.load %arg2[%c13, %c0_73, %c0_74] : memref<45x16x16xf32, #tpu.memory_space<vmem>>, vector<1x16x16xf32>
    %82 = vector.shape_cast %81 : vector<1x16x16xf32> to vector<16x16xf32>
    %c0_75 = arith.constant 0 : index
    %c128_76 = arith.constant 128 : index
    %83 = vector.load %arg7[%c0_75, %c128_76] : memref<16x512xf32, #tpu.memory_space<vmem>>, vector<16x288xf32>
    %cst_77 = arith.constant dense<0.000000e+00> : vector<16x288xf32>
    %84 = tpu.matmul %82, %83, %cst_77 {dimension_numbers = #tpu.dot_dimension_numbers<[1], [0], [0], [1], [0, 0, 1, 1], [], []>} : vector<16x16xf32>, vector<16x288xf32>, vector<16x288xf32> -> vector<16x288xf32>
    %85 = arith.addf %80, %84 : vector<16x288xf32>
    %c14 = arith.constant 14 : index
    %c0_78 = arith.constant 0 : index
    %c0_79 = arith.constant 0 : index
    %86 = vector.load %arg2[%c14, %c0_78, %c0_79] : memref<45x16x16xf32, #tpu.memory_space<vmem>>, vector<1x16x16xf32>
    %87 = vector.shape_cast %86 : vector<1x16x16xf32> to vector<16x16xf32>
    %c0_80 = arith.constant 0 : index
    %c129_81 = arith.constant 129 : index
    %88 = vector.load %arg7[%c0_80, %c129_81] : memref<16x512xf32, #tpu.memory_space<vmem>>, vector<16x288xf32>
    %cst_82 = arith.constant dense<0.000000e+00> : vector<16x288xf32>
    %89 = tpu.matmul %87, %88, %cst_82 {dimension_numbers = #tpu.dot_dimension_numbers<[1], [0], [0], [1], [0, 0, 1, 1], [], []>} : vector<16x16xf32>, vector<16x288xf32>, vector<16x288xf32> -> vector<16x288xf32>
    %90 = arith.addf %85, %89 : vector<16x288xf32>
    %c15 = arith.constant 15 : index
    %c0_83 = arith.constant 0 : index
    %c0_84 = arith.constant 0 : index
    %91 = vector.load %arg2[%c15, %c0_83, %c0_84] : memref<45x16x16xf32, #tpu.memory_space<vmem>>, vector<1x16x16xf32>
    %92 = vector.shape_cast %91 : vector<1x16x16xf32> to vector<16x16xf32>
    %c0_85 = arith.constant 0 : index
    %c145_86 = arith.constant 145 : index
    %93 = vector.load %arg7[%c0_85, %c145_86] : memref<16x512xf32, #tpu.memory_space<vmem>>, vector<16x288xf32>
    %cst_87 = arith.constant dense<0.000000e+00> : vector<16x288xf32>
    %94 = tpu.matmul %92, %93, %cst_87 {dimension_numbers = #tpu.dot_dimension_numbers<[1], [0], [0], [1], [0, 0, 1, 1], [], []>} : vector<16x16xf32>, vector<16x288xf32>, vector<16x288xf32> -> vector<16x288xf32>
    %95 = arith.addf %90, %94 : vector<16x288xf32>
    %c16 = arith.constant 16 : index
    %c0_88 = arith.constant 0 : index
    %c0_89 = arith.constant 0 : index
    %96 = vector.load %arg2[%c16, %c0_88, %c0_89] : memref<45x16x16xf32, #tpu.memory_space<vmem>>, vector<1x16x16xf32>
    %97 = vector.shape_cast %96 : vector<1x16x16xf32> to vector<16x16xf32>
    %c0_90 = arith.constant 0 : index
    %c146_91 = arith.constant 146 : index
    %98 = vector.load %arg7[%c0_90, %c146_91] : memref<16x512xf32, #tpu.memory_space<vmem>>, vector<16x288xf32>
    %cst_92 = arith.constant dense<0.000000e+00> : vector<16x288xf32>
    %99 = tpu.matmul %97, %98, %cst_92 {dimension_numbers = #tpu.dot_dimension_numbers<[1], [0], [0], [1], [0, 0, 1, 1], [], []>} : vector<16x16xf32>, vector<16x288xf32>, vector<16x288xf32> -> vector<16x288xf32>
    %100 = arith.addf %95, %99 : vector<16x288xf32>
    %c17 = arith.constant 17 : index
    %c0_93 = arith.constant 0 : index
    %c0_94 = arith.constant 0 : index
    %101 = vector.load %arg2[%c17, %c0_93, %c0_94] : memref<45x16x16xf32, #tpu.memory_space<vmem>>, vector<1x16x16xf32>
    %102 = vector.shape_cast %101 : vector<1x16x16xf32> to vector<16x16xf32>
    %c0_95 = arith.constant 0 : index
    %c147_96 = arith.constant 147 : index
    %103 = vector.load %arg7[%c0_95, %c147_96] : memref<16x512xf32, #tpu.memory_space<vmem>>, vector<16x288xf32>
    %cst_97 = arith.constant dense<0.000000e+00> : vector<16x288xf32>
    %104 = tpu.matmul %102, %103, %cst_97 {dimension_numbers = #tpu.dot_dimension_numbers<[1], [0], [0], [1], [0, 0, 1, 1], [], []>} : vector<16x16xf32>, vector<16x288xf32>, vector<16x288xf32> -> vector<16x288xf32>
    %105 = arith.addf %100, %104 : vector<16x288xf32>
    %c1_98 = arith.constant 1 : index
    %c0_99 = arith.constant 0 : index
    %c0_100 = arith.constant 0 : index
    %106 = vector.load %arg3[%c1_98, %c0_99, %c0_100] : memref<5x16x1xf32, #tpu.memory_space<vmem>>, vector<1x16x1xf32>
    %107 = vector.shape_cast %106 : vector<1x16x1xf32> to vector<16x1xf32>
    %108 = vector.broadcast %107 : vector<16x1xf32> to vector<16x288xf32>
    %109 = arith.addf %105, %108 : vector<16x288xf32>
    %c0_101 = arith.constant 0 : index
    %c128_102 = arith.constant 128 : index
    %110 = vector.load %arg6[%c0_101, %c128_102] : memref<16x512xf32, #tpu.memory_space<vmem>>, vector<16x288xf32>
    %111 = arith.addf %109, %110 : vector<16x288xf32>
    %112 = arith.mulf %111, %2 : vector<16x288xf32>
    %c0_103 = arith.constant 0 : index
    %c128_104 = arith.constant 128 : index
    %113 = vector.load %arg6[%c0_103, %c128_104] : memref<16x512xf32, #tpu.memory_space<vmem>>, vector<16x288xf32>
    tpu.vector_store %arg6[%c0_103, %c128_104], %112 {strides = array<i32>} : memref<16x512xf32, #tpu.memory_space<vmem>>, vector<16x288xf32>,
    %c18 = arith.constant 18 : index
    %c0_105 = arith.constant 0 : index
    %c0_106 = arith.constant 0 : index
    %114 = vector.load %arg2[%c18, %c0_105, %c0_106] : memref<45x16x16xf32, #tpu.memory_space<vmem>>, vector<1x16x16xf32>
    %115 = vector.shape_cast %114 : vector<1x16x16xf32> to vector<16x16xf32>
    %c0_107 = arith.constant 0 : index
    %c109_108 = arith.constant 109 : index
    %116 = vector.load %arg6[%c0_107, %c109_108] : memref<16x512xf32, #tpu.memory_space<vmem>>, vector<16x288xf32>
    %cst_109 = arith.constant dense<0.000000e+00> : vector<16x288xf32>
    %117 = tpu.matmul %115, %116, %cst_109 {dimension_numbers = #tpu.dot_dimension_numbers<[1], [0], [0], [1], [0, 0, 1, 1], [], []>} : vector<16x16xf32>, vector<16x288xf32>, vector<16x288xf32> -> vector<16x288xf32>
    %c19 = arith.constant 19 : index
    %c0_110 = arith.constant 0 : index
    %c0_111 = arith.constant 0 : index
    %118 = vector.load %arg2[%c19, %c0_110, %c0_111] : memref<45x16x16xf32, #tpu.memory_space<vmem>>, vector<1x16x16xf32>
    %119 = vector.shape_cast %118 : vector<1x16x16xf32> to vector<16x16xf32>
    %c0_112 = arith.constant 0 : index
    %c110_113 = arith.constant 110 : index
    %120 = vector.load %arg6[%c0_112, %c110_113] : memref<16x512xf32, #tpu.memory_space<vmem>>, vector<16x288xf32>
    %cst_114 = arith.constant dense<0.000000e+00> : vector<16x288xf32>
    %121 = tpu.matmul %119, %120, %cst_114 {dimension_numbers = #tpu.dot_dimension_numbers<[1], [0], [0], [1], [0, 0, 1, 1], [], []>} : vector<16x16xf32>, vector<16x288xf32>, vector<16x288xf32> -> vector<16x288xf32>
    %122 = arith.addf %117, %121 : vector<16x288xf32>
    %c20 = arith.constant 20 : index
    %c0_115 = arith.constant 0 : index
    %c0_116 = arith.constant 0 : index
    %123 = vector.load %arg2[%c20, %c0_115, %c0_116] : memref<45x16x16xf32, #tpu.memory_space<vmem>>, vector<1x16x16xf32>
    %124 = vector.shape_cast %123 : vector<1x16x16xf32> to vector<16x16xf32>
    %c0_117 = arith.constant 0 : index
    %c111_118 = arith.constant 111 : index
    %125 = vector.load %arg6[%c0_117, %c111_118] : memref<16x512xf32, #tpu.memory_space<vmem>>, vector<16x288xf32>
    %cst_119 = arith.constant dense<0.000000e+00> : vector<16x288xf32>
    %126 = tpu.matmul %124, %125, %cst_119 {dimension_numbers = #tpu.dot_dimension_numbers<[1], [0], [0], [1], [0, 0, 1, 1], [], []>} : vector<16x16xf32>, vector<16x288xf32>, vector<16x288xf32> -> vector<16x288xf32>
    %127 = arith.addf %122, %126 : vector<16x288xf32>
    %c21 = arith.constant 21 : index
    %c0_120 = arith.constant 0 : index
    %c0_121 = arith.constant 0 : index
    %128 = vector.load %arg2[%c21, %c0_120, %c0_121] : memref<45x16x16xf32, #tpu.memory_space<vmem>>, vector<1x16x16xf32>
    %129 = vector.shape_cast %128 : vector<1x16x16xf32> to vector<16x16xf32>
    %c0_122 = arith.constant 0 : index
    %c127_123 = arith.constant 127 : index
    %130 = vector.load %arg6[%c0_122, %c127_123] : memref<16x512xf32, #tpu.memory_space<vmem>>, vector<16x288xf32>
    %cst_124 = arith.constant dense<0.000000e+00> : vector<16x288xf32>
    %131 = tpu.matmul %129, %130, %cst_124 {dimension_numbers = #tpu.dot_dimension_numbers<[1], [0], [0], [1], [0, 0, 1, 1], [], []>} : vector<16x16xf32>, vector<16x288xf32>, vector<16x288xf32> -> vector<16x288xf32>
    %132 = arith.addf %127, %131 : vector<16x288xf32>
    %c22 = arith.constant 22 : index
    %c0_125 = arith.constant 0 : index
    %c0_126 = arith.constant 0 : index
    %133 = vector.load %arg2[%c22, %c0_125, %c0_126] : memref<45x16x16xf32, #tpu.memory_space<vmem>>, vector<1x16x16xf32>
    %134 = vector.shape_cast %133 : vector<1x16x16xf32> to vector<16x16xf32>
    %c0_127 = arith.constant 0 : index
    %c128_128 = arith.constant 128 : index
    %135 = vector.load %arg6[%c0_127, %c128_128] : memref<16x512xf32, #tpu.memory_space<vmem>>, vector<16x288xf32>
    %cst_129 = arith.constant dense<0.000000e+00> : vector<16x288xf32>
    %136 = tpu.matmul %134, %135, %cst_129 {dimension_numbers = #tpu.dot_dimension_numbers<[1], [0], [0], [1], [0, 0, 1, 1], [], []>} : vector<16x16xf32>, vector<16x288xf32>, vector<16x288xf32> -> vector<16x288xf32>
    %137 = arith.addf %132, %136 : vector<16x288xf32>
    %c23 = arith.constant 23 : index
    %c0_130 = arith.constant 0 : index
    %c0_131 = arith.constant 0 : index
    %138 = vector.load %arg2[%c23, %c0_130, %c0_131] : memref<45x16x16xf32, #tpu.memory_space<vmem>>, vector<1x16x16xf32>
    %139 = vector.shape_cast %138 : vector<1x16x16xf32> to vector<16x16xf32>
    %c0_132 = arith.constant 0 : index
    %c129_133 = arith.constant 129 : index
    %140 = vector.load %arg6[%c0_132, %c129_133] : memref<16x512xf32, #tpu.memory_space<vmem>>, vector<16x288xf32>
    %cst_134 = arith.constant dense<0.000000e+00> : vector<16x288xf32>
    %141 = tpu.matmul %139, %140, %cst_134 {dimension_numbers = #tpu.dot_dimension_numbers<[1], [0], [0], [1], [0, 0, 1, 1], [], []>} : vector<16x16xf32>, vector<16x288xf32>, vector<16x288xf32> -> vector<16x288xf32>
    %142 = arith.addf %137, %141 : vector<16x288xf32>
    %c24 = arith.constant 24 : index
    %c0_135 = arith.constant 0 : index
    %c0_136 = arith.constant 0 : index
    %143 = vector.load %arg2[%c24, %c0_135, %c0_136] : memref<45x16x16xf32, #tpu.memory_space<vmem>>, vector<1x16x16xf32>
    %144 = vector.shape_cast %143 : vector<1x16x16xf32> to vector<16x16xf32>
    %c0_137 = arith.constant 0 : index
    %c145_138 = arith.constant 145 : index
    %145 = vector.load %arg6[%c0_137, %c145_138] : memref<16x512xf32, #tpu.memory_space<vmem>>, vector<16x288xf32>
    %cst_139 = arith.constant dense<0.000000e+00> : vector<16x288xf32>
    %146 = tpu.matmul %144, %145, %cst_139 {dimension_numbers = #tpu.dot_dimension_numbers<[1], [0], [0], [1], [0, 0, 1, 1], [], []>} : vector<16x16xf32>, vector<16x288xf32>, vector<16x288xf32> -> vector<16x288xf32>
    %147 = arith.addf %142, %146 : vector<16x288xf32>
    %c25 = arith.constant 25 : index
    %c0_140 = arith.constant 0 : index
    %c0_141 = arith.constant 0 : index
    %148 = vector.load %arg2[%c25, %c0_140, %c0_141] : memref<45x16x16xf32, #tpu.memory_space<vmem>>, vector<1x16x16xf32>
    %149 = vector.shape_cast %148 : vector<1x16x16xf32> to vector<16x16xf32>
    %c0_142 = arith.constant 0 : index
    %c146_143 = arith.constant 146 : index
    %150 = vector.load %arg6[%c0_142, %c146_143] : memref<16x512xf32, #tpu.memory_space<vmem>>, vector<16x288xf32>
    %cst_144 = arith.constant dense<0.000000e+00> : vector<16x288xf32>
    %151 = tpu.matmul %149, %150, %cst_144 {dimension_numbers = #tpu.dot_dimension_numbers<[1], [0], [0], [1], [0, 0, 1, 1], [], []>} : vector<16x16xf32>, vector<16x288xf32>, vector<16x288xf32> -> vector<16x288xf32>
    %152 = arith.addf %147, %151 : vector<16x288xf32>
    %c26 = arith.constant 26 : index
    %c0_145 = arith.constant 0 : index
    %c0_146 = arith.constant 0 : index
    %153 = vector.load %arg2[%c26, %c0_145, %c0_146] : memref<45x16x16xf32, #tpu.memory_space<vmem>>, vector<1x16x16xf32>
    %154 = vector.shape_cast %153 : vector<1x16x16xf32> to vector<16x16xf32>
    %c0_147 = arith.constant 0 : index
    %c147_148 = arith.constant 147 : index
    %155 = vector.load %arg6[%c0_147, %c147_148] : memref<16x512xf32, #tpu.memory_space<vmem>>, vector<16x288xf32>
    %cst_149 = arith.constant dense<0.000000e+00> : vector<16x288xf32>
    %156 = tpu.matmul %154, %155, %cst_149 {dimension_numbers = #tpu.dot_dimension_numbers<[1], [0], [0], [1], [0, 0, 1, 1], [], []>} : vector<16x16xf32>, vector<16x288xf32>, vector<16x288xf32> -> vector<16x288xf32>
    %157 = arith.addf %152, %156 : vector<16x288xf32>
    %c2_150 = arith.constant 2 : index
    %c0_151 = arith.constant 0 : index
    %c0_152 = arith.constant 0 : index
    %158 = vector.load %arg3[%c2_150, %c0_151, %c0_152] : memref<5x16x1xf32, #tpu.memory_space<vmem>>, vector<1x16x1xf32>
    %159 = vector.shape_cast %158 : vector<1x16x1xf32> to vector<16x1xf32>
    %160 = vector.broadcast %159 : vector<16x1xf32> to vector<16x288xf32>
    %161 = arith.addf %157, %160 : vector<16x288xf32>
    %cst_153 = arith.constant 0.000000e+00 : f32
    %162 = vector.broadcast %cst_153 : f32 to vector<16x288xf32>
    %163 = arith.maximumf %161, %162 : vector<16x288xf32>
    %164 = arith.mulf %163, %2 : vector<16x288xf32>
    %c0_154 = arith.constant 0 : index
    %c128_155 = arith.constant 128 : index
    %165 = vector.load %arg7[%c0_154, %c128_155] : memref<16x512xf32, #tpu.memory_space<vmem>>, vector<16x288xf32>
    tpu.vector_store %arg7[%c0_154, %c128_155], %164 {strides = array<i32>} : memref<16x512xf32, #tpu.memory_space<vmem>>, vector<16x288xf32>,
    %c27 = arith.constant 27 : index
    %c0_156 = arith.constant 0 : index
    %c0_157 = arith.constant 0 : index
    %166 = vector.load %arg2[%c27, %c0_156, %c0_157] : memref<45x16x16xf32, #tpu.memory_space<vmem>>, vector<1x16x16xf32>
    %167 = vector.shape_cast %166 : vector<1x16x16xf32> to vector<16x16xf32>
    %c0_158 = arith.constant 0 : index
    %c109_159 = arith.constant 109 : index
    %168 = vector.load %arg7[%c0_158, %c109_159] : memref<16x512xf32, #tpu.memory_space<vmem>>, vector<16x288xf32>
    %cst_160 = arith.constant dense<0.000000e+00> : vector<16x288xf32>
    %169 = tpu.matmul %167, %168, %cst_160 {dimension_numbers = #tpu.dot_dimension_numbers<[1], [0], [0], [1], [0, 0, 1, 1], [], []>} : vector<16x16xf32>, vector<16x288xf32>, vector<16x288xf32> -> vector<16x288xf32>
    %c28 = arith.constant 28 : index
    %c0_161 = arith.constant 0 : index
    %c0_162 = arith.constant 0 : index
    %170 = vector.load %arg2[%c28, %c0_161, %c0_162] : memref<45x16x16xf32, #tpu.memory_space<vmem>>, vector<1x16x16xf32>
    %171 = vector.shape_cast %170 : vector<1x16x16xf32> to vector<16x16xf32>
    %c0_163 = arith.constant 0 : index
    %c110_164 = arith.constant 110 : index
    %172 = vector.load %arg7[%c0_163, %c110_164] : memref<16x512xf32, #tpu.memory_space<vmem>>, vector<16x288xf32>
    %cst_165 = arith.constant dense<0.000000e+00> : vector<16x288xf32>
    %173 = tpu.matmul %171, %172, %cst_165 {dimension_numbers = #tpu.dot_dimension_numbers<[1], [0], [0], [1], [0, 0, 1, 1], [], []>} : vector<16x16xf32>, vector<16x288xf32>, vector<16x288xf32> -> vector<16x288xf32>
    %174 = arith.addf %169, %173 : vector<16x288xf32>
    %c29 = arith.constant 29 : index
    %c0_166 = arith.constant 0 : index
    %c0_167 = arith.constant 0 : index
    %175 = vector.load %arg2[%c29, %c0_166, %c0_167] : memref<45x16x16xf32, #tpu.memory_space<vmem>>, vector<1x16x16xf32>
    %176 = vector.shape_cast %175 : vector<1x16x16xf32> to vector<16x16xf32>
    %c0_168 = arith.constant 0 : index
    %c111_169 = arith.constant 111 : index
    %177 = vector.load %arg7[%c0_168, %c111_169] : memref<16x512xf32, #tpu.memory_space<vmem>>, vector<16x288xf32>
    %cst_170 = arith.constant dense<0.000000e+00> : vector<16x288xf32>
    %178 = tpu.matmul %176, %177, %cst_170 {dimension_numbers = #tpu.dot_dimension_numbers<[1], [0], [0], [1], [0, 0, 1, 1], [], []>} : vector<16x16xf32>, vector<16x288xf32>, vector<16x288xf32> -> vector<16x288xf32>
    %179 = arith.addf %174, %178 : vector<16x288xf32>
    %c30 = arith.constant 30 : index
    %c0_171 = arith.constant 0 : index
    %c0_172 = arith.constant 0 : index
    %180 = vector.load %arg2[%c30, %c0_171, %c0_172] : memref<45x16x16xf32, #tpu.memory_space<vmem>>, vector<1x16x16xf32>
    %181 = vector.shape_cast %180 : vector<1x16x16xf32> to vector<16x16xf32>
    %c0_173 = arith.constant 0 : index
    %c127_174 = arith.constant 127 : index
    %182 = vector.load %arg7[%c0_173, %c127_174] : memref<16x512xf32, #tpu.memory_space<vmem>>, vector<16x288xf32>
    %cst_175 = arith.constant dense<0.000000e+00> : vector<16x288xf32>
    %183 = tpu.matmul %181, %182, %cst_175 {dimension_numbers = #tpu.dot_dimension_numbers<[1], [0], [0], [1], [0, 0, 1, 1], [], []>} : vector<16x16xf32>, vector<16x288xf32>, vector<16x288xf32> -> vector<16x288xf32>
    %184 = arith.addf %179, %183 : vector<16x288xf32>
    %c31 = arith.constant 31 : index
    %c0_176 = arith.constant 0 : index
    %c0_177 = arith.constant 0 : index
    %185 = vector.load %arg2[%c31, %c0_176, %c0_177] : memref<45x16x16xf32, #tpu.memory_space<vmem>>, vector<1x16x16xf32>
    %186 = vector.shape_cast %185 : vector<1x16x16xf32> to vector<16x16xf32>
    %c0_178 = arith.constant 0 : index
    %c128_179 = arith.constant 128 : index
    %187 = vector.load %arg7[%c0_178, %c128_179] : memref<16x512xf32, #tpu.memory_space<vmem>>, vector<16x288xf32>
    %cst_180 = arith.constant dense<0.000000e+00> : vector<16x288xf32>
    %188 = tpu.matmul %186, %187, %cst_180 {dimension_numbers = #tpu.dot_dimension_numbers<[1], [0], [0], [1], [0, 0, 1, 1], [], []>} : vector<16x16xf32>, vector<16x288xf32>, vector<16x288xf32> -> vector<16x288xf32>
    %189 = arith.addf %184, %188 : vector<16x288xf32>
    %c32 = arith.constant 32 : index
    %c0_181 = arith.constant 0 : index
    %c0_182 = arith.constant 0 : index
    %190 = vector.load %arg2[%c32, %c0_181, %c0_182] : memref<45x16x16xf32, #tpu.memory_space<vmem>>, vector<1x16x16xf32>
    %191 = vector.shape_cast %190 : vector<1x16x16xf32> to vector<16x16xf32>
    %c0_183 = arith.constant 0 : index
    %c129_184 = arith.constant 129 : index
    %192 = vector.load %arg7[%c0_183, %c129_184] : memref<16x512xf32, #tpu.memory_space<vmem>>, vector<16x288xf32>
    %cst_185 = arith.constant dense<0.000000e+00> : vector<16x288xf32>
    %193 = tpu.matmul %191, %192, %cst_185 {dimension_numbers = #tpu.dot_dimension_numbers<[1], [0], [0], [1], [0, 0, 1, 1], [], []>} : vector<16x16xf32>, vector<16x288xf32>, vector<16x288xf32> -> vector<16x288xf32>
    %194 = arith.addf %189, %193 : vector<16x288xf32>
    %c33 = arith.constant 33 : index
    %c0_186 = arith.constant 0 : index
    %c0_187 = arith.constant 0 : index
    %195 = vector.load %arg2[%c33, %c0_186, %c0_187] : memref<45x16x16xf32, #tpu.memory_space<vmem>>, vector<1x16x16xf32>
    %196 = vector.shape_cast %195 : vector<1x16x16xf32> to vector<16x16xf32>
    %c0_188 = arith.constant 0 : index
    %c145_189 = arith.constant 145 : index
    %197 = vector.load %arg7[%c0_188, %c145_189] : memref<16x512xf32, #tpu.memory_space<vmem>>, vector<16x288xf32>
    %cst_190 = arith.constant dense<0.000000e+00> : vector<16x288xf32>
    %198 = tpu.matmul %196, %197, %cst_190 {dimension_numbers = #tpu.dot_dimension_numbers<[1], [0], [0], [1], [0, 0, 1, 1], [], []>} : vector<16x16xf32>, vector<16x288xf32>, vector<16x288xf32> -> vector<16x288xf32>
    %199 = arith.addf %194, %198 : vector<16x288xf32>
    %c34 = arith.constant 34 : index
    %c0_191 = arith.constant 0 : index
    %c0_192 = arith.constant 0 : index
    %200 = vector.load %arg2[%c34, %c0_191, %c0_192] : memref<45x16x16xf32, #tpu.memory_space<vmem>>, vector<1x16x16xf32>
    %201 = vector.shape_cast %200 : vector<1x16x16xf32> to vector<16x16xf32>
    %c0_193 = arith.constant 0 : index
    %c146_194 = arith.constant 146 : index
    %202 = vector.load %arg7[%c0_193, %c146_194] : memref<16x512xf32, #tpu.memory_space<vmem>>, vector<16x288xf32>
    %cst_195 = arith.constant dense<0.000000e+00> : vector<16x288xf32>
    %203 = tpu.matmul %201, %202, %cst_195 {dimension_numbers = #tpu.dot_dimension_numbers<[1], [0], [0], [1], [0, 0, 1, 1], [], []>} : vector<16x16xf32>, vector<16x288xf32>, vector<16x288xf32> -> vector<16x288xf32>
    %204 = arith.addf %199, %203 : vector<16x288xf32>
    %c35 = arith.constant 35 : index
    %c0_196 = arith.constant 0 : index
    %c0_197 = arith.constant 0 : index
    %205 = vector.load %arg2[%c35, %c0_196, %c0_197] : memref<45x16x16xf32, #tpu.memory_space<vmem>>, vector<1x16x16xf32>
    %206 = vector.shape_cast %205 : vector<1x16x16xf32> to vector<16x16xf32>
    %c0_198 = arith.constant 0 : index
    %c147_199 = arith.constant 147 : index
    %207 = vector.load %arg7[%c0_198, %c147_199] : memref<16x512xf32, #tpu.memory_space<vmem>>, vector<16x288xf32>
    %cst_200 = arith.constant dense<0.000000e+00> : vector<16x288xf32>
    %208 = tpu.matmul %206, %207, %cst_200 {dimension_numbers = #tpu.dot_dimension_numbers<[1], [0], [0], [1], [0, 0, 1, 1], [], []>} : vector<16x16xf32>, vector<16x288xf32>, vector<16x288xf32> -> vector<16x288xf32>
    %209 = arith.addf %204, %208 : vector<16x288xf32>
    %c3_201 = arith.constant 3 : index
    %c0_202 = arith.constant 0 : index
    %c0_203 = arith.constant 0 : index
    %210 = vector.load %arg3[%c3_201, %c0_202, %c0_203] : memref<5x16x1xf32, #tpu.memory_space<vmem>>, vector<1x16x1xf32>
    %211 = vector.shape_cast %210 : vector<1x16x1xf32> to vector<16x1xf32>
    %212 = vector.broadcast %211 : vector<16x1xf32> to vector<16x288xf32>
    %213 = arith.addf %209, %212 : vector<16x288xf32>
    %c0_204 = arith.constant 0 : index
    %c128_205 = arith.constant 128 : index
    %214 = vector.load %arg6[%c0_204, %c128_205] : memref<16x512xf32, #tpu.memory_space<vmem>>, vector<16x288xf32>
    %215 = arith.addf %213, %214 : vector<16x288xf32>
    %216 = arith.mulf %215, %2 : vector<16x288xf32>
    %c0_206 = arith.constant 0 : index
    %c128_207 = arith.constant 128 : index
    %217 = vector.load %arg6[%c0_206, %c128_207] : memref<16x512xf32, #tpu.memory_space<vmem>>, vector<16x288xf32>
    tpu.vector_store %arg6[%c0_206, %c128_207], %216 {strides = array<i32>} : memref<16x512xf32, #tpu.memory_space<vmem>>, vector<16x288xf32>,
    %c36 = arith.constant 36 : index
    %c0_208 = arith.constant 0 : index
    %c0_209 = arith.constant 0 : index
    %218 = vector.load %arg2[%c36, %c0_208, %c0_209] : memref<45x16x16xf32, #tpu.memory_space<vmem>>, vector<1x16x16xf32>
    %219 = vector.shape_cast %218 : vector<1x16x16xf32> to vector<16x16xf32>
    %c0_210 = arith.constant 0 : index
    %c109_211 = arith.constant 109 : index
    %220 = vector.load %arg6[%c0_210, %c109_211] : memref<16x512xf32, #tpu.memory_space<vmem>>, vector<16x288xf32>
    %cst_212 = arith.constant dense<0.000000e+00> : vector<16x288xf32>
    %221 = tpu.matmul %219, %220, %cst_212 {dimension_numbers = #tpu.dot_dimension_numbers<[1], [0], [0], [1], [0, 0, 1, 1], [], []>} : vector<16x16xf32>, vector<16x288xf32>, vector<16x288xf32> -> vector<16x288xf32>
    %c37 = arith.constant 37 : index
    %c0_213 = arith.constant 0 : index
    %c0_214 = arith.constant 0 : index
    %222 = vector.load %arg2[%c37, %c0_213, %c0_214] : memref<45x16x16xf32, #tpu.memory_space<vmem>>, vector<1x16x16xf32>
    %223 = vector.shape_cast %222 : vector<1x16x16xf32> to vector<16x16xf32>
    %c0_215 = arith.constant 0 : index
    %c110_216 = arith.constant 110 : index
    %224 = vector.load %arg6[%c0_215, %c110_216] : memref<16x512xf32, #tpu.memory_space<vmem>>, vector<16x288xf32>
    %cst_217 = arith.constant dense<0.000000e+00> : vector<16x288xf32>
    %225 = tpu.matmul %223, %224, %cst_217 {dimension_numbers = #tpu.dot_dimension_numbers<[1], [0], [0], [1], [0, 0, 1, 1], [], []>} : vector<16x16xf32>, vector<16x288xf32>, vector<16x288xf32> -> vector<16x288xf32>
    %226 = arith.addf %221, %225 : vector<16x288xf32>
    %c38 = arith.constant 38 : index
    %c0_218 = arith.constant 0 : index
    %c0_219 = arith.constant 0 : index
    %227 = vector.load %arg2[%c38, %c0_218, %c0_219] : memref<45x16x16xf32, #tpu.memory_space<vmem>>, vector<1x16x16xf32>
    %228 = vector.shape_cast %227 : vector<1x16x16xf32> to vector<16x16xf32>
    %c0_220 = arith.constant 0 : index
    %c111_221 = arith.constant 111 : index
    %229 = vector.load %arg6[%c0_220, %c111_221] : memref<16x512xf32, #tpu.memory_space<vmem>>, vector<16x288xf32>
    %cst_222 = arith.constant dense<0.000000e+00> : vector<16x288xf32>
    %230 = tpu.matmul %228, %229, %cst_222 {dimension_numbers = #tpu.dot_dimension_numbers<[1], [0], [0], [1], [0, 0, 1, 1], [], []>} : vector<16x16xf32>, vector<16x288xf32>, vector<16x288xf32> -> vector<16x288xf32>
    %231 = arith.addf %226, %230 : vector<16x288xf32>
    %c39 = arith.constant 39 : index
    %c0_223 = arith.constant 0 : index
    %c0_224 = arith.constant 0 : index
    %232 = vector.load %arg2[%c39, %c0_223, %c0_224] : memref<45x16x16xf32, #tpu.memory_space<vmem>>, vector<1x16x16xf32>
    %233 = vector.shape_cast %232 : vector<1x16x16xf32> to vector<16x16xf32>
    %c0_225 = arith.constant 0 : index
    %c127_226 = arith.constant 127 : index
    %234 = vector.load %arg6[%c0_225, %c127_226] : memref<16x512xf32, #tpu.memory_space<vmem>>, vector<16x288xf32>
    %cst_227 = arith.constant dense<0.000000e+00> : vector<16x288xf32>
    %235 = tpu.matmul %233, %234, %cst_227 {dimension_numbers = #tpu.dot_dimension_numbers<[1], [0], [0], [1], [0, 0, 1, 1], [], []>} : vector<16x16xf32>, vector<16x288xf32>, vector<16x288xf32> -> vector<16x288xf32>
    %236 = arith.addf %231, %235 : vector<16x288xf32>
    %c40 = arith.constant 40 : index
    %c0_228 = arith.constant 0 : index
    %c0_229 = arith.constant 0 : index
    %237 = vector.load %arg2[%c40, %c0_228, %c0_229] : memref<45x16x16xf32, #tpu.memory_space<vmem>>, vector<1x16x16xf32>
    %238 = vector.shape_cast %237 : vector<1x16x16xf32> to vector<16x16xf32>
    %c0_230 = arith.constant 0 : index
    %c128_231 = arith.constant 128 : index
    %239 = vector.load %arg6[%c0_230, %c128_231] : memref<16x512xf32, #tpu.memory_space<vmem>>, vector<16x288xf32>
    %cst_232 = arith.constant dense<0.000000e+00> : vector<16x288xf32>
    %240 = tpu.matmul %238, %239, %cst_232 {dimension_numbers = #tpu.dot_dimension_numbers<[1], [0], [0], [1], [0, 0, 1, 1], [], []>} : vector<16x16xf32>, vector<16x288xf32>, vector<16x288xf32> -> vector<16x288xf32>
    %241 = arith.addf %236, %240 : vector<16x288xf32>
    %c41 = arith.constant 41 : index
    %c0_233 = arith.constant 0 : index
    %c0_234 = arith.constant 0 : index
    %242 = vector.load %arg2[%c41, %c0_233, %c0_234] : memref<45x16x16xf32, #tpu.memory_space<vmem>>, vector<1x16x16xf32>
    %243 = vector.shape_cast %242 : vector<1x16x16xf32> to vector<16x16xf32>
    %c0_235 = arith.constant 0 : index
    %c129_236 = arith.constant 129 : index
    %244 = vector.load %arg6[%c0_235, %c129_236] : memref<16x512xf32, #tpu.memory_space<vmem>>, vector<16x288xf32>
    %cst_237 = arith.constant dense<0.000000e+00> : vector<16x288xf32>
    %245 = tpu.matmul %243, %244, %cst_237 {dimension_numbers = #tpu.dot_dimension_numbers<[1], [0], [0], [1], [0, 0, 1, 1], [], []>} : vector<16x16xf32>, vector<16x288xf32>, vector<16x288xf32> -> vector<16x288xf32>
    %246 = arith.addf %241, %245 : vector<16x288xf32>
    %c42 = arith.constant 42 : index
    %c0_238 = arith.constant 0 : index
    %c0_239 = arith.constant 0 : index
    %247 = vector.load %arg2[%c42, %c0_238, %c0_239] : memref<45x16x16xf32, #tpu.memory_space<vmem>>, vector<1x16x16xf32>
    %248 = vector.shape_cast %247 : vector<1x16x16xf32> to vector<16x16xf32>
    %c0_240 = arith.constant 0 : index
    %c145_241 = arith.constant 145 : index
    %249 = vector.load %arg6[%c0_240, %c145_241] : memref<16x512xf32, #tpu.memory_space<vmem>>, vector<16x288xf32>
    %cst_242 = arith.constant dense<0.000000e+00> : vector<16x288xf32>
    %250 = tpu.matmul %248, %249, %cst_242 {dimension_numbers = #tpu.dot_dimension_numbers<[1], [0], [0], [1], [0, 0, 1, 1], [], []>} : vector<16x16xf32>, vector<16x288xf32>, vector<16x288xf32> -> vector<16x288xf32>
    %251 = arith.addf %246, %250 : vector<16x288xf32>
    %c43 = arith.constant 43 : index
    %c0_243 = arith.constant 0 : index
    %c0_244 = arith.constant 0 : index
    %252 = vector.load %arg2[%c43, %c0_243, %c0_244] : memref<45x16x16xf32, #tpu.memory_space<vmem>>, vector<1x16x16xf32>
    %253 = vector.shape_cast %252 : vector<1x16x16xf32> to vector<16x16xf32>
    %c0_245 = arith.constant 0 : index
    %c146_246 = arith.constant 146 : index
    %254 = vector.load %arg6[%c0_245, %c146_246] : memref<16x512xf32, #tpu.memory_space<vmem>>, vector<16x288xf32>
    %cst_247 = arith.constant dense<0.000000e+00> : vector<16x288xf32>
    %255 = tpu.matmul %253, %254, %cst_247 {dimension_numbers = #tpu.dot_dimension_numbers<[1], [0], [0], [1], [0, 0, 1, 1], [], []>} : vector<16x16xf32>, vector<16x288xf32>, vector<16x288xf32> -> vector<16x288xf32>
    %256 = arith.addf %251, %255 : vector<16x288xf32>
    %c44 = arith.constant 44 : index
    %c0_248 = arith.constant 0 : index
    %c0_249 = arith.constant 0 : index
    %257 = vector.load %arg2[%c44, %c0_248, %c0_249] : memref<45x16x16xf32, #tpu.memory_space<vmem>>, vector<1x16x16xf32>
    %258 = vector.shape_cast %257 : vector<1x16x16xf32> to vector<16x16xf32>
    %c0_250 = arith.constant 0 : index
    %c147_251 = arith.constant 147 : index
    %259 = vector.load %arg6[%c0_250, %c147_251] : memref<16x512xf32, #tpu.memory_space<vmem>>, vector<16x288xf32>
    %cst_252 = arith.constant dense<0.000000e+00> : vector<16x288xf32>
    %260 = tpu.matmul %258, %259, %cst_252 {dimension_numbers = #tpu.dot_dimension_numbers<[1], [0], [0], [1], [0, 0, 1, 1], [], []>} : vector<16x16xf32>, vector<16x288xf32>, vector<16x288xf32> -> vector<16x288xf32>
    %261 = arith.addf %256, %260 : vector<16x288xf32>
    %c4_253 = arith.constant 4 : index
    %c0_254 = arith.constant 0 : index
    %c0_255 = arith.constant 0 : index
    %262 = vector.load %arg3[%c4_253, %c0_254, %c0_255] : memref<5x16x1xf32, #tpu.memory_space<vmem>>, vector<1x16x1xf32>
    %263 = vector.shape_cast %262 : vector<1x16x1xf32> to vector<16x1xf32>
    %264 = vector.broadcast %263 : vector<16x1xf32> to vector<16x288xf32>
    %265 = arith.addf %261, %264 : vector<16x288xf32>
    %c0_256 = arith.constant 0 : index
    %c0_257 = arith.constant 0 : index
    %c128_258 = arith.constant 128 : index
    %266 = vector.load %arg1[%c0_256, %c0_257, %c128_258] : memref<1x16x512xf32, #tpu.memory_space<vmem>>, vector<1x16x288xf32>
    %267 = vector.shape_cast %266 : vector<1x16x288xf32> to vector<16x288xf32>
    %268 = arith.addf %265, %267 : vector<16x288xf32>
    %269 = arith.mulf %268, %2 : vector<16x288xf32>
    %c0_259 = arith.constant 0 : index
    %c0_260 = arith.constant 0 : index
    %c0_261 = arith.constant 0 : index
    %270 = vector.load %arg5[%c0_259, %c0_260, %c0_261] : memref<1x16x288xf32, #tpu.memory_space<vmem>>, vector<1x16x288xf32>
    %271 = vector.shape_cast %270 : vector<1x16x288xf32> to vector<16x288xf32>
    %272 = vector.shape_cast %269 : vector<16x288xf32> to vector<1x16x288xf32>
    tpu.vector_store %arg5[%c0_259, %c0_260, %c0_261], %272 {strides = array<i32>} : memref<1x16x288xf32, #tpu.memory_space<vmem>>, vector<1x16x288xf32>,
    return
  }
  func.func @transform_0(%arg0: i32) -> (i32, i32, i32) {
    %c0_i32 = arith.constant 0 : i32
    %c0_i32_0 = arith.constant 0 : i32
    %c0_i32_1 = arith.constant 0 : i32
    return %arg0, %c0_i32, %c0_i32_0 : i32, i32, i32
  }
  func.func @transform_1(%arg0: i32) -> (i32, i32, i32) {
    %c0_i32 = arith.constant 0 : i32
    %c0_i32_0 = arith.constant 0 : i32
    %c0_i32_1 = arith.constant 0 : i32
    %c0_i32_2 = arith.constant 0 : i32
    return %c0_i32, %c0_i32_0, %c0_i32_1 : i32, i32, i32
  }
  func.func @transform_2(%arg0: i32) -> (i32, i32, i32) {
    %c0_i32 = arith.constant 0 : i32
    %c0_i32_0 = arith.constant 0 : i32
    %c0_i32_1 = arith.constant 0 : i32
    %c0_i32_2 = arith.constant 0 : i32
    return %c0_i32, %c0_i32_0, %c0_i32_1 : i32, i32, i32
  }
  func.func @transform_3(%arg0: i32) -> (i32, i32) {
    %c0_i32 = arith.constant 0 : i32
    %c0_i32_0 = arith.constant 0 : i32
    %c0_i32_1 = arith.constant 0 : i32
    return %c0_i32, %c0_i32_0 : i32, i32
  }
  func.func @transform_4(%arg0: i32) -> (i32, i32, i32) {
    %c0_i32 = arith.constant 0 : i32
    %c0_i32_0 = arith.constant 0 : i32
    %c0_i32_1 = arith.constant 0 : i32
    return %arg0, %c0_i32, %c0_i32_0 : i32, i32, i32
  }
}

</mosaic_0001>

<llo_original>
// kernel: residual_group_forward.1
$region0: #{residual_group_forward.1}
  #allocation0 [shape = 'u32[]', space=smem, size = 0x4, offset = 0x4, fixed_abs, tag = 'smem constant byte address 0x4 - core index']
  #allocation1 [shape = 'u32[144,128]{1,0:T(1,128)}', space=vmem, size = 0x12000, scoped, tag = 'internal scratch']
  #allocation2 [shape = 'f32[16,512]{1,0:T(8,128)}', space=vmem, size = 0x8000, scoped, tag = 'scratch operand']
  #allocation3 [shape = 'f32[16,512]{1,0:T(8,128)}', space=vmem, size = 0x8000, scoped, tag = 'scratch operand']
  %s0 = inlined_call_operand.vmem [shape: f32[2,16,512], index: 0, kind: input, shape index: {}]
  %s1 = inlined_call_operand.vmem [shape: f32[45,16,16], index: 1, kind: input, shape index: {}]
  %s2 = inlined_call_operand.vmem [shape: f32[5,16,1], index: 2, kind: input, shape index: {}]
  %s3 = inlined_call_operand.vmem [shape: f32[1,288], index: 3, kind: input, shape index: {}]
  %s4 = inlined_call_operand.vmem [shape: f32[2,16,288], index: 4, kind: output, shape index: {}]
  %s5 = sld [smem:[#allocation0]]
  $region49: #{residual_group_forward.1} parent=0
    _
  %s7 = ssub.s32 1, %s5
  %s8 = scalar_select 0, %s7, %s5
  loop: start=0, step=1, limit=4
  $region2: #{residual_group_forward.1} parent=0 // loop_pre_header
    _
  $region3: #{residual_group_forward.1} parent=0 // loop_header
    %s10 = sphi 0, %s14
    %p11 = scmp.ge.s32.totalorder %s10, 4
    %s20 = sphi 0, %s22
    %s23 = sphi 0, %s20
    %s24 = sphi 0, %s23
    %s40 = sphi 0, %s24
    %s44 = sphi 0, %s44
    %s46 = sphi 0, %s44
    %s47 = sphi 0, %s46
    %s61 = sphi 0, %s47
    %s65 = sphi 0, %s65
    %s67 = sphi 0, %s65
    %s68 = sphi 0, %s67
    %s82 = sphi 0, %s68
    %s86 = sphi 0, %s86
    %s88 = sphi 0, %s86
    %s89 = sphi 0, %s88
    %s103 = sphi 0, %s89
    %s109 = sphi 0, %s111
    %s112 = sphi 0, %s109
    %s113 = sphi 0, %s112
    %s129 = sphi 0, %s113
  $region4: #{residual_group_forward.1} parent=0 // loop_header_branch
    %13 = sbr.rel (%p11) target = $region8
  $region5: #{residual_group_forward.1} parent=0 // loop_body
    %s15 = ssub.s32 %s10, 1
    %s16 = ssub.s32 %s10, 2
    %s17 = sadd.s32 %s10, 1
    %s18 = ssub.s32 %s10, %s17
    %p19 = scmp.eq.s32.totalorder %s18, 0
    %s21 = sadd.s32 %s20, 1
    %s22 = scalar_select %p19, %s20, %s21
    %p25 = pneg %p19
    %p26 = scmp.eq.s32.totalorder %s10, 1
    %p27 = por %p25, %p26
    %p28 = scmp.ne.s32.totalorder %s20, %s23
    %p29 = scmp.eq.s32.totalorder %s10, 0
    %p30 = por %p28, %p29
    %p31 = scmp.ne.s32.totalorder %s20, %s23
    %p32 = scmp.eq.s32.totalorder %s15, 1
    %p33 = por %p31, %p32
    %p34 = scmp.ne.s32.totalorder %s23, %s24
    %p35 = scmp.eq.s32.totalorder %s15, 0
    %p36 = por %p34, %p35
    %p37 = scmp.ne.s32.totalorder %s23, %s24
    %p38 = scmp.eq.s32.totalorder %s16, 1
    %p39 = por %p37, %p38
    %p41 = scmp.ne.s32.totalorder %s24, %s40
    %p42 = scmp.eq.s32.totalorder %s16, 0
    %p43 = por %p41, %p42
    %s45 = sadd.s32 %s44, 1
    %p48 = scmp.eq.s32.totalorder %s10, 1
    %p49 = scmp.ne.s32.totalorder %s44, %s46
    %p50 = scmp.eq.s32.totalorder %s10, 0
    %p51 = por %p49, %p50
    %p52 = scmp.ne.s32.totalorder %s44, %s46
    %p53 = scmp.eq.s32.totalorder %s15, 1
    %p54 = por %p52, %p53
    %p55 = scmp.ne.s32.totalorder %s46, %s47
    %p56 = scmp.eq.s32.totalorder %s15, 0
    %p57 = por %p55, %p56
    %p58 = scmp.ne.s32.totalorder %s46, %s47
    %p59 = scmp.eq.s32.totalorder %s16, 1
    %p60 = por %p58, %p59
    %p62 = scmp.ne.s32.totalorder %s47, %s61
    %p63 = scmp.eq.s32.totalorder %s16, 0
    %p64 = por %p62, %p63
    %s66 = sadd.s32 %s65, 1
    %p69 = scmp.eq.s32.totalorder %s10, 1
    %p70 = scmp.ne.s32.totalorder %s65, %s67
    %p71 = scmp.eq.s32.totalorder %s10, 0
    %p72 = por %p70, %p71
    %p73 = scmp.ne.s32.totalorder %s65, %s67
    %p74 = scmp.eq.s32.totalorder %s15, 1
    %p75 = por %p73, %p74
    %p76 = scmp.ne.s32.totalorder %s67, %s68
    %p77 = scmp.eq.s32.totalorder %s15, 0
    %p78 = por %p76, %p77
    %p79 = scmp.ne.s32.totalorder %s67, %s68
    %p80 = scmp.eq.s32.totalorder %s16, 1
    %p81 = por %p79, %p80
    %p83 = scmp.ne.s32.totalorder %s68, %s82
    %p84 = scmp.eq.s32.totalorder %s16, 0
    %p85 = por %p83, %p84
    %s87 = sadd.s32 %s86, 1
    %p90 = scmp.eq.s32.totalorder %s10, 1
    %p91 = scmp.ne.s32.totalorder %s86, %s88
    %p92 = scmp.eq.s32.totalorder %s10, 0
    %p93 = por %p91, %p92
    %p94 = scmp.ne.s32.totalorder %s86, %s88
    %p95 = scmp.eq.s32.totalorder %s15, 1
    %p96 = por %p94, %p95
    %p97 = scmp.ne.s32.totalorder %s88, %s89
    %p98 = scmp.eq.s32.totalorder %s15, 0
    %p99 = por %p97, %p98
    %p100 = scmp.ne.s32.totalorder %s88, %s89
    %p101 = scmp.eq.s32.totalorder %s16, 1
    %p102 = por %p100, %p101
    %p104 = scmp.ne.s32.totalorder %s89, %s103
    %p105 = scmp.eq.s32.totalorder %s16, 0
    %p106 = por %p104, %p105
    %s107 = ssub.s32 %s10, %s17
    %p108 = scmp.eq.s32.totalorder %s107, 0
    %s110 = sadd.s32 %s109, 1
    %s111 = scalar_select %p108, %s109, %s110
    %p114 = pneg %p108
    %p115 = scmp.eq.s32.totalorder %s10, 1
    %p116 = por %p114, %p115
    %p117 = scmp.ne.s32.totalorder %s109, %s112
    %p118 = scmp.eq.s32.totalorder %s10, 0
    %p119 = por %p117, %p118
    %p120 = scmp.ne.s32.totalorder %s109, %s112
    %p121 = scmp.eq.s32.totalorder %s15, 1
    %p122 = por %p120, %p121
    %p123 = scmp.ne.s32.totalorder %s112, %s113
    %p124 = scmp.eq.s32.totalorder %s15, 0
    %p125 = por %p123, %p124
    %p126 = scmp.ne.s32.totalorder %s112, %s113
    %p127 = scmp.eq.s32.totalorder %s16, 1
    %p128 = por %p126, %p127
    %p130 = scmp.ne.s32.totalorder %s113, %s129
    %p131 = scmp.eq.s32.totalorder %s16, 0
    %p132 = por %p130, %p131
    %p133 = scmp.le.s32.totalorder 1, %s10
    %p134 = scmp.lt.s32.totalorder %s10, 3
    %p135 = pnand %p133, %p134
    %p136 = pneg %p135
    // Predicated region
    $region9: #{residual_group_forward.1} parent=5 // pred_check
      _
    $region10: #{residual_group_forward.1} parent=5 // pred_check_branch
      %138 = sbr.rel (%p135) target = $region12
    $region11: #{residual_group_forward.1} parent=5 // pred_region
      %s139 = ssub.s32 %s10, 1
      // Predicated region
      $region13: #{residual_group_forward.1} parent=11 // pred_check
        %p140 = pneg %p57
      $region14: #{residual_group_forward.1} parent=11 // pred_check_branch
        %142 = sbr.rel (%p140) target = $region16
      $region15: #{residual_group_forward.1} parent=11 // pred_region
        _
      $region16: #{residual_group_forward.1} parent=11 // pred_fallthru
        _
      // Predicated region
      $region17: #{residual_group_forward.1} parent=11 // pred_check
        %p143 = pneg %p78
      $region18: #{residual_group_forward.1} parent=11 // pred_check_branch
        %145 = sbr.rel (%p143) target = $region20
      $region19: #{residual_group_forward.1} parent=11 // pred_region
        _
      $region20: #{residual_group_forward.1} parent=11 // pred_fallthru
        _
      // Predicated region
      $region21: #{residual_group_forward.1} parent=11 // pred_check
        %p146 = pneg %p99
      $region22: #{residual_group_forward.1} parent=11 // pred_check_branch
        %148 = sbr.rel (%p146) target = $region24
      $region23: #{residual_group_forward.1} parent=11 // pred_region
        _
      $region24: #{residual_group_forward.1} parent=11 // pred_fallthru
        _
    $region12: #{residual_group_forward.1} parent=5 // pred_fallthru
      _
    %p149 = scmp.lt.s32.totalorder %s10, 2
    // Predicated region
    $region25: #{residual_group_forward.1} parent=5 // pred_check
      %p150 = pneg %p149
    $region26: #{residual_group_forward.1} parent=5 // pred_check_branch
      %152 = sbr.rel (%p150) target = $region28
    $region27: #{residual_group_forward.1} parent=5 // pred_region
      // Predicated region
      $region29: #{residual_group_forward.1} parent=27 // pred_check
        %p153 = pneg %p30
      $region30: #{residual_group_forward.1} parent=27 // pred_check_branch
        %155 = sbr.rel (%p153) target = $region32
      $region31: #{residual_group_forward.1} parent=27 // pred_region
        %p156 = scmp.lt.s32.totalorder %s10, 1
        %s157 = scalar_select %p156, %s10, 1
        %s158 = smul.addr %s157, 8
        %s159 = smul.addr %s158, 8
        %s160 = scalar_lea.vmem %s0, %s159
      $region32: #{residual_group_forward.1} parent=27 // pred_fallthru
        _
    $region28: #{residual_group_forward.1} parent=5 // pred_fallthru
      _
    %p161 = scmp.le.s32.totalorder 1, %s10
    %p162 = scmp.lt.s32.totalorder %s10, 3
    %p163 = pnand %p161, %p162
    %p164 = pneg %p163
    // Predicated region
    $region33: #{residual_group_forward.1} parent=5 // pred_check
      _
    $region34: #{residual_group_forward.1} parent=5 // pred_check_branch
      %166 = sbr.rel (%p163) target = $region36
    $region35: #{residual_group_forward.1} parent=5 // pred_region
      %s167 = ssub.s32 %s10, 1
      %p168 = scmp.lt.s32.totalorder %s15, 1
      %s169 = scalar_select %p168, %s15, 1
      %s170 = smul.addr %s169, 8
      %s171 = smul.addr %s170, 8
      %s172 = scalar_lea.vmem %s0, %s171
      %p173 = pneg %p36
      %p174 = pneg %p33
      %p175 = pneg %p57
      %p176 = pneg %p54
      %p177 = pneg %p78
      %p178 = pneg %p75
      %p179 = pneg %p99
      %p180 = pneg %p96
      %p181 = pneg %p125
      %p182 = pneg %p122
      %p183 = scmp.lt.s32.totalorder %s15, 1
      %s184 = scalar_select %p183, %s15, 1
      %s185 = smul.addr %s184, 6
      %s186 = smul.addr %s185, 8
      %s187 = scalar_lea.vmem %s4, %s186
      %p188 = scmp.lt.s32.totalorder %s15, 1
      %s189 = scalar_select %p188, %s15, 1
      %s190 = smul.addr %s189, 8
      %s191 = smul.addr %s190, 8
      %s192 = scalar_lea.vmem %s0, %s191
      %p193 = scmp.lt.s32.totalorder %s15, 1
      %s194 = scalar_select %p193, %s15, 1
      %s195 = smul.addr %s194, 6
      %s196 = smul.addr %s195, 8
      %s197 = scalar_lea.vmem %s4, %s196
      %v198 = vld [vmem:[%s3] sm:$0x7]
      %v200 = vlaneseq
      %v201 = vshrl.u32 %v200, 7
      %v202 = vsub.s32 0, %v201
      %v203 = vrot.slane %v198, %v202
      %v204 = vlaneseq
      %v205 = vshrl.u32 %v204, 7
      %v206 = vsub.s32 1, %v205
      %v207 = vrot.slane %v198, %v206
      %v208 = vlaneseq
      %v209 = vshrl.u32 %v208, 7
      %v210 = vsub.s32 2, %v209
      %v211 = vrot.slane %v198, %v210
      %v215 = vld [vmem:[%s192] sm:$0xff]
      %v216 = vld [vmem:[%s192 + $0x8] sm:$0xff]
      %v217 = vld [vmem:[%s192 + $0x10] sm:$0xff]
      %v218 = vld [vmem:[%s192 + $0x18] sm:$0xff]
      %v219 = vld [vmem:[%s192 + $0x20] sm:$0xff]
      %v220 = vld [vmem:[%s192 + $0x28] sm:$0xff]
      %v221 = vld [vmem:[%s192 + $0x30] sm:$0xff]
      %v222 = vld [vmem:[%s192 + $0x38] sm:$0xff]
      %223 = vst [vmem:[#allocation2] sm:$0xff] %v215
      %224 = vst [vmem:[#allocation2 + $0x8] sm:$0xff] %v216
      %225 = vst [vmem:[#allocation2 + $0x10] sm:$0xff] %v217
      %226 = vst [vmem:[#allocation2 + $0x18] sm:$0xff] %v218
      %227 = vst [vmem:[#allocation2 + $0x20] sm:$0xff] %v219
      %228 = vst [vmem:[#allocation2 + $0x28] sm:$0xff] %v220
      %229 = vst [vmem:[#allocation2 + $0x30] sm:$0xff] %v221
      %230 = vst [vmem:[#allocation2 + $0x38] sm:$0xff] %v222
      %231 = vst [vmem:[#allocation3] sm:$0xff] 0.0
      %232 = vst [vmem:[#allocation3 + $0x20] sm:$0xff] 0.0
      %vm233 = vcmask 1047808
      %234 = vst.msk [vmem:[#allocation3 + $0x18] sm:$0xff] %vm233, 0.0
      %235 = vst.msk [vmem:[#allocation3 + $0x38] sm:$0xff] %vm233, 0.0
      %v236 = vld [vmem:[%s1] sm:$0xff]
      %v237 = vld [vmem:[%s1 + $0x8] sm:$0xff]
      %v238 = vld [vmem:[#allocation2] sm:$0xff]
      %v239 = vld [vmem:[#allocation2 + $0x8] sm:$0xff]
      %v240 = vld [vmem:[#allocation2 + $0x10] sm:$0xff]
      %v241 = vld [vmem:[#allocation2 + $0x18] sm:$0xff]
      %v242 = vld [vmem:[#allocation2 + $0x20] sm:$0xff]
      %v243 = vld [vmem:[#allocation2 + $0x28] sm:$0xff]
      %v244 = vld [vmem:[#allocation2 + $0x30] sm:$0xff]
      %v245 = vld [vmem:[#allocation2 + $0x38] sm:$0xff]
      %s246 = scalar_lea.vmem %s1, 16
      %v247 = vld [vmem:[%s246] sm:$0xff]
      %v248 = vld [vmem:[%s246 + $0x8] sm:$0xff]
      %257 = vrot.lane.b32.xlu0 %v238, 18
      %v258 = vpop.permute.xlu0 %257
      %259 = vrot.lane.b32.xlu0 %v239, 18
      %v260 = vpop.permute.xlu0 %259
      %261 = vrot.lane.b32.xlu0 %v240, 18
      %v262 = vpop.permute.xlu0 %261
      %263 = vrot.lane.b32.xlu0 %v241, 18
      %v264 = vpop.permute.xlu0 %263
      %265 = vrot.lane.b32.xlu0 %v242, 18
      %v266 = vpop.permute.xlu0 %265
      %267 = vrot.lane.b32.xlu0 %v243, 18
      %v268 = vpop.permute.xlu0 %267
      %269 = vrot.lane.b32.xlu0 %v244, 18
      %v270 = vpop.permute.xlu0 %269
      %271 = vrot.lane.b32.xlu0 %v245, 18
      %v272 = vpop.permute.xlu0 %271
      %vm273 = vcmask 146432
      %v274 = vsel %vm273, %v258, %v260
      %v275 = vsel %vm273, %v260, %v262
      %v276 = vsel %vm273, %v262, %v264
      %v277 = vsel %vm273, %v266, %v268
      %v278 = vsel %vm273, %v268, %v270
      %v279 = vsel %vm273, %v270, %v272
      %vm286 = vcmask 130048
      %v288 = vsel %vm286, %v247, 0
      %v291 = vsel %vm286, %v248, 0
      %293 = vmatprep.subr.mxu0 0.0
      %294 = vmatpush1.msra.mxu0 0.0
      %295 = vmatprep.subr.mxu0 0.0
      %296 = vmatpush1.msra.mxu0 0.0
      %297 = vmatprep.subr.mxu0 0.0
      %298 = vmatpush1.msra.mxu0 0.0
      %299 = vmatprep.subr.mxu0 0.0
      %300 = vmatpush1.msra.mxu0 0.0
      %301 = vmatprep.subr.mxu0 0.0
      %302 = vmatpush1.msra.mxu0 0.0
      %303 = vmatprep.subr.mxu0 0.0
      %304 = vmatpush1.msra.mxu0 0.0
      %305 = vmatprep.subr.mxu0 0.0
      %306 = vmatpush1.msra.mxu0 0.0
      %307 = vmatprep.subr.mxu0 0.0
      %308 = vmatpush1.msra.mxu0 0.0
      %309 = vmatprep.subr.mxu0 0.0
      %310 = vmatpush1.msra.mxu0 0.0
      %311 = vmatprep.subr.mxu0 0.0
      %312 = vmatpush1.msra.mxu0 0.0
      %313 = vmatprep.subr.mxu0 0.0
      %314 = vmatpush1.msra.mxu0 0.0
      %315 = vmatprep.subr.mxu0 0.0
      %316 = vmatpush1.msra.mxu0 0.0
      %317 = vmatprep.subr.mxu0 0.0
      %318 = vmatpush1.msra.mxu0 0.0
      %319 = vmatprep.subr.mxu0 0.0
      %320 = vmatpush1.msra.mxu0 0.0
      %321 = vmatprep.subr.mxu0 %v278
      %322 = vmatpush1.msra.mxu0 %v277
      %323 = vmatprep.subr.mxu0 %v275
      %324 = vmatpush1.msra.mxu0 %v274
      %325 = vmatprep.subr.mxu0 0.0
      %326 = vmatpush2.msra.mxu0 0.0
      %327 = vmatprep.subr.mxu0 0.0
      %328 = vmatpush2.msra.mxu0 0.0
      %329 = vmatprep.subr.mxu0 0.0
      %330 = vmatpush2.msra.mxu0 0.0
      %331 = vmatprep.subr.mxu0 0.0
      %332 = vmatpush2.msra.mxu0 0.0
      %333 = vmatprep.subr.mxu0 0.0
      %334 = vmatpush2.msra.mxu0 0.0
      %335 = vmatprep.subr.mxu0 0.0
      %336 = vmatpush2.msra.mxu0 0.0
      %337 = vmatprep.subr.mxu0 0.0
      %338 = vmatpush2.msra.mxu0 0.0
      %339 = vmatprep.subr.mxu0 0.0
      %340 = vmatpush2.msra.mxu0 0.0
      %341 = vmatprep.subr.mxu0 0.0
      %342 = vmatpush2.msra.mxu0 0.0
      %343 = vmatprep.subr.mxu0 0.0
      %344 = vmatpush2.msra.mxu0 0.0
      %345 = vmatprep.subr.mxu0 0.0
      %346 = vmatpush2.msra.mxu0 0.0
      %347 = vmatprep.subr.mxu0 0.0
      %348 = vmatpush2.msra.mxu0 0.0
      %349 = vmatprep.subr.mxu0 0.0
      %350 = vmatpush2.msra.mxu0 0.0
      %351 = vmatprep.subr.mxu0 0.0
      %352 = vmatpush2.msra.mxu0 0.0
      %353 = vmatprep.subr.mxu0 0.0
      %354 = vmatpush2.msra.mxu0 0.0
      %355 = vmatprep.subr.mxu0 0.0
      %356 = vmatpush2.msra.mxu0 0.0
      %357 = vmatprep.mubr.f32.mxu0 0.0
      %358 = vmatmul.mubr.f32.gmra.mxu0 %v288
      %v359 = vpop.f32.mrf.mxu0
      %v360 = vadd.f32 0.0, %v359
      %v361 = vpop.f32.mrf.mxu0
      %v362 = vadd.f32 0.0, %v361
      %363 = vmatprep.mubr.f32.mxu0 0.0
      %364 = vmatmul.mubr.f32.gmra.mxu0 %v291
      %v365 = vpop.f32.mrf.mxu0
      %v366 = vadd.f32 0.0, %v365
      %v367 = vpop.f32.mrf.mxu0
      %v368 = vadd.f32 0.0, %v367
      %369 = vdwg.mxu0
      %370 = vmatprep.subr.mxu0 0.0
      %371 = vmatpush1.msra.mxu0 0.0
      %372 = vmatprep.subr.mxu0 0.0
      %373 = vmatpush1.msra.mxu0 0.0
      %374 = vmatprep.subr.mxu0 0.0
      %375 = vmatpush1.msra.mxu0 0.0
      %376 = vmatprep.subr.mxu0 0.0
      %377 = vmatpush1.msra.mxu0 0.0
      %378 = vmatprep.subr.mxu0 0.0
      %379 = vmatpush1.msra.mxu0 0.0
      %380 = vmatprep.subr.mxu0 0.0
      %381 = vmatpush1.msra.mxu0 0.0
      %382 = vmatprep.subr.mxu0 0.0
      %383 = vmatpush1.msra.mxu0 0.0
      %384 = vmatprep.subr.mxu0 0.0
      %385 = vmatpush1.msra.mxu0 0.0
      %386 = vmatprep.subr.mxu0 0.0
      %387 = vmatpush1.msra.mxu0 0.0
      %388 = vmatprep.subr.mxu0 0.0
      %389 = vmatpush1.msra.mxu0 0.0
      %390 = vmatprep.subr.mxu0 0.0
      %391 = vmatpush1.msra.mxu0 0.0
      %392 = vmatprep.subr.mxu0 0.0
      %393 = vmatpush1.msra.mxu0 0.0
      %394 = vmatprep.subr.mxu0 0.0
      %395 = vmatpush1.msra.mxu0 0.0
      %396 = vmatprep.subr.mxu0 0.0
      %397 = vmatpush1.msra.mxu0 0.0
      %398 = vmatprep.subr.mxu0 0.0
      %399 = vmatpush1.msra.mxu0 %v279
      %400 = vmatprep.subr.mxu0 0.0
      %401 = vmatpush1.msra.mxu0 %v276
      %402 = vmatprep.subr.mxu0 0.0
      %403 = vmatpush2.msra.mxu0 0.0
      %404 = vmatprep.subr.mxu0 0.0
      %405 = vmatpush2.msra.mxu0 0.0
      %406 = vmatprep.subr.mxu0 0.0
      %407 = vmatpush2.msra.mxu0 0.0
      %408 = vmatprep.subr.mxu0 0.0
      %409 = vmatpush2.msra.mxu0 0.0
      %410 = vmatprep.subr.mxu0 0.0
      %411 = vmatpush2.msra.mxu0 0.0
      %412 = vmatprep.subr.mxu0 0.0
      %413 = vmatpush2.msra.mxu0 0.0
      %414 = vmatprep.subr.mxu0 0.0
      %415 = vmatpush2.msra.mxu0 0.0
      %416 = vmatprep.subr.mxu0 0.0
      %417 = vmatpush2.msra.mxu0 0.0
      %418 = vmatprep.subr.mxu0 0.0
      %419 = vmatpush2.msra.mxu0 0.0
      %420 = vmatprep.subr.mxu0 0.0
      %421 = vmatpush2.msra.mxu0 0.0
      %422 = vmatprep.subr.mxu0 0.0
      %423 = vmatpush2.msra.mxu0 0.0
      %424 = vmatprep.subr.mxu0 0.0
      %425 = vmatpush2.msra.mxu0 0.0
      %426 = vmatprep.subr.mxu0 0.0
      %427 = vmatpush2.msra.mxu0 0.0
      %428 = vmatprep.subr.mxu0 0.0
      %429 = vmatpush2.msra.mxu0 0.0
      %430 = vmatprep.subr.mxu0 0.0
      %431 = vmatpush2.msra.mxu0 0.0
      %432 = vmatprep.subr.mxu0 0.0
      %433 = vmatpush2.msra.mxu0 0.0
      %434 = vmatprep.mubr.f32.mxu0 0.0
      %435 = vmatmul.mubr.f32.gmra.mxu0 %v288
      %v436 = vpop.f32.mrf.mxu0
      %v437 = vadd.f32 0.0, %v436
      %v438 = vpop.f32.mrf.mxu0
      %439 = vmatprep.mubr.f32.mxu0 0.0
      %440 = vmatmul.mubr.f32.gmra.mxu0 %v291
      %v441 = vpop.f32.mrf.mxu0
      %v442 = vadd.f32 0.0, %v441
      %v443 = vpop.f32.mrf.mxu0
      %444 = vdwg.mxu0
      %445 = vrot.lane.b32.xlu0 %v238, 19
      %v446 = vpop.permute.xlu0 %445
      %447 = vrot.lane.b32.xlu0 %v239, 19
      %v448 = vpop.permute.xlu0 %447
      %449 = vrot.lane.b32.xlu0 %v240, 19
      %v450 = vpop.permute.xlu0 %449
      %451 = vrot.lane.b32.xlu0 %v241, 19
      %v452 = vpop.permute.xlu0 %451
      %453 = vrot.lane.b32.xlu0 %v242, 19
      %v454 = vpop.permute.xlu0 %453
      %455 = vrot.lane.b32.xlu0 %v243, 19
      %v456 = vpop.permute.xlu0 %455
      %457 = vrot.lane.b32.xlu0 %v244, 19
      %v458 = vpop.permute.xlu0 %457
      %459 = vrot.lane.b32.xlu0 %v245, 19
      %v460 = vpop.permute.xlu0 %459
      %vm461 = vcmask 154624
      %v462 = vsel %vm461, %v446, %v448
      %v463 = vsel %vm461, %v448, %v450
      %v464 = vsel %vm461, %v450, %v452
      %v465 = vsel %vm461, %v454, %v456
      %v466 = vsel %vm461, %v456, %v458
      %v467 = vsel %vm461, %v458, %v460
      %v475 = vsel %vm286, %v236, 0
      %v478 = vsel %vm286, %v237, 0
      %480 = vmatprep.subr.mxu0 0.0
      %481 = vmatpush1.msra.mxu0 0.0
      %482 = vmatprep.subr.mxu0 0.0
      %483 = vmatpush1.msra.mxu0 0.0
      %484 = vmatprep.subr.mxu0 0.0
      %485 = vmatpush1.msra.mxu0 0.0
      %486 = vmatprep.subr.mxu0 0.0
      %487 = vmatpush1.msra.mxu0 0.0
      %488 = vmatprep.subr.mxu0 0.0
      %489 = vmatpush1.msra.mxu0 0.0
      %490 = vmatprep.subr.mxu0 0.0
      %491 = vmatpush1.msra.mxu0 0.0
      %492 = vmatprep.subr.mxu0 0.0
      %493 = vmatpush1.msra.mxu0 0.0
      %494 = vmatprep.subr.mxu0 0.0
      %495 = vmatpush1.msra.mxu0 0.0
      %496 = vmatprep.subr.mxu0 0.0
      %497 = vmatpush1.msra.mxu0 0.0
      %498 = vmatprep.subr.mxu0 0.0
      %499 = vmatpush1.msra.mxu0 0.0
      %500 = vmatprep.subr.mxu0 0.0
      %501 = vmatpush1.msra.mxu0 0.0
      %502 = vmatprep.subr.mxu0 0.0
      %503 = vmatpush1.msra.mxu0 0.0
      %504 = vmatprep.subr.mxu0 0.0
      %505 = vmatpush1.msra.mxu0 0.0
      %506 = vmatprep.subr.mxu0 0.0
      %507 = vmatpush1.msra.mxu0 0.0
      %508 = vmatprep.subr.mxu0 %v466
      %509 = vmatpush1.msra.mxu0 %v465
      %510 = vmatprep.subr.mxu0 %v463
      %511 = vmatpush1.msra.mxu0 %v462
      %512 = vmatprep.subr.mxu0 0.0
      %513 = vmatpush2.msra.mxu0 0.0
      %514 = vmatprep.subr.mxu0 0.0
      %515 = vmatpush2.msra.mxu0 0.0
      %516 = vmatprep.subr.mxu0 0.0
      %517 = vmatpush2.msra.mxu0 0.0
      %518 = vmatprep.subr.mxu0 0.0
      %519 = vmatpush2.msra.mxu0 0.0
      %520 = vmatprep.subr.mxu0 0.0
      %521 = vmatpush2.msra.mxu0 0.0
      %522 = vmatprep.subr.mxu0 0.0
      %523 = vmatpush2.msra.mxu0 0.0
      %524 = vmatprep.subr.mxu0 0.0
      %525 = vmatpush2.msra.mxu0 0.0
      %526 = vmatprep.subr.mxu0 0.0
      %527 = vmatpush2.msra.mxu0 0.0
      %528 = vmatprep.subr.mxu0 0.0
      %529 = vmatpush2.msra.mxu0 0.0
      %530 = vmatprep.subr.mxu0 0.0
      %531 = vmatpush2.msra.mxu0 0.0
      %532 = vmatprep.subr.mxu0 0.0
      %533 = vmatpush2.msra.mxu0 0.0
      %534 = vmatprep.subr.mxu0 0.0
      %535 = vmatpush2.msra.mxu0 0.0
      %536 = vmatprep.subr.mxu0 0.0
      %537 = vmatpush2.msra.mxu0 0.0
      %538 = vmatprep.subr.mxu0 0.0
      %539 = vmatpush2.msra.mxu0 0.0
      %540 = vmatprep.subr.mxu0 0.0
      %541 = vmatpush2.msra.mxu0 0.0
      %542 = vmatprep.subr.mxu0 0.0
      %543 = vmatpush2.msra.mxu0 0.0
      %544 = vmatprep.mubr.f32.mxu0 0.0
      %545 = vmatmul.mubr.f32.gmra.mxu0 %v475
      %v546 = vpop.f32.mrf.mxu0
      %v547 = vadd.f32 %v360, %v546
      %v548 = vpop.f32.mrf.mxu0
      %v549 = vadd.f32 %v362, %v548
      %550 = vmatprep.mubr.f32.mxu0 0.0
      %551 = vmatmul.mubr.f32.gmra.mxu0 %v478
      %v552 = vpop.f32.mrf.mxu0
      %v553 = vadd.f32 %v366, %v552
      %v554 = vpop.f32.mrf.mxu0
      %v555 = vadd.f32 %v368, %v554
      %556 = vdwg.mxu0
      %557 = vmatprep.subr.mxu0 0.0
      %558 = vmatpush1.msra.mxu0 0.0
      %559 = vmatprep.subr.mxu0 0.0
      %560 = vmatpush1.msra.mxu0 0.0
      %561 = vmatprep.subr.mxu0 0.0
      %562 = vmatpush1.msra.mxu0 0.0
      %563 = vmatprep.subr.mxu0 0.0
      %564 = vmatpush1.msra.mxu0 0.0
      %565 = vmatprep.subr.mxu0 0.0
      %566 = vmatpush1.msra.mxu0 0.0
      %567 = vmatprep.subr.mxu0 0.0
      %568 = vmatpush1.msra.mxu0 0.0
      %569 = vmatprep.subr.mxu0 0.0
      %570 = vmatpush1.msra.mxu0 0.0
      %571 = vmatprep.subr.mxu0 0.0
      %572 = vmatpush1.msra.mxu0 0.0
      %573 = vmatprep.subr.mxu0 0.0
      %574 = vmatpush1.msra.mxu0 0.0
      %575 = vmatprep.subr.mxu0 0.0
      %576 = vmatpush1.msra.mxu0 0.0
      %577 = vmatprep.subr.mxu0 0.0
      %578 = vmatpush1.msra.mxu0 0.0
      %579 = vmatprep.subr.mxu0 0.0
      %580 = vmatpush1.msra.mxu0 0.0
      %581 = vmatprep.subr.mxu0 0.0
      %582 = vmatpush1.msra.mxu0 0.0
      %583 = vmatprep.subr.mxu0 0.0
      %584 = vmatpush1.msra.mxu0 0.0
      %585 = vmatprep.subr.mxu0 0.0
      %586 = vmatpush1.msra.mxu0 %v467
      %587 = vmatprep.subr.mxu0 0.0
      %588 = vmatpush1.msra.mxu0 %v464
      %589 = vmatprep.subr.mxu0 0.0
      %590 = vmatpush2.msra.mxu0 0.0
      %591 = vmatprep.subr.mxu0 0.0
      %592 = vmatpush2.msra.mxu0 0.0
      %593 = vmatprep.subr.mxu0 0.0
      %594 = vmatpush2.msra.mxu0 0.0
      %595 = vmatprep.subr.mxu0 0.0
      %596 = vmatpush2.msra.mxu0 0.0
      %597 = vmatprep.subr.mxu0 0.0
      %598 = vmatpush2.msra.mxu0 0.0
      %599 = vmatprep.subr.mxu0 0.0
      %600 = vmatpush2.msra.mxu0 0.0
      %601 = vmatprep.subr.mxu0 0.0
      %602 = vmatpush2.msra.mxu0 0.0
      %603 = vmatprep.subr.mxu0 0.0
      %604 = vmatpush2.msra.mxu0 0.0
      %605 = vmatprep.subr.mxu0 0.0
      %606 = vmatpush2.msra.mxu0 0.0
      %607 = vmatprep.subr.mxu0 0.0
      %608 = vmatpush2.msra.mxu0 0.0
      %609 = vmatprep.subr.mxu0 0.0
      %610 = vmatpush2.msra.mxu0 0.0
      %611 = vmatprep.subr.mxu0 0.0
      %612 = vmatpush2.msra.mxu0 0.0
      %613 = vmatprep.subr.mxu0 0.0
      %614 = vmatpush2.msra.mxu0 0.0
      %615 = vmatprep.subr.mxu0 0.0
      %616 = vmatpush2.msra.mxu0 0.0
      %617 = vmatprep.subr.mxu0 0.0
      %618 = vmatpush2.msra.mxu0 0.0
      %619 = vmatprep.subr.mxu0 0.0
      %620 = vmatpush2.msra.mxu0 0.0
      %621 = vmatprep.mubr.f32.mxu0 0.0
      %622 = vmatmul.mubr.f32.gmra.mxu0 %v475
      %v623 = vpop.f32.mrf.mxu0
      %v624 = vadd.f32 %v437, %v623
      %v625 = vpop.f32.mrf.mxu0
      %626 = vmatprep.mubr.f32.mxu0 0.0
      %627 = vmatmul.mubr.f32.gmra.mxu0 %v478
      %v628 = vpop.f32.mrf.mxu0
      %v629 = vadd.f32 %v442, %v628
      %v630 = vpop.f32.mrf.mxu0
      %631 = vdwg.mxu0
      %s632 = scalar_lea.vmem %s1, 32
      %v633 = vld [vmem:[%s632] sm:$0xff]
      %v634 = vld [vmem:[%s632 + $0x8] sm:$0xff]
      %635 = vrot.lane.b32.xlu0 %v238, 17
      %v636 = vpop.permute.xlu0 %635
      %637 = vrot.lane.b32.xlu0 %v239, 17
      %v638 = vpop.permute.xlu0 %637
      %639 = vrot.lane.b32.xlu0 %v240, 17
      %v640 = vpop.permute.xlu0 %639
      %641 = vrot.lane.b32.xlu0 %v241, 17
      %v642 = vpop.permute.xlu0 %641
      %643 = vrot.lane.b32.xlu0 %v242, 17
      %v644 = vpop.permute.xlu0 %643
      %645 = vrot.lane.b32.xlu0 %v243, 17
      %v646 = vpop.permute.xlu0 %645
      %647 = vrot.lane.b32.xlu0 %v244, 17
      %v648 = vpop.permute.xlu0 %647
      %649 = vrot.lane.b32.xlu0 %v245, 17
      %v650 = vpop.permute.xlu0 %649
      %vm651 = vcmask 138240
      %v652 = vsel %vm651, %v636, %v638
      %v653 = vsel %vm651, %v638, %v640
      %v654 = vsel %vm651, %v640, %v642
      %v655 = vsel %vm651, %v644, %v646
      %v656 = vsel %vm651, %v646, %v648
      %v657 = vsel %vm651, %v648, %v650
      %v665 = vsel %vm286, %v633, 0
      %v668 = vsel %vm286, %v634, 0
      %670 = vmatprep.subr.mxu0 0.0
      %671 = vmatpush1.msra.mxu0 0.0
      %672 = vmatprep.subr.mxu0 0.0
      %673 = vmatpush1.msra.mxu0 0.0
      %674 = vmatprep.subr.mxu0 0.0
      %675 = vmatpush1.msra.mxu0 0.0
      %676 = vmatprep.subr.mxu0 0.0
      %677 = vmatpush1.msra.mxu0 0.0
      %678 = vmatprep.subr.mxu0 0.0
      %679 = vmatpush1.msra.mxu0 0.0
      %680 = vmatprep.subr.mxu0 0.0
      %681 = vmatpush1.msra.mxu0 0.0
      %682 = vmatprep.subr.mxu0 0.0
      %683 = vmatpush1.msra.mxu0 0.0
      %684 = vmatprep.subr.mxu0 0.0
      %685 = vmatpush1.msra.mxu0 0.0
      %686 = vmatprep.subr.mxu0 0.0
      %687 = vmatpush1.msra.mxu0 0.0
      %688 = vmatprep.subr.mxu0 0.0
      %689 = vmatpush1.msra.mxu0 0.0
      %690 = vmatprep.subr.mxu0 0.0
      %691 = vmatpush1.msra.mxu0 0.0
      %692 = vmatprep.subr.mxu0 0.0
      %693 = vmatpush1.msra.mxu0 0.0
      %694 = vmatprep.subr.mxu0 0.0
      %695 = vmatpush1.msra.mxu0 0.0
      %696 = vmatprep.subr.mxu0 0.0
      %697 = vmatpush1.msra.mxu0 0.0
      %698 = vmatprep.subr.mxu0 %v656
      %699 = vmatpush1.msra.mxu0 %v655
      %700 = vmatprep.subr.mxu0 %v653
      %701 = vmatpush1.msra.mxu0 %v652
      %702 = vmatprep.subr.mxu0 0.0
      %703 = vmatpush2.msra.mxu0 0.0
      %704 = vmatprep.subr.mxu0 0.0
      %705 = vmatpush2.msra.mxu0 0.0
      %706 = vmatprep.subr.mxu0 0.0
      %707 = vmatpush2.msra.mxu0 0.0
      %708 = vmatprep.subr.mxu0 0.0
      %709 = vmatpush2.msra.mxu0 0.0
      %710 = vmatprep.subr.mxu0 0.0
      %711 = vmatpush2.msra.mxu0 0.0
      %712 = vmatprep.subr.mxu0 0.0
      %713 = vmatpush2.msra.mxu0 0.0
      %714 = vmatprep.subr.mxu0 0.0
      %715 = vmatpush2.msra.mxu0 0.0
      %716 = vmatprep.subr.mxu0 0.0
      %717 = vmatpush2.msra.mxu0 0.0
      %718 = vmatprep.subr.mxu0 0.0
      %719 = vmatpush2.msra.mxu0 0.0
      %720 = vmatprep.subr.mxu0 0.0
      %721 = vmatpush2.msra.mxu0 0.0
      %722 = vmatprep.subr.mxu0 0.0
      %723 = vmatpush2.msra.mxu0 0.0
      %724 = vmatprep.subr.mxu0 0.0
      %725 = vmatpush2.msra.mxu0 0.0
      %726 = vmatprep.subr.mxu0 0.0
      %727 = vmatpush2.msra.mxu0 0.0
      %728 = vmatprep.subr.mxu0 0.0
      %729 = vmatpush2.msra.mxu0 0.0
      %730 = vmatprep.subr.mxu0 0.0
      %731 = vmatpush2.msra.mxu0 0.0
      %732 = vmatprep.subr.mxu0 0.0
      %733 = vmatpush2.msra.mxu0 0.0
      %734 = vmatprep.mubr.f32.mxu0 0.0
      %735 = vmatmul.mubr.f32.gmra.mxu0 %v665
      %v736 = vpop.f32.mrf.mxu0
      %v737 = vadd.f32 0.0, %v736
      %v738 = vpop.f32.mrf.mxu0
      %v739 = vadd.f32 0.0, %v738
      %740 = vmatprep.mubr.f32.mxu0 0.0
      %741 = vmatmul.mubr.f32.gmra.mxu0 %v668
      %v742 = vpop.f32.mrf.mxu0
      %v743 = vadd.f32 0.0, %v742
      %v744 = vpop.f32.mrf.mxu0
      %v745 = vadd.f32 0.0, %v744
      %746 = vdwg.mxu0
      %747 = vmatprep.subr.mxu0 0.0
      %748 = vmatpush1.msra.mxu0 0.0
      %749 = vmatprep.subr.mxu0 0.0
      %750 = vmatpush1.msra.mxu0 0.0
      %751 = vmatprep.subr.mxu0 0.0
      %752 = vmatpush1.msra.mxu0 0.0
      %753 = vmatprep.subr.mxu0 0.0
      %754 = vmatpush1.msra.mxu0 0.0
      %755 = vmatprep.subr.mxu0 0.0
      %756 = vmatpush1.msra.mxu0 0.0
      %757 = vmatprep.subr.mxu0 0.0
      %758 = vmatpush1.msra.mxu0 0.0
      %759 = vmatprep.subr.mxu0 0.0
      %760 = vmatpush1.msra.mxu0 0.0
      %761 = vmatprep.subr.mxu0 0.0
      %762 = vmatpush1.msra.mxu0 0.0
      %763 = vmatprep.subr.mxu0 0.0
      %764 = vmatpush1.msra.mxu0 0.0
      %765 = vmatprep.subr.mxu0 0.0
      %766 = vmatpush1.msra.mxu0 0.0
      %767 = vmatprep.subr.mxu0 0.0
      %768 = vmatpush1.msra.mxu0 0.0
      %769 = vmatprep.subr.mxu0 0.0
      %770 = vmatpush1.msra.mxu0 0.0
      %771 = vmatprep.subr.mxu0 0.0
      %772 = vmatpush1.msra.mxu0 0.0
      %773 = vmatprep.subr.mxu0 0.0
      %774 = vmatpush1.msra.mxu0 0.0
      %775 = vmatprep.subr.mxu0 0.0
      %776 = vmatpush1.msra.mxu0 %v657
      %777 = vmatprep.subr.mxu0 0.0
      %778 = vmatpush1.msra.mxu0 %v654
      %779 = vmatprep.subr.mxu0 0.0
      %780 = vmatpush2.msra.mxu0 0.0
      %781 = vmatprep.subr.mxu0 0.0
      %782 = vmatpush2.msra.mxu0 0.0
      %783 = vmatprep.subr.mxu0 0.0
      %784 = vmatpush2.msra.mxu0 0.0
      %785 = vmatprep.subr.mxu0 0.0
      %786 = vmatpush2.msra.mxu0 0.0
      %787 = vmatprep.subr.mxu0 0.0
      %788 = vmatpush2.msra.mxu0 0.0
      %789 = vmatprep.subr.mxu0 0.0
      %790 = vmatpush2.msra.mxu0 0.0
      %791 = vmatprep.subr.mxu0 0.0
      %792 = vmatpush2.msra.mxu0 0.0
      %793 = vmatprep.subr.mxu0 0.0
      %794 = vmatpush2.msra.mxu0 0.0
      %795 = vmatprep.subr.mxu0 0.0
      %796 = vmatpush2.msra.mxu0 0.0
      %797 = vmatprep.subr.mxu0 0.0
      %798 = vmatpush2.msra.mxu0 0.0
      %799 = vmatprep.subr.mxu0 0.0
      %800 = vmatpush2.msra.mxu0 0.0
      %801 = vmatprep.subr.mxu0 0.0
      %802 = vmatpush2.msra.mxu0 0.0
      %803 = vmatprep.subr.mxu0 0.0
      %804 = vmatpush2.msra.mxu0 0.0
      %805 = vmatprep.subr.mxu0 0.0
      %806 = vmatpush2.msra.mxu0 0.0
      %807 = vmatprep.subr.mxu0 0.0
      %808 = vmatpush2.msra.mxu0 0.0
      %809 = vmatprep.subr.mxu0 0.0
      %810 = vmatpush2.msra.mxu0 0.0
      %811 = vmatprep.mubr.f32.mxu0 0.0
      %812 = vmatmul.mubr.f32.gmra.mxu0 %v665
      %v813 = vpop.f32.mrf.mxu0
      %v814 = vadd.f32 0.0, %v813
      %v815 = vpop.f32.mrf.mxu0
      %816 = vmatprep.mubr.f32.mxu0 0.0
      %817 = vmatmul.mubr.f32.gmra.mxu0 %v668
      %v818 = vpop.f32.mrf.mxu0
      %v819 = vadd.f32 0.0, %v818
      %v820 = vpop.f32.mrf.mxu0
      %821 = vdwg.mxu0
      %v822 = vadd.f32 %v547, %v737
      %v823 = vadd.f32 %v549, %v739
      %v824 = vadd.f32 %v624, %v814
      %v825 = vadd.f32 %v553, %v743
      %v826 = vadd.f32 %v555, %v745
      %v827 = vadd.f32 %v629, %v819
      %s828 = scalar_lea.vmem %s1, 48
      %v829 = vld [vmem:[%s828] sm:$0xff]
      %v830 = vld [vmem:[%s828 + $0x8] sm:$0xff]
      %831 = vrot.lane.b32.xlu0 %v238, 1
      %v832 = vpop.permute.xlu0 %831
      %833 = vrot.lane.b32.xlu0 %v239, 1
      %v834 = vpop.permute.xlu0 %833
      %835 = vrot.lane.b32.xlu0 %v240, 1
      %v836 = vpop.permute.xlu0 %835
      %837 = vrot.lane.b32.xlu0 %v241, 1
      %v838 = vpop.permute.xlu0 %837
      %839 = vrot.lane.b32.xlu0 %v242, 1
      %v840 = vpop.permute.xlu0 %839
      %841 = vrot.lane.b32.xlu0 %v243, 1
      %v842 = vpop.permute.xlu0 %841
      %843 = vrot.lane.b32.xlu0 %v244, 1
      %v844 = vpop.permute.xlu0 %843
      %845 = vrot.lane.b32.xlu0 %v245, 1
      %v846 = vpop.permute.xlu0 %845
      %vm847 = vcmask 7168
      %v848 = vsel %vm847, %v832, %v834
      %v849 = vsel %vm847, %v834, %v836
      %v850 = vsel %vm847, %v836, %v838
      %v851 = vsel %vm847, %v840, %v842
      %v852 = vsel %vm847, %v842, %v844
      %v853 = vsel %vm847, %v844, %v846
      %v861 = vsel %vm286, %v829, 0
      %v864 = vsel %vm286, %v830, 0
      %866 = vmatprep.subr.mxu0 0.0
      %867 = vmatpush1.msra.mxu0 0.0
      %868 = vmatprep.subr.mxu0 0.0
      %869 = vmatpush1.msra.mxu0 0.0
      %870 = vmatprep.subr.mxu0 0.0
      %871 = vmatpush1.msra.mxu0 0.0
      %872 = vmatprep.subr.mxu0 0.0
      %873 = vmatpush1.msra.mxu0 0.0
      %874 = vmatprep.subr.mxu0 0.0
      %875 = vmatpush1.msra.mxu0 0.0
      %876 = vmatprep.subr.mxu0 0.0
      %877 = vmatpush1.msra.mxu0 0.0
      %878 = vmatprep.subr.mxu0 0.0
      %879 = vmatpush1.msra.mxu0 0.0
      %880 = vmatprep.subr.mxu0 0.0
      %881 = vmatpush1.msra.mxu0 0.0
      %882 = vmatprep.subr.mxu0 0.0
      %883 = vmatpush1.msra.mxu0 0.0
      %884 = vmatprep.subr.mxu0 0.0
      %885 = vmatpush1.msra.mxu0 0.0
      %886 = vmatprep.subr.mxu0 0.0
      %887 = vmatpush1.msra.mxu0 0.0
      %888 = vmatprep.subr.mxu0 0.0
      %889 = vmatpush1.msra.mxu0 0.0
      %890 = vmatprep.subr.mxu0 0.0
      %891 = vmatpush1.msra.mxu0 0.0
      %892 = vmatprep.subr.mxu0 0.0
      %893 = vmatpush1.msra.mxu0 0.0
      %894 = vmatprep.subr.mxu0 %v852
      %895 = vmatpush1.msra.mxu0 %v851
      %896 = vmatprep.subr.mxu0 %v849
      %897 = vmatpush1.msra.mxu0 %v848
      %898 = vmatprep.subr.mxu0 0.0
      %899 = vmatpush2.msra.mxu0 0.0
      %900 = vmatprep.subr.mxu0 0.0
      %901 = vmatpush2.msra.mxu0 0.0
      %902 = vmatprep.subr.mxu0 0.0
      %903 = vmatpush2.msra.mxu0 0.0
      %904 = vmatprep.subr.mxu0 0.0
      %905 = vmatpush2.msra.mxu0 0.0
      %906 = vmatprep.subr.mxu0 0.0
      %907 = vmatpush2.msra.mxu0 0.0
      %908 = vmatprep.subr.mxu0 0.0
      %909 = vmatpush2.msra.mxu0 0.0
      %910 = vmatprep.subr.mxu0 0.0
      %911 = vmatpush2.msra.mxu0 0.0
      %912 = vmatprep.subr.mxu0 0.0
      %913 = vmatpush2.msra.mxu0 0.0
      %914 = vmatprep.subr.mxu0 0.0
      %915 = vmatpush2.msra.mxu0 0.0
      %916 = vmatprep.subr.mxu0 0.0
      %917 = vmatpush2.msra.mxu0 0.0
      %918 = vmatprep.subr.mxu0 0.0
      %919 = vmatpush2.msra.mxu0 0.0
      %920 = vmatprep.subr.mxu0 0.0
      %921 = vmatpush2.msra.mxu0 0.0
      %922 = vmatprep.subr.mxu0 0.0
      %923 = vmatpush2.msra.mxu0 0.0
      %924 = vmatprep.subr.mxu0 0.0
      %925 = vmatpush2.msra.mxu0 0.0
      %926 = vmatprep.subr.mxu0 0.0
      %927 = vmatpush2.msra.mxu0 0.0
      %928 = vmatprep.subr.mxu0 0.0
      %929 = vmatpush2.msra.mxu0 0.0
      %930 = vmatprep.mubr.f32.mxu0 0.0
      %931 = vmatmul.mubr.f32.gmra.mxu0 %v861
      %v932 = vpop.f32.mrf.mxu0
      %v933 = vadd.f32 0.0, %v932
      %v934 = vpop.f32.mrf.mxu0
      %v935 = vadd.f32 0.0, %v934
      %936 = vmatprep.mubr.f32.mxu0 0.0
      %937 = vmatmul.mubr.f32.gmra.mxu0 %v864
      %v938 = vpop.f32.mrf.mxu0
      %v939 = vadd.f32 0.0, %v938
      %v940 = vpop.f32.mrf.mxu0
      %v941 = vadd.f32 0.0, %v940
      %942 = vdwg.mxu0
      %943 = vmatprep.subr.mxu0 0.0
      %944 = vmatpush1.msra.mxu0 0.0
      %945 = vmatprep.subr.mxu0 0.0
      %946 = vmatpush1.msra.mxu0 0.0
      %947 = vmatprep.subr.mxu0 0.0
      %948 = vmatpush1.msra.mxu0 0.0
      %949 = vmatprep.subr.mxu0 0.0
      %950 = vmatpush1.msra.mxu0 0.0
      %951 = vmatprep.subr.mxu0 0.0
      %952 = vmatpush1.msra.mxu0 0.0
      %953 = vmatprep.subr.mxu0 0.0
      %954 = vmatpush1.msra.mxu0 0.0
      %955 = vmatprep.subr.mxu0 0.0
      %956 = vmatpush1.msra.mxu0 0.0
      %957 = vmatprep.subr.mxu0 0.0
      %958 = vmatpush1.msra.mxu0 0.0
      %959 = vmatprep.subr.mxu0 0.0
      %960 = vmatpush1.msra.mxu0 0.0
      %961 = vmatprep.subr.mxu0 0.0
      %962 = vmatpush1.msra.mxu0 0.0
      %963 = vmatprep.subr.mxu0 0.0
      %964 = vmatpush1.msra.mxu0 0.0
      %965 = vmatprep.subr.mxu0 0.0
      %966 = vmatpush1.msra.mxu0 0.0
      %967 = vmatprep.subr.mxu0 0.0
      %968 = vmatpush1.msra.mxu0 0.0
      %969 = vmatprep.subr.mxu0 0.0
      %970 = vmatpush1.msra.mxu0 0.0
      %971 = vmatprep.subr.mxu0 0.0
      %972 = vmatpush1.msra.mxu0 %v853
      %973 = vmatprep.subr.mxu0 0.0
      %974 = vmatpush1.msra.mxu0 %v850
      %975 = vmatprep.subr.mxu0 0.0
      %976 = vmatpush2.msra.mxu0 0.0
      %977 = vmatprep.subr.mxu0 0.0
      %978 = vmatpush2.msra.mxu0 0.0
      %979 = vmatprep.subr.mxu0 0.0
      %980 = vmatpush2.msra.mxu0 0.0
      %981 = vmatprep.subr.mxu0 0.0
      %982 = vmatpush2.msra.mxu0 0.0
      %983 = vmatprep.subr.mxu0 0.0
      %984 = vmatpush2.msra.mxu0 0.0
      %985 = vmatprep.subr.mxu0 0.0
      %986 = vmatpush2.msra.mxu0 0.0
      %987 = vmatprep.subr.mxu0 0.0
      %988 = vmatpush2.msra.mxu0 0.0
      %989 = vmatprep.subr.mxu0 0.0
      %990 = vmatpush2.msra.mxu0 0.0
      %991 = vmatprep.subr.mxu0 0.0
      %992 = vmatpush2.msra.mxu0 0.0
      %993 = vmatprep.subr.mxu0 0.0
      %994 = vmatpush2.msra.mxu0 0.0
      %995 = vmatprep.subr.mxu0 0.0
      %996 = vmatpush2.msra.mxu0 0.0
      %997 = vmatprep.subr.mxu0 0.0
      %998 = vmatpush2.msra.mxu0 0.0
      %999 = vmatprep.subr.mxu0 0.0
      %1000 = vmatpush2.msra.mxu0 0.0
      %1001 = vmatprep.subr.mxu0 0.0
      %1002 = vmatpush2.msra.mxu0 0.0
      %1003 = vmatprep.subr.mxu0 0.0
      %1004 = vmatpush2.msra.mxu0 0.0
      %1005 = vmatprep.subr.mxu0 0.0
      %1006 = vmatpush2.msra.mxu0 0.0
      %1007 = vmatprep.mubr.f32.mxu0 0.0
      %1008 = vmatmul.mubr.f32.gmra.mxu0 %v861
      %v1009 = vpop.f32.mrf.mxu0
      %v1010 = vadd.f32 0.0, %v1009
      %v1011 = vpop.f32.mrf.mxu0
      %1012 = vmatprep.mubr.f32.mxu0 0.0
      %1013 = vmatmul.mubr.f32.gmra.mxu0 %v864
      %v1014 = vpop.f32.mrf.mxu0
      %v1015 = vadd.f32 0.0, %v1014
      %v1016 = vpop.f32.mrf.mxu0
      %1017 = vdwg.mxu0
      %v1018 = vadd.f32 %v822, %v933
      %v1019 = vadd.f32 %v823, %v935
      %v1020 = vadd.f32 %v824, %v1010
      %v1021 = vadd.f32 %v825, %v939
      %v1022 = vadd.f32 %v826, %v941
      %v1023 = vadd.f32 %v827, %v1015
      %s1024 = scalar_lea.vmem %s1, 64
      %v1025 = vld [vmem:[%s1024] sm:$0xff]
      %v1026 = vld [vmem:[%s1024 + $0x8] sm:$0xff]
      %v1028 = vsel %vm286, %v1025, 0
      %v1031 = vsel %vm286, %v1026, 0
      %1033 = vmatprep.subr.mxu0 0.0
      %1034 = vmatpush1.msra.mxu0 0.0
      %1035 = vmatprep.subr.mxu0 0.0
      %1036 = vmatpush1.msra.mxu0 0.0
      %1037 = vmatprep.subr.mxu0 0.0
      %1038 = vmatpush1.msra.mxu0 0.0
      %1039 = vmatprep.subr.mxu0 0.0
      %1040 = vmatpush1.msra.mxu0 0.0
      %1041 = vmatprep.subr.mxu0 0.0
      %1042 = vmatpush1.msra.mxu0 0.0
      %1043 = vmatprep.subr.mxu0 0.0
      %1044 = vmatpush1.msra.mxu0 0.0
      %1045 = vmatprep.subr.mxu0 0.0
      %1046 = vmatpush1.msra.mxu0 0.0
      %1047 = vmatprep.subr.mxu0 0.0
      %1048 = vmatpush1.msra.mxu0 0.0
      %1049 = vmatprep.subr.mxu0 0.0
      %1050 = vmatpush1.msra.mxu0 0.0
      %1051 = vmatprep.subr.mxu0 0.0
      %1052 = vmatpush1.msra.mxu0 0.0
      %1053 = vmatprep.subr.mxu0 0.0
      %1054 = vmatpush1.msra.mxu0 0.0
      %1055 = vmatprep.subr.mxu0 0.0
      %1056 = vmatpush1.msra.mxu0 0.0
      %1057 = vmatprep.subr.mxu0 0.0
      %1058 = vmatpush1.msra.mxu0 0.0
      %1059 = vmatprep.subr.mxu0 0.0
      %1060 = vmatpush1.msra.mxu0 0.0
      %1061 = vmatprep.subr.mxu0 %v244
      %1062 = vmatpush1.msra.mxu0 %v243
      %1063 = vmatprep.subr.mxu0 %v240
      %1064 = vmatpush1.msra.mxu0 %v239
      %1065 = vmatprep.subr.mxu0 0.0
      %1066 = vmatpush2.msra.mxu0 0.0
      %1067 = vmatprep.subr.mxu0 0.0
      %1068 = vmatpush2.msra.mxu0 0.0
      %1069 = vmatprep.subr.mxu0 0.0
      %1070 = vmatpush2.msra.mxu0 0.0
      %1071 = vmatprep.subr.mxu0 0.0
      %1072 = vmatpush2.msra.mxu0 0.0
      %1073 = vmatprep.subr.mxu0 0.0
      %1074 = vmatpush2.msra.mxu0 0.0
      %1075 = vmatprep.subr.mxu0 0.0
      %1076 = vmatpush2.msra.mxu0 0.0
      %1077 = vmatprep.subr.mxu0 0.0
      %1078 = vmatpush2.msra.mxu0 0.0
      %1079 = vmatprep.subr.mxu0 0.0
      %1080 = vmatpush2.msra.mxu0 0.0
      %1081 = vmatprep.subr.mxu0 0.0
      %1082 = vmatpush2.msra.mxu0 0.0
      %1083 = vmatprep.subr.mxu0 0.0
      %1084 = vmatpush2.msra.mxu0 0.0
      %1085 = vmatprep.subr.mxu0 0.0
      %1086 = vmatpush2.msra.mxu0 0.0
      %1087 = vmatprep.subr.mxu0 0.0
      %1088 = vmatpush2.msra.mxu0 0.0
      %1089 = vmatprep.subr.mxu0 0.0
      %1090 = vmatpush2.msra.mxu0 0.0
      %1091 = vmatprep.subr.mxu0 0.0
      %1092 = vmatpush2.msra.mxu0 0.0
      %1093 = vmatprep.subr.mxu0 0.0
      %1094 = vmatpush2.msra.mxu0 0.0
      %1095 = vmatprep.subr.mxu0 0.0
      %1096 = vmatpush2.msra.mxu0 0.0
      %1097 = vmatprep.mubr.f32.mxu0 0.0
      %1098 = vmatmul.mubr.f32.gmra.mxu0 %v1028
      %v1099 = vpop.f32.mrf.mxu0
      %v1100 = vadd.f32 0.0, %v1099
      %v1101 = vpop.f32.mrf.mxu0
      %v1102 = vadd.f32 0.0, %v1101
      %1103 = vmatprep.mubr.f32.mxu0 0.0
      %1104 = vmatmul.mubr.f32.gmra.mxu0 %v1031
      %v1105 = vpop.f32.mrf.mxu0
      %v1106 = vadd.f32 0.0, %v1105
      %v1107 = vpop.f32.mrf.mxu0
      %v1108 = vadd.f32 0.0, %v1107
      %1109 = vdwg.mxu0
      %1110 = vmatprep.subr.mxu0 0.0
      %1111 = vmatpush1.msra.mxu0 0.0
      %1112 = vmatprep.subr.mxu0 0.0
      %1113 = vmatpush1.msra.mxu0 0.0
      %1114 = vmatprep.subr.mxu0 0.0
      %1115 = vmatpush1.msra.mxu0 0.0
      %1116 = vmatprep.subr.mxu0 0.0
      %1117 = vmatpush1.msra.mxu0 0.0
      %1118 = vmatprep.subr.mxu0 0.0
      %1119 = vmatpush1.msra.mxu0 0.0
      %1120 = vmatprep.subr.mxu0 0.0
      %1121 = vmatpush1.msra.mxu0 0.0
      %1122 = vmatprep.subr.mxu0 0.0
      %1123 = vmatpush1.msra.mxu0 0.0
      %1124 = vmatprep.subr.mxu0 0.0
      %1125 = vmatpush1.msra.mxu0 0.0
      %1126 = vmatprep.subr.mxu0 0.0
      %1127 = vmatpush1.msra.mxu0 0.0
      %1128 = vmatprep.subr.mxu0 0.0
      %1129 = vmatpush1.msra.mxu0 0.0
      %1130 = vmatprep.subr.mxu0 0.0
      %1131 = vmatpush1.msra.mxu0 0.0
      %1132 = vmatprep.subr.mxu0 0.0
      %1133 = vmatpush1.msra.mxu0 0.0
      %1134 = vmatprep.subr.mxu0 0.0
      %1135 = vmatpush1.msra.mxu0 0.0
      %1136 = vmatprep.subr.mxu0 0.0
      %1137 = vmatpush1.msra.mxu0 0.0
      %1138 = vmatprep.subr.mxu0 0.0
      %1139 = vmatpush1.msra.mxu0 %v245
      %1140 = vmatprep.subr.mxu0 0.0
      %1141 = vmatpush1.msra.mxu0 %v241
      %1142 = vmatprep.subr.mxu0 0.0
      %1143 = vmatpush2.msra.mxu0 0.0
      %1144 = vmatprep.subr.mxu0 0.0
      %1145 = vmatpush2.msra.mxu0 0.0
      %1146 = vmatprep.subr.mxu0 0.0
      %1147 = vmatpush2.msra.mxu0 0.0
      %1148 = vmatprep.subr.mxu0 0.0
      %1149 = vmatpush2.msra.mxu0 0.0
      %1150 = vmatprep.subr.mxu0 0.0
      %1151 = vmatpush2.msra.mxu0 0.0
      %1152 = vmatprep.subr.mxu0 0.0
      %1153 = vmatpush2.msra.mxu0 0.0
      %1154 = vmatprep.subr.mxu0 0.0
      %1155 = vmatpush2.msra.mxu0 0.0
      %1156 = vmatprep.subr.mxu0 0.0
      %1157 = vmatpush2.msra.mxu0 0.0
      %1158 = vmatprep.subr.mxu0 0.0
      %1159 = vmatpush2.msra.mxu0 0.0
      %1160 = vmatprep.subr.mxu0 0.0
      %1161 = vmatpush2.msra.mxu0 0.0
      %1162 = vmatprep.subr.mxu0 0.0
      %1163 = vmatpush2.msra.mxu0 0.0
      %1164 = vmatprep.subr.mxu0 0.0
      %1165 = vmatpush2.msra.mxu0 0.0
      %1166 = vmatprep.subr.mxu0 0.0
      %1167 = vmatpush2.msra.mxu0 0.0
      %1168 = vmatprep.subr.mxu0 0.0
      %1169 = vmatpush2.msra.mxu0 0.0
      %1170 = vmatprep.subr.mxu0 0.0
      %1171 = vmatpush2.msra.mxu0 0.0
      %1172 = vmatprep.subr.mxu0 0.0
      %1173 = vmatpush2.msra.mxu0 0.0
      %1174 = vmatprep.mubr.f32.mxu0 0.0
      %1175 = vmatmul.mubr.f32.gmra.mxu0 %v1028
      %v1176 = vpop.f32.mrf.mxu0
      %v1177 = vadd.f32 0.0, %v1176
      %v1178 = vpop.f32.mrf.mxu0
      %1179 = vmatprep.mubr.f32.mxu0 0.0
      %1180 = vmatmul.mubr.f32.gmra.mxu0 %v1031
      %v1181 = vpop.f32.mrf.mxu0
      %v1182 = vadd.f32 0.0, %v1181
      %v1183 = vpop.f32.mrf.mxu0
      %1184 = vdwg.mxu0
      %v1185 = vadd.f32 %v1018, %v1100
      %v1186 = vadd.f32 %v1019, %v1102
      %v1187 = vadd.f32 %v1020, %v1177
      %v1188 = vadd.f32 %v1021, %v1106
      %v1189 = vadd.f32 %v1022, %v1108
      %v1190 = vadd.f32 %v1023, %v1182
      %s1191 = scalar_lea.vmem %s1, 80
      %v1192 = vld [vmem:[%s1191] sm:$0xff]
      %v1193 = vld [vmem:[%s1191 + $0x8] sm:$0xff]
      %1194 = vrot.lane.b32.xlu0 %v239, 127
      %v1195 = vpop.permute.xlu0 %1194
      %1196 = vrot.lane.b32.xlu0 %v240, 127
      %v1197 = vpop.permute.xlu0 %1196
      %1198 = vrot.lane.b32.xlu0 %v241, 127
      %v1199 = vpop.permute.xlu0 %1198
      %1200 = vrot.lane.b32.xlu0 %v243, 127
      %v1201 = vpop.permute.xlu0 %1200
      %1202 = vrot.lane.b32.xlu0 %v244, 127
      %v1203 = vpop.permute.xlu0 %1202
      %1204 = vrot.lane.b32.xlu0 %v245, 127
      %v1205 = vpop.permute.xlu0 %1204
      %vm1206 = vcmask 1039360
      %v1207 = vsel %vm1206, %v1195, %v1197
      %v1208 = vsel %vm1206, %v1197, %v1199
      %v1209 = vsel %vm1206, %v1201, %v1203
      %v1210 = vsel %vm1206, %v1203, %v1205
      %v1218 = vsel %vm286, %v1192, 0
      %v1221 = vsel %vm286, %v1193, 0
      %1223 = vmatprep.subr.mxu0 0.0
      %1224 = vmatpush1.msra.mxu0 0.0
      %1225 = vmatprep.subr.mxu0 0.0
      %1226 = vmatpush1.msra.mxu0 0.0
      %1227 = vmatprep.subr.mxu0 0.0
      %1228 = vmatpush1.msra.mxu0 0.0
      %1229 = vmatprep.subr.mxu0 0.0
      %1230 = vmatpush1.msra.mxu0 0.0
      %1231 = vmatprep.subr.mxu0 0.0
      %1232 = vmatpush1.msra.mxu0 0.0
      %1233 = vmatprep.subr.mxu0 0.0
      %1234 = vmatpush1.msra.mxu0 0.0
      %1235 = vmatprep.subr.mxu0 0.0
      %1236 = vmatpush1.msra.mxu0 0.0
      %1237 = vmatprep.subr.mxu0 0.0
      %1238 = vmatpush1.msra.mxu0 0.0
      %1239 = vmatprep.subr.mxu0 0.0
      %1240 = vmatpush1.msra.mxu0 0.0
      %1241 = vmatprep.subr.mxu0 0.0
      %1242 = vmatpush1.msra.mxu0 0.0
      %1243 = vmatprep.subr.mxu0 0.0
      %1244 = vmatpush1.msra.mxu0 0.0
      %1245 = vmatprep.subr.mxu0 0.0
      %1246 = vmatpush1.msra.mxu0 0.0
      %1247 = vmatprep.subr.mxu0 0.0
      %1248 = vmatpush1.msra.mxu0 0.0
      %1249 = vmatprep.subr.mxu0 0.0
      %1250 = vmatpush1.msra.mxu0 0.0
      %1251 = vmatprep.subr.mxu0 %v1210
      %1252 = vmatpush1.msra.mxu0 %v1209
      %1253 = vmatprep.subr.mxu0 %v1208
      %1254 = vmatpush1.msra.mxu0 %v1207
      %1255 = vmatprep.subr.mxu0 0.0
      %1256 = vmatpush2.msra.mxu0 0.0
      %1257 = vmatprep.subr.mxu0 0.0
      %1258 = vmatpush2.msra.mxu0 0.0
      %1259 = vmatprep.subr.mxu0 0.0
      %1260 = vmatpush2.msra.mxu0 0.0
      %1261 = vmatprep.subr.mxu0 0.0
      %1262 = vmatpush2.msra.mxu0 0.0
      %1263 = vmatprep.subr.mxu0 0.0
      %1264 = vmatpush2.msra.mxu0 0.0
      %1265 = vmatprep.subr.mxu0 0.0
      %1266 = vmatpush2.msra.mxu0 0.0
      %1267 = vmatprep.subr.mxu0 0.0
      %1268 = vmatpush2.msra.mxu0 0.0
      %1269 = vmatprep.subr.mxu0 0.0
      %1270 = vmatpush2.msra.mxu0 0.0
      %1271 = vmatprep.subr.mxu0 0.0
      %1272 = vmatpush2.msra.mxu0 0.0
      %1273 = vmatprep.subr.mxu0 0.0
      %1274 = vmatpush2.msra.mxu0 0.0
      %1275 = vmatprep.subr.mxu0 0.0
      %1276 = vmatpush2.msra.mxu0 0.0
      %1277 = vmatprep.subr.mxu0 0.0
      %1278 = vmatpush2.msra.mxu0 0.0
      %1279 = vmatprep.subr.mxu0 0.0
      %1280 = vmatpush2.msra.mxu0 0.0
      %1281 = vmatprep.subr.mxu0 0.0
      %1282 = vmatpush2.msra.mxu0 0.0
      %1283 = vmatprep.subr.mxu0 0.0
      %1284 = vmatpush2.msra.mxu0 0.0
      %1285 = vmatprep.subr.mxu0 0.0
      %1286 = vmatpush2.msra.mxu0 0.0
      %1287 = vmatprep.mubr.f32.mxu0 0.0
      %1288 = vmatmul.mubr.f32.gmra.mxu0 %v1218
      %v1289 = vpop.f32.mrf.mxu0
      %v1290 = vadd.f32 0.0, %v1289
      %v1291 = vpop.f32.mrf.mxu0
      %v1292 = vadd.f32 0.0, %v1291
      %1293 = vmatprep.mubr.f32.mxu0 0.0
      %1294 = vmatmul.mubr.f32.gmra.mxu0 %v1221
      %v1295 = vpop.f32.mrf.mxu0
      %v1296 = vadd.f32 0.0, %v1295
      %v1297 = vpop.f32.mrf.mxu0
      %v1298 = vadd.f32 0.0, %v1297
      %1299 = vdwg.mxu0
      %1300 = vmatprep.subr.mxu0 0.0
      %1301 = vmatpush1.msra.mxu0 0.0
      %1302 = vmatprep.subr.mxu0 0.0
      %1303 = vmatpush1.msra.mxu0 0.0
      %1304 = vmatprep.subr.mxu0 0.0
      %1305 = vmatpush1.msra.mxu0 0.0
      %1306 = vmatprep.subr.mxu0 0.0
      %1307 = vmatpush1.msra.mxu0 0.0
      %1308 = vmatprep.subr.mxu0 0.0
      %1309 = vmatpush1.msra.mxu0 0.0
      %1310 = vmatprep.subr.mxu0 0.0
      %1311 = vmatpush1.msra.mxu0 0.0
      %1312 = vmatprep.subr.mxu0 0.0
      %1313 = vmatpush1.msra.mxu0 0.0
      %1314 = vmatprep.subr.mxu0 0.0
      %1315 = vmatpush1.msra.mxu0 0.0
      %1316 = vmatprep.subr.mxu0 0.0
      %1317 = vmatpush1.msra.mxu0 0.0
      %1318 = vmatprep.subr.mxu0 0.0
      %1319 = vmatpush1.msra.mxu0 0.0
      %1320 = vmatprep.subr.mxu0 0.0
      %1321 = vmatpush1.msra.mxu0 0.0
      %1322 = vmatprep.subr.mxu0 0.0
      %1323 = vmatpush1.msra.mxu0 0.0
      %1324 = vmatprep.subr.mxu0 0.0
      %1325 = vmatpush1.msra.mxu0 0.0
      %1326 = vmatprep.subr.mxu0 0.0
      %1327 = vmatpush1.msra.mxu0 0.0
      %1328 = vmatprep.subr.mxu0 0.0
      %1329 = vmatpush1.msra.mxu0 %v1205
      %1330 = vmatprep.subr.mxu0 0.0
      %1331 = vmatpush1.msra.mxu0 %v1199
      %1332 = vmatprep.subr.mxu0 0.0
      %1333 = vmatpush2.msra.mxu0 0.0
      %1334 = vmatprep.subr.mxu0 0.0
      %1335 = vmatpush2.msra.mxu0 0.0
      %1336 = vmatprep.subr.mxu0 0.0
      %1337 = vmatpush2.msra.mxu0 0.0
      %1338 = vmatprep.subr.mxu0 0.0
      %1339 = vmatpush2.msra.mxu0 0.0
      %1340 = vmatprep.subr.mxu0 0.0
      %1341 = vmatpush2.msra.mxu0 0.0
      %1342 = vmatprep.subr.mxu0 0.0
      %1343 = vmatpush2.msra.mxu0 0.0
      %1344 = vmatprep.subr.mxu0 0.0
      %1345 = vmatpush2.msra.mxu0 0.0
      %1346 = vmatprep.subr.mxu0 0.0
      %1347 = vmatpush2.msra.mxu0 0.0
      %1348 = vmatprep.subr.mxu0 0.0
      %1349 = vmatpush2.msra.mxu0 0.0
      %1350 = vmatprep.subr.mxu0 0.0
      %1351 = vmatpush2.msra.mxu0 0.0
      %1352 = vmatprep.subr.mxu0 0.0
      %1353 = vmatpush2.msra.mxu0 0.0
      %1354 = vmatprep.subr.mxu0 0.0
      %1355 = vmatpush2.msra.mxu0 0.0
      %1356 = vmatprep.subr.mxu0 0.0
      %1357 = vmatpush2.msra.mxu0 0.0
      %1358 = vmatprep.subr.mxu0 0.0
      %1359 = vmatpush2.msra.mxu0 0.0
      %1360 = vmatprep.subr.mxu0 0.0
      %1361 = vmatpush2.msra.mxu0 0.0
      %1362 = vmatprep.subr.mxu0 0.0
      %1363 = vmatpush2.msra.mxu0 0.0
      %1364 = vmatprep.mubr.f32.mxu0 0.0
      %1365 = vmatmul.mubr.f32.gmra.mxu0 %v1218
      %v1366 = vpop.f32.mrf.mxu0
      %v1367 = vadd.f32 0.0, %v1366
      %v1368 = vpop.f32.mrf.mxu0
      %1369 = vmatprep.mubr.f32.mxu0 0.0
      %1370 = vmatmul.mubr.f32.gmra.mxu0 %v1221
      %v1371 = vpop.f32.mrf.mxu0
      %v1372 = vadd.f32 0.0, %v1371
      %v1373 = vpop.f32.mrf.mxu0
      %1374 = vdwg.mxu0
      %v1375 = vadd.f32 %v1185, %v1290
      %v1376 = vadd.f32 %v1186, %v1292
      %v1377 = vadd.f32 %v1187, %v1367
      %v1378 = vadd.f32 %v1188, %v1296
      %v1379 = vadd.f32 %v1189, %v1298
      %v1380 = vadd.f32 %v1190, %v1372
      %s1381 = scalar_lea.vmem %s1, 96
      %v1382 = vld [vmem:[%s1381] sm:$0xff]
      %v1383 = vld [vmem:[%s1381 + $0x8] sm:$0xff]
      %1384 = vrot.lane.b32.xlu0 %v239, 111
      %v1385 = vpop.permute.xlu0 %1384
      %1386 = vrot.lane.b32.xlu0 %v240, 111
      %v1387 = vpop.permute.xlu0 %1386
      %1388 = vrot.lane.b32.xlu0 %v241, 111
      %v1389 = vpop.permute.xlu0 %1388
      %1390 = vrot.lane.b32.xlu0 %v243, 111
      %v1391 = vpop.permute.xlu0 %1390
      %1392 = vrot.lane.b32.xlu0 %v244, 111
      %v1393 = vpop.permute.xlu0 %1392
      %1394 = vrot.lane.b32.xlu0 %v245, 111
      %v1395 = vpop.permute.xlu0 %1394
      %vm1396 = vcmask 908288
      %v1397 = vsel %vm1396, %v1385, %v1387
      %v1398 = vsel %vm1396, %v1387, %v1389
      %v1399 = vsel %vm1396, %v1391, %v1393
      %v1400 = vsel %vm1396, %v1393, %v1395
      %v1408 = vsel %vm286, %v1382, 0
      %v1411 = vsel %vm286, %v1383, 0
      %1413 = vmatprep.subr.mxu0 0.0
      %1414 = vmatpush1.msra.mxu0 0.0
      %1415 = vmatprep.subr.mxu0 0.0
      %1416 = vmatpush1.msra.mxu0 0.0
      %1417 = vmatprep.subr.mxu0 0.0
      %1418 = vmatpush1.msra.mxu0 0.0
      %1419 = vmatprep.subr.mxu0 0.0
      %1420 = vmatpush1.msra.mxu0 0.0
      %1421 = vmatprep.subr.mxu0 0.0
      %1422 = vmatpush1.msra.mxu0 0.0
      %1423 = vmatprep.subr.mxu0 0.0
      %1424 = vmatpush1.msra.mxu0 0.0
      %1425 = vmatprep.subr.mxu0 0.0
      %1426 = vmatpush1.msra.mxu0 0.0
      %1427 = vmatprep.subr.mxu0 0.0
      %1428 = vmatpush1.msra.mxu0 0.0
      %1429 = vmatprep.subr.mxu0 0.0
      %1430 = vmatpush1.msra.mxu0 0.0
      %1431 = vmatprep.subr.mxu0 0.0
      %1432 = vmatpush1.msra.mxu0 0.0
      %1433 = vmatprep.subr.mxu0 0.0
      %1434 = vmatpush1.msra.mxu0 0.0
      %1435 = vmatprep.subr.mxu0 0.0
      %1436 = vmatpush1.msra.mxu0 0.0
      %1437 = vmatprep.subr.mxu0 0.0
      %1438 = vmatpush1.msra.mxu0 0.0
      %1439 = vmatprep.subr.mxu0 0.0
      %1440 = vmatpush1.msra.mxu0 0.0
      %1441 = vmatprep.subr.mxu0 %v1400
      %1442 = vmatpush1.msra.mxu0 %v1399
      %1443 = vmatprep.subr.mxu0 %v1398
      %1444 = vmatpush1.msra.mxu0 %v1397
      %1445 = vmatprep.subr.mxu0 0.0
      %1446 = vmatpush2.msra.mxu0 0.0
      %1447 = vmatprep.subr.mxu0 0.0
      %1448 = vmatpush2.msra.mxu0 0.0
      %1449 = vmatprep.subr.mxu0 0.0
      %1450 = vmatpush2.msra.mxu0 0.0
      %1451 = vmatprep.subr.mxu0 0.0
      %1452 = vmatpush2.msra.mxu0 0.0
      %1453 = vmatprep.subr.mxu0 0.0
      %1454 = vmatpush2.msra.mxu0 0.0
      %1455 = vmatprep.subr.mxu0 0.0
      %1456 = vmatpush2.msra.mxu0 0.0
      %1457 = vmatprep.subr.mxu0 0.0
      %1458 = vmatpush2.msra.mxu0 0.0
      %1459 = vmatprep.subr.mxu0 0.0
      %1460 = vmatpush2.msra.mxu0 0.0
      %1461 = vmatprep.subr.mxu0 0.0
      %1462 = vmatpush2.msra.mxu0 0.0
      %1463 = vmatprep.subr.mxu0 0.0
      %1464 = vmatpush2.msra.mxu0 0.0
      %1465 = vmatprep.subr.mxu0 0.0
      %1466 = vmatpush2.msra.mxu0 0.0
      %1467 = vmatprep.subr.mxu0 0.0
      %1468 = vmatpush2.msra.mxu0 0.0
      %1469 = vmatprep.subr.mxu0 0.0
      %1470 = vmatpush2.msra.mxu0 0.0
      %1471 = vmatprep.subr.mxu0 0.0
      %1472 = vmatpush2.msra.mxu0 0.0
      %1473 = vmatprep.subr.mxu0 0.0
      %1474 = vmatpush2.msra.mxu0 0.0
      %1475 = vmatprep.subr.mxu0 0.0
      %1476 = vmatpush2.msra.mxu0 0.0
      %1477 = vmatprep.mubr.f32.mxu0 0.0
      %1478 = vmatmul.mubr.f32.gmra.mxu0 %v1408
      %v1479 = vpop.f32.mrf.mxu0
      %v1480 = vadd.f32 0.0, %v1479
      %v1481 = vpop.f32.mrf.mxu0
      %v1482 = vadd.f32 0.0, %v1481
      %1483 = vmatprep.mubr.f32.mxu0 0.0
      %1484 = vmatmul.mubr.f32.gmra.mxu0 %v1411
      %v1485 = vpop.f32.mrf.mxu0
      %v1486 = vadd.f32 0.0, %v1485
      %v1487 = vpop.f32.mrf.mxu0
      %v1488 = vadd.f32 0.0, %v1487
      %1489 = vdwg.mxu0
      %1490 = vmatprep.subr.mxu0 0.0
      %1491 = vmatpush1.msra.mxu0 0.0
      %1492 = vmatprep.subr.mxu0 0.0
      %1493 = vmatpush1.msra.mxu0 0.0
      %1494 = vmatprep.subr.mxu0 0.0
      %1495 = vmatpush1.msra.mxu0 0.0
      %1496 = vmatprep.subr.mxu0 0.0
      %1497 = vmatpush1.msra.mxu0 0.0
      %1498 = vmatprep.subr.mxu0 0.0
      %1499 = vmatpush1.msra.mxu0 0.0
      %1500 = vmatprep.subr.mxu0 0.0
      %1501 = vmatpush1.msra.mxu0 0.0
      %1502 = vmatprep.subr.mxu0 0.0
      %1503 = vmatpush1.msra.mxu0 0.0
      %1504 = vmatprep.subr.mxu0 0.0
      %1505 = vmatpush1.msra.mxu0 0.0
      %1506 = vmatprep.subr.mxu0 0.0
      %1507 = vmatpush1.msra.mxu0 0.0
      %1508 = vmatprep.subr.mxu0 0.0
      %1509 = vmatpush1.msra.mxu0 0.0
      %1510 = vmatprep.subr.mxu0 0.0
      %1511 = vmatpush1.msra.mxu0 0.0
      %1512 = vmatprep.subr.mxu0 0.0
      %1513 = vmatpush1.msra.mxu0 0.0
      %1514 = vmatprep.subr.mxu0 0.0
      %1515 = vmatpush1.msra.mxu0 0.0
      %1516 = vmatprep.subr.mxu0 0.0
      %1517 = vmatpush1.msra.mxu0 0.0
      %1518 = vmatprep.subr.mxu0 0.0
      %1519 = vmatpush1.msra.mxu0 %v1395
      %1520 = vmatprep.subr.mxu0 0.0
      %1521 = vmatpush1.msra.mxu0 %v1389
      %1522 = vmatprep.subr.mxu0 0.0
      %1523 = vmatpush2.msra.mxu0 0.0
      %1524 = vmatprep.subr.mxu0 0.0
      %1525 = vmatpush2.msra.mxu0 0.0
      %1526 = vmatprep.subr.mxu0 0.0
      %1527 = vmatpush2.msra.mxu0 0.0
      %1528 = vmatprep.subr.mxu0 0.0
      %1529 = vmatpush2.msra.mxu0 0.0
      %1530 = vmatprep.subr.mxu0 0.0
      %1531 = vmatpush2.msra.mxu0 0.0
      %1532 = vmatprep.subr.mxu0 0.0
      %1533 = vmatpush2.msra.mxu0 0.0
      %1534 = vmatprep.subr.mxu0 0.0
      %1535 = vmatpush2.msra.mxu0 0.0
      %1536 = vmatprep.subr.mxu0 0.0
      %1537 = vmatpush2.msra.mxu0 0.0
      %1538 = vmatprep.subr.mxu0 0.0
      %1539 = vmatpush2.msra.mxu0 0.0
      %1540 = vmatprep.subr.mxu0 0.0
      %1541 = vmatpush2.msra.mxu0 0.0
      %1542 = vmatprep.subr.mxu0 0.0
      %1543 = vmatpush2.msra.mxu0 0.0
      %1544 = vmatprep.subr.mxu0 0.0
      %1545 = vmatpush2.msra.mxu0 0.0
      %1546 = vmatprep.subr.mxu0 0.0
      %1547 = vmatpush2.msra.mxu0 0.0
      %1548 = vmatprep.subr.mxu0 0.0
      %1549 = vmatpush2.msra.mxu0 0.0
      %1550 = vmatprep.subr.mxu0 0.0
      %1551 = vmatpush2.msra.mxu0 0.0
      %1552 = vmatprep.subr.mxu0 0.0
      %1553 = vmatpush2.msra.mxu0 0.0
      %1554 = vmatprep.mubr.f32.mxu0 0.0
      %1555 = vmatmul.mubr.f32.gmra.mxu0 %v1408
      %v1556 = vpop.f32.mrf.mxu0
      %v1557 = vadd.f32 0.0, %v1556
      %v1558 = vpop.f32.mrf.mxu0
      %1559 = vmatprep.mubr.f32.mxu0 0.0
      %1560 = vmatmul.mubr.f32.gmra.mxu0 %v1411
      %v1561 = vpop.f32.mrf.mxu0
      %v1562 = vadd.f32 0.0, %v1561
      %v1563 = vpop.f32.mrf.mxu0
      %1564 = vdwg.mxu0
      %v1565 = vadd.f32 %v1375, %v1480
      %v1566 = vadd.f32 %v1376, %v1482
      %v1567 = vadd.f32 %v1377, %v1557
      %v1568 = vadd.f32 %v1378, %v1486
      %v1569 = vadd.f32 %v1379, %v1488
      %v1570 = vadd.f32 %v1380, %v1562
      %s1571 = scalar_lea.vmem %s1, 112
      %v1572 = vld [vmem:[%s1571] sm:$0xff]
      %v1573 = vld [vmem:[%s1571 + $0x8] sm:$0xff]
      %1574 = vrot.lane.b32.xlu0 %v239, 110
      %v1575 = vpop.permute.xlu0 %1574
      %1576 = vrot.lane.b32.xlu0 %v240, 110
      %v1577 = vpop.permute.xlu0 %1576
      %1578 = vrot.lane.b32.xlu0 %v241, 110
      %v1579 = vpop.permute.xlu0 %1578
      %1580 = vrot.lane.b32.xlu0 %v243, 110
      %v1581 = vpop.permute.xlu0 %1580
      %1582 = vrot.lane.b32.xlu0 %v244, 110
      %v1583 = vpop.permute.xlu0 %1582
      %1584 = vrot.lane.b32.xlu0 %v245, 110
      %v1585 = vpop.permute.xlu0 %1584
      %vm1586 = vcmask 900096
      %v1587 = vsel %vm1586, %v1575, %v1577
      %v1588 = vsel %vm1586, %v1577, %v1579
      %v1589 = vsel %vm1586, %v1581, %v1583
      %v1590 = vsel %vm1586, %v1583, %v1585
      %v1598 = vsel %vm286, %v1572, 0
      %v1601 = vsel %vm286, %v1573, 0
      %1603 = vmatprep.subr.mxu0 0.0
      %1604 = vmatpush1.msra.mxu0 0.0
      %1605 = vmatprep.subr.mxu0 0.0
      %1606 = vmatpush1.msra.mxu0 0.0
      %1607 = vmatprep.subr.mxu0 0.0
      %1608 = vmatpush1.msra.mxu0 0.0
      %1609 = vmatprep.subr.mxu0 0.0
      %1610 = vmatpush1.msra.mxu0 0.0
      %1611 = vmatprep.subr.mxu0 0.0
      %1612 = vmatpush1.msra.mxu0 0.0
      %1613 = vmatprep.subr.mxu0 0.0
      %1614 = vmatpush1.msra.mxu0 0.0
      %1615 = vmatprep.subr.mxu0 0.0
      %1616 = vmatpush1.msra.mxu0 0.0
      %1617 = vmatprep.subr.mxu0 0.0
      %1618 = vmatpush1.msra.mxu0 0.0
      %1619 = vmatprep.subr.mxu0 0.0
      %1620 = vmatpush1.msra.mxu0 0.0
      %1621 = vmatprep.subr.mxu0 0.0
      %1622 = vmatpush1.msra.mxu0 0.0
      %1623 = vmatprep.subr.mxu0 0.0
      %1624 = vmatpush1.msra.mxu0 0.0
      %1625 = vmatprep.subr.mxu0 0.0
      %1626 = vmatpush1.msra.mxu0 0.0
      %1627 = vmatprep.subr.mxu0 0.0
      %1628 = vmatpush1.msra.mxu0 0.0
      %1629 = vmatprep.subr.mxu0 0.0
      %1630 = vmatpush1.msra.mxu0 0.0
      %1631 = vmatprep.subr.mxu0 %v1590
      %1632 = vmatpush1.msra.mxu0 %v1589
      %1633 = vmatprep.subr.mxu0 %v1588
      %1634 = vmatpush1.msra.mxu0 %v1587
      %1635 = vmatprep.subr.mxu0 0.0
      %1636 = vmatpush2.msra.mxu0 0.0
      %1637 = vmatprep.subr.mxu0 0.0
      %1638 = vmatpush2.msra.mxu0 0.0
      %1639 = vmatprep.subr.mxu0 0.0
      %1640 = vmatpush2.msra.mxu0 0.0
      %1641 = vmatprep.subr.mxu0 0.0
      %1642 = vmatpush2.msra.mxu0 0.0
      %1643 = vmatprep.subr.mxu0 0.0
      %1644 = vmatpush2.msra.mxu0 0.0
      %1645 = vmatprep.subr.mxu0 0.0
      %1646 = vmatpush2.msra.mxu0 0.0
      %1647 = vmatprep.subr.mxu0 0.0
      %1648 = vmatpush2.msra.mxu0 0.0
      %1649 = vmatprep.subr.mxu0 0.0
      %1650 = vmatpush2.msra.mxu0 0.0
      %1651 = vmatprep.subr.mxu0 0.0
      %1652 = vmatpush2.msra.mxu0 0.0
      %1653 = vmatprep.subr.mxu0 0.0
      %1654 = vmatpush2.msra.mxu0 0.0
      %1655 = vmatprep.subr.mxu0 0.0
      %1656 = vmatpush2.msra.mxu0 0.0
      %1657 = vmatprep.subr.mxu0 0.0
      %1658 = vmatpush2.msra.mxu0 0.0
      %1659 = vmatprep.subr.mxu0 0.0
      %1660 = vmatpush2.msra.mxu0 0.0
      %1661 = vmatprep.subr.mxu0 0.0
      %1662 = vmatpush2.msra.mxu0 0.0
      %1663 = vmatprep.subr.mxu0 0.0
      %1664 = vmatpush2.msra.mxu0 0.0
      %1665 = vmatprep.subr.mxu0 0.0
      %1666 = vmatpush2.msra.mxu0 0.0
      %1667 = vmatprep.mubr.f32.mxu0 0.0
      %1668 = vmatmul.mubr.f32.gmra.mxu0 %v1598
      %v1669 = vpop.f32.mrf.mxu0
      %v1670 = vadd.f32 0.0, %v1669
      %v1671 = vpop.f32.mrf.mxu0
      %v1672 = vadd.f32 0.0, %v1671
      %1673 = vmatprep.mubr.f32.mxu0 0.0
      %1674 = vmatmul.mubr.f32.gmra.mxu0 %v1601
      %v1675 = vpop.f32.mrf.mxu0
      %v1676 = vadd.f32 0.0, %v1675
      %v1677 = vpop.f32.mrf.mxu0
      %v1678 = vadd.f32 0.0, %v1677
      %1679 = vdwg.mxu0
      %1680 = vmatprep.subr.mxu0 0.0
      %1681 = vmatpush1.msra.mxu0 0.0
      %1682 = vmatprep.subr.mxu0 0.0
      %1683 = vmatpush1.msra.mxu0 0.0
      %1684 = vmatprep.subr.mxu0 0.0
      %1685 = vmatpush1.msra.mxu0 0.0
      %1686 = vmatprep.subr.mxu0 0.0
      %1687 = vmatpush1.msra.mxu0 0.0
      %1688 = vmatprep.subr.mxu0 0.0
      %1689 = vmatpush1.msra.mxu0 0.0
      %1690 = vmatprep.subr.mxu0 0.0
      %1691 = vmatpush1.msra.mxu0 0.0
      %1692 = vmatprep.subr.mxu0 0.0
      %1693 = vmatpush1.msra.mxu0 0.0
      %1694 = vmatprep.subr.mxu0 0.0
      %1695 = vmatpush1.msra.mxu0 0.0
      %1696 = vmatprep.subr.mxu0 0.0
      %1697 = vmatpush1.msra.mxu0 0.0
      %1698 = vmatprep.subr.mxu0 0.0
      %1699 = vmatpush1.msra.mxu0 0.0
      %1700 = vmatprep.subr.mxu0 0.0
      %1701 = vmatpush1.msra.mxu0 0.0
      %1702 = vmatprep.subr.mxu0 0.0
      %1703 = vmatpush1.msra.mxu0 0.0
      %1704 = vmatprep.subr.mxu0 0.0
      %1705 = vmatpush1.msra.mxu0 0.0
      %1706 = vmatprep.subr.mxu0 0.0
      %1707 = vmatpush1.msra.mxu0 0.0
      %1708 = vmatprep.subr.mxu0 0.0
      %1709 = vmatpush1.msra.mxu0 %v1585
      %1710 = vmatprep.subr.mxu0 0.0
      %1711 = vmatpush1.msra.mxu0 %v1579
      %1712 = vmatprep.subr.mxu0 0.0
      %1713 = vmatpush2.msra.mxu0 0.0
      %1714 = vmatprep.subr.mxu0 0.0
      %1715 = vmatpush2.msra.mxu0 0.0
      %1716 = vmatprep.subr.mxu0 0.0
      %1717 = vmatpush2.msra.mxu0 0.0
      %1718 = vmatprep.subr.mxu0 0.0
      %1719 = vmatpush2.msra.mxu0 0.0
      %1720 = vmatprep.subr.mxu0 0.0
      %1721 = vmatpush2.msra.mxu0 0.0
      %1722 = vmatprep.subr.mxu0 0.0
      %1723 = vmatpush2.msra.mxu0 0.0
      %1724 = vmatprep.subr.mxu0 0.0
      %1725 = vmatpush2.msra.mxu0 0.0
      %1726 = vmatprep.subr.mxu0 0.0
      %1727 = vmatpush2.msra.mxu0 0.0
      %1728 = vmatprep.subr.mxu0 0.0
      %1729 = vmatpush2.msra.mxu0 0.0
      %1730 = vmatprep.subr.mxu0 0.0
      %1731 = vmatpush2.msra.mxu0 0.0
      %1732 = vmatprep.subr.mxu0 0.0
      %1733 = vmatpush2.msra.mxu0 0.0
      %1734 = vmatprep.subr.mxu0 0.0
      %1735 = vmatpush2.msra.mxu0 0.0
      %1736 = vmatprep.subr.mxu0 0.0
      %1737 = vmatpush2.msra.mxu0 0.0
      %1738 = vmatprep.subr.mxu0 0.0
      %1739 = vmatpush2.msra.mxu0 0.0
      %1740 = vmatprep.subr.mxu0 0.0
      %1741 = vmatpush2.msra.mxu0 0.0
      %1742 = vmatprep.subr.mxu0 0.0
      %1743 = vmatpush2.msra.mxu0 0.0
      %1744 = vmatprep.mubr.f32.mxu0 0.0
      %1745 = vmatmul.mubr.f32.gmra.mxu0 %v1598
      %v1746 = vpop.f32.mrf.mxu0
      %v1747 = vadd.f32 0.0, %v1746
      %v1748 = vpop.f32.mrf.mxu0
      %1749 = vmatprep.mubr.f32.mxu0 0.0
      %1750 = vmatmul.mubr.f32.gmra.mxu0 %v1601
      %v1751 = vpop.f32.mrf.mxu0
      %v1752 = vadd.f32 0.0, %v1751
      %v1753 = vpop.f32.mrf.mxu0
      %1754 = vdwg.mxu0
      %v1755 = vadd.f32 %v1565, %v1670
      %v1756 = vadd.f32 %v1566, %v1672
      %v1757 = vadd.f32 %v1567, %v1747
      %v1758 = vadd.f32 %v1568, %v1676
      %v1759 = vadd.f32 %v1569, %v1678
      %v1760 = vadd.f32 %v1570, %v1752
      %s1761 = scalar_lea.vmem %s1, 128
      %v1762 = vld [vmem:[%s1761] sm:$0xff]
      %v1763 = vld [vmem:[%s1761 + $0x8] sm:$0xff]
      %1764 = vrot.lane.b32.xlu0 %v239, 109
      %v1765 = vpop.permute.xlu0 %1764
      %1766 = vrot.lane.b32.xlu0 %v240, 109
      %v1767 = vpop.permute.xlu0 %1766
      %1768 = vrot.lane.b32.xlu0 %v241, 109
      %v1769 = vpop.permute.xlu0 %1768
      %1770 = vrot.lane.b32.xlu0 %v243, 109
      %v1771 = vpop.permute.xlu0 %1770
      %1772 = vrot.lane.b32.xlu0 %v244, 109
      %v1773 = vpop.permute.xlu0 %1772
      %1774 = vrot.lane.b32.xlu0 %v245, 109
      %v1775 = vpop.permute.xlu0 %1774
      %vm1776 = vcmask 891904
      %v1777 = vsel %vm1776, %v1765, %v1767
      %v1778 = vsel %vm1776, %v1767, %v1769
      %v1779 = vsel %vm1776, %v1771, %v1773
      %v1780 = vsel %vm1776, %v1773, %v1775
      %v1788 = vsel %vm286, %v1762, 0
      %v1791 = vsel %vm286, %v1763, 0
      %1793 = vmatprep.subr.mxu0 0.0
      %1794 = vmatpush1.msra.mxu0 0.0
      %1795 = vmatprep.subr.mxu0 0.0
      %1796 = vmatpush1.msra.mxu0 0.0
      %1797 = vmatprep.subr.mxu0 0.0
      %1798 = vmatpush1.msra.mxu0 0.0
      %1799 = vmatprep.subr.mxu0 0.0
      %1800 = vmatpush1.msra.mxu0 0.0
      %1801 = vmatprep.subr.mxu0 0.0
      %1802 = vmatpush1.msra.mxu0 0.0
      %1803 = vmatprep.subr.mxu0 0.0
      %1804 = vmatpush1.msra.mxu0 0.0
      %1805 = vmatprep.subr.mxu0 0.0
      %1806 = vmatpush1.msra.mxu0 0.0
      %1807 = vmatprep.subr.mxu0 0.0
      %1808 = vmatpush1.msra.mxu0 0.0
      %1809 = vmatprep.subr.mxu0 0.0
      %1810 = vmatpush1.msra.mxu0 0.0
      %1811 = vmatprep.subr.mxu0 0.0
      %1812 = vmatpush1.msra.mxu0 0.0
      %1813 = vmatprep.subr.mxu0 0.0
      %1814 = vmatpush1.msra.mxu0 0.0
      %1815 = vmatprep.subr.mxu0 0.0
      %1816 = vmatpush1.msra.mxu0 0.0
      %1817 = vmatprep.subr.mxu0 0.0
      %1818 = vmatpush1.msra.mxu0 0.0
      %1819 = vmatprep.subr.mxu0 0.0
      %1820 = vmatpush1.msra.mxu0 0.0
      %1821 = vmatprep.subr.mxu0 %v1780
      %1822 = vmatpush1.msra.mxu0 %v1779
      %1823 = vmatprep.subr.mxu0 %v1778
      %1824 = vmatpush1.msra.mxu0 %v1777
      %1825 = vmatprep.subr.mxu0 0.0
      %1826 = vmatpush2.msra.mxu0 0.0
      %1827 = vmatprep.subr.mxu0 0.0
      %1828 = vmatpush2.msra.mxu0 0.0
      %1829 = vmatprep.subr.mxu0 0.0
      %1830 = vmatpush2.msra.mxu0 0.0
      %1831 = vmatprep.subr.mxu0 0.0
      %1832 = vmatpush2.msra.mxu0 0.0
      %1833 = vmatprep.subr.mxu0 0.0
      %1834 = vmatpush2.msra.mxu0 0.0
      %1835 = vmatprep.subr.mxu0 0.0
      %1836 = vmatpush2.msra.mxu0 0.0
      %1837 = vmatprep.subr.mxu0 0.0
      %1838 = vmatpush2.msra.mxu0 0.0
      %1839 = vmatprep.subr.mxu0 0.0
      %1840 = vmatpush2.msra.mxu0 0.0
      %1841 = vmatprep.subr.mxu0 0.0
      %1842 = vmatpush2.msra.mxu0 0.0
      %1843 = vmatprep.subr.mxu0 0.0
      %1844 = vmatpush2.msra.mxu0 0.0
      %1845 = vmatprep.subr.mxu0 0.0
      %1846 = vmatpush2.msra.mxu0 0.0
      %1847 = vmatprep.subr.mxu0 0.0
      %1848 = vmatpush2.msra.mxu0 0.0
      %1849 = vmatprep.subr.mxu0 0.0
      %1850 = vmatpush2.msra.mxu0 0.0
      %1851 = vmatprep.subr.mxu0 0.0
      %1852 = vmatpush2.msra.mxu0 0.0
      %1853 = vmatprep.subr.mxu0 0.0
      %1854 = vmatpush2.msra.mxu0 0.0
      %1855 = vmatprep.subr.mxu0 0.0
      %1856 = vmatpush2.msra.mxu0 0.0
      %1857 = vmatprep.mubr.f32.mxu0 0.0
      %1858 = vmatmul.mubr.f32.gmra.mxu0 %v1788
      %v1859 = vpop.f32.mrf.mxu0
      %v1860 = vadd.f32 0.0, %v1859
      %v1861 = vpop.f32.mrf.mxu0
      %v1862 = vadd.f32 0.0, %v1861
      %1863 = vmatprep.mubr.f32.mxu0 0.0
      %1864 = vmatmul.mubr.f32.gmra.mxu0 %v1791
      %v1865 = vpop.f32.mrf.mxu0
      %v1866 = vadd.f32 0.0, %v1865
      %v1867 = vpop.f32.mrf.mxu0
      %v1868 = vadd.f32 0.0, %v1867
      %1869 = vdwg.mxu0
      %1870 = vmatprep.subr.mxu0 0.0
      %1871 = vmatpush1.msra.mxu0 0.0
      %1872 = vmatprep.subr.mxu0 0.0
      %1873 = vmatpush1.msra.mxu0 0.0
      %1874 = vmatprep.subr.mxu0 0.0
      %1875 = vmatpush1.msra.mxu0 0.0
      %1876 = vmatprep.subr.mxu0 0.0
      %1877 = vmatpush1.msra.mxu0 0.0
      %1878 = vmatprep.subr.mxu0 0.0
      %1879 = vmatpush1.msra.mxu0 0.0
      %1880 = vmatprep.subr.mxu0 0.0
      %1881 = vmatpush1.msra.mxu0 0.0
      %1882 = vmatprep.subr.mxu0 0.0
      %1883 = vmatpush1.msra.mxu0 0.0
      %1884 = vmatprep.subr.mxu0 0.0
      %1885 = vmatpush1.msra.mxu0 0.0
      %1886 = vmatprep.subr.mxu0 0.0
      %1887 = vmatpush1.msra.mxu0 0.0
      %1888 = vmatprep.subr.mxu0 0.0
      %1889 = vmatpush1.msra.mxu0 0.0
      %1890 = vmatprep.subr.mxu0 0.0
      %1891 = vmatpush1.msra.mxu0 0.0
      %1892 = vmatprep.subr.mxu0 0.0
      %1893 = vmatpush1.msra.mxu0 0.0
      %1894 = vmatprep.subr.mxu0 0.0
      %1895 = vmatpush1.msra.mxu0 0.0
      %1896 = vmatprep.subr.mxu0 0.0
      %1897 = vmatpush1.msra.mxu0 0.0
      %1898 = vmatprep.subr.mxu0 0.0
      %1899 = vmatpush1.msra.mxu0 %v1775
      %1900 = vmatprep.subr.mxu0 0.0
      %1901 = vmatpush1.msra.mxu0 %v1769
      %1902 = vmatprep.subr.mxu0 0.0
      %1903 = vmatpush2.msra.mxu0 0.0
      %1904 = vmatprep.subr.mxu0 0.0
      %1905 = vmatpush2.msra.mxu0 0.0
      %1906 = vmatprep.subr.mxu0 0.0
      %1907 = vmatpush2.msra.mxu0 0.0
      %1908 = vmatprep.subr.mxu0 0.0
      %1909 = vmatpush2.msra.mxu0 0.0
      %1910 = vmatprep.subr.mxu0 0.0
      %1911 = vmatpush2.msra.mxu0 0.0
      %1912 = vmatprep.subr.mxu0 0.0
      %1913 = vmatpush2.msra.mxu0 0.0
      %1914 = vmatprep.subr.mxu0 0.0
      %1915 = vmatpush2.msra.mxu0 0.0
      %1916 = vmatprep.subr.mxu0 0.0
      %1917 = vmatpush2.msra.mxu0 0.0
      %1918 = vmatprep.subr.mxu0 0.0
      %1919 = vmatpush2.msra.mxu0 0.0
      %1920 = vmatprep.subr.mxu0 0.0
      %1921 = vmatpush2.msra.mxu0 0.0
      %1922 = vmatprep.subr.mxu0 0.0
      %1923 = vmatpush2.msra.mxu0 0.0
      %1924 = vmatprep.subr.mxu0 0.0
      %1925 = vmatpush2.msra.mxu0 0.0
      %1926 = vmatprep.subr.mxu0 0.0
      %1927 = vmatpush2.msra.mxu0 0.0
      %1928 = vmatprep.subr.mxu0 0.0
      %1929 = vmatpush2.msra.mxu0 0.0
      %1930 = vmatprep.subr.mxu0 0.0
      %1931 = vmatpush2.msra.mxu0 0.0
      %1932 = vmatprep.subr.mxu0 0.0
      %1933 = vmatpush2.msra.mxu0 0.0
      %1934 = vmatprep.mubr.f32.mxu0 0.0
      %1935 = vmatmul.mubr.f32.gmra.mxu0 %v1788
      %v1936 = vpop.f32.mrf.mxu0
      %v1937 = vadd.f32 0.0, %v1936
      %v1938 = vpop.f32.mrf.mxu0
      %1939 = vmatprep.mubr.f32.mxu0 0.0
      %1940 = vmatmul.mubr.f32.gmra.mxu0 %v1791
      %v1941 = vpop.f32.mrf.mxu0
      %v1942 = vadd.f32 0.0, %v1941
      %v1943 = vpop.f32.mrf.mxu0
      %1944 = vdwg.mxu0
      %v1945 = vadd.f32 %v1755, %v1860
      %v1946 = vadd.f32 %v1756, %v1862
      %v1947 = vadd.f32 %v1757, %v1937
      %v1948 = vadd.f32 %v1758, %v1866
      %v1949 = vadd.f32 %v1759, %v1868
      %v1950 = vadd.f32 %v1760, %v1942
      %v1951 = vld [vmem:[%s2] sm:$0xff]
      %v1952 = vld [vmem:[%s2 + $0x8] sm:$0xff]
      %1954 = vset.pattern.permute.xlu0 0
      %1955 = vperm.xlu0 %1954, %v1951
      %v1956 = vpop.permute.xlu0 %1955
      %1959 = vset.pattern.permute.xlu0 0
      %1960 = vperm.xlu0 %1959, %v1952
      %v1961 = vpop.permute.xlu0 %1960
      %v1963 = vadd.f32 %v1945, %v1956
      %v1964 = vadd.f32 %v1946, %v1956
      %v1965 = vadd.f32 %v1947, %v1956
      %v1966 = vadd.f32 %v1948, %v1961
      %v1967 = vadd.f32 %v1949, %v1961
      %v1968 = vadd.f32 %v1950, %v1961
      %v1969 = vmax.f32 %v1963, 0.0
      %v1970 = vmax.f32 %v1964, 0.0
      %v1971 = vmax.f32 %v1965, 0.0
      %v1972 = vmax.f32 %v1966, 0.0
      %v1973 = vmax.f32 %v1967, 0.0
      %v1974 = vmax.f32 %v1968, 0.0
      %v1975 = vmul.f32 %v1969, %v203
      %v1976 = vmul.f32 %v1970, %v207
      %v1977 = vmul.f32 %v1971, %v211
      %v1978 = vmul.f32 %v1972, %v203
      %v1979 = vmul.f32 %v1973, %v207
      %v1980 = vmul.f32 %v1974, %v211
      %1981 = vst [vmem:[#allocation3 + $0x8] sm:$0xff] %v1975
      %1982 = vst [vmem:[#allocation3 + $0x10] sm:$0xff] %v1976
      %vm1983 = vcmask 261120
      %1984 = vst.msk [vmem:[#allocation3 + $0x18] sm:$0xff] %vm1983, %v1977
      %1985 = vst [vmem:[#allocation3 + $0x28] sm:$0xff] %v1978
      %1986 = vst [vmem:[#allocation3 + $0x30] sm:$0xff] %v1979
      %1987 = vst.msk [vmem:[#allocation3 + $0x38] sm:$0xff] %vm1983, %v1980
      %s1988 = scalar_lea.vmem %s1, 144
      %v1989 = vld [vmem:[%s1988] sm:$0xff]
      %v1990 = vld [vmem:[%s1988 + $0x8] sm:$0xff]
      %v1991 = vld [vmem:[#allocation3] sm:$0xff]
      %v1992 = vld [vmem:[#allocation3 + $0x8] sm:$0xff]
      %v1993 = vld [vmem:[#allocation3 + $0x10] sm:$0xff]
      %v1994 = vld [vmem:[#allocation3 + $0x18] sm:$0xff]
      %v1995 = vld [vmem:[#allocation3 + $0x20] sm:$0xff]
      %v1996 = vld [vmem:[#allocation3 + $0x28] sm:$0xff]
      %v1997 = vld [vmem:[#allocation3 + $0x30] sm:$0xff]
      %v1998 = vld [vmem:[#allocation3 + $0x38] sm:$0xff]
      %s1999 = scalar_lea.vmem %s1, 160
      %v2000 = vld [vmem:[%s1999] sm:$0xff]
      %v2001 = vld [vmem:[%s1999 + $0x8] sm:$0xff]
      %2010 = vrot.lane.b32.xlu0 %v1991, 18
      %v2011 = vpop.permute.xlu0 %2010
      %2012 = vrot.lane.b32.xlu0 %v1992, 18
      %v2013 = vpop.permute.xlu0 %2012
      %2014 = vrot.lane.b32.xlu0 %v1993, 18
      %v2015 = vpop.permute.xlu0 %2014
      %2016 = vrot.lane.b32.xlu0 %v1994, 18
      %v2017 = vpop.permute.xlu0 %2016
      %2018 = vrot.lane.b32.xlu0 %v1995, 18
      %v2019 = vpop.permute.xlu0 %2018
      %2020 = vrot.lane.b32.xlu0 %v1996, 18
      %v2021 = vpop.permute.xlu0 %2020
      %2022 = vrot.lane.b32.xlu0 %v1997, 18
      %v2023 = vpop.permute.xlu0 %2022
      %2024 = vrot.lane.b32.xlu0 %v1998, 18
      %v2025 = vpop.permute.xlu0 %2024
      %v2026 = vsel %vm273, %v2011, %v2013
      %v2027 = vsel %vm273, %v2013, %v2015
      %v2028 = vsel %vm273, %v2015, %v2017
      %v2029 = vsel %vm273, %v2019, %v2021
      %v2030 = vsel %vm273, %v2021, %v2023
      %v2031 = vsel %vm273, %v2023, %v2025
      %v2039 = vsel %vm286, %v2000, 0
      %v2042 = vsel %vm286, %v2001, 0
      %2044 = vmatprep.subr.mxu0 0.0
      %2045 = vmatpush1.msra.mxu0 0.0
      %2046 = vmatprep.subr.mxu0 0.0
      %2047 = vmatpush1.msra.mxu0 0.0
      %2048 = vmatprep.subr.mxu0 0.0
      %2049 = vmatpush1.msra.mxu0 0.0
      %2050 = vmatprep.subr.mxu0 0.0
      %2051 = vmatpush1.msra.mxu0 0.0
      %2052 = vmatprep.subr.mxu0 0.0
      %2053 = vmatpush1.msra.mxu0 0.0
      %2054 = vmatprep.subr.mxu0 0.0
      %2055 = vmatpush1.msra.mxu0 0.0
      %2056 = vmatprep.subr.mxu0 0.0
      %2057 = vmatpush1.msra.mxu0 0.0
      %2058 = vmatprep.subr.mxu0 0.0
      %2059 = vmatpush1.msra.mxu0 0.0
      %2060 = vmatprep.subr.mxu0 0.0
      %2061 = vmatpush1.msra.mxu0 0.0
      %2062 = vmatprep.subr.mxu0 0.0
      %2063 = vmatpush1.msra.mxu0 0.0
      %2064 = vmatprep.subr.mxu0 0.0
      %2065 = vmatpush1.msra.mxu0 0.0
      %2066 = vmatprep.subr.mxu0 0.0
      %2067 = vmatpush1.msra.mxu0 0.0
      %2068 = vmatprep.subr.mxu0 0.0
      %2069 = vmatpush1.msra.mxu0 0.0
      %2070 = vmatprep.subr.mxu0 0.0
      %2071 = vmatpush1.msra.mxu0 0.0
      %2072 = vmatprep.subr.mxu0 %v2030
      %2073 = vmatpush1.msra.mxu0 %v2029
      %2074 = vmatprep.subr.mxu0 %v2027
      %2075 = vmatpush1.msra.mxu0 %v2026
      %2076 = vmatprep.subr.mxu0 0.0
      %2077 = vmatpush2.msra.mxu0 0.0
      %2078 = vmatprep.subr.mxu0 0.0
      %2079 = vmatpush2.msra.mxu0 0.0
      %2080 = vmatprep.subr.mxu0 0.0
      %2081 = vmatpush2.msra.mxu0 0.0
      %2082 = vmatprep.subr.mxu0 0.0
      %2083 = vmatpush2.msra.mxu0 0.0
      %2084 = vmatprep.subr.mxu0 0.0
      %2085 = vmatpush2.msra.mxu0 0.0
      %2086 = vmatprep.subr.mxu0 0.0
      %2087 = vmatpush2.msra.mxu0 0.0
      %2088 = vmatprep.subr.mxu0 0.0
      %2089 = vmatpush2.msra.mxu0 0.0
      %2090 = vmatprep.subr.mxu0 0.0
      %2091 = vmatpush2.msra.mxu0 0.0
      %2092 = vmatprep.subr.mxu0 0.0
      %2093 = vmatpush2.msra.mxu0 0.0
      %2094 = vmatprep.subr.mxu0 0.0
      %2095 = vmatpush2.msra.mxu0 0.0
      %2096 = vmatprep.subr.mxu0 0.0
      %2097 = vmatpush2.msra.mxu0 0.0
      %2098 = vmatprep.subr.mxu0 0.0
      %2099 = vmatpush2.msra.mxu0 0.0
      %2100 = vmatprep.subr.mxu0 0.0
      %2101 = vmatpush2.msra.mxu0 0.0
      %2102 = vmatprep.subr.mxu0 0.0
      %2103 = vmatpush2.msra.mxu0 0.0
      %2104 = vmatprep.subr.mxu0 0.0
      %2105 = vmatpush2.msra.mxu0 0.0
      %2106 = vmatprep.subr.mxu0 0.0
      %2107 = vmatpush2.msra.mxu0 0.0
      %2108 = vmatprep.mubr.f32.mxu0 0.0
      %2109 = vmatmul.mubr.f32.gmra.mxu0 %v2039
      %v2110 = vpop.f32.mrf.mxu0
      %v2111 = vadd.f32 0.0, %v2110
      %v2112 = vpop.f32.mrf.mxu0
      %v2113 = vadd.f32 0.0, %v2112
      %2114 = vmatprep.mubr.f32.mxu0 0.0
      %2115 = vmatmul.mubr.f32.gmra.mxu0 %v2042
      %v2116 = vpop.f32.mrf.mxu0
      %v2117 = vadd.f32 0.0, %v2116
      %v2118 = vpop.f32.mrf.mxu0
      %v2119 = vadd.f32 0.0, %v2118
      %2120 = vdwg.mxu0
      %2121 = vmatprep.subr.mxu0 0.0
      %2122 = vmatpush1.msra.mxu0 0.0
      %2123 = vmatprep.subr.mxu0 0.0
      %2124 = vmatpush1.msra.mxu0 0.0
      %2125 = vmatprep.subr.mxu0 0.0
      %2126 = vmatpush1.msra.mxu0 0.0
      %2127 = vmatprep.subr.mxu0 0.0
      %2128 = vmatpush1.msra.mxu0 0.0
      %2129 = vmatprep.subr.mxu0 0.0
      %2130 = vmatpush1.msra.mxu0 0.0
      %2131 = vmatprep.subr.mxu0 0.0
      %2132 = vmatpush1.msra.mxu0 0.0
      %2133 = vmatprep.subr.mxu0 0.0
      %2134 = vmatpush1.msra.mxu0 0.0
      %2135 = vmatprep.subr.mxu0 0.0
      %2136 = vmatpush1.msra.mxu0 0.0
      %2137 = vmatprep.subr.mxu0 0.0
      %2138 = vmatpush1.msra.mxu0 0.0
      %2139 = vmatprep.subr.mxu0 0.0
      %2140 = vmatpush1.msra.mxu0 0.0
      %2141 = vmatprep.subr.mxu0 0.0
      %2142 = vmatpush1.msra.mxu0 0.0
      %2143 = vmatprep.subr.mxu0 0.0
      %2144 = vmatpush1.msra.mxu0 0.0
      %2145 = vmatprep.subr.mxu0 0.0
      %2146 = vmatpush1.msra.mxu0 0.0
      %2147 = vmatprep.subr.mxu0 0.0
      %2148 = vmatpush1.msra.mxu0 0.0
      %2149 = vmatprep.subr.mxu0 0.0
      %2150 = vmatpush1.msra.mxu0 %v2031
      %2151 = vmatprep.subr.mxu0 0.0
      %2152 = vmatpush1.msra.mxu0 %v2028
      %2153 = vmatprep.subr.mxu0 0.0
      %2154 = vmatpush2.msra.mxu0 0.0
      %2155 = vmatprep.subr.mxu0 0.0
      %2156 = vmatpush2.msra.mxu0 0.0
      %2157 = vmatprep.subr.mxu0 0.0
      %2158 = vmatpush2.msra.mxu0 0.0
      %2159 = vmatprep.subr.mxu0 0.0
      %2160 = vmatpush2.msra.mxu0 0.0
      %2161 = vmatprep.subr.mxu0 0.0
      %2162 = vmatpush2.msra.mxu0 0.0
      %2163 = vmatprep.subr.mxu0 0.0
      %2164 = vmatpush2.msra.mxu0 0.0
      %2165 = vmatprep.subr.mxu0 0.0
      %2166 = vmatpush2.msra.mxu0 0.0
      %2167 = vmatprep.subr.mxu0 0.0
      %2168 = vmatpush2.msra.mxu0 0.0
      %2169 = vmatprep.subr.mxu0 0.0
      %2170 = vmatpush2.msra.mxu0 0.0
      %2171 = vmatprep.subr.mxu0 0.0
      %2172 = vmatpush2.msra.mxu0 0.0
      %2173 = vmatprep.subr.mxu0 0.0
      %2174 = vmatpush2.msra.mxu0 0.0
      %2175 = vmatprep.subr.mxu0 0.0
      %2176 = vmatpush2.msra.mxu0 0.0
      %2177 = vmatprep.subr.mxu0 0.0
      %2178 = vmatpush2.msra.mxu0 0.0
      %2179 = vmatprep.subr.mxu0 0.0
      %2180 = vmatpush2.msra.mxu0 0.0
      %2181 = vmatprep.subr.mxu0 0.0
      %2182 = vmatpush2.msra.mxu0 0.0
      %2183 = vmatprep.subr.mxu0 0.0
      %2184 = vmatpush2.msra.mxu0 0.0
      %2185 = vmatprep.mubr.f32.mxu0 0.0
      %2186 = vmatmul.mubr.f32.gmra.mxu0 %v2039
      %v2187 = vpop.f32.mrf.mxu0
      %v2188 = vadd.f32 0.0, %v2187
      %v2189 = vpop.f32.mrf.mxu0
      %2190 = vmatprep.mubr.f32.mxu0 0.0
      %2191 = vmatmul.mubr.f32.gmra.mxu0 %v2042
      %v2192 = vpop.f32.mrf.mxu0
      %v2193 = vadd.f32 0.0, %v2192
      %v2194 = vpop.f32.mrf.mxu0
      %2195 = vdwg.mxu0
      %2196 = vrot.lane.b32.xlu0 %v1991, 19
      %v2197 = vpop.permute.xlu0 %2196
      %2198 = vrot.lane.b32.xlu0 %v1992, 19
      %v2199 = vpop.permute.xlu0 %2198
      %2200 = vrot.lane.b32.xlu0 %v1993, 19
      %v2201 = vpop.permute.xlu0 %2200
      %2202 = vrot.lane.b32.xlu0 %v1994, 19
      %v2203 = vpop.permute.xlu0 %2202
      %2204 = vrot.lane.b32.xlu0 %v1995, 19
      %v2205 = vpop.permute.xlu0 %2204
      %2206 = vrot.lane.b32.xlu0 %v1996, 19
      %v2207 = vpop.permute.xlu0 %2206
      %2208 = vrot.lane.b32.xlu0 %v1997, 19
      %v2209 = vpop.permute.xlu0 %2208
      %2210 = vrot.lane.b32.xlu0 %v1998, 19
      %v2211 = vpop.permute.xlu0 %2210
      %v2212 = vsel %vm461, %v2197, %v2199
      %v2213 = vsel %vm461, %v2199, %v2201
      %v2214 = vsel %vm461, %v2201, %v2203
      %v2215 = vsel %vm461, %v2205, %v2207
      %v2216 = vsel %vm461, %v2207, %v2209
      %v2217 = vsel %vm461, %v2209, %v2211
      %v2225 = vsel %vm286, %v1989, 0
      %v2228 = vsel %vm286, %v1990, 0
      %2230 = vmatprep.subr.mxu0 0.0
      %2231 = vmatpush1.msra.mxu0 0.0
      %2232 = vmatprep.subr.mxu0 0.0
      %2233 = vmatpush1.msra.mxu0 0.0
      %2234 = vmatprep.subr.mxu0 0.0
      %2235 = vmatpush1.msra.mxu0 0.0
      %2236 = vmatprep.subr.mxu0 0.0
      %2237 = vmatpush1.msra.mxu0 0.0
      %2238 = vmatprep.subr.mxu0 0.0
      %2239 = vmatpush1.msra.mxu0 0.0
      %2240 = vmatprep.subr.mxu0 0.0
      %2241 = vmatpush1.msra.mxu0 0.0
      %2242 = vmatprep.subr.mxu0 0.0
      %2243 = vmatpush1.msra.mxu0 0.0
      %2244 = vmatprep.subr.mxu0 0.0
      %2245 = vmatpush1.msra.mxu0 0.0
      %2246 = vmatprep.subr.mxu0 0.0
      %2247 = vmatpush1.msra.mxu0 0.0
      %2248 = vmatprep.subr.mxu0 0.0
      %2249 = vmatpush1.msra.mxu0 0.0
      %2250 = vmatprep.subr.mxu0 0.0
      %2251 = vmatpush1.msra.mxu0 0.0
      %2252 = vmatprep.subr.mxu0 0.0
      %2253 = vmatpush1.msra.mxu0 0.0
      %2254 = vmatprep.subr.mxu0 0.0
      %2255 = vmatpush1.msra.mxu0 0.0
      %2256 = vmatprep.subr.mxu0 0.0
      %2257 = vmatpush1.msra.mxu0 0.0
      %2258 = vmatprep.subr.mxu0 %v2216
      %2259 = vmatpush1.msra.mxu0 %v2215
      %2260 = vmatprep.subr.mxu0 %v2213
      %2261 = vmatpush1.msra.mxu0 %v2212
      %2262 = vmatprep.subr.mxu0 0.0
      %2263 = vmatpush2.msra.mxu0 0.0
      %2264 = vmatprep.subr.mxu0 0.0
      %2265 = vmatpush2.msra.mxu0 0.0
      %2266 = vmatprep.subr.mxu0 0.0
      %2267 = vmatpush2.msra.mxu0 0.0
      %2268 = vmatprep.subr.mxu0 0.0
      %2269 = vmatpush2.msra.mxu0 0.0
      %2270 = vmatprep.subr.mxu0 0.0
      %2271 = vmatpush2.msra.mxu0 0.0
      %2272 = vmatprep.subr.mxu0 0.0
      %2273 = vmatpush2.msra.mxu0 0.0
      %2274 = vmatprep.subr.mxu0 0.0
      %2275 = vmatpush2.msra.mxu0 0.0
      %2276 = vmatprep.subr.mxu0 0.0
      %2277 = vmatpush2.msra.mxu0 0.0
      %2278 = vmatprep.subr.mxu0 0.0
      %2279 = vmatpush2.msra.mxu0 0.0
      %2280 = vmatprep.subr.mxu0 0.0
      %2281 = vmatpush2.msra.mxu0 0.0
      %2282 = vmatprep.subr.mxu0 0.0
      %2283 = vmatpush2.msra.mxu0 0.0
      %2284 = vmatprep.subr.mxu0 0.0
      %2285 = vmatpush2.msra.mxu0 0.0
      %2286 = vmatprep.subr.mxu0 0.0
      %2287 = vmatpush2.msra.mxu0 0.0
      %2288 = vmatprep.subr.mxu0 0.0
      %2289 = vmatpush2.msra.mxu0 0.0
      %2290 = vmatprep.subr.mxu0 0.0
      %2291 = vmatpush2.msra.mxu0 0.0
      %2292 = vmatprep.subr.mxu0 0.0
      %2293 = vmatpush2.msra.mxu0 0.0
      %2294 = vmatprep.mubr.f32.mxu0 0.0
      %2295 = vmatmul.mubr.f32.gmra.mxu0 %v2225
      %v2296 = vpop.f32.mrf.mxu0
      %v2297 = vadd.f32 %v2111, %v2296
      %v2298 = vpop.f32.mrf.mxu0
      %v2299 = vadd.f32 %v2113, %v2298
      %2300 = vmatprep.mubr.f32.mxu0 0.0
      %2301 = vmatmul.mubr.f32.gmra.mxu0 %v2228
      %v2302 = vpop.f32.mrf.mxu0
      %v2303 = vadd.f32 %v2117, %v2302
      %v2304 = vpop.f32.mrf.mxu0
      %v2305 = vadd.f32 %v2119, %v2304
      %2306 = vdwg.mxu0
      %2307 = vmatprep.subr.mxu0 0.0
      %2308 = vmatpush1.msra.mxu0 0.0
      %2309 = vmatprep.subr.mxu0 0.0
      %2310 = vmatpush1.msra.mxu0 0.0
      %2311 = vmatprep.subr.mxu0 0.0
      %2312 = vmatpush1.msra.mxu0 0.0
      %2313 = vmatprep.subr.mxu0 0.0
      %2314 = vmatpush1.msra.mxu0 0.0
      %2315 = vmatprep.subr.mxu0 0.0
      %2316 = vmatpush1.msra.mxu0 0.0
      %2317 = vmatprep.subr.mxu0 0.0
      %2318 = vmatpush1.msra.mxu0 0.0
      %2319 = vmatprep.subr.mxu0 0.0
      %2320 = vmatpush1.msra.mxu0 0.0
      %2321 = vmatprep.subr.mxu0 0.0
      %2322 = vmatpush1.msra.mxu0 0.0
      %2323 = vmatprep.subr.mxu0 0.0
      %2324 = vmatpush1.msra.mxu0 0.0
      %2325 = vmatprep.subr.mxu0 0.0
      %2326 = vmatpush1.msra.mxu0 0.0
      %2327 = vmatprep.subr.mxu0 0.0
      %2328 = vmatpush1.msra.mxu0 0.0
      %2329 = vmatprep.subr.mxu0 0.0
      %2330 = vmatpush1.msra.mxu0 0.0
      %2331 = vmatprep.subr.mxu0 0.0
      %2332 = vmatpush1.msra.mxu0 0.0
      %2333 = vmatprep.subr.mxu0 0.0
      %2334 = vmatpush1.msra.mxu0 0.0
      %2335 = vmatprep.subr.mxu0 0.0
      %2336 = vmatpush1.msra.mxu0 %v2217
      %2337 = vmatprep.subr.mxu0 0.0
      %2338 = vmatpush1.msra.mxu0 %v2214
      %2339 = vmatprep.subr.mxu0 0.0
      %2340 = vmatpush2.msra.mxu0 0.0
      %2341 = vmatprep.subr.mxu0 0.0
      %2342 = vmatpush2.msra.mxu0 0.0
      %2343 = vmatprep.subr.mxu0 0.0
      %2344 = vmatpush2.msra.mxu0 0.0
      %2345 = vmatprep.subr.mxu0 0.0
      %2346 = vmatpush2.msra.mxu0 0.0
      %2347 = vmatprep.subr.mxu0 0.0
      %2348 = vmatpush2.msra.mxu0 0.0
      %2349 = vmatprep.subr.mxu0 0.0
      %2350 = vmatpush2.msra.mxu0 0.0
      %2351 = vmatprep.subr.mxu0 0.0
      %2352 = vmatpush2.msra.mxu0 0.0
      %2353 = vmatprep.subr.mxu0 0.0
      %2354 = vmatpush2.msra.mxu0 0.0
      %2355 = vmatprep.subr.mxu0 0.0
      %2356 = vmatpush2.msra.mxu0 0.0
      %2357 = vmatprep.subr.mxu0 0.0
      %2358 = vmatpush2.msra.mxu0 0.0
      %2359 = vmatprep.subr.mxu0 0.0
      %2360 = vmatpush2.msra.mxu0 0.0
      %2361 = vmatprep.subr.mxu0 0.0
      %2362 = vmatpush2.msra.mxu0 0.0
      %2363 = vmatprep.subr.mxu0 0.0
      %2364 = vmatpush2.msra.mxu0 0.0
      %2365 = vmatprep.subr.mxu0 0.0
      %2366 = vmatpush2.msra.mxu0 0.0
      %2367 = vmatprep.subr.mxu0 0.0
      %2368 = vmatpush2.msra.mxu0 0.0
      %2369 = vmatprep.subr.mxu0 0.0
      %2370 = vmatpush2.msra.mxu0 0.0
      %2371 = vmatprep.mubr.f32.mxu0 0.0
      %2372 = vmatmul.mubr.f32.gmra.mxu0 %v2225
      %v2373 = vpop.f32.mrf.mxu0
      %v2374 = vadd.f32 %v2188, %v2373
      %v2375 = vpop.f32.mrf.mxu0
      %2376 = vmatprep.mubr.f32.mxu0 0.0
      %2377 = vmatmul.mubr.f32.gmra.mxu0 %v2228
      %v2378 = vpop.f32.mrf.mxu0
      %v2379 = vadd.f32 %v2193, %v2378
      %v2380 = vpop.f32.mrf.mxu0
      %2381 = vdwg.mxu0
      %s2382 = scalar_lea.vmem %s1, 176
      %v2383 = vld [vmem:[%s2382] sm:$0xff]
      %v2384 = vld [vmem:[%s2382 + $0x8] sm:$0xff]
      %2385 = vrot.lane.b32.xlu0 %v1991, 17
      %v2386 = vpop.permute.xlu0 %2385
      %2387 = vrot.lane.b32.xlu0 %v1992, 17
      %v2388 = vpop.permute.xlu0 %2387
      %2389 = vrot.lane.b32.xlu0 %v1993, 17
      %v2390 = vpop.permute.xlu0 %2389
      %2391 = vrot.lane.b32.xlu0 %v1994, 17
      %v2392 = vpop.permute.xlu0 %2391
      %2393 = vrot.lane.b32.xlu0 %v1995, 17
      %v2394 = vpop.permute.xlu0 %2393
      %2395 = vrot.lane.b32.xlu0 %v1996, 17
      %v2396 = vpop.permute.xlu0 %2395
      %2397 = vrot.lane.b32.xlu0 %v1997, 17
      %v2398 = vpop.permute.xlu0 %2397
      %2399 = vrot.lane.b32.xlu0 %v1998, 17
      %v2400 = vpop.permute.xlu0 %2399
      %v2401 = vsel %vm651, %v2386, %v2388
      %v2402 = vsel %vm651, %v2388, %v2390
      %v2403 = vsel %vm651, %v2390, %v2392
      %v2404 = vsel %vm651, %v2394, %v2396
      %v2405 = vsel %vm651, %v2396, %v2398
      %v2406 = vsel %vm651, %v2398, %v2400
      %v2414 = vsel %vm286, %v2383, 0
      %v2417 = vsel %vm286, %v2384, 0
      %2419 = vmatprep.subr.mxu0 0.0
      %2420 = vmatpush1.msra.mxu0 0.0
      %2421 = vmatprep.subr.mxu0 0.0
      %2422 = vmatpush1.msra.mxu0 0.0
      %2423 = vmatprep.subr.mxu0 0.0
      %2424 = vmatpush1.msra.mxu0 0.0
      %2425 = vmatprep.subr.mxu0 0.0
      %2426 = vmatpush1.msra.mxu0 0.0
      %2427 = vmatprep.subr.mxu0 0.0
      %2428 = vmatpush1.msra.mxu0 0.0
      %2429 = vmatprep.subr.mxu0 0.0
      %2430 = vmatpush1.msra.mxu0 0.0
      %2431 = vmatprep.subr.mxu0 0.0
      %2432 = vmatpush1.msra.mxu0 0.0
      %2433 = vmatprep.subr.mxu0 0.0
      %2434 = vmatpush1.msra.mxu0 0.0
      %2435 = vmatprep.subr.mxu0 0.0
      %2436 = vmatpush1.msra.mxu0 0.0
      %2437 = vmatprep.subr.mxu0 0.0
      %2438 = vmatpush1.msra.mxu0 0.0
      %2439 = vmatprep.subr.mxu0 0.0
      %2440 = vmatpush1.msra.mxu0 0.0
      %2441 = vmatprep.subr.mxu0 0.0
      %2442 = vmatpush1.msra.mxu0 0.0
      %2443 = vmatprep.subr.mxu0 0.0
      %2444 = vmatpush1.msra.mxu0 0.0
      %2445 = vmatprep.subr.mxu0 0.0
      %2446 = vmatpush1.msra.mxu0 0.0
      %2447 = vmatprep.subr.mxu0 %v2405
      %2448 = vmatpush1.msra.mxu0 %v2404
      %2449 = vmatprep.subr.mxu0 %v2402
      %2450 = vmatpush1.msra.mxu0 %v2401
      %2451 = vmatprep.subr.mxu0 0.0
      %2452 = vmatpush2.msra.mxu0 0.0
      %2453 = vmatprep.subr.mxu0 0.0
      %2454 = vmatpush2.msra.mxu0 0.0
      %2455 = vmatprep.subr.mxu0 0.0
      %2456 = vmatpush2.msra.mxu0 0.0
      %2457 = vmatprep.subr.mxu0 0.0
      %2458 = vmatpush2.msra.mxu0 0.0
      %2459 = vmatprep.subr.mxu0 0.0
      %2460 = vmatpush2.msra.mxu0 0.0
      %2461 = vmatprep.subr.mxu0 0.0
      %2462 = vmatpush2.msra.mxu0 0.0
      %2463 = vmatprep.subr.mxu0 0.0
      %2464 = vmatpush2.msra.mxu0 0.0
      %2465 = vmatprep.subr.mxu0 0.0
      %2466 = vmatpush2.msra.mxu0 0.0
      %2467 = vmatprep.subr.mxu0 0.0
      %2468 = vmatpush2.msra.mxu0 0.0
      %2469 = vmatprep.subr.mxu0 0.0
      %2470 = vmatpush2.msra.mxu0 0.0
      %2471 = vmatprep.subr.mxu0 0.0
      %2472 = vmatpush2.msra.mxu0 0.0
      %2473 = vmatprep.subr.mxu0 0.0
      %2474 = vmatpush2.msra.mxu0 0.0
      %2475 = vmatprep.subr.mxu0 0.0
      %2476 = vmatpush2.msra.mxu0 0.0
      %2477 = vmatprep.subr.mxu0 0.0
      %2478 = vmatpush2.msra.mxu0 0.0
      %2479 = vmatprep.subr.mxu0 0.0
      %2480 = vmatpush2.msra.mxu0 0.0
      %2481 = vmatprep.subr.mxu0 0.0
      %2482 = vmatpush2.msra.mxu0 0.0
      %2483 = vmatprep.mubr.f32.mxu0 0.0
      %2484 = vmatmul.mubr.f32.gmra.mxu0 %v2414
      %v2485 = vpop.f32.mrf.mxu0
      %v2486 = vadd.f32 0.0, %v2485
      %v2487 = vpop.f32.mrf.mxu0
      %v2488 = vadd.f32 0.0, %v2487
      %2489 = vmatprep.mubr.f32.mxu0 0.0
      %2490 = vmatmul.mubr.f32.gmra.mxu0 %v2417
      %v2491 = vpop.f32.mrf.mxu0
      %v2492 = vadd.f32 0.0, %v2491
      %v2493 = vpop.f32.mrf.mxu0
      %v2494 = vadd.f32 0.0, %v2493
      %2495 = vdwg.mxu0
      %2496 = vmatprep.subr.mxu0 0.0
      %2497 = vmatpush1.msra.mxu0 0.0
      %2498 = vmatprep.subr.mxu0 0.0
      %2499 = vmatpush1.msra.mxu0 0.0
      %2500 = vmatprep.subr.mxu0 0.0
      %2501 = vmatpush1.msra.mxu0 0.0
      %2502 = vmatprep.subr.mxu0 0.0
      %2503 = vmatpush1.msra.mxu0 0.0
      %2504 = vmatprep.subr.mxu0 0.0
      %2505 = vmatpush1.msra.mxu0 0.0
      %2506 = vmatprep.subr.mxu0 0.0
      %2507 = vmatpush1.msra.mxu0 0.0
      %2508 = vmatprep.subr.mxu0 0.0
      %2509 = vmatpush1.msra.mxu0 0.0
      %2510 = vmatprep.subr.mxu0 0.0
      %2511 = vmatpush1.msra.mxu0 0.0
      %2512 = vmatprep.subr.mxu0 0.0
      %2513 = vmatpush1.msra.mxu0 0.0
      %2514 = vmatprep.subr.mxu0 0.0
      %2515 = vmatpush1.msra.mxu0 0.0
      %2516 = vmatprep.subr.mxu0 0.0
      %2517 = vmatpush1.msra.mxu0 0.0
      %2518 = vmatprep.subr.mxu0 0.0
      %2519 = vmatpush1.msra.mxu0 0.0
      %2520 = vmatprep.subr.mxu0 0.0
      %2521 = vmatpush1.msra.mxu0 0.0
      %2522 = vmatprep.subr.mxu0 0.0
      %2523 = vmatpush1.msra.mxu0 0.0
      %2524 = vmatprep.subr.mxu0 0.0
      %2525 = vmatpush1.msra.mxu0 %v2406
      %2526 = vmatprep.subr.mxu0 0.0
      %2527 = vmatpush1.msra.mxu0 %v2403
      %2528 = vmatprep.subr.mxu0 0.0
      %2529 = vmatpush2.msra.mxu0 0.0
      %2530 = vmatprep.subr.mxu0 0.0
      %2531 = vmatpush2.msra.mxu0 0.0
      %2532 = vmatprep.subr.mxu0 0.0
      %2533 = vmatpush2.msra.mxu0 0.0
      %2534 = vmatprep.subr.mxu0 0.0
      %2535 = vmatpush2.msra.mxu0 0.0
      %2536 = vmatprep.subr.mxu0 0.0
      %2537 = vmatpush2.msra.mxu0 0.0
      %2538 = vmatprep.subr.mxu0 0.0
      %2539 = vmatpush2.msra.mxu0 0.0
      %2540 = vmatprep.subr.mxu0 0.0
      %2541 = vmatpush2.msra.mxu0 0.0
      %2542 = vmatprep.subr.mxu0 0.0
      %2543 = vmatpush2.msra.mxu0 0.0
      %2544 = vmatprep.subr.mxu0 0.0
      %2545 = vmatpush2.msra.mxu0 0.0
      %2546 = vmatprep.subr.mxu0 0.0
      %2547 = vmatpush2.msra.mxu0 0.0
      %2548 = vmatprep.subr.mxu0 0.0
      %2549 = vmatpush2.msra.mxu0 0.0
      %2550 = vmatprep.subr.mxu0 0.0
      %2551 = vmatpush2.msra.mxu0 0.0
      %2552 = vmatprep.subr.mxu0 0.0
      %2553 = vmatpush2.msra.mxu0 0.0
      %2554 = vmatprep.subr.mxu0 0.0
      %2555 = vmatpush2.msra.mxu0 0.0
      %2556 = vmatprep.subr.mxu0 0.0
      %2557 = vmatpush2.msra.mxu0 0.0
      %2558 = vmatprep.subr.mxu0 0.0
      %2559 = vmatpush2.msra.mxu0 0.0
      %2560 = vmatprep.mubr.f32.mxu0 0.0
      %2561 = vmatmul.mubr.f32.gmra.mxu0 %v2414
      %v2562 = vpop.f32.mrf.mxu0
      %v2563 = vadd.f32 0.0, %v2562
      %v2564 = vpop.f32.mrf.mxu0
      %2565 = vmatprep.mubr.f32.mxu0 0.0
      %2566 = vmatmul.mubr.f32.gmra.mxu0 %v2417
      %v2567 = vpop.f32.mrf.mxu0
      %v2568 = vadd.f32 0.0, %v2567
      %v2569 = vpop.f32.mrf.mxu0
      %2570 = vdwg.mxu0
      %v2571 = vadd.f32 %v2297, %v2486
      %v2572 = vadd.f32 %v2299, %v2488
      %v2573 = vadd.f32 %v2374, %v2563
      %v2574 = vadd.f32 %v2303, %v2492
      %v2575 = vadd.f32 %v2305, %v2494
      %v2576 = vadd.f32 %v2379, %v2568
      %s2577 = scalar_lea.vmem %s1, 192
      %v2578 = vld [vmem:[%s2577] sm:$0xff]
      %v2579 = vld [vmem:[%s2577 + $0x8] sm:$0xff]
      %2580 = vrot.lane.b32.xlu0 %v1991, 1
      %v2581 = vpop.permute.xlu0 %2580
      %2582 = vrot.lane.b32.xlu0 %v1992, 1
      %v2583 = vpop.permute.xlu0 %2582
      %2584 = vrot.lane.b32.xlu0 %v1993, 1
      %v2585 = vpop.permute.xlu0 %2584
      %2586 = vrot.lane.b32.xlu0 %v1994, 1
      %v2587 = vpop.permute.xlu0 %2586
      %2588 = vrot.lane.b32.xlu0 %v1995, 1
      %v2589 = vpop.permute.xlu0 %2588
      %2590 = vrot.lane.b32.xlu0 %v1996, 1
      %v2591 = vpop.permute.xlu0 %2590
      %2592 = vrot.lane.b32.xlu0 %v1997, 1
      %v2593 = vpop.permute.xlu0 %2592
      %2594 = vrot.lane.b32.xlu0 %v1998, 1
      %v2595 = vpop.permute.xlu0 %2594
      %v2596 = vsel %vm847, %v2581, %v2583
      %v2597 = vsel %vm847, %v2583, %v2585
      %v2598 = vsel %vm847, %v2585, %v2587
      %v2599 = vsel %vm847, %v2589, %v2591
      %v2600 = vsel %vm847, %v2591, %v2593
      %v2601 = vsel %vm847, %v2593, %v2595
      %v2609 = vsel %vm286, %v2578, 0
      %v2612 = vsel %vm286, %v2579, 0
      %2614 = vmatprep.subr.mxu0 0.0
      %2615 = vmatpush1.msra.mxu0 0.0
      %2616 = vmatprep.subr.mxu0 0.0
      %2617 = vmatpush1.msra.mxu0 0.0
      %2618 = vmatprep.subr.mxu0 0.0
      %2619 = vmatpush1.msra.mxu0 0.0
      %2620 = vmatprep.subr.mxu0 0.0
      %2621 = vmatpush1.msra.mxu0 0.0
      %2622 = vmatprep.subr.mxu0 0.0
      %2623 = vmatpush1.msra.mxu0 0.0
      %2624 = vmatprep.subr.mxu0 0.0
      %2625 = vmatpush1.msra.mxu0 0.0
      %2626 = vmatprep.subr.mxu0 0.0
      %2627 = vmatpush1.msra.mxu0 0.0
      %2628 = vmatprep.subr.mxu0 0.0
      %2629 = vmatpush1.msra.mxu0 0.0
      %2630 = vmatprep.subr.mxu0 0.0
      %2631 = vmatpush1.msra.mxu0 0.0
      %2632 = vmatprep.subr.mxu0 0.0
      %2633 = vmatpush1.msra.mxu0 0.0
      %2634 = vmatprep.subr.mxu0 0.0
      %2635 = vmatpush1.msra.mxu0 0.0
      %2636 = vmatprep.subr.mxu0 0.0
      %2637 = vmatpush1.msra.mxu0 0.0
      %2638 = vmatprep.subr.mxu0 0.0
      %2639 = vmatpush1.msra.mxu0 0.0
      %2640 = vmatprep.subr.mxu0 0.0
      %2641 = vmatpush1.msra.mxu0 0.0
      %2642 = vmatprep.subr.mxu0 %v2600
      %2643 = vmatpush1.msra.mxu0 %v2599
      %2644 = vmatprep.subr.mxu0 %v2597
      %2645 = vmatpush1.msra.mxu0 %v2596
      %2646 = vmatprep.subr.mxu0 0.0
      %2647 = vmatpush2.msra.mxu0 0.0
      %2648 = vmatprep.subr.mxu0 0.0
      %2649 = vmatpush2.msra.mxu0 0.0
      %2650 = vmatprep.subr.mxu0 0.0
      %2651 = vmatpush2.msra.mxu0 0.0
      %2652 = vmatprep.subr.mxu0 0.0
      %2653 = vmatpush2.msra.mxu0 0.0
      %2654 = vmatprep.subr.mxu0 0.0
      %2655 = vmatpush2.msra.mxu0 0.0
      %2656 = vmatprep.subr.mxu0 0.0
      %2657 = vmatpush2.msra.mxu0 0.0
      %2658 = vmatprep.subr.mxu0 0.0
      %2659 = vmatpush2.msra.mxu0 0.0
      %2660 = vmatprep.subr.mxu0 0.0
      %2661 = vmatpush2.msra.mxu0 0.0
      %2662 = vmatprep.subr.mxu0 0.0
      %2663 = vmatpush2.msra.mxu0 0.0
      %2664 = vmatprep.subr.mxu0 0.0
      %2665 = vmatpush2.msra.mxu0 0.0
      %2666 = vmatprep.subr.mxu0 0.0
      %2667 = vmatpush2.msra.mxu0 0.0
      %2668 = vmatprep.subr.mxu0 0.0
      %2669 = vmatpush2.msra.mxu0 0.0
      %2670 = vmatprep.subr.mxu0 0.0
      %2671 = vmatpush2.msra.mxu0 0.0
      %2672 = vmatprep.subr.mxu0 0.0
      %2673 = vmatpush2.msra.mxu0 0.0
      %2674 = vmatprep.subr.mxu0 0.0
      %2675 = vmatpush2.msra.mxu0 0.0
      %2676 = vmatprep.subr.mxu0 0.0
      %2677 = vmatpush2.msra.mxu0 0.0
      %2678 = vmatprep.mubr.f32.mxu0 0.0
      %2679 = vmatmul.mubr.f32.gmra.mxu0 %v2609
      %v2680 = vpop.f32.mrf.mxu0
      %v2681 = vadd.f32 0.0, %v2680
      %v2682 = vpop.f32.mrf.mxu0
      %v2683 = vadd.f32 0.0, %v2682
      %2684 = vmatprep.mubr.f32.mxu0 0.0
      %2685 = vmatmul.mubr.f32.gmra.mxu0 %v2612
      %v2686 = vpop.f32.mrf.mxu0
      %v2687 = vadd.f32 0.0, %v2686
      %v2688 = vpop.f32.mrf.mxu0
      %v2689 = vadd.f32 0.0, %v2688
      %2690 = vdwg.mxu0
      %2691 = vmatprep.subr.mxu0 0.0
      %2692 = vmatpush1.msra.mxu0 0.0
      %2693 = vmatprep.subr.mxu0 0.0
      %2694 = vmatpush1.msra.mxu0 0.0
      %2695 = vmatprep.subr.mxu0 0.0
      %2696 = vmatpush1.msra.mxu0 0.0
      %2697 = vmatprep.subr.mxu0 0.0
      %2698 = vmatpush1.msra.mxu0 0.0
      %2699 = vmatprep.subr.mxu0 0.0
      %2700 = vmatpush1.msra.mxu0 0.0
      %2701 = vmatprep.subr.mxu0 0.0
      %2702 = vmatpush1.msra.mxu0 0.0
      %2703 = vmatprep.subr.mxu0 0.0
      %2704 = vmatpush1.msra.mxu0 0.0
      %2705 = vmatprep.subr.mxu0 0.0
      %2706 = vmatpush1.msra.mxu0 0.0
      %2707 = vmatprep.subr.mxu0 0.0
      %2708 = vmatpush1.msra.mxu0 0.0
      %2709 = vmatprep.subr.mxu0 0.0
      %2710 = vmatpush1.msra.mxu0 0.0
      %2711 = vmatprep.subr.mxu0 0.0
      %2712 = vmatpush1.msra.mxu0 0.0
      %2713 = vmatprep.subr.mxu0 0.0
      %2714 = vmatpush1.msra.mxu0 0.0
      %2715 = vmatprep.subr.mxu0 0.0
      %2716 = vmatpush1.msra.mxu0 0.0
      %2717 = vmatprep.subr.mxu0 0.0
      %2718 = vmatpush1.msra.mxu0 0.0
      %2719 = vmatprep.subr.mxu0 0.0
      %2720 = vmatpush1.msra.mxu0 %v2601
      %2721 = vmatprep.subr.mxu0 0.0
      %2722 = vmatpush1.msra.mxu0 %v2598
      %2723 = vmatprep.subr.mxu0 0.0
      %2724 = vmatpush2.msra.mxu0 0.0
      %2725 = vmatprep.subr.mxu0 0.0
      %2726 = vmatpush2.msra.mxu0 0.0
      %2727 = vmatprep.subr.mxu0 0.0
      %2728 = vmatpush2.msra.mxu0 0.0
      %2729 = vmatprep.subr.mxu0 0.0
      %2730 = vmatpush2.msra.mxu0 0.0
      %2731 = vmatprep.subr.mxu0 0.0
      %2732 = vmatpush2.msra.mxu0 0.0
      %2733 = vmatprep.subr.mxu0 0.0
      %2734 = vmatpush2.msra.mxu0 0.0
      %2735 = vmatprep.subr.mxu0 0.0
      %2736 = vmatpush2.msra.mxu0 0.0
      %2737 = vmatprep.subr.mxu0 0.0
      %2738 = vmatpush2.msra.mxu0 0.0
      %2739 = vmatprep.subr.mxu0 0.0
      %2740 = vmatpush2.msra.mxu0 0.0
      %2741 = vmatprep.subr.mxu0 0.0
      %2742 = vmatpush2.msra.mxu0 0.0
      %2743 = vmatprep.subr.mxu0 0.0
      %2744 = vmatpush2.msra.mxu0 0.0
      %2745 = vmatprep.subr.mxu0 0.0
      %2746 = vmatpush2.msra.mxu0 0.0
      %2747 = vmatprep.subr.mxu0 0.0
      %2748 = vmatpush2.msra.mxu0 0.0
      %2749 = vmatprep.subr.mxu0 0.0
      %2750 = vmatpush2.msra.mxu0 0.0
      %2751 = vmatprep.subr.mxu0 0.0
      %2752 = vmatpush2.msra.mxu0 0.0
      %2753 = vmatprep.subr.mxu0 0.0
      %2754 = vmatpush2.msra.mxu0 0.0
      %2755 = vmatprep.mubr.f32.mxu0 0.0
      %2756 = vmatmul.mubr.f32.gmra.mxu0 %v2609
      %v2757 = vpop.f32.mrf.mxu0
      %v2758 = vadd.f32 0.0, %v2757
      %v2759 = vpop.f32.mrf.mxu0
      %2760 = vmatprep.mubr.f32.mxu0 0.0
      %2761 = vmatmul.mubr.f32.gmra.mxu0 %v2612
      %v2762 = vpop.f32.mrf.mxu0
      %v2763 = vadd.f32 0.0, %v2762
      %v2764 = vpop.f32.mrf.mxu0
      %2765 = vdwg.mxu0
      %v2766 = vadd.f32 %v2571, %v2681
      %v2767 = vadd.f32 %v2572, %v2683
      %v2768 = vadd.f32 %v2573, %v2758
      %v2769 = vadd.f32 %v2574, %v2687
      %v2770 = vadd.f32 %v2575, %v2689
      %v2771 = vadd.f32 %v2576, %v2763
      %s2772 = scalar_lea.vmem %s1, 208
      %v2773 = vld [vmem:[%s2772] sm:$0xff]
      %v2774 = vld [vmem:[%s2772 + $0x8] sm:$0xff]
      %v2776 = vsel %vm286, %v2773, 0
      %v2779 = vsel %vm286, %v2774, 0
      %2781 = vmatprep.subr.mxu0 0.0
      %2782 = vmatpush1.msra.mxu0 0.0
      %2783 = vmatprep.subr.mxu0 0.0
      %2784 = vmatpush1.msra.mxu0 0.0
      %2785 = vmatprep.subr.mxu0 0.0
      %2786 = vmatpush1.msra.mxu0 0.0
      %2787 = vmatprep.subr.mxu0 0.0
      %2788 = vmatpush1.msra.mxu0 0.0
      %2789 = vmatprep.subr.mxu0 0.0
      %2790 = vmatpush1.msra.mxu0 0.0
      %2791 = vmatprep.subr.mxu0 0.0
      %2792 = vmatpush1.msra.mxu0 0.0
      %2793 = vmatprep.subr.mxu0 0.0
      %2794 = vmatpush1.msra.mxu0 0.0
      %2795 = vmatprep.subr.mxu0 0.0
      %2796 = vmatpush1.msra.mxu0 0.0
      %2797 = vmatprep.subr.mxu0 0.0
      %2798 = vmatpush1.msra.mxu0 0.0
      %2799 = vmatprep.subr.mxu0 0.0
      %2800 = vmatpush1.msra.mxu0 0.0
      %2801 = vmatprep.subr.mxu0 0.0
      %2802 = vmatpush1.msra.mxu0 0.0
      %2803 = vmatprep.subr.mxu0 0.0
      %2804 = vmatpush1.msra.mxu0 0.0
      %2805 = vmatprep.subr.mxu0 0.0
      %2806 = vmatpush1.msra.mxu0 0.0
      %2807 = vmatprep.subr.mxu0 0.0
      %2808 = vmatpush1.msra.mxu0 0.0
      %2809 = vmatprep.subr.mxu0 %v1997
      %2810 = vmatpush1.msra.mxu0 %v1996
      %2811 = vmatprep.subr.mxu0 %v1993
      %2812 = vmatpush1.msra.mxu0 %v1992
      %2813 = vmatprep.subr.mxu0 0.0
      %2814 = vmatpush2.msra.mxu0 0.0
      %2815 = vmatprep.subr.mxu0 0.0
      %2816 = vmatpush2.msra.mxu0 0.0
      %2817 = vmatprep.subr.mxu0 0.0
      %2818 = vmatpush2.msra.mxu0 0.0
      %2819 = vmatprep.subr.mxu0 0.0
      %2820 = vmatpush2.msra.mxu0 0.0
      %2821 = vmatprep.subr.mxu0 0.0
      %2822 = vmatpush2.msra.mxu0 0.0
      %2823 = vmatprep.subr.mxu0 0.0
      %2824 = vmatpush2.msra.mxu0 0.0
      %2825 = vmatprep.subr.mxu0 0.0
      %2826 = vmatpush2.msra.mxu0 0.0
      %2827 = vmatprep.subr.mxu0 0.0
      %2828 = vmatpush2.msra.mxu0 0.0
      %2829 = vmatprep.subr.mxu0 0.0
      %2830 = vmatpush2.msra.mxu0 0.0
      %2831 = vmatprep.subr.mxu0 0.0
      %2832 = vmatpush2.msra.mxu0 0.0
      %2833 = vmatprep.subr.mxu0 0.0
      %2834 = vmatpush2.msra.mxu0 0.0
      %2835 = vmatprep.subr.mxu0 0.0
      %2836 = vmatpush2.msra.mxu0 0.0
      %2837 = vmatprep.subr.mxu0 0.0
      %2838 = vmatpush2.msra.mxu0 0.0
      %2839 = vmatprep.subr.mxu0 0.0
      %2840 = vmatpush2.msra.mxu0 0.0
      %2841 = vmatprep.subr.mxu0 0.0
      %2842 = vmatpush2.msra.mxu0 0.0
      %2843 = vmatprep.subr.mxu0 0.0
      %2844 = vmatpush2.msra.mxu0 0.0
      %2845 = vmatprep.mubr.f32.mxu0 0.0
      %2846 = vmatmul.mubr.f32.gmra.mxu0 %v2776
      %v2847 = vpop.f32.mrf.mxu0
      %v2848 = vadd.f32 0.0, %v2847
      %v2849 = vpop.f32.mrf.mxu0
      %v2850 = vadd.f32 0.0, %v2849
      %2851 = vmatprep.mubr.f32.mxu0 0.0
      %2852 = vmatmul.mubr.f32.gmra.mxu0 %v2779
      %v2853 = vpop.f32.mrf.mxu0
      %v2854 = vadd.f32 0.0, %v2853
      %v2855 = vpop.f32.mrf.mxu0
      %v2856 = vadd.f32 0.0, %v2855
      %2857 = vdwg.mxu0
      %2858 = vmatprep.subr.mxu0 0.0
      %2859 = vmatpush1.msra.mxu0 0.0
      %2860 = vmatprep.subr.mxu0 0.0
      %2861 = vmatpush1.msra.mxu0 0.0
      %2862 = vmatprep.subr.mxu0 0.0
      %2863 = vmatpush1.msra.mxu0 0.0
      %2864 = vmatprep.subr.mxu0 0.0
      %2865 = vmatpush1.msra.mxu0 0.0
      %2866 = vmatprep.subr.mxu0 0.0
      %2867 = vmatpush1.msra.mxu0 0.0
      %2868 = vmatprep.subr.mxu0 0.0
      %2869 = vmatpush1.msra.mxu0 0.0
      %2870 = vmatprep.subr.mxu0 0.0
      %2871 = vmatpush1.msra.mxu0 0.0
      %2872 = vmatprep.subr.mxu0 0.0
      %2873 = vmatpush1.msra.mxu0 0.0
      %2874 = vmatprep.subr.mxu0 0.0
      %2875 = vmatpush1.msra.mxu0 0.0
      %2876 = vmatprep.subr.mxu0 0.0
      %2877 = vmatpush1.msra.mxu0 0.0
      %2878 = vmatprep.subr.mxu0 0.0
      %2879 = vmatpush1.msra.mxu0 0.0
      %2880 = vmatprep.subr.mxu0 0.0
      %2881 = vmatpush1.msra.mxu0 0.0
      %2882 = vmatprep.subr.mxu0 0.0
      %2883 = vmatpush1.msra.mxu0 0.0
      %2884 = vmatprep.subr.mxu0 0.0
      %2885 = vmatpush1.msra.mxu0 0.0
      %2886 = vmatprep.subr.mxu0 0.0
      %2887 = vmatpush1.msra.mxu0 %v1998
      %2888 = vmatprep.subr.mxu0 0.0
      %2889 = vmatpush1.msra.mxu0 %v1994
      %2890 = vmatprep.subr.mxu0 0.0
      %2891 = vmatpush2.msra.mxu0 0.0
      %2892 = vmatprep.subr.mxu0 0.0
      %2893 = vmatpush2.msra.mxu0 0.0
      %2894 = vmatprep.subr.mxu0 0.0
      %2895 = vmatpush2.msra.mxu0 0.0
      %2896 = vmatprep.subr.mxu0 0.0
      %2897 = vmatpush2.msra.mxu0 0.0
      %2898 = vmatprep.subr.mxu0 0.0
      %2899 = vmatpush2.msra.mxu0 0.0
      %2900 = vmatprep.subr.mxu0 0.0
      %2901 = vmatpush2.msra.mxu0 0.0
      %2902 = vmatprep.subr.mxu0 0.0
      %2903 = vmatpush2.msra.mxu0 0.0
      %2904 = vmatprep.subr.mxu0 0.0
      %2905 = vmatpush2.msra.mxu0 0.0
      %2906 = vmatprep.subr.mxu0 0.0
      %2907 = vmatpush2.msra.mxu0 0.0
      %2908 = vmatprep.subr.mxu0 0.0
      %2909 = vmatpush2.msra.mxu0 0.0
      %2910 = vmatprep.subr.mxu0 0.0
      %2911 = vmatpush2.msra.mxu0 0.0
      %2912 = vmatprep.subr.mxu0 0.0
      %2913 = vmatpush2.msra.mxu0 0.0
      %2914 = vmatprep.subr.mxu0 0.0
      %2915 = vmatpush2.msra.mxu0 0.0
      %2916 = vmatprep.subr.mxu0 0.0
      %2917 = vmatpush2.msra.mxu0 0.0
      %2918 = vmatprep.subr.mxu0 0.0
      %2919 = vmatpush2.msra.mxu0 0.0
      %2920 = vmatprep.subr.mxu0 0.0
      %2921 = vmatpush2.msra.mxu0 0.0
      %2922 = vmatprep.mubr.f32.mxu0 0.0
      %2923 = vmatmul.mubr.f32.gmra.mxu0 %v2776
      %v2924 = vpop.f32.mrf.mxu0
      %v2925 = vadd.f32 0.0, %v2924
      %v2926 = vpop.f32.mrf.mxu0
      %2927 = vmatprep.mubr.f32.mxu0 0.0
      %2928 = vmatmul.mubr.f32.gmra.mxu0 %v2779
      %v2929 = vpop.f32.mrf.mxu0
      %v2930 = vadd.f32 0.0, %v2929
      %v2931 = vpop.f32.mrf.mxu0
      %2932 = vdwg.mxu0
      %v2933 = vadd.f32 %v2766, %v2848
      %v2934 = vadd.f32 %v2767, %v2850
      %v2935 = vadd.f32 %v2768, %v2925
      %v2936 = vadd.f32 %v2769, %v2854
      %v2937 = vadd.f32 %v2770, %v2856
      %v2938 = vadd.f32 %v2771, %v2930
      %s2939 = scalar_lea.vmem %s1, 224
      %v2940 = vld [vmem:[%s2939] sm:$0xff]
      %v2941 = vld [vmem:[%s2939 + $0x8] sm:$0xff]
      %2942 = vrot.lane.b32.xlu0 %v1992, 127
      %v2943 = vpop.permute.xlu0 %2942
      %2944 = vrot.lane.b32.xlu0 %v1993, 127
      %v2945 = vpop.permute.xlu0 %2944
      %2946 = vrot.lane.b32.xlu0 %v1994, 127
      %v2947 = vpop.permute.xlu0 %2946
      %2948 = vrot.lane.b32.xlu0 %v1996, 127
      %v2949 = vpop.permute.xlu0 %2948
      %2950 = vrot.lane.b32.xlu0 %v1997, 127
      %v2951 = vpop.permute.xlu0 %2950
      %2952 = vrot.lane.b32.xlu0 %v1998, 127
      %v2953 = vpop.permute.xlu0 %2952
      %v2954 = vsel %vm1206, %v2943, %v2945
      %v2955 = vsel %vm1206, %v2945, %v2947
      %v2956 = vsel %vm1206, %v2949, %v2951
      %v2957 = vsel %vm1206, %v2951, %v2953
      %v2965 = vsel %vm286, %v2940, 0
      %v2968 = vsel %vm286, %v2941, 0
      %2970 = vmatprep.subr.mxu0 0.0
      %2971 = vmatpush1.msra.mxu0 0.0
      %2972 = vmatprep.subr.mxu0 0.0
      %2973 = vmatpush1.msra.mxu0 0.0
      %2974 = vmatprep.subr.mxu0 0.0
      %2975 = vmatpush1.msra.mxu0 0.0
      %2976 = vmatprep.subr.mxu0 0.0
      %2977 = vmatpush1.msra.mxu0 0.0
      %2978 = vmatprep.subr.mxu0 0.0
      %2979 = vmatpush1.msra.mxu0 0.0
      %2980 = vmatprep.subr.mxu0 0.0
      %2981 = vmatpush1.msra.mxu0 0.0
      %2982 = vmatprep.subr.mxu0 0.0
      %2983 = vmatpush1.msra.mxu0 0.0
      %2984 = vmatprep.subr.mxu0 0.0
      %2985 = vmatpush1.msra.mxu0 0.0
      %2986 = vmatprep.subr.mxu0 0.0
      %2987 = vmatpush1.msra.mxu0 0.0
      %2988 = vmatprep.subr.mxu0 0.0
      %2989 = vmatpush1.msra.mxu0 0.0
      %2990 = vmatprep.subr.mxu0 0.0
      %2991 = vmatpush1.msra.mxu0 0.0
      %2992 = vmatprep.subr.mxu0 0.0
      %2993 = vmatpush1.msra.mxu0 0.0
      %2994 = vmatprep.subr.mxu0 0.0
      %2995 = vmatpush1.msra.mxu0 0.0
      %2996 = vmatprep.subr.mxu0 0.0
      %2997 = vmatpush1.msra.mxu0 0.0
      %2998 = vmatprep.subr.mxu0 %v2957
      %2999 = vmatpush1.msra.mxu0 %v2956
      %3000 = vmatprep.subr.mxu0 %v2955
      %3001 = vmatpush1.msra.mxu0 %v2954
      %3002 = vmatprep.subr.mxu0 0.0
      %3003 = vmatpush2.msra.mxu0 0.0
      %3004 = vmatprep.subr.mxu0 0.0
      %3005 = vmatpush2.msra.mxu0 0.0
      %3006 = vmatprep.subr.mxu0 0.0
      %3007 = vmatpush2.msra.mxu0 0.0
      %3008 = vmatprep.subr.mxu0 0.0
      %3009 = vmatpush2.msra.mxu0 0.0
      %3010 = vmatprep.subr.mxu0 0.0
      %3011 = vmatpush2.msra.mxu0 0.0
      %3012 = vmatprep.subr.mxu0 0.0
      %3013 = vmatpush2.msra.mxu0 0.0
      %3014 = vmatprep.subr.mxu0 0.0
      %3015 = vmatpush2.msra.mxu0 0.0
      %3016 = vmatprep.subr.mxu0 0.0
      %3017 = vmatpush2.msra.mxu0 0.0
      %3018 = vmatprep.subr.mxu0 0.0
      %3019 = vmatpush2.msra.mxu0 0.0
      %3020 = vmatprep.subr.mxu0 0.0
      %3021 = vmatpush2.msra.mxu0 0.0
      %3022 = vmatprep.subr.mxu0 0.0
      %3023 = vmatpush2.msra.mxu0 0.0
      %3024 = vmatprep.subr.mxu0 0.0
      %3025 = vmatpush2.msra.mxu0 0.0
      %3026 = vmatprep.subr.mxu0 0.0
      %3027 = vmatpush2.msra.mxu0 0.0
      %3028 = vmatprep.subr.mxu0 0.0
      %3029 = vmatpush2.msra.mxu0 0.0
      %3030 = vmatprep.subr.mxu0 0.0
      %3031 = vmatpush2.msra.mxu0 0.0
      %3032 = vmatprep.subr.mxu0 0.0
      %3033 = vmatpush2.msra.mxu0 0.0
      %3034 = vmatprep.mubr.f32.mxu0 0.0
      %3035 = vmatmul.mubr.f32.gmra.mxu0 %v2965
      %v3036 = vpop.f32.mrf.mxu0
      %v3037 = vadd.f32 0.0, %v3036
      %v3038 = vpop.f32.mrf.mxu0
      %v3039 = vadd.f32 0.0, %v3038
      %3040 = vmatprep.mubr.f32.mxu0 0.0
      %3041 = vmatmul.mubr.f32.gmra.mxu0 %v2968
      %v3042 = vpop.f32.mrf.mxu0
      %v3043 = vadd.f32 0.0, %v3042
      %v3044 = vpop.f32.mrf.mxu0
      %v3045 = vadd.f32 0.0, %v3044
      %3046 = vdwg.mxu0
      %3047 = vmatprep.subr.mxu0 0.0
      %3048 = vmatpush1.msra.mxu0 0.0
      %3049 = vmatprep.subr.mxu0 0.0
      %3050 = vmatpush1.msra.mxu0 0.0
      %3051 = vmatprep.subr.mxu0 0.0
      %3052 = vmatpush1.msra.mxu0 0.0
      %3053 = vmatprep.subr.mxu0 0.0
      %3054 = vmatpush1.msra.mxu0 0.0
      %3055 = vmatprep.subr.mxu0 0.0
      %3056 = vmatpush1.msra.mxu0 0.0
      %3057 = vmatprep.subr.mxu0 0.0
      %3058 = vmatpush1.msra.mxu0 0.0
      %3059 = vmatprep.subr.mxu0 0.0
      %3060 = vmatpush1.msra.mxu0 0.0
      %3061 = vmatprep.subr.mxu0 0.0
      %3062 = vmatpush1.msra.mxu0 0.0
      %3063 = vmatprep.subr.mxu0 0.0
      %3064 = vmatpush1.msra.mxu0 0.0
      %3065 = vmatprep.subr.mxu0 0.0
      %3066 = vmatpush1.msra.mxu0 0.0
      %3067 = vmatprep.subr.mxu0 0.0
      %3068 = vmatpush1.msra.mxu0 0.0
      %3069 = vmatprep.subr.mxu0 0.0
      %3070 = vmatpush1.msra.mxu0 0.0
      %3071 = vmatprep.subr.mxu0 0.0
      %3072 = vmatpush1.msra.mxu0 0.0
      %3073 = vmatprep.subr.mxu0 0.0
      %3074 = vmatpush1.msra.mxu0 0.0
      %3075 = vmatprep.subr.mxu0 0.0
      %3076 = vmatpush1.msra.mxu0 %v2953
      %3077 = vmatprep.subr.mxu0 0.0
      %3078 = vmatpush1.msra.mxu0 %v2947
      %3079 = vmatprep.subr.mxu0 0.0
      %3080 = vmatpush2.msra.mxu0 0.0
      %3081 = vmatprep.subr.mxu0 0.0
      %3082 = vmatpush2.msra.mxu0 0.0
      %3083 = vmatprep.subr.mxu0 0.0
      %3084 = vmatpush2.msra.mxu0 0.0
      %3085 = vmatprep.subr.mxu0 0.0
      %3086 = vmatpush2.msra.mxu0 0.0
      %3087 = vmatprep.subr.mxu0 0.0
      %3088 = vmatpush2.msra.mxu0 0.0
      %3089 = vmatprep.subr.mxu0 0.0
      %3090 = vmatpush2.msra.mxu0 0.0
      %3091 = vmatprep.subr.mxu0 0.0
      %3092 = vmatpush2.msra.mxu0 0.0
      %3093 = vmatprep.subr.mxu0 0.0
      %3094 = vmatpush2.msra.mxu0 0.0
      %3095 = vmatprep.subr.mxu0 0.0
      %3096 = vmatpush2.msra.mxu0 0.0
      %3097 = vmatprep.subr.mxu0 0.0
      %3098 = vmatpush2.msra.mxu0 0.0
      %3099 = vmatprep.subr.mxu0 0.0
      %3100 = vmatpush2.msra.mxu0 0.0
      %3101 = vmatprep.subr.mxu0 0.0
      %3102 = vmatpush2.msra.mxu0 0.0
      %3103 = vmatprep.subr.mxu0 0.0
      %3104 = vmatpush2.msra.mxu0 0.0
      %3105 = vmatprep.subr.mxu0 0.0
      %3106 = vmatpush2.msra.mxu0 0.0
      %3107 = vmatprep.subr.mxu0 0.0
      %3108 = vmatpush2.msra.mxu0 0.0
      %3109 = vmatprep.subr.mxu0 0.0
      %3110 = vmatpush2.msra.mxu0 0.0
      %3111 = vmatprep.mubr.f32.mxu0 0.0
      %3112 = vmatmul.mubr.f32.gmra.mxu0 %v2965
      %v3113 = vpop.f32.mrf.mxu0
      %v3114 = vadd.f32 0.0, %v3113
      %v3115 = vpop.f32.mrf.mxu0
      %3116 = vmatprep.mubr.f32.mxu0 0.0
      %3117 = vmatmul.mubr.f32.gmra.mxu0 %v2968
      %v3118 = vpop.f32.mrf.mxu0
      %v3119 = vadd.f32 0.0, %v3118
      %v3120 = vpop.f32.mrf.mxu0
      %3121 = vdwg.mxu0
      %v3122 = vadd.f32 %v2933, %v3037
      %v3123 = vadd.f32 %v2934, %v3039
      %v3124 = vadd.f32 %v2935, %v3114
      %v3125 = vadd.f32 %v2936, %v3043
      %v3126 = vadd.f32 %v2937, %v3045
      %v3127 = vadd.f32 %v2938, %v3119
      %s3128 = scalar_lea.vmem %s1, 240
      %v3129 = vld [vmem:[%s3128] sm:$0xff]
      %v3130 = vld [vmem:[%s3128 + $0x8] sm:$0xff]
      %3131 = vrot.lane.b32.xlu0 %v1992, 111
      %v3132 = vpop.permute.xlu0 %3131
      %3133 = vrot.lane.b32.xlu0 %v1993, 111
      %v3134 = vpop.permute.xlu0 %3133
      %3135 = vrot.lane.b32.xlu0 %v1994, 111
      %v3136 = vpop.permute.xlu0 %3135
      %3137 = vrot.lane.b32.xlu0 %v1996, 111
      %v3138 = vpop.permute.xlu0 %3137
      %3139 = vrot.lane.b32.xlu0 %v1997, 111
      %v3140 = vpop.permute.xlu0 %3139
      %3141 = vrot.lane.b32.xlu0 %v1998, 111
      %v3142 = vpop.permute.xlu0 %3141
      %v3143 = vsel %vm1396, %v3132, %v3134
      %v3144 = vsel %vm1396, %v3134, %v3136
      %v3145 = vsel %vm1396, %v3138, %v3140
      %v3146 = vsel %vm1396, %v3140, %v3142
      %v3154 = vsel %vm286, %v3129, 0
      %v3157 = vsel %vm286, %v3130, 0
      %3159 = vmatprep.subr.mxu0 0.0
      %3160 = vmatpush1.msra.mxu0 0.0
      %3161 = vmatprep.subr.mxu0 0.0
      %3162 = vmatpush1.msra.mxu0 0.0
      %3163 = vmatprep.subr.mxu0 0.0
      %3164 = vmatpush1.msra.mxu0 0.0
      %3165 = vmatprep.subr.mxu0 0.0
      %3166 = vmatpush1.msra.mxu0 0.0
      %3167 = vmatprep.subr.mxu0 0.0
      %3168 = vmatpush1.msra.mxu0 0.0
      %3169 = vmatprep.subr.mxu0 0.0
      %3170 = vmatpush1.msra.mxu0 0.0
      %3171 = vmatprep.subr.mxu0 0.0
      %3172 = vmatpush1.msra.mxu0 0.0
      %3173 = vmatprep.subr.mxu0 0.0
      %3174 = vmatpush1.msra.mxu0 0.0
      %3175 = vmatprep.subr.mxu0 0.0
      %3176 = vmatpush1.msra.mxu0 0.0
      %3177 = vmatprep.subr.mxu0 0.0
      %3178 = vmatpush1.msra.mxu0 0.0
      %3179 = vmatprep.subr.mxu0 0.0
      %3180 = vmatpush1.msra.mxu0 0.0
      %3181 = vmatprep.subr.mxu0 0.0
      %3182 = vmatpush1.msra.mxu0 0.0
      %3183 = vmatprep.subr.mxu0 0.0
      %3184 = vmatpush1.msra.mxu0 0.0
      %3185 = vmatprep.subr.mxu0 0.0
      %3186 = vmatpush1.msra.mxu0 0.0
      %3187 = vmatprep.subr.mxu0 %v3146
      %3188 = vmatpush1.msra.mxu0 %v3145
      %3189 = vmatprep.subr.mxu0 %v3144
      %3190 = vmatpush1.msra.mxu0 %v3143
      %3191 = vmatprep.subr.mxu0 0.0
      %3192 = vmatpush2.msra.mxu0 0.0
      %3193 = vmatprep.subr.mxu0 0.0
      %3194 = vmatpush2.msra.mxu0 0.0
      %3195 = vmatprep.subr.mxu0 0.0
      %3196 = vmatpush2.msra.mxu0 0.0
      %3197 = vmatprep.subr.mxu0 0.0
      %3198 = vmatpush2.msra.mxu0 0.0
      %3199 = vmatprep.subr.mxu0 0.0
      %3200 = vmatpush2.msra.mxu0 0.0
      %3201 = vmatprep.subr.mxu0 0.0
      %3202 = vmatpush2.msra.mxu0 0.0
      %3203 = vmatprep.subr.mxu0 0.0
      %3204 = vmatpush2.msra.mxu0 0.0
      %3205 = vmatprep.subr.mxu0 0.0
      %3206 = vmatpush2.msra.mxu0 0.0
      %3207 = vmatprep.subr.mxu0 0.0
      %3208 = vmatpush2.msra.mxu0 0.0
      %3209 = vmatprep.subr.mxu0 0.0
      %3210 = vmatpush2.msra.mxu0 0.0
      %3211 = vmatprep.subr.mxu0 0.0
      %3212 = vmatpush2.msra.mxu0 0.0
      %3213 = vmatprep.subr.mxu0 0.0
      %3214 = vmatpush2.msra.mxu0 0.0
      %3215 = vmatprep.subr.mxu0 0.0
      %3216 = vmatpush2.msra.mxu0 0.0
      %3217 = vmatprep.subr.mxu0 0.0
      %3218 = vmatpush2.msra.mxu0 0.0
      %3219 = vmatprep.subr.mxu0 0.0
      %3220 = vmatpush2.msra.mxu0 0.0
      %3221 = vmatprep.subr.mxu0 0.0
      %3222 = vmatpush2.msra.mxu0 0.0
      %3223 = vmatprep.mubr.f32.mxu0 0.0
      %3224 = vmatmul.mubr.f32.gmra.mxu0 %v3154
      %v3225 = vpop.f32.mrf.mxu0
      %v3226 = vadd.f32 0.0, %v3225
      %v3227 = vpop.f32.mrf.mxu0
      %v3228 = vadd.f32 0.0, %v3227
      %3229 = vmatprep.mubr.f32.mxu0 0.0
      %3230 = vmatmul.mubr.f32.gmra.mxu0 %v3157
      %v3231 = vpop.f32.mrf.mxu0
      %v3232 = vadd.f32 0.0, %v3231
      %v3233 = vpop.f32.mrf.mxu0
      %v3234 = vadd.f32 0.0, %v3233
      %3235 = vdwg.mxu0
      %3236 = vmatprep.subr.mxu0 0.0
      %3237 = vmatpush1.msra.mxu0 0.0
      %3238 = vmatprep.subr.mxu0 0.0
      %3239 = vmatpush1.msra.mxu0 0.0
      %3240 = vmatprep.subr.mxu0 0.0
      %3241 = vmatpush1.msra.mxu0 0.0
      %3242 = vmatprep.subr.mxu0 0.0
      %3243 = vmatpush1.msra.mxu0 0.0
      %3244 = vmatprep.subr.mxu0 0.0
      %3245 = vmatpush1.msra.mxu0 0.0
      %3246 = vmatprep.subr.mxu0 0.0
      %3247 = vmatpush1.msra.mxu0 0.0
      %3248 = vmatprep.subr.mxu0 0.0
      %3249 = vmatpush1.msra.mxu0 0.0
      %3250 = vmatprep.subr.mxu0 0.0
      %3251 = vmatpush1.msra.mxu0 0.0
      %3252 = vmatprep.subr.mxu0 0.0
      %3253 = vmatpush1.msra.mxu0 0.0
      %3254 = vmatprep.subr.mxu0 0.0
      %3255 = vmatpush1.msra.mxu0 0.0
      %3256 = vmatprep.subr.mxu0 0.0
      %3257 = vmatpush1.msra.mxu0 0.0
      %3258 = vmatprep.subr.mxu0 0.0
      %3259 = vmatpush1.msra.mxu0 0.0
      %3260 = vmatprep.subr.mxu0 0.0
      %3261 = vmatpush1.msra.mxu0 0.0
      %3262 = vmatprep.subr.mxu0 0.0
      %3263 = vmatpush1.msra.mxu0 0.0
      %3264 = vmatprep.subr.mxu0 0.0
      %3265 = vmatpush1.msra.mxu0 %v3142
      %3266 = vmatprep.subr.mxu0 0.0
      %3267 = vmatpush1.msra.mxu0 %v3136
      %3268 = vmatprep.subr.mxu0 0.0
      %3269 = vmatpush2.msra.mxu0 0.0
      %3270 = vmatprep.subr.mxu0 0.0
      %3271 = vmatpush2.msra.mxu0 0.0
      %3272 = vmatprep.subr.mxu0 0.0
      %3273 = vmatpush2.msra.mxu0 0.0
      %3274 = vmatprep.subr.mxu0 0.0
      %3275 = vmatpush2.msra.mxu0 0.0
      %3276 = vmatprep.subr.mxu0 0.0
      %3277 = vmatpush2.msra.mxu0 0.0
      %3278 = vmatprep.subr.mxu0 0.0
      %3279 = vmatpush2.msra.mxu0 0.0
      %3280 = vmatprep.subr.mxu0 0.0
      %3281 = vmatpush2.msra.mxu0 0.0
      %3282 = vmatprep.subr.mxu0 0.0
      %3283 = vmatpush2.msra.mxu0 0.0
      %3284 = vmatprep.subr.mxu0 0.0
      %3285 = vmatpush2.msra.mxu0 0.0
      %3286 = vmatprep.subr.mxu0 0.0
      %3287 = vmatpush2.msra.mxu0 0.0
      %3288 = vmatprep.subr.mxu0 0.0
      %3289 = vmatpush2.msra.mxu0 0.0
      %3290 = vmatprep.subr.mxu0 0.0
      %3291 = vmatpush2.msra.mxu0 0.0
      %3292 = vmatprep.subr.mxu0 0.0
      %3293 = vmatpush2.msra.mxu0 0.0
      %3294 = vmatprep.subr.mxu0 0.0
      %3295 = vmatpush2.msra.mxu0 0.0
      %3296 = vmatprep.subr.mxu0 0.0
      %3297 = vmatpush2.msra.mxu0 0.0
      %3298 = vmatprep.subr.mxu0 0.0
      %3299 = vmatpush2.msra.mxu0 0.0
      %3300 = vmatprep.mubr.f32.mxu0 0.0
      %3301 = vmatmul.mubr.f32.gmra.mxu0 %v3154
      %v3302 = vpop.f32.mrf.mxu0
      %v3303 = vadd.f32 0.0, %v3302
      %v3304 = vpop.f32.mrf.mxu0
      %3305 = vmatprep.mubr.f32.mxu0 0.0
      %3306 = vmatmul.mubr.f32.gmra.mxu0 %v3157
      %v3307 = vpop.f32.mrf.mxu0
      %v3308 = vadd.f32 0.0, %v3307
      %v3309 = vpop.f32.mrf.mxu0
      %3310 = vdwg.mxu0
      %v3311 = vadd.f32 %v3122, %v3226
      %v3312 = vadd.f32 %v3123, %v3228
      %v3313 = vadd.f32 %v3124, %v3303
      %v3314 = vadd.f32 %v3125, %v3232
      %v3315 = vadd.f32 %v3126, %v3234
      %v3316 = vadd.f32 %v3127, %v3308
      %s3317 = scalar_lea.vmem %s1, 256
      %v3318 = vld [vmem:[%s3317] sm:$0xff]
      %v3319 = vld [vmem:[%s3317 + $0x8] sm:$0xff]
      %3320 = vrot.lane.b32.xlu0 %v1992, 110
      %v3321 = vpop.permute.xlu0 %3320
      %3322 = vrot.lane.b32.xlu0 %v1993, 110
      %v3323 = vpop.permute.xlu0 %3322
      %3324 = vrot.lane.b32.xlu0 %v1994, 110
      %v3325 = vpop.permute.xlu0 %3324
      %3326 = vrot.lane.b32.xlu0 %v1996, 110
      %v3327 = vpop.permute.xlu0 %3326
      %3328 = vrot.lane.b32.xlu0 %v1997, 110
      %v3329 = vpop.permute.xlu0 %3328
      %3330 = vrot.lane.b32.xlu0 %v1998, 110
      %v3331 = vpop.permute.xlu0 %3330
      %v3332 = vsel %vm1586, %v3321, %v3323
      %v3333 = vsel %vm1586, %v3323, %v3325
      %v3334 = vsel %vm1586, %v3327, %v3329
      %v3335 = vsel %vm1586, %v3329, %v3331
      %v3343 = vsel %vm286, %v3318, 0
      %v3346 = vsel %vm286, %v3319, 0
      %3348 = vmatprep.subr.mxu0 0.0
      %3349 = vmatpush1.msra.mxu0 0.0
      %3350 = vmatprep.subr.mxu0 0.0
      %3351 = vmatpush1.msra.mxu0 0.0
      %3352 = vmatprep.subr.mxu0 0.0
      %3353 = vmatpush1.msra.mxu0 0.0
      %3354 = vmatprep.subr.mxu0 0.0
      %3355 = vmatpush1.msra.mxu0 0.0
      %3356 = vmatprep.subr.mxu0 0.0
      %3357 = vmatpush1.msra.mxu0 0.0
      %3358 = vmatprep.subr.mxu0 0.0
      %3359 = vmatpush1.msra.mxu0 0.0
      %3360 = vmatprep.subr.mxu0 0.0
      %3361 = vmatpush1.msra.mxu0 0.0
      %3362 = vmatprep.subr.mxu0 0.0
      %3363 = vmatpush1.msra.mxu0 0.0
      %3364 = vmatprep.subr.mxu0 0.0
      %3365 = vmatpush1.msra.mxu0 0.0
      %3366 = vmatprep.subr.mxu0 0.0
      %3367 = vmatpush1.msra.mxu0 0.0
      %3368 = vmatprep.subr.mxu0 0.0
      %3369 = vmatpush1.msra.mxu0 0.0
      %3370 = vmatprep.subr.mxu0 0.0
      %3371 = vmatpush1.msra.mxu0 0.0
      %3372 = vmatprep.subr.mxu0 0.0
      %3373 = vmatpush1.msra.mxu0 0.0
      %3374 = vmatprep.subr.mxu0 0.0
      %3375 = vmatpush1.msra.mxu0 0.0
      %3376 = vmatprep.subr.mxu0 %v3335
      %3377 = vmatpush1.msra.mxu0 %v3334
      %3378 = vmatprep.subr.mxu0 %v3333
      %3379 = vmatpush1.msra.mxu0 %v3332
      %3380 = vmatprep.subr.mxu0 0.0
      %3381 = vmatpush2.msra.mxu0 0.0
      %3382 = vmatprep.subr.mxu0 0.0
      %3383 = vmatpush2.msra.mxu0 0.0
      %3384 = vmatprep.subr.mxu0 0.0
      %3385 = vmatpush2.msra.mxu0 0.0
      %3386 = vmatprep.subr.mxu0 0.0
      %3387 = vmatpush2.msra.mxu0 0.0
      %3388 = vmatprep.subr.mxu0 0.0
      %3389 = vmatpush2.msra.mxu0 0.0
      %3390 = vmatprep.subr.mxu0 0.0
      %3391 = vmatpush2.msra.mxu0 0.0
      %3392 = vmatprep.subr.mxu0 0.0
      %3393 = vmatpush2.msra.mxu0 0.0
      %3394 = vmatprep.subr.mxu0 0.0
      %3395 = vmatpush2.msra.mxu0 0.0
      %3396 = vmatprep.subr.mxu0 0.0
      %3397 = vmatpush2.msra.mxu0 0.0
      %3398 = vmatprep.subr.mxu0 0.0
      %3399 = vmatpush2.msra.mxu0 0.0
      %3400 = vmatprep.subr.mxu0 0.0
      %3401 = vmatpush2.msra.mxu0 0.0
      %3402 = vmatprep.subr.mxu0 0.0
      %3403 = vmatpush2.msra.mxu0 0.0
      %3404 = vmatprep.subr.mxu0 0.0
      %3405 = vmatpush2.msra.mxu0 0.0
      %3406 = vmatprep.subr.mxu0 0.0
      %3407 = vmatpush2.msra.mxu0 0.0
      %3408 = vmatprep.subr.mxu0 0.0
      %3409 = vmatpush2.msra.mxu0 0.0
      %3410 = vmatprep.subr.mxu0 0.0
      %3411 = vmatpush2.msra.mxu0 0.0
      %3412 = vmatprep.mubr.f32.mxu0 0.0
      %3413 = vmatmul.mubr.f32.gmra.mxu0 %v3343
      %v3414 = vpop.f32.mrf.mxu0
      %v3415 = vadd.f32 0.0, %v3414
      %v3416 = vpop.f32.mrf.mxu0
      %v3417 = vadd.f32 0.0, %v3416
      %3418 = vmatprep.mubr.f32.mxu0 0.0
      %3419 = vmatmul.mubr.f32.gmra.mxu0 %v3346
      %v3420 = vpop.f32.mrf.mxu0
      %v3421 = vadd.f32 0.0, %v3420
      %v3422 = vpop.f32.mrf.mxu0
      %v3423 = vadd.f32 0.0, %v3422
      %3424 = vdwg.mxu0
      %3425 = vmatprep.subr.mxu0 0.0
      %3426 = vmatpush1.msra.mxu0 0.0
      %3427 = vmatprep.subr.mxu0 0.0
      %3428 = vmatpush1.msra.mxu0 0.0
      %3429 = vmatprep.subr.mxu0 0.0
      %3430 = vmatpush1.msra.mxu0 0.0
      %3431 = vmatprep.subr.mxu0 0.0
      %3432 = vmatpush1.msra.mxu0 0.0
      %3433 = vmatprep.subr.mxu0 0.0
      %3434 = vmatpush1.msra.mxu0 0.0
      %3435 = vmatprep.subr.mxu0 0.0
      %3436 = vmatpush1.msra.mxu0 0.0
      %3437 = vmatprep.subr.mxu0 0.0
      %3438 = vmatpush1.msra.mxu0 0.0
      %3439 = vmatprep.subr.mxu0 0.0
      %3440 = vmatpush1.msra.mxu0 0.0
      %3441 = vmatprep.subr.mxu0 0.0
      %3442 = vmatpush1.msra.mxu0 0.0
      %3443 = vmatprep.subr.mxu0 0.0
      %3444 = vmatpush1.msra.mxu0 0.0
      %3445 = vmatprep.subr.mxu0 0.0
      %3446 = vmatpush1.msra.mxu0 0.0
      %3447 = vmatprep.subr.mxu0 0.0
      %3448 = vmatpush1.msra.mxu0 0.0
      %3449 = vmatprep.subr.mxu0 0.0
      %3450 = vmatpush1.msra.mxu0 0.0
      %3451 = vmatprep.subr.mxu0 0.0
      %3452 = vmatpush1.msra.mxu0 0.0
      %3453 = vmatprep.subr.mxu0 0.0
      %3454 = vmatpush1.msra.mxu0 %v3331
      %3455 = vmatprep.subr.mxu0 0.0
      %3456 = vmatpush1.msra.mxu0 %v3325
      %3457 = vmatprep.subr.mxu0 0.0
      %3458 = vmatpush2.msra.mxu0 0.0
      %3459 = vmatprep.subr.mxu0 0.0
      %3460 = vmatpush2.msra.mxu0 0.0
      %3461 = vmatprep.subr.mxu0 0.0
      %3462 = vmatpush2.msra.mxu0 0.0
      %3463 = vmatprep.subr.mxu0 0.0
      %3464 = vmatpush2.msra.mxu0 0.0
      %3465 = vmatprep.subr.mxu0 0.0
      %3466 = vmatpush2.msra.mxu0 0.0
      %3467 = vmatprep.subr.mxu0 0.0
      %3468 = vmatpush2.msra.mxu0 0.0
      %3469 = vmatprep.subr.mxu0 0.0
      %3470 = vmatpush2.msra.mxu0 0.0
      %3471 = vmatprep.subr.mxu0 0.0
      %3472 = vmatpush2.msra.mxu0 0.0
      %3473 = vmatprep.subr.mxu0 0.0
      %3474 = vmatpush2.msra.mxu0 0.0
      %3475 = vmatprep.subr.mxu0 0.0
      %3476 = vmatpush2.msra.mxu0 0.0
      %3477 = vmatprep.subr.mxu0 0.0
      %3478 = vmatpush2.msra.mxu0 0.0
      %3479 = vmatprep.subr.mxu0 0.0
      %3480 = vmatpush2.msra.mxu0 0.0
      %3481 = vmatprep.subr.mxu0 0.0
      %3482 = vmatpush2.msra.mxu0 0.0
      %3483 = vmatprep.subr.mxu0 0.0
      %3484 = vmatpush2.msra.mxu0 0.0
      %3485 = vmatprep.subr.mxu0 0.0
      %3486 = vmatpush2.msra.mxu0 0.0
      %3487 = vmatprep.subr.mxu0 0.0
      %3488 = vmatpush2.msra.mxu0 0.0
      %3489 = vmatprep.mubr.f32.mxu0 0.0
      %3490 = vmatmul.mubr.f32.gmra.mxu0 %v3343
      %v3491 = vpop.f32.mrf.mxu0
      %v3492 = vadd.f32 0.0, %v3491
      %v3493 = vpop.f32.mrf.mxu0
      %3494 = vmatprep.mubr.f32.mxu0 0.0
      %3495 = vmatmul.mubr.f32.gmra.mxu0 %v3346
      %v3496 = vpop.f32.mrf.mxu0
      %v3497 = vadd.f32 0.0, %v3496
      %v3498 = vpop.f32.mrf.mxu0
      %3499 = vdwg.mxu0
      %v3500 = vadd.f32 %v3311, %v3415
      %v3501 = vadd.f32 %v3312, %v3417
      %v3502 = vadd.f32 %v3313, %v3492
      %v3503 = vadd.f32 %v3314, %v3421
      %v3504 = vadd.f32 %v3315, %v3423
      %v3505 = vadd.f32 %v3316, %v3497
      %s3506 = scalar_lea.vmem %s1, 272
      %v3507 = vld [vmem:[%s3506] sm:$0xff]
      %v3508 = vld [vmem:[%s3506 + $0x8] sm:$0xff]
      %3509 = vrot.lane.b32.xlu0 %v1992, 109
      %v3510 = vpop.permute.xlu0 %3509
      %3511 = vrot.lane.b32.xlu0 %v1993, 109
      %v3512 = vpop.permute.xlu0 %3511
      %3513 = vrot.lane.b32.xlu0 %v1994, 109
      %v3514 = vpop.permute.xlu0 %3513
      %3515 = vrot.lane.b32.xlu0 %v1996, 109
      %v3516 = vpop.permute.xlu0 %3515
      %3517 = vrot.lane.b32.xlu0 %v1997, 109
      %v3518 = vpop.permute.xlu0 %3517
      %3519 = vrot.lane.b32.xlu0 %v1998, 109
      %v3520 = vpop.permute.xlu0 %3519
      %v3521 = vsel %vm1776, %v3510, %v3512
      %v3522 = vsel %vm1776, %v3512, %v3514
      %v3523 = vsel %vm1776, %v3516, %v3518
      %v3524 = vsel %vm1776, %v3518, %v3520
      %v3532 = vsel %vm286, %v3507, 0
      %v3535 = vsel %vm286, %v3508, 0
      %3537 = vmatprep.subr.mxu0 0.0
      %3538 = vmatpush1.msra.mxu0 0.0
      %3539 = vmatprep.subr.mxu0 0.0
      %3540 = vmatpush1.msra.mxu0 0.0
      %3541 = vmatprep.subr.mxu0 0.0
      %3542 = vmatpush1.msra.mxu0 0.0
      %3543 = vmatprep.subr.mxu0 0.0
      %3544 = vmatpush1.msra.mxu0 0.0
      %3545 = vmatprep.subr.mxu0 0.0
      %3546 = vmatpush1.msra.mxu0 0.0
      %3547 = vmatprep.subr.mxu0 0.0
      %3548 = vmatpush1.msra.mxu0 0.0
      %3549 = vmatprep.subr.mxu0 0.0
      %3550 = vmatpush1.msra.mxu0 0.0
      %3551 = vmatprep.subr.mxu0 0.0
      %3552 = vmatpush1.msra.mxu0 0.0
      %3553 = vmatprep.subr.mxu0 0.0
      %3554 = vmatpush1.msra.mxu0 0.0
      %3555 = vmatprep.subr.mxu0 0.0
      %3556 = vmatpush1.msra.mxu0 0.0
      %3557 = vmatprep.subr.mxu0 0.0
      %3558 = vmatpush1.msra.mxu0 0.0
      %3559 = vmatprep.subr.mxu0 0.0
      %3560 = vmatpush1.msra.mxu0 0.0
      %3561 = vmatprep.subr.mxu0 0.0
      %3562 = vmatpush1.msra.mxu0 0.0
      %3563 = vmatprep.subr.mxu0 0.0
      %3564 = vmatpush1.msra.mxu0 0.0
      %3565 = vmatprep.subr.mxu0 %v3524
      %3566 = vmatpush1.msra.mxu0 %v3523
      %3567 = vmatprep.subr.mxu0 %v3522
      %3568 = vmatpush1.msra.mxu0 %v3521
      %3569 = vmatprep.subr.mxu0 0.0
      %3570 = vmatpush2.msra.mxu0 0.0
      %3571 = vmatprep.subr.mxu0 0.0
      %3572 = vmatpush2.msra.mxu0 0.0
      %3573 = vmatprep.subr.mxu0 0.0
      %3574 = vmatpush2.msra.mxu0 0.0
      %3575 = vmatprep.subr.mxu0 0.0
      %3576 = vmatpush2.msra.mxu0 0.0
      %3577 = vmatprep.subr.mxu0 0.0
      %3578 = vmatpush2.msra.mxu0 0.0
      %3579 = vmatprep.subr.mxu0 0.0
      %3580 = vmatpush2.msra.mxu0 0.0
      %3581 = vmatprep.subr.mxu0 0.0
      %3582 = vmatpush2.msra.mxu0 0.0
      %3583 = vmatprep.subr.mxu0 0.0
      %3584 = vmatpush2.msra.mxu0 0.0
      %3585 = vmatprep.subr.mxu0 0.0
      %3586 = vmatpush2.msra.mxu0 0.0
      %3587 = vmatprep.subr.mxu0 0.0
      %3588 = vmatpush2.msra.mxu0 0.0
      %3589 = vmatprep.subr.mxu0 0.0
      %3590 = vmatpush2.msra.mxu0 0.0
      %3591 = vmatprep.subr.mxu0 0.0
      %3592 = vmatpush2.msra.mxu0 0.0
      %3593 = vmatprep.subr.mxu0 0.0
      %3594 = vmatpush2.msra.mxu0 0.0
      %3595 = vmatprep.subr.mxu0 0.0
      %3596 = vmatpush2.msra.mxu0 0.0
      %3597 = vmatprep.subr.mxu0 0.0
      %3598 = vmatpush2.msra.mxu0 0.0
      %3599 = vmatprep.subr.mxu0 0.0
      %3600 = vmatpush2.msra.mxu0 0.0
      %3601 = vmatprep.mubr.f32.mxu0 0.0
      %3602 = vmatmul.mubr.f32.gmra.mxu0 %v3532
      %v3603 = vpop.f32.mrf.mxu0
      %v3604 = vadd.f32 0.0, %v3603
      %v3605 = vpop.f32.mrf.mxu0
      %v3606 = vadd.f32 0.0, %v3605
      %3607 = vmatprep.mubr.f32.mxu0 0.0
      %3608 = vmatmul.mubr.f32.gmra.mxu0 %v3535
      %v3609 = vpop.f32.mrf.mxu0
      %v3610 = vadd.f32 0.0, %v3609
      %v3611 = vpop.f32.mrf.mxu0
      %v3612 = vadd.f32 0.0, %v3611
      %3613 = vdwg.mxu0
      %3614 = vmatprep.subr.mxu0 0.0
      %3615 = vmatpush1.msra.mxu0 0.0
      %3616 = vmatprep.subr.mxu0 0.0
      %3617 = vmatpush1.msra.mxu0 0.0
      %3618 = vmatprep.subr.mxu0 0.0
      %3619 = vmatpush1.msra.mxu0 0.0
      %3620 = vmatprep.subr.mxu0 0.0
      %3621 = vmatpush1.msra.mxu0 0.0
      %3622 = vmatprep.subr.mxu0 0.0
      %3623 = vmatpush1.msra.mxu0 0.0
      %3624 = vmatprep.subr.mxu0 0.0
      %3625 = vmatpush1.msra.mxu0 0.0
      %3626 = vmatprep.subr.mxu0 0.0
      %3627 = vmatpush1.msra.mxu0 0.0
      %3628 = vmatprep.subr.mxu0 0.0
      %3629 = vmatpush1.msra.mxu0 0.0
      %3630 = vmatprep.subr.mxu0 0.0
      %3631 = vmatpush1.msra.mxu0 0.0
      %3632 = vmatprep.subr.mxu0 0.0
      %3633 = vmatpush1.msra.mxu0 0.0
      %3634 = vmatprep.subr.mxu0 0.0
      %3635 = vmatpush1.msra.mxu0 0.0
      %3636 = vmatprep.subr.mxu0 0.0
      %3637 = vmatpush1.msra.mxu0 0.0
      %3638 = vmatprep.subr.mxu0 0.0
      %3639 = vmatpush1.msra.mxu0 0.0
      %3640 = vmatprep.subr.mxu0 0.0
      %3641 = vmatpush1.msra.mxu0 0.0
      %3642 = vmatprep.subr.mxu0 0.0
      %3643 = vmatpush1.msra.mxu0 %v3520
      %3644 = vmatprep.subr.mxu0 0.0
      %3645 = vmatpush1.msra.mxu0 %v3514
      %3646 = vmatprep.subr.mxu0 0.0
      %3647 = vmatpush2.msra.mxu0 0.0
      %3648 = vmatprep.subr.mxu0 0.0
      %3649 = vmatpush2.msra.mxu0 0.0
      %3650 = vmatprep.subr.mxu0 0.0
      %3651 = vmatpush2.msra.mxu0 0.0
      %3652 = vmatprep.subr.mxu0 0.0
      %3653 = vmatpush2.msra.mxu0 0.0
      %3654 = vmatprep.subr.mxu0 0.0
      %3655 = vmatpush2.msra.mxu0 0.0
      %3656 = vmatprep.subr.mxu0 0.0
      %3657 = vmatpush2.msra.mxu0 0.0
      %3658 = vmatprep.subr.mxu0 0.0
      %3659 = vmatpush2.msra.mxu0 0.0
      %3660 = vmatprep.subr.mxu0 0.0
      %3661 = vmatpush2.msra.mxu0 0.0
      %3662 = vmatprep.subr.mxu0 0.0
      %3663 = vmatpush2.msra.mxu0 0.0
      %3664 = vmatprep.subr.mxu0 0.0
      %3665 = vmatpush2.msra.mxu0 0.0
      %3666 = vmatprep.subr.mxu0 0.0
      %3667 = vmatpush2.msra.mxu0 0.0
      %3668 = vmatprep.subr.mxu0 0.0
      %3669 = vmatpush2.msra.mxu0 0.0
      %3670 = vmatprep.subr.mxu0 0.0
      %3671 = vmatpush2.msra.mxu0 0.0
      %3672 = vmatprep.subr.mxu0 0.0
      %3673 = vmatpush2.msra.mxu0 0.0
      %3674 = vmatprep.subr.mxu0 0.0
      %3675 = vmatpush2.msra.mxu0 0.0
      %3676 = vmatprep.subr.mxu0 0.0
      %3677 = vmatpush2.msra.mxu0 0.0
      %3678 = vmatprep.mubr.f32.mxu0 0.0
      %3679 = vmatmul.mubr.f32.gmra.mxu0 %v3532
      %v3680 = vpop.f32.mrf.mxu0
      %v3681 = vadd.f32 0.0, %v3680
      %v3682 = vpop.f32.mrf.mxu0
      %3683 = vmatprep.mubr.f32.mxu0 0.0
      %3684 = vmatmul.mubr.f32.gmra.mxu0 %v3535
      %v3685 = vpop.f32.mrf.mxu0
      %v3686 = vadd.f32 0.0, %v3685
      %v3687 = vpop.f32.mrf.mxu0
      %3688 = vdwg.mxu0
      %v3689 = vadd.f32 %v3500, %v3604
      %v3690 = vadd.f32 %v3501, %v3606
      %v3691 = vadd.f32 %v3502, %v3681
      %v3692 = vadd.f32 %v3503, %v3610
      %v3693 = vadd.f32 %v3504, %v3612
      %v3694 = vadd.f32 %v3505, %v3686
      %s3695 = scalar_lea.vmem %s2, 16
      %v3696 = vld [vmem:[%s3695] sm:$0xff]
      %v3697 = vld [vmem:[%s3695 + $0x8] sm:$0xff]
      %3699 = vset.pattern.permute.xlu0 0
      %3700 = vperm.xlu0 %3699, %v3696
      %v3701 = vpop.permute.xlu0 %3700
      %3704 = vset.pattern.permute.xlu0 0
      %3705 = vperm.xlu0 %3704, %v3697
      %v3706 = vpop.permute.xlu0 %3705
      %v3708 = vadd.f32 %v3689, %v3701
      %v3709 = vadd.f32 %v3690, %v3701
      %v3710 = vadd.f32 %v3691, %v3701
      %v3711 = vadd.f32 %v3692, %v3706
      %v3712 = vadd.f32 %v3693, %v3706
      %v3713 = vadd.f32 %v3694, %v3706
      %v3714 = vld [vmem:[#allocation2 + $0x8] sm:$0xff]
      %v3715 = vld [vmem:[#allocation2 + $0x10] sm:$0xff]
      %v3716 = vld [vmem:[#allocation2 + $0x18] sm:$0xff]
      %v3717 = vld [vmem:[#allocation2 + $0x28] sm:$0xff]
      %v3718 = vld [vmem:[#allocation2 + $0x30] sm:$0xff]
      %v3719 = vld [vmem:[#allocation2 + $0x38] sm:$0xff]
      %v3720 = vadd.f32 %v3708, %v3714
      %v3721 = vadd.f32 %v3709, %v3715
      %v3722 = vadd.f32 %v3710, %v3716
      %v3723 = vadd.f32 %v3711, %v3717
      %v3724 = vadd.f32 %v3712, %v3718
      %v3725 = vadd.f32 %v3713, %v3719
      %v3726 = vmul.f32 %v3720, %v203
      %v3727 = vmul.f32 %v3721, %v207
      %v3728 = vmul.f32 %v3722, %v211
      %v3729 = vmul.f32 %v3723, %v203
      %v3730 = vmul.f32 %v3724, %v207
      %v3731 = vmul.f32 %v3725, %v211
      %3732 = vst [vmem:[#allocation2 + $0x8] sm:$0xff] %v3726
      %3733 = vst [vmem:[#allocation2 + $0x10] sm:$0xff] %v3727
      %3734 = vst.msk [vmem:[#allocation2 + $0x18] sm:$0xff] %vm1983, %v3728
      %3735 = vst [vmem:[#allocation2 + $0x28] sm:$0xff] %v3729
      %3736 = vst [vmem:[#allocation2 + $0x30] sm:$0xff] %v3730
      %3737 = vst.msk [vmem:[#allocation2 + $0x38] sm:$0xff] %vm1983, %v3731
      %s3738 = scalar_lea.vmem %s1, 288
      %v3739 = vld [vmem:[%s3738] sm:$0xff]
      %v3740 = vld [vmem:[%s3738 + $0x8] sm:$0xff]
      %v3741 = vld [vmem:[#allocation2] sm:$0xff]
      %v3742 = vld [vmem:[#allocation2 + $0x8] sm:$0xff]
      %v3743 = vld [vmem:[#allocation2 + $0x10] sm:$0xff]
      %v3744 = vld [vmem:[#allocation2 + $0x18] sm:$0xff]
      %v3745 = vld [vmem:[#allocation2 + $0x20] sm:$0xff]
      %v3746 = vld [vmem:[#allocation2 + $0x28] sm:$0xff]
      %v3747 = vld [vmem:[#allocation2 + $0x30] sm:$0xff]
      %v3748 = vld [vmem:[#allocation2 + $0x38] sm:$0xff]
      %s3749 = scalar_lea.vmem %s1, 304
      %v3750 = vld [vmem:[%s3749] sm:$0xff]
      %v3751 = vld [vmem:[%s3749 + $0x8] sm:$0xff]
      %3760 = vrot.lane.b32.xlu0 %v3741, 18
      %v3761 = vpop.permute.xlu0 %3760
      %3762 = vrot.lane.b32.xlu0 %v3742, 18
      %v3763 = vpop.permute.xlu0 %3762
      %3764 = vrot.lane.b32.xlu0 %v3743, 18
      %v3765 = vpop.permute.xlu0 %3764
      %3766 = vrot.lane.b32.xlu0 %v3744, 18
      %v3767 = vpop.permute.xlu0 %3766
      %3768 = vrot.lane.b32.xlu0 %v3745, 18
      %v3769 = vpop.permute.xlu0 %3768
      %3770 = vrot.lane.b32.xlu0 %v3746, 18
      %v3771 = vpop.permute.xlu0 %3770
      %3772 = vrot.lane.b32.xlu0 %v3747, 18
      %v3773 = vpop.permute.xlu0 %3772
      %3774 = vrot.lane.b32.xlu0 %v3748, 18
      %v3775 = vpop.permute.xlu0 %3774
      %v3776 = vsel %vm273, %v3761, %v3763
      %v3777 = vsel %vm273, %v3763, %v3765
      %v3778 = vsel %vm273, %v3765, %v3767
      %v3779 = vsel %vm273, %v3769, %v3771
      %v3780 = vsel %vm273, %v3771, %v3773
      %v3781 = vsel %vm273, %v3773, %v3775
      %v3789 = vsel %vm286, %v3750, 0
      %v3792 = vsel %vm286, %v3751, 0
      %3794 = vmatprep.subr.mxu0 0.0
      %3795 = vmatpush1.msra.mxu0 0.0
      %3796 = vmatprep.subr.mxu0 0.0
      %3797 = vmatpush1.msra.mxu0 0.0
      %3798 = vmatprep.subr.mxu0 0.0
      %3799 = vmatpush1.msra.mxu0 0.0
      %3800 = vmatprep.subr.mxu0 0.0
      %3801 = vmatpush1.msra.mxu0 0.0
      %3802 = vmatprep.subr.mxu0 0.0
      %3803 = vmatpush1.msra.mxu0 0.0
      %3804 = vmatprep.subr.mxu0 0.0
      %3805 = vmatpush1.msra.mxu0 0.0
      %3806 = vmatprep.subr.mxu0 0.0
      %3807 = vmatpush1.msra.mxu0 0.0
      %3808 = vmatprep.subr.mxu0 0.0
      %3809 = vmatpush1.msra.mxu0 0.0
      %3810 = vmatprep.subr.mxu0 0.0
      %3811 = vmatpush1.msra.mxu0 0.0
      %3812 = vmatprep.subr.mxu0 0.0
      %3813 = vmatpush1.msra.mxu0 0.0
      %3814 = vmatprep.subr.mxu0 0.0
      %3815 = vmatpush1.msra.mxu0 0.0
      %3816 = vmatprep.subr.mxu0 0.0
      %3817 = vmatpush1.msra.mxu0 0.0
      %3818 = vmatprep.subr.mxu0 0.0
      %3819 = vmatpush1.msra.mxu0 0.0
      %3820 = vmatprep.subr.mxu0 0.0
      %3821 = vmatpush1.msra.mxu0 0.0
      %3822 = vmatprep.subr.mxu0 %v3780
      %3823 = vmatpush1.msra.mxu0 %v3779
      %3824 = vmatprep.subr.mxu0 %v3777
      %3825 = vmatpush1.msra.mxu0 %v3776
      %3826 = vmatprep.subr.mxu0 0.0
      %3827 = vmatpush2.msra.mxu0 0.0
      %3828 = vmatprep.subr.mxu0 0.0
      %3829 = vmatpush2.msra.mxu0 0.0
      %3830 = vmatprep.subr.mxu0 0.0
      %3831 = vmatpush2.msra.mxu0 0.0
      %3832 = vmatprep.subr.mxu0 0.0
      %3833 = vmatpush2.msra.mxu0 0.0
      %3834 = vmatprep.subr.mxu0 0.0
      %3835 = vmatpush2.msra.mxu0 0.0
      %3836 = vmatprep.subr.mxu0 0.0
      %3837 = vmatpush2.msra.mxu0 0.0
      %3838 = vmatprep.subr.mxu0 0.0
      %3839 = vmatpush2.msra.mxu0 0.0
      %3840 = vmatprep.subr.mxu0 0.0
      %3841 = vmatpush2.msra.mxu0 0.0
      %3842 = vmatprep.subr.mxu0 0.0
      %3843 = vmatpush2.msra.mxu0 0.0
      %3844 = vmatprep.subr.mxu0 0.0
      %3845 = vmatpush2.msra.mxu0 0.0
      %3846 = vmatprep.subr.mxu0 0.0
      %3847 = vmatpush2.msra.mxu0 0.0
      %3848 = vmatprep.subr.mxu0 0.0
      %3849 = vmatpush2.msra.mxu0 0.0
      %3850 = vmatprep.subr.mxu0 0.0
      %3851 = vmatpush2.msra.mxu0 0.0
      %3852 = vmatprep.subr.mxu0 0.0
      %3853 = vmatpush2.msra.mxu0 0.0
      %3854 = vmatprep.subr.mxu0 0.0
      %3855 = vmatpush2.msra.mxu0 0.0
      %3856 = vmatprep.subr.mxu0 0.0
      %3857 = vmatpush2.msra.mxu0 0.0
      %3858 = vmatprep.mubr.f32.mxu0 0.0
      %3859 = vmatmul.mubr.f32.gmra.mxu0 %v3789
      %v3860 = vpop.f32.mrf.mxu0
      %v3861 = vadd.f32 0.0, %v3860
      %v3862 = vpop.f32.mrf.mxu0
      %v3863 = vadd.f32 0.0, %v3862
      %3864 = vmatprep.mubr.f32.mxu0 0.0
      %3865 = vmatmul.mubr.f32.gmra.mxu0 %v3792
      %v3866 = vpop.f32.mrf.mxu0
      %v3867 = vadd.f32 0.0, %v3866
      %v3868 = vpop.f32.mrf.mxu0
      %v3869 = vadd.f32 0.0, %v3868
      %3870 = vdwg.mxu0
      %3871 = vmatprep.subr.mxu0 0.0
      %3872 = vmatpush1.msra.mxu0 0.0
      %3873 = vmatprep.subr.mxu0 0.0
      %3874 = vmatpush1.msra.mxu0 0.0
      %3875 = vmatprep.subr.mxu0 0.0
      %3876 = vmatpush1.msra.mxu0 0.0
      %3877 = vmatprep.subr.mxu0 0.0
      %3878 = vmatpush1.msra.mxu0 0.0
      %3879 = vmatprep.subr.mxu0 0.0
      %3880 = vmatpush1.msra.mxu0 0.0
      %3881 = vmatprep.subr.mxu0 0.0
      %3882 = vmatpush1.msra.mxu0 0.0
      %3883 = vmatprep.subr.mxu0 0.0
      %3884 = vmatpush1.msra.mxu0 0.0
      %3885 = vmatprep.subr.mxu0 0.0
      %3886 = vmatpush1.msra.mxu0 0.0
      %3887 = vmatprep.subr.mxu0 0.0
      %3888 = vmatpush1.msra.mxu0 0.0
      %3889 = vmatprep.subr.mxu0 0.0
      %3890 = vmatpush1.msra.mxu0 0.0
      %3891 = vmatprep.subr.mxu0 0.0
      %3892 = vmatpush1.msra.mxu0 0.0
      %3893 = vmatprep.subr.mxu0 0.0
      %3894 = vmatpush1.msra.mxu0 0.0
      %3895 = vmatprep.subr.mxu0 0.0
      %3896 = vmatpush1.msra.mxu0 0.0
      %3897 = vmatprep.subr.mxu0 0.0
      %3898 = vmatpush1.msra.mxu0 0.0
      %3899 = vmatprep.subr.mxu0 0.0
      %3900 = vmatpush1.msra.mxu0 %v3781
      %3901 = vmatprep.subr.mxu0 0.0
      %3902 = vmatpush1.msra.mxu0 %v3778
      %3903 = vmatprep.subr.mxu0 0.0
      %3904 = vmatpush2.msra.mxu0 0.0
      %3905 = vmatprep.subr.mxu0 0.0
      %3906 = vmatpush2.msra.mxu0 0.0
      %3907 = vmatprep.subr.mxu0 0.0
      %3908 = vmatpush2.msra.mxu0 0.0
      %3909 = vmatprep.subr.mxu0 0.0
      %3910 = vmatpush2.msra.mxu0 0.0
      %3911 = vmatprep.subr.mxu0 0.0
      %3912 = vmatpush2.msra.mxu0 0.0
      %3913 = vmatprep.subr.mxu0 0.0
      %3914 = vmatpush2.msra.mxu0 0.0
      %3915 = vmatprep.subr.mxu0 0.0
      %3916 = vmatpush2.msra.mxu0 0.0
      %3917 = vmatprep.subr.mxu0 0.0
      %3918 = vmatpush2.msra.mxu0 0.0
      %3919 = vmatprep.subr.mxu0 0.0
      %3920 = vmatpush2.msra.mxu0 0.0
      %3921 = vmatprep.subr.mxu0 0.0
      %3922 = vmatpush2.msra.mxu0 0.0
      %3923 = vmatprep.subr.mxu0 0.0
      %3924 = vmatpush2.msra.mxu0 0.0
      %3925 = vmatprep.subr.mxu0 0.0
      %3926 = vmatpush2.msra.mxu0 0.0
      %3927 = vmatprep.subr.mxu0 0.0
      %3928 = vmatpush2.msra.mxu0 0.0
      %3929 = vmatprep.subr.mxu0 0.0
      %3930 = vmatpush2.msra.mxu0 0.0
      %3931 = vmatprep.subr.mxu0 0.0
      %3932 = vmatpush2.msra.mxu0 0.0
      %3933 = vmatprep.subr.mxu0 0.0
      %3934 = vmatpush2.msra.mxu0 0.0
      %3935 = vmatprep.mubr.f32.mxu0 0.0
      %3936 = vmatmul.mubr.f32.gmra.mxu0 %v3789
      %v3937 = vpop.f32.mrf.mxu0
      %v3938 = vadd.f32 0.0, %v3937
      %v3939 = vpop.f32.mrf.mxu0
      %3940 = vmatprep.mubr.f32.mxu0 0.0
      %3941 = vmatmul.mubr.f32.gmra.mxu0 %v3792
      %v3942 = vpop.f32.mrf.mxu0
      %v3943 = vadd.f32 0.0, %v3942
      %v3944 = vpop.f32.mrf.mxu0
      %3945 = vdwg.mxu0
      %3946 = vrot.lane.b32.xlu0 %v3741, 19
      %v3947 = vpop.permute.xlu0 %3946
      %3948 = vrot.lane.b32.xlu0 %v3742, 19
      %v3949 = vpop.permute.xlu0 %3948
      %3950 = vrot.lane.b32.xlu0 %v3743, 19
      %v3951 = vpop.permute.xlu0 %3950
      %3952 = vrot.lane.b32.xlu0 %v3744, 19
      %v3953 = vpop.permute.xlu0 %3952
      %3954 = vrot.lane.b32.xlu0 %v3745, 19
      %v3955 = vpop.permute.xlu0 %3954
      %3956 = vrot.lane.b32.xlu0 %v3746, 19
      %v3957 = vpop.permute.xlu0 %3956
      %3958 = vrot.lane.b32.xlu0 %v3747, 19
      %v3959 = vpop.permute.xlu0 %3958
      %3960 = vrot.lane.b32.xlu0 %v3748, 19
      %v3961 = vpop.permute.xlu0 %3960
      %v3962 = vsel %vm461, %v3947, %v3949
      %v3963 = vsel %vm461, %v3949, %v3951
      %v3964 = vsel %vm461, %v3951, %v3953
      %v3965 = vsel %vm461, %v3955, %v3957
      %v3966 = vsel %vm461, %v3957, %v3959
      %v3967 = vsel %vm461, %v3959, %v3961
      %v3975 = vsel %vm286, %v3739, 0
      %v3978 = vsel %vm286, %v3740, 0
      %3980 = vmatprep.subr.mxu0 0.0
      %3981 = vmatpush1.msra.mxu0 0.0
      %3982 = vmatprep.subr.mxu0 0.0
      %3983 = vmatpush1.msra.mxu0 0.0
      %3984 = vmatprep.subr.mxu0 0.0
      %3985 = vmatpush1.msra.mxu0 0.0
      %3986 = vmatprep.subr.mxu0 0.0
      %3987 = vmatpush1.msra.mxu0 0.0
      %3988 = vmatprep.subr.mxu0 0.0
      %3989 = vmatpush1.msra.mxu0 0.0
      %3990 = vmatprep.subr.mxu0 0.0
      %3991 = vmatpush1.msra.mxu0 0.0
      %3992 = vmatprep.subr.mxu0 0.0
      %3993 = vmatpush1.msra.mxu0 0.0
      %3994 = vmatprep.subr.mxu0 0.0
      %3995 = vmatpush1.msra.mxu0 0.0
      %3996 = vmatprep.subr.mxu0 0.0
      %3997 = vmatpush1.msra.mxu0 0.0
      %3998 = vmatprep.subr.mxu0 0.0
      %3999 = vmatpush1.msra.mxu0 0.0
      %4000 = vmatprep.subr.mxu0 0.0
      %4001 = vmatpush1.msra.mxu0 0.0
      %4002 = vmatprep.subr.mxu0 0.0
      %4003 = vmatpush1.msra.mxu0 0.0
      %4004 = vmatprep.subr.mxu0 0.0
      %4005 = vmatpush1.msra.mxu0 0.0
      %4006 = vmatprep.subr.mxu0 0.0
      %4007 = vmatpush1.msra.mxu0 0.0
      %4008 = vmatprep.subr.mxu0 %v3966
      %4009 = vmatpush1.msra.mxu0 %v3965
      %4010 = vmatprep.subr.mxu0 %v3963
      %4011 = vmatpush1.msra.mxu0 %v3962
      %4012 = vmatprep.subr.mxu0 0.0
      %4013 = vmatpush2.msra.mxu0 0.0
      %4014 = vmatprep.subr.mxu0 0.0
      %4015 = vmatpush2.msra.mxu0 0.0
      %4016 = vmatprep.subr.mxu0 0.0
      %4017 = vmatpush2.msra.mxu0 0.0
      %4018 = vmatprep.subr.mxu0 0.0
      %4019 = vmatpush2.msra.mxu0 0.0
      %4020 = vmatprep.subr.mxu0 0.0
      %4021 = vmatpush2.msra.mxu0 0.0
      %4022 = vmatprep.subr.mxu0 0.0
      %4023 = vmatpush2.msra.mxu0 0.0
      %4024 = vmatprep.subr.mxu0 0.0
      %4025 = vmatpush2.msra.mxu0 0.0
      %4026 = vmatprep.subr.mxu0 0.0
      %4027 = vmatpush2.msra.mxu0 0.0
      %4028 = vmatprep.subr.mxu0 0.0
      %4029 = vmatpush2.msra.mxu0 0.0
      %4030 = vmatprep.subr.mxu0 0.0
      %4031 = vmatpush2.msra.mxu0 0.0
      %4032 = vmatprep.subr.mxu0 0.0
      %4033 = vmatpush2.msra.mxu0 0.0
      %4034 = vmatprep.subr.mxu0 0.0
      %4035 = vmatpush2.msra.mxu0 0.0
      %4036 = vmatprep.subr.mxu0 0.0
      %4037 = vmatpush2.msra.mxu0 0.0
      %4038 = vmatprep.subr.mxu0 0.0
      %4039 = vmatpush2.msra.mxu0 0.0
      %4040 = vmatprep.subr.mxu0 0.0
      %4041 = vmatpush2.msra.mxu0 0.0
      %4042 = vmatprep.subr.mxu0 0.0
      %4043 = vmatpush2.msra.mxu0 0.0
      %4044 = vmatprep.mubr.f32.mxu0 0.0
      %4045 = vmatmul.mubr.f32.gmra.mxu0 %v3975
      %v4046 = vpop.f32.mrf.mxu0
      %v4047 = vadd.f32 %v3861, %v4046
      %v4048 = vpop.f32.mrf.mxu0
      %v4049 = vadd.f32 %v3863, %v4048
      %4050 = vmatprep.mubr.f32.mxu0 0.0
      %4051 = vmatmul.mubr.f32.gmra.mxu0 %v3978
      %v4052 = vpop.f32.mrf.mxu0
      %v4053 = vadd.f32 %v3867, %v4052
      %v4054 = vpop.f32.mrf.mxu0
      %v4055 = vadd.f32 %v3869, %v4054
      %4056 = vdwg.mxu0
      %4057 = vmatprep.subr.mxu0 0.0
      %4058 = vmatpush1.msra.mxu0 0.0
      %4059 = vmatprep.subr.mxu0 0.0
      %4060 = vmatpush1.msra.mxu0 0.0
      %4061 = vmatprep.subr.mxu0 0.0
      %4062 = vmatpush1.msra.mxu0 0.0
      %4063 = vmatprep.subr.mxu0 0.0
      %4064 = vmatpush1.msra.mxu0 0.0
      %4065 = vmatprep.subr.mxu0 0.0
      %4066 = vmatpush1.msra.mxu0 0.0
      %4067 = vmatprep.subr.mxu0 0.0
      %4068 = vmatpush1.msra.mxu0 0.0
      %4069 = vmatprep.subr.mxu0 0.0
      %4070 = vmatpush1.msra.mxu0 0.0
      %4071 = vmatprep.subr.mxu0 0.0
      %4072 = vmatpush1.msra.mxu0 0.0
      %4073 = vmatprep.subr.mxu0 0.0
      %4074 = vmatpush1.msra.mxu0 0.0
      %4075 = vmatprep.subr.mxu0 0.0
      %4076 = vmatpush1.msra.mxu0 0.0
      %4077 = vmatprep.subr.mxu0 0.0
      %4078 = vmatpush1.msra.mxu0 0.0
      %4079 = vmatprep.subr.mxu0 0.0
      %4080 = vmatpush1.msra.mxu0 0.0
      %4081 = vmatprep.subr.mxu0 0.0
      %4082 = vmatpush1.msra.mxu0 0.0
      %4083 = vmatprep.subr.mxu0 0.0
      %4084 = vmatpush1.msra.mxu0 0.0
      %4085 = vmatprep.subr.mxu0 0.0
      %4086 = vmatpush1.msra.mxu0 %v3967
      %4087 = vmatprep.subr.mxu0 0.0
      %4088 = vmatpush1.msra.mxu0 %v3964
      %4089 = vmatprep.subr.mxu0 0.0
      %4090 = vmatpush2.msra.mxu0 0.0
      %4091 = vmatprep.subr.mxu0 0.0
      %4092 = vmatpush2.msra.mxu0 0.0
      %4093 = vmatprep.subr.mxu0 0.0
      %4094 = vmatpush2.msra.mxu0 0.0
      %4095 = vmatprep.subr.mxu0 0.0
      %4096 = vmatpush2.msra.mxu0 0.0
      %4097 = vmatprep.subr.mxu0 0.0
      %4098 = vmatpush2.msra.mxu0 0.0
      %4099 = vmatprep.subr.mxu0 0.0
      %4100 = vmatpush2.msra.mxu0 0.0
      %4101 = vmatprep.subr.mxu0 0.0
      %4102 = vmatpush2.msra.mxu0 0.0
      %4103 = vmatprep.subr.mxu0 0.0
      %4104 = vmatpush2.msra.mxu0 0.0
      %4105 = vmatprep.subr.mxu0 0.0
      %4106 = vmatpush2.msra.mxu0 0.0
      %4107 = vmatprep.subr.mxu0 0.0
      %4108 = vmatpush2.msra.mxu0 0.0
      %4109 = vmatprep.subr.mxu0 0.0
      %4110 = vmatpush2.msra.mxu0 0.0
      %4111 = vmatprep.subr.mxu0 0.0
      %4112 = vmatpush2.msra.mxu0 0.0
      %4113 = vmatprep.subr.mxu0 0.0
      %4114 = vmatpush2.msra.mxu0 0.0
      %4115 = vmatprep.subr.mxu0 0.0
      %4116 = vmatpush2.msra.mxu0 0.0
      %4117 = vmatprep.subr.mxu0 0.0
      %4118 = vmatpush2.msra.mxu0 0.0
      %4119 = vmatprep.subr.mxu0 0.0
      %4120 = vmatpush2.msra.mxu0 0.0
      %4121 = vmatprep.mubr.f32.mxu0 0.0
      %4122 = vmatmul.mubr.f32.gmra.mxu0 %v3975
      %v4123 = vpop.f32.mrf.mxu0
      %v4124 = vadd.f32 %v3938, %v4123
      %v4125 = vpop.f32.mrf.mxu0
      %4126 = vmatprep.mubr.f32.mxu0 0.0
      %4127 = vmatmul.mubr.f32.gmra.mxu0 %v3978
      %v4128 = vpop.f32.mrf.mxu0
      %v4129 = vadd.f32 %v3943, %v4128
      %v4130 = vpop.f32.mrf.mxu0
      %4131 = vdwg.mxu0
      %s4132 = scalar_lea.vmem %s1, 320
      %v4133 = vld [vmem:[%s4132] sm:$0xff]
      %v4134 = vld [vmem:[%s4132 + $0x8] sm:$0xff]
      %4135 = vrot.lane.b32.xlu0 %v3741, 17
      %v4136 = vpop.permute.xlu0 %4135
      %4137 = vrot.lane.b32.xlu0 %v3742, 17
      %v4138 = vpop.permute.xlu0 %4137
      %4139 = vrot.lane.b32.xlu0 %v3743, 17
      %v4140 = vpop.permute.xlu0 %4139
      %4141 = vrot.lane.b32.xlu0 %v3744, 17
      %v4142 = vpop.permute.xlu0 %4141
      %4143 = vrot.lane.b32.xlu0 %v3745, 17
      %v4144 = vpop.permute.xlu0 %4143
      %4145 = vrot.lane.b32.xlu0 %v3746, 17
      %v4146 = vpop.permute.xlu0 %4145
      %4147 = vrot.lane.b32.xlu0 %v3747, 17
      %v4148 = vpop.permute.xlu0 %4147
      %4149 = vrot.lane.b32.xlu0 %v3748, 17
      %v4150 = vpop.permute.xlu0 %4149
      %v4151 = vsel %vm651, %v4136, %v4138
      %v4152 = vsel %vm651, %v4138, %v4140
      %v4153 = vsel %vm651, %v4140, %v4142
      %v4154 = vsel %vm651, %v4144, %v4146
      %v4155 = vsel %vm651, %v4146, %v4148
      %v4156 = vsel %vm651, %v4148, %v4150
      %v4164 = vsel %vm286, %v4133, 0
      %v4167 = vsel %vm286, %v4134, 0
      %4169 = vmatprep.subr.mxu0 0.0
      %4170 = vmatpush1.msra.mxu0 0.0
      %4171 = vmatprep.subr.mxu0 0.0
      %4172 = vmatpush1.msra.mxu0 0.0
      %4173 = vmatprep.subr.mxu0 0.0
      %4174 = vmatpush1.msra.mxu0 0.0
      %4175 = vmatprep.subr.mxu0 0.0
      %4176 = vmatpush1.msra.mxu0 0.0
      %4177 = vmatprep.subr.mxu0 0.0
      %4178 = vmatpush1.msra.mxu0 0.0
      %4179 = vmatprep.subr.mxu0 0.0
      %4180 = vmatpush1.msra.mxu0 0.0
      %4181 = vmatprep.subr.mxu0 0.0
      %4182 = vmatpush1.msra.mxu0 0.0
      %4183 = vmatprep.subr.mxu0 0.0
      %4184 = vmatpush1.msra.mxu0 0.0
      %4185 = vmatprep.subr.mxu0 0.0
      %4186 = vmatpush1.msra.mxu0 0.0
      %4187 = vmatprep.subr.mxu0 0.0
      %4188 = vmatpush1.msra.mxu0 0.0
      %4189 = vmatprep.subr.mxu0 0.0
      %4190 = vmatpush1.msra.mxu0 0.0
      %4191 = vmatprep.subr.mxu0 0.0
      %4192 = vmatpush1.msra.mxu0 0.0
      %4193 = vmatprep.subr.mxu0 0.0
      %4194 = vmatpush1.msra.mxu0 0.0
      %4195 = vmatprep.subr.mxu0 0.0
      %4196 = vmatpush1.msra.mxu0 0.0
      %4197 = vmatprep.subr.mxu0 %v4155
      %4198 = vmatpush1.msra.mxu0 %v4154
      %4199 = vmatprep.subr.mxu0 %v4152
      %4200 = vmatpush1.msra.mxu0 %v4151
      %4201 = vmatprep.subr.mxu0 0.0
      %4202 = vmatpush2.msra.mxu0 0.0
      %4203 = vmatprep.subr.mxu0 0.0
      %4204 = vmatpush2.msra.mxu0 0.0
      %4205 = vmatprep.subr.mxu0 0.0
      %4206 = vmatpush2.msra.mxu0 0.0
      %4207 = vmatprep.subr.mxu0 0.0
      %4208 = vmatpush2.msra.mxu0 0.0
      %4209 = vmatprep.subr.mxu0 0.0
      %4210 = vmatpush2.msra.mxu0 0.0
      %4211 = vmatprep.subr.mxu0 0.0
      %4212 = vmatpush2.msra.mxu0 0.0
      %4213 = vmatprep.subr.mxu0 0.0
      %4214 = vmatpush2.msra.mxu0 0.0
      %4215 = vmatprep.subr.mxu0 0.0
      %4216 = vmatpush2.msra.mxu0 0.0
      %4217 = vmatprep.subr.mxu0 0.0
      %4218 = vmatpush2.msra.mxu0 0.0
      %4219 = vmatprep.subr.mxu0 0.0
      %4220 = vmatpush2.msra.mxu0 0.0
      %4221 = vmatprep.subr.mxu0 0.0
      %4222 = vmatpush2.msra.mxu0 0.0
      %4223 = vmatprep.subr.mxu0 0.0
      %4224 = vmatpush2.msra.mxu0 0.0
      %4225 = vmatprep.subr.mxu0 0.0
      %4226 = vmatpush2.msra.mxu0 0.0
      %4227 = vmatprep.subr.mxu0 0.0
      %4228 = vmatpush2.msra.mxu0 0.0
      %4229 = vmatprep.subr.mxu0 0.0
      %4230 = vmatpush2.msra.mxu0 0.0
      %4231 = vmatprep.subr.mxu0 0.0
      %4232 = vmatpush2.msra.mxu0 0.0
      %4233 = vmatprep.mubr.f32.mxu0 0.0
      %4234 = vmatmul.mubr.f32.gmra.mxu0 %v4164
      %v4235 = vpop.f32.mrf.mxu0
      %v4236 = vadd.f32 0.0, %v4235
      %v4237 = vpop.f32.mrf.mxu0
      %v4238 = vadd.f32 0.0, %v4237
      %4239 = vmatprep.mubr.f32.mxu0 0.0
      %4240 = vmatmul.mubr.f32.gmra.mxu0 %v4167
      %v4241 = vpop.f32.mrf.mxu0
      %v4242 = vadd.f32 0.0, %v4241
      %v4243 = vpop.f32.mrf.mxu0
      %v4244 = vadd.f32 0.0, %v4243
      %4245 = vdwg.mxu0
      %4246 = vmatprep.subr.mxu0 0.0
      %4247 = vmatpush1.msra.mxu0 0.0
      %4248 = vmatprep.subr.mxu0 0.0
      %4249 = vmatpush1.msra.mxu0 0.0
      %4250 = vmatprep.subr.mxu0 0.0
      %4251 = vmatpush1.msra.mxu0 0.0
      %4252 = vmatprep.subr.mxu0 0.0
      %4253 = vmatpush1.msra.mxu0 0.0
      %4254 = vmatprep.subr.mxu0 0.0
      %4255 = vmatpush1.msra.mxu0 0.0
      %4256 = vmatprep.subr.mxu0 0.0
      %4257 = vmatpush1.msra.mxu0 0.0
      %4258 = vmatprep.subr.mxu0 0.0
      %4259 = vmatpush1.msra.mxu0 0.0
      %4260 = vmatprep.subr.mxu0 0.0
      %4261 = vmatpush1.msra.mxu0 0.0
      %4262 = vmatprep.subr.mxu0 0.0
      %4263 = vmatpush1.msra.mxu0 0.0
      %4264 = vmatprep.subr.mxu0 0.0
      %4265 = vmatpush1.msra.mxu0 0.0
      %4266 = vmatprep.subr.mxu0 0.0
      %4267 = vmatpush1.msra.mxu0 0.0
      %4268 = vmatprep.subr.mxu0 0.0
      %4269 = vmatpush1.msra.mxu0 0.0
      %4270 = vmatprep.subr.mxu0 0.0
      %4271 = vmatpush1.msra.mxu0 0.0
      %4272 = vmatprep.subr.mxu0 0.0
      %4273 = vmatpush1.msra.mxu0 0.0
      %4274 = vmatprep.subr.mxu0 0.0
      %4275 = vmatpush1.msra.mxu0 %v4156
      %4276 = vmatprep.subr.mxu0 0.0
      %4277 = vmatpush1.msra.mxu0 %v4153
      %4278 = vmatprep.subr.mxu0 0.0
      %4279 = vmatpush2.msra.mxu0 0.0
      %4280 = vmatprep.subr.mxu0 0.0
      %4281 = vmatpush2.msra.mxu0 0.0
      %4282 = vmatprep.subr.mxu0 0.0
      %4283 = vmatpush2.msra.mxu0 0.0
      %4284 = vmatprep.subr.mxu0 0.0
      %4285 = vmatpush2.msra.mxu0 0.0
      %4286 = vmatprep.subr.mxu0 0.0
      %4287 = vmatpush2.msra.mxu0 0.0
      %4288 = vmatprep.subr.mxu0 0.0
      %4289 = vmatpush2.msra.mxu0 0.0
      %4290 = vmatprep.subr.mxu0 0.0
      %4291 = vmatpush2.msra.mxu0 0.0
      %4292 = vmatprep.subr.mxu0 0.0
      %4293 = vmatpush2.msra.mxu0 0.0
      %4294 = vmatprep.subr.mxu0 0.0
      %4295 = vmatpush2.msra.mxu0 0.0
      %4296 = vmatprep.subr.mxu0 0.0
      %4297 = vmatpush2.msra.mxu0 0.0
      %4298 = vmatprep.subr.mxu0 0.0
      %4299 = vmatpush2.msra.mxu0 0.0
      %4300 = vmatprep.subr.mxu0 0.0
      %4301 = vmatpush2.msra.mxu0 0.0
      %4302 = vmatprep.subr.mxu0 0.0
      %4303 = vmatpush2.msra.mxu0 0.0
      %4304 = vmatprep.subr.mxu0 0.0
      %4305 = vmatpush2.msra.mxu0 0.0
      %4306 = vmatprep.subr.mxu0 0.0
      %4307 = vmatpush2.msra.mxu0 0.0
      %4308 = vmatprep.subr.mxu0 0.0
      %4309 = vmatpush2.msra.mxu0 0.0
      %4310 = vmatprep.mubr.f32.mxu0 0.0
      %4311 = vmatmul.mubr.f32.gmra.mxu0 %v4164
      %v4312 = vpop.f32.mrf.mxu0
      %v4313 = vadd.f32 0.0, %v4312
      %v4314 = vpop.f32.mrf.mxu0
      %4315 = vmatprep.mubr.f32.mxu0 0.0
      %4316 = vmatmul.mubr.f32.gmra.mxu0 %v4167
      %v4317 = vpop.f32.mrf.mxu0
      %v4318 = vadd.f32 0.0, %v4317
      %v4319 = vpop.f32.mrf.mxu0
      %4320 = vdwg.mxu0
      %v4321 = vadd.f32 %v4047, %v4236
      %v4322 = vadd.f32 %v4049, %v4238
      %v4323 = vadd.f32 %v4124, %v4313
      %v4324 = vadd.f32 %v4053, %v4242
      %v4325 = vadd.f32 %v4055, %v4244
      %v4326 = vadd.f32 %v4129, %v4318
      %s4327 = scalar_lea.vmem %s1, 336
      %v4328 = vld [vmem:[%s4327] sm:$0xff]
      %v4329 = vld [vmem:[%s4327 + $0x8] sm:$0xff]
      %4330 = vrot.lane.b32.xlu0 %v3741, 1
      %v4331 = vpop.permute.xlu0 %4330
      %4332 = vrot.lane.b32.xlu0 %v3742, 1
      %v4333 = vpop.permute.xlu0 %4332
      %4334 = vrot.lane.b32.xlu0 %v3743, 1
      %v4335 = vpop.permute.xlu0 %4334
      %4336 = vrot.lane.b32.xlu0 %v3744, 1
      %v4337 = vpop.permute.xlu0 %4336
      %4338 = vrot.lane.b32.xlu0 %v3745, 1
      %v4339 = vpop.permute.xlu0 %4338
      %4340 = vrot.lane.b32.xlu0 %v3746, 1
      %v4341 = vpop.permute.xlu0 %4340
      %4342 = vrot.lane.b32.xlu0 %v3747, 1
      %v4343 = vpop.permute.xlu0 %4342
      %4344 = vrot.lane.b32.xlu0 %v3748, 1
      %v4345 = vpop.permute.xlu0 %4344
      %v4346 = vsel %vm847, %v4331, %v4333
      %v4347 = vsel %vm847, %v4333, %v4335
      %v4348 = vsel %vm847, %v4335, %v4337
      %v4349 = vsel %vm847, %v4339, %v4341
      %v4350 = vsel %vm847, %v4341, %v4343
      %v4351 = vsel %vm847, %v4343, %v4345
      %v4359 = vsel %vm286, %v4328, 0
      %v4362 = vsel %vm286, %v4329, 0
      %4364 = vmatprep.subr.mxu0 0.0
      %4365 = vmatpush1.msra.mxu0 0.0
      %4366 = vmatprep.subr.mxu0 0.0
      %4367 = vmatpush1.msra.mxu0 0.0
      %4368 = vmatprep.subr.mxu0 0.0
      %4369 = vmatpush1.msra.mxu0 0.0
      %4370 = vmatprep.subr.mxu0 0.0
      %4371 = vmatpush1.msra.mxu0 0.0
      %4372 = vmatprep.subr.mxu0 0.0
      %4373 = vmatpush1.msra.mxu0 0.0
      %4374 = vmatprep.subr.mxu0 0.0
      %4375 = vmatpush1.msra.mxu0 0.0
      %4376 = vmatprep.subr.mxu0 0.0
      %4377 = vmatpush1.msra.mxu0 0.0
      %4378 = vmatprep.subr.mxu0 0.0
      %4379 = vmatpush1.msra.mxu0 0.0
      %4380 = vmatprep.subr.mxu0 0.0
      %4381 = vmatpush1.msra.mxu0 0.0
      %4382 = vmatprep.subr.mxu0 0.0
      %4383 = vmatpush1.msra.mxu0 0.0
      %4384 = vmatprep.subr.mxu0 0.0
      %4385 = vmatpush1.msra.mxu0 0.0
      %4386 = vmatprep.subr.mxu0 0.0
      %4387 = vmatpush1.msra.mxu0 0.0
      %4388 = vmatprep.subr.mxu0 0.0
      %4389 = vmatpush1.msra.mxu0 0.0
      %4390 = vmatprep.subr.mxu0 0.0
      %4391 = vmatpush1.msra.mxu0 0.0
      %4392 = vmatprep.subr.mxu0 %v4350
      %4393 = vmatpush1.msra.mxu0 %v4349
      %4394 = vmatprep.subr.mxu0 %v4347
      %4395 = vmatpush1.msra.mxu0 %v4346
      %4396 = vmatprep.subr.mxu0 0.0
      %4397 = vmatpush2.msra.mxu0 0.0
      %4398 = vmatprep.subr.mxu0 0.0
      %4399 = vmatpush2.msra.mxu0 0.0
      %4400 = vmatprep.subr.mxu0 0.0
      %4401 = vmatpush2.msra.mxu0 0.0
      %4402 = vmatprep.subr.mxu0 0.0
      %4403 = vmatpush2.msra.mxu0 0.0
      %4404 = vmatprep.subr.mxu0 0.0
      %4405 = vmatpush2.msra.mxu0 0.0
      %4406 = vmatprep.subr.mxu0 0.0
      %4407 = vmatpush2.msra.mxu0 0.0
      %4408 = vmatprep.subr.mxu0 0.0
      %4409 = vmatpush2.msra.mxu0 0.0
      %4410 = vmatprep.subr.mxu0 0.0
      %4411 = vmatpush2.msra.mxu0 0.0
      %4412 = vmatprep.subr.mxu0 0.0
      %4413 = vmatpush2.msra.mxu0 0.0
      %4414 = vmatprep.subr.mxu0 0.0
      %4415 = vmatpush2.msra.mxu0 0.0
      %4416 = vmatprep.subr.mxu0 0.0
      %4417 = vmatpush2.msra.mxu0 0.0
      %4418 = vmatprep.subr.mxu0 0.0
      %4419 = vmatpush2.msra.mxu0 0.0
      %4420 = vmatprep.subr.mxu0 0.0
      %4421 = vmatpush2.msra.mxu0 0.0
      %4422 = vmatprep.subr.mxu0 0.0
      %4423 = vmatpush2.msra.mxu0 0.0
      %4424 = vmatprep.subr.mxu0 0.0
      %4425 = vmatpush2.msra.mxu0 0.0
      %4426 = vmatprep.subr.mxu0 0.0
      %4427 = vmatpush2.msra.mxu0 0.0
      %4428 = vmatprep.mubr.f32.mxu0 0.0
      %4429 = vmatmul.mubr.f32.gmra.mxu0 %v4359
      %v4430 = vpop.f32.mrf.mxu0
      %v4431 = vadd.f32 0.0, %v4430
      %v4432 = vpop.f32.mrf.mxu0
      %v4433 = vadd.f32 0.0, %v4432
      %4434 = vmatprep.mubr.f32.mxu0 0.0
      %4435 = vmatmul.mubr.f32.gmra.mxu0 %v4362
      %v4436 = vpop.f32.mrf.mxu0
      %v4437 = vadd.f32 0.0, %v4436
      %v4438 = vpop.f32.mrf.mxu0
      %v4439 = vadd.f32 0.0, %v4438
      %4440 = vdwg.mxu0
      %4441 = vmatprep.subr.mxu0 0.0
      %4442 = vmatpush1.msra.mxu0 0.0
      %4443 = vmatprep.subr.mxu0 0.0
      %4444 = vmatpush1.msra.mxu0 0.0
      %4445 = vmatprep.subr.mxu0 0.0
      %4446 = vmatpush1.msra.mxu0 0.0
      %4447 = vmatprep.subr.mxu0 0.0
      %4448 = vmatpush1.msra.mxu0 0.0
      %4449 = vmatprep.subr.mxu0 0.0
      %4450 = vmatpush1.msra.mxu0 0.0
      %4451 = vmatprep.subr.mxu0 0.0
      %4452 = vmatpush1.msra.mxu0 0.0
      %4453 = vmatprep.subr.mxu0 0.0
      %4454 = vmatpush1.msra.mxu0 0.0
      %4455 = vmatprep.subr.mxu0 0.0
      %4456 = vmatpush1.msra.mxu0 0.0
      %4457 = vmatprep.subr.mxu0 0.0
      %4458 = vmatpush1.msra.mxu0 0.0
      %4459 = vmatprep.subr.mxu0 0.0
      %4460 = vmatpush1.msra.mxu0 0.0
      %4461 = vmatprep.subr.mxu0 0.0
      %4462 = vmatpush1.msra.mxu0 0.0
      %4463 = vmatprep.subr.mxu0 0.0
      %4464 = vmatpush1.msra.mxu0 0.0
      %4465 = vmatprep.subr.mxu0 0.0
      %4466 = vmatpush1.msra.mxu0 0.0
      %4467 = vmatprep.subr.mxu0 0.0
      %4468 = vmatpush1.msra.mxu0 0.0
      %4469 = vmatprep.subr.mxu0 0.0
      %4470 = vmatpush1.msra.mxu0 %v4351
      %4471 = vmatprep.subr.mxu0 0.0
      %4472 = vmatpush1.msra.mxu0 %v4348
      %4473 = vmatprep.subr.mxu0 0.0
      %4474 = vmatpush2.msra.mxu0 0.0
      %4475 = vmatprep.subr.mxu0 0.0
      %4476 = vmatpush2.msra.mxu0 0.0
      %4477 = vmatprep.subr.mxu0 0.0
      %4478 = vmatpush2.msra.mxu0 0.0
      %4479 = vmatprep.subr.mxu0 0.0
      %4480 = vmatpush2.msra.mxu0 0.0
      %4481 = vmatprep.subr.mxu0 0.0
      %4482 = vmatpush2.msra.mxu0 0.0
      %4483 = vmatprep.subr.mxu0 0.0
      %4484 = vmatpush2.msra.mxu0 0.0
      %4485 = vmatprep.subr.mxu0 0.0
      %4486 = vmatpush2.msra.mxu0 0.0
      %4487 = vmatprep.subr.mxu0 0.0
      %4488 = vmatpush2.msra.mxu0 0.0
      %4489 = vmatprep.subr.mxu0 0.0
      %4490 = vmatpush2.msra.mxu0 0.0
      %4491 = vmatprep.subr.mxu0 0.0
      %4492 = vmatpush2.msra.mxu0 0.0
      %4493 = vmatprep.subr.mxu0 0.0
      %4494 = vmatpush2.msra.mxu0 0.0
      %4495 = vmatprep.subr.mxu0 0.0
      %4496 = vmatpush2.msra.mxu0 0.0
      %4497 = vmatprep.subr.mxu0 0.0
      %4498 = vmatpush2.msra.mxu0 0.0
      %4499 = vmatprep.subr.mxu0 0.0
      %4500 = vmatpush2.msra.mxu0 0.0
      %4501 = vmatprep.subr.mxu0 0.0
      %4502 = vmatpush2.msra.mxu0 0.0
      %4503 = vmatprep.subr.mxu0 0.0
      %4504 = vmatpush2.msra.mxu0 0.0
      %4505 = vmatprep.mubr.f32.mxu0 0.0
      %4506 = vmatmul.mubr.f32.gmra.mxu0 %v4359
      %v4507 = vpop.f32.mrf.mxu0
      %v4508 = vadd.f32 0.0, %v4507
      %v4509 = vpop.f32.mrf.mxu0
      %4510 = vmatprep.mubr.f32.mxu0 0.0
      %4511 = vmatmul.mubr.f32.gmra.mxu0 %v4362
      %v4512 = vpop.f32.mrf.mxu0
      %v4513 = vadd.f32 0.0, %v4512
      %v4514 = vpop.f32.mrf.mxu0
      %4515 = vdwg.mxu0
      %v4516 = vadd.f32 %v4321, %v4431
      %v4517 = vadd.f32 %v4322, %v4433
      %v4518 = vadd.f32 %v4323, %v4508
      %v4519 = vadd.f32 %v4324, %v4437
      %v4520 = vadd.f32 %v4325, %v4439
      %v4521 = vadd.f32 %v4326, %v4513
      %s4522 = scalar_lea.vmem %s1, 352
      %v4523 = vld [vmem:[%s4522] sm:$0xff]
      %v4524 = vld [vmem:[%s4522 + $0x8] sm:$0xff]
      %v4526 = vsel %vm286, %v4523, 0
      %v4529 = vsel %vm286, %v4524, 0
      %4531 = vmatprep.subr.mxu0 0.0
      %4532 = vmatpush1.msra.mxu0 0.0
      %4533 = vmatprep.subr.mxu0 0.0
      %4534 = vmatpush1.msra.mxu0 0.0
      %4535 = vmatprep.subr.mxu0 0.0
      %4536 = vmatpush1.msra.mxu0 0.0
      %4537 = vmatprep.subr.mxu0 0.0
      %4538 = vmatpush1.msra.mxu0 0.0
      %4539 = vmatprep.subr.mxu0 0.0
      %4540 = vmatpush1.msra.mxu0 0.0
      %4541 = vmatprep.subr.mxu0 0.0
      %4542 = vmatpush1.msra.mxu0 0.0
      %4543 = vmatprep.subr.mxu0 0.0
      %4544 = vmatpush1.msra.mxu0 0.0
      %4545 = vmatprep.subr.mxu0 0.0
      %4546 = vmatpush1.msra.mxu0 0.0
      %4547 = vmatprep.subr.mxu0 0.0
      %4548 = vmatpush1.msra.mxu0 0.0
      %4549 = vmatprep.subr.mxu0 0.0
      %4550 = vmatpush1.msra.mxu0 0.0
      %4551 = vmatprep.subr.mxu0 0.0
      %4552 = vmatpush1.msra.mxu0 0.0
      %4553 = vmatprep.subr.mxu0 0.0
      %4554 = vmatpush1.msra.mxu0 0.0
      %4555 = vmatprep.subr.mxu0 0.0
      %4556 = vmatpush1.msra.mxu0 0.0
      %4557 = vmatprep.subr.mxu0 0.0
      %4558 = vmatpush1.msra.mxu0 0.0
      %4559 = vmatprep.subr.mxu0 %v3747
      %4560 = vmatpush1.msra.mxu0 %v3746
      %4561 = vmatprep.subr.mxu0 %v3743
      %4562 = vmatpush1.msra.mxu0 %v3742
      %4563 = vmatprep.subr.mxu0 0.0
      %4564 = vmatpush2.msra.mxu0 0.0
      %4565 = vmatprep.subr.mxu0 0.0
      %4566 = vmatpush2.msra.mxu0 0.0
      %4567 = vmatprep.subr.mxu0 0.0
      %4568 = vmatpush2.msra.mxu0 0.0
      %4569 = vmatprep.subr.mxu0 0.0
      %4570 = vmatpush2.msra.mxu0 0.0
      %4571 = vmatprep.subr.mxu0 0.0
      %4572 = vmatpush2.msra.mxu0 0.0
      %4573 = vmatprep.subr.mxu0 0.0
      %4574 = vmatpush2.msra.mxu0 0.0
      %4575 = vmatprep.subr.mxu0 0.0
      %4576 = vmatpush2.msra.mxu0 0.0
      %4577 = vmatprep.subr.mxu0 0.0
      %4578 = vmatpush2.msra.mxu0 0.0
      %4579 = vmatprep.subr.mxu0 0.0
      %4580 = vmatpush2.msra.mxu0 0.0
      %4581 = vmatprep.subr.mxu0 0.0
      %4582 = vmatpush2.msra.mxu0 0.0
      %4583 = vmatprep.subr.mxu0 0.0
      %4584 = vmatpush2.msra.mxu0 0.0
      %4585 = vmatprep.subr.mxu0 0.0
      %4586 = vmatpush2.msra.mxu0 0.0
      %4587 = vmatprep.subr.mxu0 0.0
      %4588 = vmatpush2.msra.mxu0 0.0
      %4589 = vmatprep.subr.mxu0 0.0
      %4590 = vmatpush2.msra.mxu0 0.0
      %4591 = vmatprep.subr.mxu0 0.0
      %4592 = vmatpush2.msra.mxu0 0.0
      %4593 = vmatprep.subr.mxu0 0.0
      %4594 = vmatpush2.msra.mxu0 0.0
      %4595 = vmatprep.mubr.f32.mxu0 0.0
      %4596 = vmatmul.mubr.f32.gmra.mxu0 %v4526
      %v4597 = vpop.f32.mrf.mxu0
      %v4598 = vadd.f32 0.0, %v4597
      %v4599 = vpop.f32.mrf.mxu0
      %v4600 = vadd.f32 0.0, %v4599
      %4601 = vmatprep.mubr.f32.mxu0 0.0
      %4602 = vmatmul.mubr.f32.gmra.mxu0 %v4529
      %v4603 = vpop.f32.mrf.mxu0
      %v4604 = vadd.f32 0.0, %v4603
      %v4605 = vpop.f32.mrf.mxu0
      %v4606 = vadd.f32 0.0, %v4605
      %4607 = vdwg.mxu0
      %4608 = vmatprep.subr.mxu0 0.0
      %4609 = vmatpush1.msra.mxu0 0.0
      %4610 = vmatprep.subr.mxu0 0.0
      %4611 = vmatpush1.msra.mxu0 0.0
      %4612 = vmatprep.subr.mxu0 0.0
      %4613 = vmatpush1.msra.mxu0 0.0
      %4614 = vmatprep.subr.mxu0 0.0
      %4615 = vmatpush1.msra.mxu0 0.0
      %4616 = vmatprep.subr.mxu0 0.0
      %4617 = vmatpush1.msra.mxu0 0.0
      %4618 = vmatprep.subr.mxu0 0.0
      %4619 = vmatpush1.msra.mxu0 0.0
      %4620 = vmatprep.subr.mxu0 0.0
      %4621 = vmatpush1.msra.mxu0 0.0
      %4622 = vmatprep.subr.mxu0 0.0
      %4623 = vmatpush1.msra.mxu0 0.0
      %4624 = vmatprep.subr.mxu0 0.0
      %4625 = vmatpush1.msra.mxu0 0.0
      %4626 = vmatprep.subr.mxu0 0.0
      %4627 = vmatpush1.msra.mxu0 0.0
      %4628 = vmatprep.subr.mxu0 0.0
      %4629 = vmatpush1.msra.mxu0 0.0
      %4630 = vmatprep.subr.mxu0 0.0
      %4631 = vmatpush1.msra.mxu0 0.0
      %4632 = vmatprep.subr.mxu0 0.0
      %4633 = vmatpush1.msra.mxu0 0.0
      %4634 = vmatprep.subr.mxu0 0.0
      %4635 = vmatpush1.msra.mxu0 0.0
      %4636 = vmatprep.subr.mxu0 0.0
      %4637 = vmatpush1.msra.mxu0 %v3748
      %4638 = vmatprep.subr.mxu0 0.0
      %4639 = vmatpush1.msra.mxu0 %v3744
      %4640 = vmatprep.subr.mxu0 0.0
      %4641 = vmatpush2.msra.mxu0 0.0
      %4642 = vmatprep.subr.mxu0 0.0
      %4643 = vmatpush2.msra.mxu0 0.0
      %4644 = vmatprep.subr.mxu0 0.0
      %4645 = vmatpush2.msra.mxu0 0.0
      %4646 = vmatprep.subr.mxu0 0.0
      %4647 = vmatpush2.msra.mxu0 0.0
      %4648 = vmatprep.subr.mxu0 0.0
      %4649 = vmatpush2.msra.mxu0 0.0
      %4650 = vmatprep.subr.mxu0 0.0
      %4651 = vmatpush2.msra.mxu0 0.0
      %4652 = vmatprep.subr.mxu0 0.0
      %4653 = vmatpush2.msra.mxu0 0.0
      %4654 = vmatprep.subr.mxu0 0.0
      %4655 = vmatpush2.msra.mxu0 0.0
      %4656 = vmatprep.subr.mxu0 0.0
      %4657 = vmatpush2.msra.mxu0 0.0
      %4658 = vmatprep.subr.mxu0 0.0
      %4659 = vmatpush2.msra.mxu0 0.0
      %4660 = vmatprep.subr.mxu0 0.0
      %4661 = vmatpush2.msra.mxu0 0.0
      %4662 = vmatprep.subr.mxu0 0.0
      %4663 = vmatpush2.msra.mxu0 0.0
      %4664 = vmatprep.subr.mxu0 0.0
      %4665 = vmatpush2.msra.mxu0 0.0
      %4666 = vmatprep.subr.mxu0 0.0
      %4667 = vmatpush2.msra.mxu0 0.0
      %4668 = vmatprep.subr.mxu0 0.0
      %4669 = vmatpush2.msra.mxu0 0.0
      %4670 = vmatprep.subr.mxu0 0.0
      %4671 = vmatpush2.msra.mxu0 0.0
      %4672 = vmatprep.mubr.f32.mxu0 0.0
      %4673 = vmatmul.mubr.f32.gmra.mxu0 %v4526
      %v4674 = vpop.f32.mrf.mxu0
      %v4675 = vadd.f32 0.0, %v4674
      %v4676 = vpop.f32.mrf.mxu0
      %4677 = vmatprep.mubr.f32.mxu0 0.0
      %4678 = vmatmul.mubr.f32.gmra.mxu0 %v4529
      %v4679 = vpop.f32.mrf.mxu0
      %v4680 = vadd.f32 0.0, %v4679
      %v4681 = vpop.f32.mrf.mxu0
      %4682 = vdwg.mxu0
      %v4683 = vadd.f32 %v4516, %v4598
      %v4684 = vadd.f32 %v4517, %v4600
      %v4685 = vadd.f32 %v4518, %v4675
      %v4686 = vadd.f32 %v4519, %v4604
      %v4687 = vadd.f32 %v4520, %v4606
      %v4688 = vadd.f32 %v4521, %v4680
      %s4689 = scalar_lea.vmem %s1, 368
      %v4690 = vld [vmem:[%s4689] sm:$0xff]
      %v4691 = vld [vmem:[%s4689 + $0x8] sm:$0xff]
      %4692 = vrot.lane.b32.xlu0 %v3742, 127
      %v4693 = vpop.permute.xlu0 %4692
      %4694 = vrot.lane.b32.xlu0 %v3743, 127
      %v4695 = vpop.permute.xlu0 %4694
      %4696 = vrot.lane.b32.xlu0 %v3744, 127
      %v4697 = vpop.permute.xlu0 %4696
      %4698 = vrot.lane.b32.xlu0 %v3746, 127
      %v4699 = vpop.permute.xlu0 %4698
      %4700 = vrot.lane.b32.xlu0 %v3747, 127
      %v4701 = vpop.permute.xlu0 %4700
      %4702 = vrot.lane.b32.xlu0 %v3748, 127
      %v4703 = vpop.permute.xlu0 %4702
      %v4704 = vsel %vm1206, %v4693, %v4695
      %v4705 = vsel %vm1206, %v4695, %v4697
      %v4706 = vsel %vm1206, %v4699, %v4701
      %v4707 = vsel %vm1206, %v4701, %v4703
      %v4715 = vsel %vm286, %v4690, 0
      %v4718 = vsel %vm286, %v4691, 0
      %4720 = vmatprep.subr.mxu0 0.0
      %4721 = vmatpush1.msra.mxu0 0.0
      %4722 = vmatprep.subr.mxu0 0.0
      %4723 = vmatpush1.msra.mxu0 0.0
      %4724 = vmatprep.subr.mxu0 0.0
      %4725 = vmatpush1.msra.mxu0 0.0
      %4726 = vmatprep.subr.mxu0 0.0
      %4727 = vmatpush1.msra.mxu0 0.0
      %4728 = vmatprep.subr.mxu0 0.0
      %4729 = vmatpush1.msra.mxu0 0.0
      %4730 = vmatprep.subr.mxu0 0.0
      %4731 = vmatpush1.msra.mxu0 0.0
      %4732 = vmatprep.subr.mxu0 0.0
      %4733 = vmatpush1.msra.mxu0 0.0
      %4734 = vmatprep.subr.mxu0 0.0
      %4735 = vmatpush1.msra.mxu0 0.0
      %4736 = vmatprep.subr.mxu0 0.0
      %4737 = vmatpush1.msra.mxu0 0.0
      %4738 = vmatprep.subr.mxu0 0.0
      %4739 = vmatpush1.msra.mxu0 0.0
      %4740 = vmatprep.subr.mxu0 0.0
      %4741 = vmatpush1.msra.mxu0 0.0
      %4742 = vmatprep.subr.mxu0 0.0
      %4743 = vmatpush1.msra.mxu0 0.0
      %4744 = vmatprep.subr.mxu0 0.0
      %4745 = vmatpush1.msra.mxu0 0.0
      %4746 = vmatprep.subr.mxu0 0.0
      %4747 = vmatpush1.msra.mxu0 0.0
      %4748 = vmatprep.subr.mxu0 %v4707
      %4749 = vmatpush1.msra.mxu0 %v4706
      %4750 = vmatprep.subr.mxu0 %v4705
      %4751 = vmatpush1.msra.mxu0 %v4704
      %4752 = vmatprep.subr.mxu0 0.0
      %4753 = vmatpush2.msra.mxu0 0.0
      %4754 = vmatprep.subr.mxu0 0.0
      %4755 = vmatpush2.msra.mxu0 0.0
      %4756 = vmatprep.subr.mxu0 0.0
      %4757 = vmatpush2.msra.mxu0 0.0
      %4758 = vmatprep.subr.mxu0 0.0
      %4759 = vmatpush2.msra.mxu0 0.0
      %4760 = vmatprep.subr.mxu0 0.0
      %4761 = vmatpush2.msra.mxu0 0.0
      %4762 = vmatprep.subr.mxu0 0.0
      %4763 = vmatpush2.msra.mxu0 0.0
      %4764 = vmatprep.subr.mxu0 0.0
      %4765 = vmatpush2.msra.mxu0 0.0
      %4766 = vmatprep.subr.mxu0 0.0
      %4767 = vmatpush2.msra.mxu0 0.0
      %4768 = vmatprep.subr.mxu0 0.0
      %4769 = vmatpush2.msra.mxu0 0.0
      %4770 = vmatprep.subr.mxu0 0.0
      %4771 = vmatpush2.msra.mxu0 0.0
      %4772 = vmatprep.subr.mxu0 0.0
      %4773 = vmatpush2.msra.mxu0 0.0
      %4774 = vmatprep.subr.mxu0 0.0
      %4775 = vmatpush2.msra.mxu0 0.0
      %4776 = vmatprep.subr.mxu0 0.0
      %4777 = vmatpush2.msra.mxu0 0.0
      %4778 = vmatprep.subr.mxu0 0.0
      %4779 = vmatpush2.msra.mxu0 0.0
      %4780 = vmatprep.subr.mxu0 0.0
      %4781 = vmatpush2.msra.mxu0 0.0
      %4782 = vmatprep.subr.mxu0 0.0
      %4783 = vmatpush2.msra.mxu0 0.0
      %4784 = vmatprep.mubr.f32.mxu0 0.0
      %4785 = vmatmul.mubr.f32.gmra.mxu0 %v4715
      %v4786 = vpop.f32.mrf.mxu0
      %v4787 = vadd.f32 0.0, %v4786
      %v4788 = vpop.f32.mrf.mxu0
      %v4789 = vadd.f32 0.0, %v4788
      %4790 = vmatprep.mubr.f32.mxu0 0.0
      %4791 = vmatmul.mubr.f32.gmra.mxu0 %v4718
      %v4792 = vpop.f32.mrf.mxu0
      %v4793 = vadd.f32 0.0, %v4792
      %v4794 = vpop.f32.mrf.mxu0
      %v4795 = vadd.f32 0.0, %v4794
      %4796 = vdwg.mxu0
      %4797 = vmatprep.subr.mxu0 0.0
      %4798 = vmatpush1.msra.mxu0 0.0
      %4799 = vmatprep.subr.mxu0 0.0
      %4800 = vmatpush1.msra.mxu0 0.0
      %4801 = vmatprep.subr.mxu0 0.0
      %4802 = vmatpush1.msra.mxu0 0.0
      %4803 = vmatprep.subr.mxu0 0.0
      %4804 = vmatpush1.msra.mxu0 0.0
      %4805 = vmatprep.subr.mxu0 0.0
      %4806 = vmatpush1.msra.mxu0 0.0
      %4807 = vmatprep.subr.mxu0 0.0
      %4808 = vmatpush1.msra.mxu0 0.0
      %4809 = vmatprep.subr.mxu0 0.0
      %4810 = vmatpush1.msra.mxu0 0.0
      %4811 = vmatprep.subr.mxu0 0.0
      %4812 = vmatpush1.msra.mxu0 0.0
      %4813 = vmatprep.subr.mxu0 0.0
      %4814 = vmatpush1.msra.mxu0 0.0
      %4815 = vmatprep.subr.mxu0 0.0
      %4816 = vmatpush1.msra.mxu0 0.0
      %4817 = vmatprep.subr.mxu0 0.0
      %4818 = vmatpush1.msra.mxu0 0.0
      %4819 = vmatprep.subr.mxu0 0.0
      %4820 = vmatpush1.msra.mxu0 0.0
      %4821 = vmatprep.subr.mxu0 0.0
      %4822 = vmatpush1.msra.mxu0 0.0
      %4823 = vmatprep.subr.mxu0 0.0
      %4824 = vmatpush1.msra.mxu0 0.0
      %4825 = vmatprep.subr.mxu0 0.0
      %4826 = vmatpush1.msra.mxu0 %v4703
      %4827 = vmatprep.subr.mxu0 0.0
      %4828 = vmatpush1.msra.mxu0 %v4697
      %4829 = vmatprep.subr.mxu0 0.0
      %4830 = vmatpush2.msra.mxu0 0.0
      %4831 = vmatprep.subr.mxu0 0.0
      %4832 = vmatpush2.msra.mxu0 0.0
      %4833 = vmatprep.subr.mxu0 0.0
      %4834 = vmatpush2.msra.mxu0 0.0
      %4835 = vmatprep.subr.mxu0 0.0
      %4836 = vmatpush2.msra.mxu0 0.0
      %4837 = vmatprep.subr.mxu0 0.0
      %4838 = vmatpush2.msra.mxu0 0.0
      %4839 = vmatprep.subr.mxu0 0.0
      %4840 = vmatpush2.msra.mxu0 0.0
      %4841 = vmatprep.subr.mxu0 0.0
      %4842 = vmatpush2.msra.mxu0 0.0
      %4843 = vmatprep.subr.mxu0 0.0
      %4844 = vmatpush2.msra.mxu0 0.0
      %4845 = vmatprep.subr.mxu0 0.0
      %4846 = vmatpush2.msra.mxu0 0.0
      %4847 = vmatprep.subr.mxu0 0.0
      %4848 = vmatpush2.msra.mxu0 0.0
      %4849 = vmatprep.subr.mxu0 0.0
      %4850 = vmatpush2.msra.mxu0 0.0
      %4851 = vmatprep.subr.mxu0 0.0
      %4852 = vmatpush2.msra.mxu0 0.0
      %4853 = vmatprep.subr.mxu0 0.0
      %4854 = vmatpush2.msra.mxu0 0.0
      %4855 = vmatprep.subr.mxu0 0.0
      %4856 = vmatpush2.msra.mxu0 0.0
      %4857 = vmatprep.subr.mxu0 0.0
      %4858 = vmatpush2.msra.mxu0 0.0
      %4859 = vmatprep.subr.mxu0 0.0
      %4860 = vmatpush2.msra.mxu0 0.0
      %4861 = vmatprep.mubr.f32.mxu0 0.0
      %4862 = vmatmul.mubr.f32.gmra.mxu0 %v4715
      %v4863 = vpop.f32.mrf.mxu0
      %v4864 = vadd.f32 0.0, %v4863
      %v4865 = vpop.f32.mrf.mxu0
      %4866 = vmatprep.mubr.f32.mxu0 0.0
      %4867 = vmatmul.mubr.f32.gmra.mxu0 %v4718
      %v4868 = vpop.f32.mrf.mxu0
      %v4869 = vadd.f32 0.0, %v4868
      %v4870 = vpop.f32.mrf.mxu0
      %4871 = vdwg.mxu0
      %v4872 = vadd.f32 %v4683, %v4787
      %v4873 = vadd.f32 %v4684, %v4789
      %v4874 = vadd.f32 %v4685, %v4864
      %v4875 = vadd.f32 %v4686, %v4793
      %v4876 = vadd.f32 %v4687, %v4795
      %v4877 = vadd.f32 %v4688, %v4869
      %s4878 = scalar_lea.vmem %s1, 384
      %v4879 = vld [vmem:[%s4878] sm:$0xff]
      %v4880 = vld [vmem:[%s4878 + $0x8] sm:$0xff]
      %4881 = vrot.lane.b32.xlu0 %v3742, 111
      %v4882 = vpop.permute.xlu0 %4881
      %4883 = vrot.lane.b32.xlu0 %v3743, 111
      %v4884 = vpop.permute.xlu0 %4883
      %4885 = vrot.lane.b32.xlu0 %v3744, 111
      %v4886 = vpop.permute.xlu0 %4885
      %4887 = vrot.lane.b32.xlu0 %v3746, 111
      %v4888 = vpop.permute.xlu0 %4887
      %4889 = vrot.lane.b32.xlu0 %v3747, 111
      %v4890 = vpop.permute.xlu0 %4889
      %4891 = vrot.lane.b32.xlu0 %v3748, 111
      %v4892 = vpop.permute.xlu0 %4891
      %v4893 = vsel %vm1396, %v4882, %v4884
      %v4894 = vsel %vm1396, %v4884, %v4886
      %v4895 = vsel %vm1396, %v4888, %v4890
      %v4896 = vsel %vm1396, %v4890, %v4892
      %v4904 = vsel %vm286, %v4879, 0
      %v4907 = vsel %vm286, %v4880, 0
      %4909 = vmatprep.subr.mxu0 0.0
      %4910 = vmatpush1.msra.mxu0 0.0
      %4911 = vmatprep.subr.mxu0 0.0
      %4912 = vmatpush1.msra.mxu0 0.0
      %4913 = vmatprep.subr.mxu0 0.0
      %4914 = vmatpush1.msra.mxu0 0.0
      %4915 = vmatprep.subr.mxu0 0.0
      %4916 = vmatpush1.msra.mxu0 0.0
      %4917 = vmatprep.subr.mxu0 0.0
      %4918 = vmatpush1.msra.mxu0 0.0
      %4919 = vmatprep.subr.mxu0 0.0
      %4920 = vmatpush1.msra.mxu0 0.0
      %4921 = vmatprep.subr.mxu0 0.0
      %4922 = vmatpush1.msra.mxu0 0.0
      %4923 = vmatprep.subr.mxu0 0.0
      %4924 = vmatpush1.msra.mxu0 0.0
      %4925 = vmatprep.subr.mxu0 0.0
      %4926 = vmatpush1.msra.mxu0 0.0
      %4927 = vmatprep.subr.mxu0 0.0
      %4928 = vmatpush1.msra.mxu0 0.0
      %4929 = vmatprep.subr.mxu0 0.0
      %4930 = vmatpush1.msra.mxu0 0.0
      %4931 = vmatprep.subr.mxu0 0.0
      %4932 = vmatpush1.msra.mxu0 0.0
      %4933 = vmatprep.subr.mxu0 0.0
      %4934 = vmatpush1.msra.mxu0 0.0
      %4935 = vmatprep.subr.mxu0 0.0
      %4936 = vmatpush1.msra.mxu0 0.0
      %4937 = vmatprep.subr.mxu0 %v4896
      %4938 = vmatpush1.msra.mxu0 %v4895
      %4939 = vmatprep.subr.mxu0 %v4894
      %4940 = vmatpush1.msra.mxu0 %v4893
      %4941 = vmatprep.subr.mxu0 0.0
      %4942 = vmatpush2.msra.mxu0 0.0
      %4943 = vmatprep.subr.mxu0 0.0
      %4944 = vmatpush2.msra.mxu0 0.0
      %4945 = vmatprep.subr.mxu0 0.0
      %4946 = vmatpush2.msra.mxu0 0.0
      %4947 = vmatprep.subr.mxu0 0.0
      %4948 = vmatpush2.msra.mxu0 0.0
      %4949 = vmatprep.subr.mxu0 0.0
      %4950 = vmatpush2.msra.mxu0 0.0
      %4951 = vmatprep.subr.mxu0 0.0
      %4952 = vmatpush2.msra.mxu0 0.0
      %4953 = vmatprep.subr.mxu0 0.0
      %4954 = vmatpush2.msra.mxu0 0.0
      %4955 = vmatprep.subr.mxu0 0.0
      %4956 = vmatpush2.msra.mxu0 0.0
      %4957 = vmatprep.subr.mxu0 0.0
      %4958 = vmatpush2.msra.mxu0 0.0
      %4959 = vmatprep.subr.mxu0 0.0
      %4960 = vmatpush2.msra.mxu0 0.0
      %4961 = vmatprep.subr.mxu0 0.0
      %4962 = vmatpush2.msra.mxu0 0.0
      %4963 = vmatprep.subr.mxu0 0.0
      %4964 = vmatpush2.msra.mxu0 0.0
      %4965 = vmatprep.subr.mxu0 0.0
      %4966 = vmatpush2.msra.mxu0 0.0
      %4967 = vmatprep.subr.mxu0 0.0
      %4968 = vmatpush2.msra.mxu0 0.0
      %4969 = vmatprep.subr.mxu0 0.0
      %4970 = vmatpush2.msra.mxu0 0.0
      %4971 = vmatprep.subr.mxu0 0.0
      %4972 = vmatpush2.msra.mxu0 0.0
      %4973 = vmatprep.mubr.f32.mxu0 0.0
      %4974 = vmatmul.mubr.f32.gmra.mxu0 %v4904
      %v4975 = vpop.f32.mrf.mxu0
      %v4976 = vadd.f32 0.0, %v4975
      %v4977 = vpop.f32.mrf.mxu0
      %v4978 = vadd.f32 0.0, %v4977
      %4979 = vmatprep.mubr.f32.mxu0 0.0
      %4980 = vmatmul.mubr.f32.gmra.mxu0 %v4907
      %v4981 = vpop.f32.mrf.mxu0
      %v4982 = vadd.f32 0.0, %v4981
      %v4983 = vpop.f32.mrf.mxu0
      %v4984 = vadd.f32 0.0, %v4983
      %4985 = vdwg.mxu0
      %4986 = vmatprep.subr.mxu0 0.0
      %4987 = vmatpush1.msra.mxu0 0.0
      %4988 = vmatprep.subr.mxu0 0.0
      %4989 = vmatpush1.msra.mxu0 0.0
      %4990 = vmatprep.subr.mxu0 0.0
      %4991 = vmatpush1.msra.mxu0 0.0
      %4992 = vmatprep.subr.mxu0 0.0
      %4993 = vmatpush1.msra.mxu0 0.0
      %4994 = vmatprep.subr.mxu0 0.0
      %4995 = vmatpush1.msra.mxu0 0.0
      %4996 = vmatprep.subr.mxu0 0.0
      %4997 = vmatpush1.msra.mxu0 0.0
      %4998 = vmatprep.subr.mxu0 0.0
      %4999 = vmatpush1.msra.mxu0 0.0
      %5000 = vmatprep.subr.mxu0 0.0
      %5001 = vmatpush1.msra.mxu0 0.0
      %5002 = vmatprep.subr.mxu0 0.0
      %5003 = vmatpush1.msra.mxu0 0.0
      %5004 = vmatprep.subr.mxu0 0.0
      %5005 = vmatpush1.msra.mxu0 0.0
      %5006 = vmatprep.subr.mxu0 0.0
      %5007 = vmatpush1.msra.mxu0 0.0
      %5008 = vmatprep.subr.mxu0 0.0
      %5009 = vmatpush1.msra.mxu0 0.0
      %5010 = vmatprep.subr.mxu0 0.0
      %5011 = vmatpush1.msra.mxu0 0.0
      %5012 = vmatprep.subr.mxu0 0.0
      %5013 = vmatpush1.msra.mxu0 0.0
      %5014 = vmatprep.subr.mxu0 0.0
      %5015 = vmatpush1.msra.mxu0 %v4892
      %5016 = vmatprep.subr.mxu0 0.0
      %5017 = vmatpush1.msra.mxu0 %v4886
      %5018 = vmatprep.subr.mxu0 0.0
      %5019 = vmatpush2.msra.mxu0 0.0
      %5020 = vmatprep.subr.mxu0 0.0
      %5021 = vmatpush2.msra.mxu0 0.0
      %5022 = vmatprep.subr.mxu0 0.0
      %5023 = vmatpush2.msra.mxu0 0.0
      %5024 = vmatprep.subr.mxu0 0.0
      %5025 = vmatpush2.msra.mxu0 0.0
      %5026 = vmatprep.subr.mxu0 0.0
      %5027 = vmatpush2.msra.mxu0 0.0
      %5028 = vmatprep.subr.mxu0 0.0
      %5029 = vmatpush2.msra.mxu0 0.0
      %5030 = vmatprep.subr.mxu0 0.0
      %5031 = vmatpush2.msra.mxu0 0.0
      %5032 = vmatprep.subr.mxu0 0.0
      %5033 = vmatpush2.msra.mxu0 0.0
      %5034 = vmatprep.subr.mxu0 0.0
      %5035 = vmatpush2.msra.mxu0 0.0
      %5036 = vmatprep.subr.mxu0 0.0
      %5037 = vmatpush2.msra.mxu0 0.0
      %5038 = vmatprep.subr.mxu0 0.0
      %5039 = vmatpush2.msra.mxu0 0.0
      %5040 = vmatprep.subr.mxu0 0.0
      %5041 = vmatpush2.msra.mxu0 0.0
      %5042 = vmatprep.subr.mxu0 0.0
      %5043 = vmatpush2.msra.mxu0 0.0
      %5044 = vmatprep.subr.mxu0 0.0
      %5045 = vmatpush2.msra.mxu0 0.0
      %5046 = vmatprep.subr.mxu0 0.0
      %5047 = vmatpush2.msra.mxu0 0.0
      %5048 = vmatprep.subr.mxu0 0.0
      %5049 = vmatpush2.msra.mxu0 0.0
      %5050 = vmatprep.mubr.f32.mxu0 0.0
      %5051 = vmatmul.mubr.f32.gmra.mxu0 %v4904
      %v5052 = vpop.f32.mrf.mxu0
      %v5053 = vadd.f32 0.0, %v5052
      %v5054 = vpop.f32.mrf.mxu0
      %5055 = vmatprep.mubr.f32.mxu0 0.0
      %5056 = vmatmul.mubr.f32.gmra.mxu0 %v4907
      %v5057 = vpop.f32.mrf.mxu0
      %v5058 = vadd.f32 0.0, %v5057
      %v5059 = vpop.f32.mrf.mxu0
      %5060 = vdwg.mxu0
      %v5061 = vadd.f32 %v4872, %v4976
      %v5062 = vadd.f32 %v4873, %v4978
      %v5063 = vadd.f32 %v4874, %v5053
      %v5064 = vadd.f32 %v4875, %v4982
      %v5065 = vadd.f32 %v4876, %v4984
      %v5066 = vadd.f32 %v4877, %v5058
      %s5067 = scalar_lea.vmem %s1, 400
      %v5068 = vld [vmem:[%s5067] sm:$0xff]
      %v5069 = vld [vmem:[%s5067 + $0x8] sm:$0xff]
      %5070 = vrot.lane.b32.xlu0 %v3742, 110
      %v5071 = vpop.permute.xlu0 %5070
      %5072 = vrot.lane.b32.xlu0 %v3743, 110
      %v5073 = vpop.permute.xlu0 %5072
      %5074 = vrot.lane.b32.xlu0 %v3744, 110
      %v5075 = vpop.permute.xlu0 %5074
      %5076 = vrot.lane.b32.xlu0 %v3746, 110
      %v5077 = vpop.permute.xlu0 %5076
      %5078 = vrot.lane.b32.xlu0 %v3747, 110
      %v5079 = vpop.permute.xlu0 %5078
      %5080 = vrot.lane.b32.xlu0 %v3748, 110
      %v5081 = vpop.permute.xlu0 %5080
      %v5082 = vsel %vm1586, %v5071, %v5073
      %v5083 = vsel %vm1586, %v5073, %v5075
      %v5084 = vsel %vm1586, %v5077, %v5079
      %v5085 = vsel %vm1586, %v5079, %v5081
      %v5093 = vsel %vm286, %v5068, 0
      %v5096 = vsel %vm286, %v5069, 0
      %5098 = vmatprep.subr.mxu0 0.0
      %5099 = vmatpush1.msra.mxu0 0.0
      %5100 = vmatprep.subr.mxu0 0.0
      %5101 = vmatpush1.msra.mxu0 0.0
      %5102 = vmatprep.subr.mxu0 0.0
      %5103 = vmatpush1.msra.mxu0 0.0
      %5104 = vmatprep.subr.mxu0 0.0
      %5105 = vmatpush1.msra.mxu0 0.0
      %5106 = vmatprep.subr.mxu0 0.0
      %5107 = vmatpush1.msra.mxu0 0.0
      %5108 = vmatprep.subr.mxu0 0.0
      %5109 = vmatpush1.msra.mxu0 0.0
      %5110 = vmatprep.subr.mxu0 0.0
      %5111 = vmatpush1.msra.mxu0 0.0
      %5112 = vmatprep.subr.mxu0 0.0
      %5113 = vmatpush1.msra.mxu0 0.0
      %5114 = vmatprep.subr.mxu0 0.0
      %5115 = vmatpush1.msra.mxu0 0.0
      %5116 = vmatprep.subr.mxu0 0.0
      %5117 = vmatpush1.msra.mxu0 0.0
      %5118 = vmatprep.subr.mxu0 0.0
      %5119 = vmatpush1.msra.mxu0 0.0
      %5120 = vmatprep.subr.mxu0 0.0
      %5121 = vmatpush1.msra.mxu0 0.0
      %5122 = vmatprep.subr.mxu0 0.0
      %5123 = vmatpush1.msra.mxu0 0.0
      %5124 = vmatprep.subr.mxu0 0.0
      %5125 = vmatpush1.msra.mxu0 0.0
      %5126 = vmatprep.subr.mxu0 %v5085
      %5127 = vmatpush1.msra.mxu0 %v5084
      %5128 = vmatprep.subr.mxu0 %v5083
      %5129 = vmatpush1.msra.mxu0 %v5082
      %5130 = vmatprep.subr.mxu0 0.0
      %5131 = vmatpush2.msra.mxu0 0.0
      %5132 = vmatprep.subr.mxu0 0.0
      %5133 = vmatpush2.msra.mxu0 0.0
      %5134 = vmatprep.subr.mxu0 0.0
      %5135 = vmatpush2.msra.mxu0 0.0
      %5136 = vmatprep.subr.mxu0 0.0
      %5137 = vmatpush2.msra.mxu0 0.0
      %5138 = vmatprep.subr.mxu0 0.0
      %5139 = vmatpush2.msra.mxu0 0.0
      %5140 = vmatprep.subr.mxu0 0.0
      %5141 = vmatpush2.msra.mxu0 0.0
      %5142 = vmatprep.subr.mxu0 0.0
      %5143 = vmatpush2.msra.mxu0 0.0
      %5144 = vmatprep.subr.mxu0 0.0
      %5145 = vmatpush2.msra.mxu0 0.0
      %5146 = vmatprep.subr.mxu0 0.0
      %5147 = vmatpush2.msra.mxu0 0.0
      %5148 = vmatprep.subr.mxu0 0.0
      %5149 = vmatpush2.msra.mxu0 0.0
      %5150 = vmatprep.subr.mxu0 0.0
      %5151 = vmatpush2.msra.mxu0 0.0
      %5152 = vmatprep.subr.mxu0 0.0
      %5153 = vmatpush2.msra.mxu0 0.0
      %5154 = vmatprep.subr.mxu0 0.0
      %5155 = vmatpush2.msra.mxu0 0.0
      %5156 = vmatprep.subr.mxu0 0.0
      %5157 = vmatpush2.msra.mxu0 0.0
      %5158 = vmatprep.subr.mxu0 0.0
      %5159 = vmatpush2.msra.mxu0 0.0
      %5160 = vmatprep.subr.mxu0 0.0
      %5161 = vmatpush2.msra.mxu0 0.0
      %5162 = vmatprep.mubr.f32.mxu0 0.0
      %5163 = vmatmul.mubr.f32.gmra.mxu0 %v5093
      %v5164 = vpop.f32.mrf.mxu0
      %v5165 = vadd.f32 0.0, %v5164
      %v5166 = vpop.f32.mrf.mxu0
      %v5167 = vadd.f32 0.0, %v5166
      %5168 = vmatprep.mubr.f32.mxu0 0.0
      %5169 = vmatmul.mubr.f32.gmra.mxu0 %v5096
      %v5170 = vpop.f32.mrf.mxu0
      %v5171 = vadd.f32 0.0, %v5170
      %v5172 = vpop.f32.mrf.mxu0
      %v5173 = vadd.f32 0.0, %v5172
      %5174 = vdwg.mxu0
      %5175 = vmatprep.subr.mxu0 0.0
      %5176 = vmatpush1.msra.mxu0 0.0
      %5177 = vmatprep.subr.mxu0 0.0
      %5178 = vmatpush1.msra.mxu0 0.0
      %5179 = vmatprep.subr.mxu0 0.0
      %5180 = vmatpush1.msra.mxu0 0.0
      %5181 = vmatprep.subr.mxu0 0.0
      %5182 = vmatpush1.msra.mxu0 0.0
      %5183 = vmatprep.subr.mxu0 0.0
      %5184 = vmatpush1.msra.mxu0 0.0
      %5185 = vmatprep.subr.mxu0 0.0
      %5186 = vmatpush1.msra.mxu0 0.0
      %5187 = vmatprep.subr.mxu0 0.0
      %5188 = vmatpush1.msra.mxu0 0.0
      %5189 = vmatprep.subr.mxu0 0.0
      %5190 = vmatpush1.msra.mxu0 0.0
      %5191 = vmatprep.subr.mxu0 0.0
      %5192 = vmatpush1.msra.mxu0 0.0
      %5193 = vmatprep.subr.mxu0 0.0
      %5194 = vmatpush1.msra.mxu0 0.0
      %5195 = vmatprep.subr.mxu0 0.0
      %5196 = vmatpush1.msra.mxu0 0.0
      %5197 = vmatprep.subr.mxu0 0.0
      %5198 = vmatpush1.msra.mxu0 0.0
      %5199 = vmatprep.subr.mxu0 0.0
      %5200 = vmatpush1.msra.mxu0 0.0
      %5201 = vmatprep.subr.mxu0 0.0
      %5202 = vmatpush1.msra.mxu0 0.0
      %5203 = vmatprep.subr.mxu0 0.0
      %5204 = vmatpush1.msra.mxu0 %v5081
      %5205 = vmatprep.subr.mxu0 0.0
      %5206 = vmatpush1.msra.mxu0 %v5075
      %5207 = vmatprep.subr.mxu0 0.0
      %5208 = vmatpush2.msra.mxu0 0.0
      %5209 = vmatprep.subr.mxu0 0.0
      %5210 = vmatpush2.msra.mxu0 0.0
      %5211 = vmatprep.subr.mxu0 0.0
      %5212 = vmatpush2.msra.mxu0 0.0
      %5213 = vmatprep.subr.mxu0 0.0
      %5214 = vmatpush2.msra.mxu0 0.0
      %5215 = vmatprep.subr.mxu0 0.0
      %5216 = vmatpush2.msra.mxu0 0.0
      %5217 = vmatprep.subr.mxu0 0.0
      %5218 = vmatpush2.msra.mxu0 0.0
      %5219 = vmatprep.subr.mxu0 0.0
      %5220 = vmatpush2.msra.mxu0 0.0
      %5221 = vmatprep.subr.mxu0 0.0
      %5222 = vmatpush2.msra.mxu0 0.0
      %5223 = vmatprep.subr.mxu0 0.0
      %5224 = vmatpush2.msra.mxu0 0.0
      %5225 = vmatprep.subr.mxu0 0.0
      %5226 = vmatpush2.msra.mxu0 0.0
      %5227 = vmatprep.subr.mxu0 0.0
      %5228 = vmatpush2.msra.mxu0 0.0
      %5229 = vmatprep.subr.mxu0 0.0
      %5230 = vmatpush2.msra.mxu0 0.0
      %5231 = vmatprep.subr.mxu0 0.0
      %5232 = vmatpush2.msra.mxu0 0.0
      %5233 = vmatprep.subr.mxu0 0.0
      %5234 = vmatpush2.msra.mxu0 0.0
      %5235 = vmatprep.subr.mxu0 0.0
      %5236 = vmatpush2.msra.mxu0 0.0
      %5237 = vmatprep.subr.mxu0 0.0
      %5238 = vmatpush2.msra.mxu0 0.0
      %5239 = vmatprep.mubr.f32.mxu0 0.0
      %5240 = vmatmul.mubr.f32.gmra.mxu0 %v5093
      %v5241 = vpop.f32.mrf.mxu0
      %v5242 = vadd.f32 0.0, %v5241
      %v5243 = vpop.f32.mrf.mxu0
      %5244 = vmatprep.mubr.f32.mxu0 0.0
      %5245 = vmatmul.mubr.f32.gmra.mxu0 %v5096
      %v5246 = vpop.f32.mrf.mxu0
      %v5247 = vadd.f32 0.0, %v5246
      %v5248 = vpop.f32.mrf.mxu0
      %5249 = vdwg.mxu0
      %v5250 = vadd.f32 %v5061, %v5165
      %v5251 = vadd.f32 %v5062, %v5167
      %v5252 = vadd.f32 %v5063, %v5242
      %v5253 = vadd.f32 %v5064, %v5171
      %v5254 = vadd.f32 %v5065, %v5173
      %v5255 = vadd.f32 %v5066, %v5247
      %s5256 = scalar_lea.vmem %s1, 416
      %v5257 = vld [vmem:[%s5256] sm:$0xff]
      %v5258 = vld [vmem:[%s5256 + $0x8] sm:$0xff]
      %5259 = vrot.lane.b32.xlu0 %v3742, 109
      %v5260 = vpop.permute.xlu0 %5259
      %5261 = vrot.lane.b32.xlu0 %v3743, 109
      %v5262 = vpop.permute.xlu0 %5261
      %5263 = vrot.lane.b32.xlu0 %v3744, 109
      %v5264 = vpop.permute.xlu0 %5263
      %5265 = vrot.lane.b32.xlu0 %v3746, 109
      %v5266 = vpop.permute.xlu0 %5265
      %5267 = vrot.lane.b32.xlu0 %v3747, 109
      %v5268 = vpop.permute.xlu0 %5267
      %5269 = vrot.lane.b32.xlu0 %v3748, 109
      %v5270 = vpop.permute.xlu0 %5269
      %v5271 = vsel %vm1776, %v5260, %v5262
      %v5272 = vsel %vm1776, %v5262, %v5264
      %v5273 = vsel %vm1776, %v5266, %v5268
      %v5274 = vsel %vm1776, %v5268, %v5270
      %v5282 = vsel %vm286, %v5257, 0
      %v5285 = vsel %vm286, %v5258, 0
      %5287 = vmatprep.subr.mxu0 0.0
      %5288 = vmatpush1.msra.mxu0 0.0
      %5289 = vmatprep.subr.mxu0 0.0
      %5290 = vmatpush1.msra.mxu0 0.0
      %5291 = vmatprep.subr.mxu0 0.0
      %5292 = vmatpush1.msra.mxu0 0.0
      %5293 = vmatprep.subr.mxu0 0.0
      %5294 = vmatpush1.msra.mxu0 0.0
      %5295 = vmatprep.subr.mxu0 0.0
      %5296 = vmatpush1.msra.mxu0 0.0
      %5297 = vmatprep.subr.mxu0 0.0
      %5298 = vmatpush1.msra.mxu0 0.0
      %5299 = vmatprep.subr.mxu0 0.0
      %5300 = vmatpush1.msra.mxu0 0.0
      %5301 = vmatprep.subr.mxu0 0.0
      %5302 = vmatpush1.msra.mxu0 0.0
      %5303 = vmatprep.subr.mxu0 0.0
      %5304 = vmatpush1.msra.mxu0 0.0
      %5305 = vmatprep.subr.mxu0 0.0
      %5306 = vmatpush1.msra.mxu0 0.0
      %5307 = vmatprep.subr.mxu0 0.0
      %5308 = vmatpush1.msra.mxu0 0.0
      %5309 = vmatprep.subr.mxu0 0.0
      %5310 = vmatpush1.msra.mxu0 0.0
      %5311 = vmatprep.subr.mxu0 0.0
      %5312 = vmatpush1.msra.mxu0 0.0
      %5313 = vmatprep.subr.mxu0 0.0
      %5314 = vmatpush1.msra.mxu0 0.0
      %5315 = vmatprep.subr.mxu0 %v5274
      %5316 = vmatpush1.msra.mxu0 %v5273
      %5317 = vmatprep.subr.mxu0 %v5272
      %5318 = vmatpush1.msra.mxu0 %v5271
      %5319 = vmatprep.subr.mxu0 0.0
      %5320 = vmatpush2.msra.mxu0 0.0
      %5321 = vmatprep.subr.mxu0 0.0
      %5322 = vmatpush2.msra.mxu0 0.0
      %5323 = vmatprep.subr.mxu0 0.0
      %5324 = vmatpush2.msra.mxu0 0.0
      %5325 = vmatprep.subr.mxu0 0.0
      %5326 = vmatpush2.msra.mxu0 0.0
      %5327 = vmatprep.subr.mxu0 0.0
      %5328 = vmatpush2.msra.mxu0 0.0
      %5329 = vmatprep.subr.mxu0 0.0
      %5330 = vmatpush2.msra.mxu0 0.0
      %5331 = vmatprep.subr.mxu0 0.0
      %5332 = vmatpush2.msra.mxu0 0.0
      %5333 = vmatprep.subr.mxu0 0.0
      %5334 = vmatpush2.msra.mxu0 0.0
      %5335 = vmatprep.subr.mxu0 0.0
      %5336 = vmatpush2.msra.mxu0 0.0
      %5337 = vmatprep.subr.mxu0 0.0
      %5338 = vmatpush2.msra.mxu0 0.0
      %5339 = vmatprep.subr.mxu0 0.0
      %5340 = vmatpush2.msra.mxu0 0.0
      %5341 = vmatprep.subr.mxu0 0.0
      %5342 = vmatpush2.msra.mxu0 0.0
      %5343 = vmatprep.subr.mxu0 0.0
      %5344 = vmatpush2.msra.mxu0 0.0
      %5345 = vmatprep.subr.mxu0 0.0
      %5346 = vmatpush2.msra.mxu0 0.0
      %5347 = vmatprep.subr.mxu0 0.0
      %5348 = vmatpush2.msra.mxu0 0.0
      %5349 = vmatprep.subr.mxu0 0.0
      %5350 = vmatpush2.msra.mxu0 0.0
      %5351 = vmatprep.mubr.f32.mxu0 0.0
      %5352 = vmatmul.mubr.f32.gmra.mxu0 %v5282
      %v5353 = vpop.f32.mrf.mxu0
      %v5354 = vadd.f32 0.0, %v5353
      %v5355 = vpop.f32.mrf.mxu0
      %v5356 = vadd.f32 0.0, %v5355
      %5357 = vmatprep.mubr.f32.mxu0 0.0
      %5358 = vmatmul.mubr.f32.gmra.mxu0 %v5285
      %v5359 = vpop.f32.mrf.mxu0
      %v5360 = vadd.f32 0.0, %v5359
      %v5361 = vpop.f32.mrf.mxu0
      %v5362 = vadd.f32 0.0, %v5361
      %5363 = vdwg.mxu0
      %5364 = vmatprep.subr.mxu0 0.0
      %5365 = vmatpush1.msra.mxu0 0.0
      %5366 = vmatprep.subr.mxu0 0.0
      %5367 = vmatpush1.msra.mxu0 0.0
      %5368 = vmatprep.subr.mxu0 0.0
      %5369 = vmatpush1.msra.mxu0 0.0
      %5370 = vmatprep.subr.mxu0 0.0
      %5371 = vmatpush1.msra.mxu0 0.0
      %5372 = vmatprep.subr.mxu0 0.0
      %5373 = vmatpush1.msra.mxu0 0.0
      %5374 = vmatprep.subr.mxu0 0.0
      %5375 = vmatpush1.msra.mxu0 0.0
      %5376 = vmatprep.subr.mxu0 0.0
      %5377 = vmatpush1.msra.mxu0 0.0
      %5378 = vmatprep.subr.mxu0 0.0
      %5379 = vmatpush1.msra.mxu0 0.0
      %5380 = vmatprep.subr.mxu0 0.0
      %5381 = vmatpush1.msra.mxu0 0.0
      %5382 = vmatprep.subr.mxu0 0.0
      %5383 = vmatpush1.msra.mxu0 0.0
      %5384 = vmatprep.subr.mxu0 0.0
      %5385 = vmatpush1.msra.mxu0 0.0
      %5386 = vmatprep.subr.mxu0 0.0
      %5387 = vmatpush1.msra.mxu0 0.0
      %5388 = vmatprep.subr.mxu0 0.0
      %5389 = vmatpush1.msra.mxu0 0.0
      %5390 = vmatprep.subr.mxu0 0.0
      %5391 = vmatpush1.msra.mxu0 0.0
      %5392 = vmatprep.subr.mxu0 0.0
      %5393 = vmatpush1.msra.mxu0 %v5270
      %5394 = vmatprep.subr.mxu0 0.0
      %5395 = vmatpush1.msra.mxu0 %v5264
      %5396 = vmatprep.subr.mxu0 0.0
      %5397 = vmatpush2.msra.mxu0 0.0
      %5398 = vmatprep.subr.mxu0 0.0
      %5399 = vmatpush2.msra.mxu0 0.0
      %5400 = vmatprep.subr.mxu0 0.0
      %5401 = vmatpush2.msra.mxu0 0.0
      %5402 = vmatprep.subr.mxu0 0.0
      %5403 = vmatpush2.msra.mxu0 0.0
      %5404 = vmatprep.subr.mxu0 0.0
      %5405 = vmatpush2.msra.mxu0 0.0
      %5406 = vmatprep.subr.mxu0 0.0
      %5407 = vmatpush2.msra.mxu0 0.0
      %5408 = vmatprep.subr.mxu0 0.0
      %5409 = vmatpush2.msra.mxu0 0.0
      %5410 = vmatprep.subr.mxu0 0.0
      %5411 = vmatpush2.msra.mxu0 0.0
      %5412 = vmatprep.subr.mxu0 0.0
      %5413 = vmatpush2.msra.mxu0 0.0
      %5414 = vmatprep.subr.mxu0 0.0
      %5415 = vmatpush2.msra.mxu0 0.0
      %5416 = vmatprep.subr.mxu0 0.0
      %5417 = vmatpush2.msra.mxu0 0.0
      %5418 = vmatprep.subr.mxu0 0.0
      %5419 = vmatpush2.msra.mxu0 0.0
      %5420 = vmatprep.subr.mxu0 0.0
      %5421 = vmatpush2.msra.mxu0 0.0
      %5422 = vmatprep.subr.mxu0 0.0
      %5423 = vmatpush2.msra.mxu0 0.0
      %5424 = vmatprep.subr.mxu0 0.0
      %5425 = vmatpush2.msra.mxu0 0.0
      %5426 = vmatprep.subr.mxu0 0.0
      %5427 = vmatpush2.msra.mxu0 0.0
      %5428 = vmatprep.mubr.f32.mxu0 0.0
      %5429 = vmatmul.mubr.f32.gmra.mxu0 %v5282
      %v5430 = vpop.f32.mrf.mxu0
      %v5431 = vadd.f32 0.0, %v5430
      %v5432 = vpop.f32.mrf.mxu0
      %5433 = vmatprep.mubr.f32.mxu0 0.0
      %5434 = vmatmul.mubr.f32.gmra.mxu0 %v5285
      %v5435 = vpop.f32.mrf.mxu0
      %v5436 = vadd.f32 0.0, %v5435
      %v5437 = vpop.f32.mrf.mxu0
      %5438 = vdwg.mxu0
      %v5439 = vadd.f32 %v5250, %v5354
      %v5440 = vadd.f32 %v5251, %v5356
      %v5441 = vadd.f32 %v5252, %v5431
      %v5442 = vadd.f32 %v5253, %v5360
      %v5443 = vadd.f32 %v5254, %v5362
      %v5444 = vadd.f32 %v5255, %v5436
      %s5445 = scalar_lea.vmem %s2, 32
      %v5446 = vld [vmem:[%s5445] sm:$0xff]
      %v5447 = vld [vmem:[%s5445 + $0x8] sm:$0xff]
      %5449 = vset.pattern.permute.xlu0 0
      %5450 = vperm.xlu0 %5449, %v5446
      %v5451 = vpop.permute.xlu0 %5450
      %5454 = vset.pattern.permute.xlu0 0
      %5455 = vperm.xlu0 %5454, %v5447
      %v5456 = vpop.permute.xlu0 %5455
      %v5458 = vadd.f32 %v5439, %v5451
      %v5459 = vadd.f32 %v5440, %v5451
      %v5460 = vadd.f32 %v5441, %v5451
      %v5461 = vadd.f32 %v5442, %v5456
      %v5462 = vadd.f32 %v5443, %v5456
      %v5463 = vadd.f32 %v5444, %v5456
      %v5464 = vmax.f32 %v5458, 0.0
      %v5465 = vmax.f32 %v5459, 0.0
      %v5466 = vmax.f32 %v5460, 0.0
      %v5467 = vmax.f32 %v5461, 0.0
      %v5468 = vmax.f32 %v5462, 0.0
      %v5469 = vmax.f32 %v5463, 0.0
      %v5470 = vmul.f32 %v5464, %v203
      %v5471 = vmul.f32 %v5465, %v207
      %v5472 = vmul.f32 %v5466, %v211
      %v5473 = vmul.f32 %v5467, %v203
      %v5474 = vmul.f32 %v5468, %v207
      %v5475 = vmul.f32 %v5469, %v211
      %5476 = vst [vmem:[#allocation3 + $0x8] sm:$0xff] %v5470
      %5477 = vst [vmem:[#allocation3 + $0x10] sm:$0xff] %v5471
      %5478 = vst.msk [vmem:[#allocation3 + $0x18] sm:$0xff] %vm1983, %v5472
      %5479 = vst [vmem:[#allocation3 + $0x28] sm:$0xff] %v5473
      %5480 = vst [vmem:[#allocation3 + $0x30] sm:$0xff] %v5474
      %5481 = vst.msk [vmem:[#allocation3 + $0x38] sm:$0xff] %vm1983, %v5475
      %s5482 = scalar_lea.vmem %s1, 432
      %v5483 = vld [vmem:[%s5482] sm:$0xff]
      %v5484 = vld [vmem:[%s5482 + $0x8] sm:$0xff]
      %v5485 = vld [vmem:[#allocation3] sm:$0xff]
      %v5486 = vld [vmem:[#allocation3 + $0x8] sm:$0xff]
      %v5487 = vld [vmem:[#allocation3 + $0x10] sm:$0xff]
      %v5488 = vld [vmem:[#allocation3 + $0x18] sm:$0xff]
      %v5489 = vld [vmem:[#allocation3 + $0x20] sm:$0xff]
      %v5490 = vld [vmem:[#allocation3 + $0x28] sm:$0xff]
      %v5491 = vld [vmem:[#allocation3 + $0x30] sm:$0xff]
      %v5492 = vld [vmem:[#allocation3 + $0x38] sm:$0xff]
      %s5493 = scalar_lea.vmem %s1, 448
      %v5494 = vld [vmem:[%s5493] sm:$0xff]
      %v5495 = vld [vmem:[%s5493 + $0x8] sm:$0xff]
      %5504 = vrot.lane.b32.xlu0 %v5485, 18
      %v5505 = vpop.permute.xlu0 %5504
      %5506 = vrot.lane.b32.xlu0 %v5486, 18
      %v5507 = vpop.permute.xlu0 %5506
      %5508 = vrot.lane.b32.xlu0 %v5487, 18
      %v5509 = vpop.permute.xlu0 %5508
      %5510 = vrot.lane.b32.xlu0 %v5488, 18
      %v5511 = vpop.permute.xlu0 %5510
      %5512 = vrot.lane.b32.xlu0 %v5489, 18
      %v5513 = vpop.permute.xlu0 %5512
      %5514 = vrot.lane.b32.xlu0 %v5490, 18
      %v5515 = vpop.permute.xlu0 %5514
      %5516 = vrot.lane.b32.xlu0 %v5491, 18
      %v5517 = vpop.permute.xlu0 %5516
      %5518 = vrot.lane.b32.xlu0 %v5492, 18
      %v5519 = vpop.permute.xlu0 %5518
      %v5520 = vsel %vm273, %v5505, %v5507
      %v5521 = vsel %vm273, %v5507, %v5509
      %v5522 = vsel %vm273, %v5509, %v5511
      %v5523 = vsel %vm273, %v5513, %v5515
      %v5524 = vsel %vm273, %v5515, %v5517
      %v5525 = vsel %vm273, %v5517, %v5519
      %v5533 = vsel %vm286, %v5494, 0
      %v5536 = vsel %vm286, %v5495, 0
      %5538 = vmatprep.subr.mxu0 0.0
      %5539 = vmatpush1.msra.mxu0 0.0
      %5540 = vmatprep.subr.mxu0 0.0
      %5541 = vmatpush1.msra.mxu0 0.0
      %5542 = vmatprep.subr.mxu0 0.0
      %5543 = vmatpush1.msra.mxu0 0.0
      %5544 = vmatprep.subr.mxu0 0.0
      %5545 = vmatpush1.msra.mxu0 0.0
      %5546 = vmatprep.subr.mxu0 0.0
      %5547 = vmatpush1.msra.mxu0 0.0
      %5548 = vmatprep.subr.mxu0 0.0
      %5549 = vmatpush1.msra.mxu0 0.0
      %5550 = vmatprep.subr.mxu0 0.0
      %5551 = vmatpush1.msra.mxu0 0.0
      %5552 = vmatprep.subr.mxu0 0.0
      %5553 = vmatpush1.msra.mxu0 0.0
      %5554 = vmatprep.subr.mxu0 0.0
      %5555 = vmatpush1.msra.mxu0 0.0
      %5556 = vmatprep.subr.mxu0 0.0
      %5557 = vmatpush1.msra.mxu0 0.0
      %5558 = vmatprep.subr.mxu0 0.0
      %5559 = vmatpush1.msra.mxu0 0.0
      %5560 = vmatprep.subr.mxu0 0.0
      %5561 = vmatpush1.msra.mxu0 0.0
      %5562 = vmatprep.subr.mxu0 0.0
      %5563 = vmatpush1.msra.mxu0 0.0
      %5564 = vmatprep.subr.mxu0 0.0
      %5565 = vmatpush1.msra.mxu0 0.0
      %5566 = vmatprep.subr.mxu0 %v5524
      %5567 = vmatpush1.msra.mxu0 %v5523
      %5568 = vmatprep.subr.mxu0 %v5521
      %5569 = vmatpush1.msra.mxu0 %v5520
      %5570 = vmatprep.subr.mxu0 0.0
      %5571 = vmatpush2.msra.mxu0 0.0
      %5572 = vmatprep.subr.mxu0 0.0
      %5573 = vmatpush2.msra.mxu0 0.0
      %5574 = vmatprep.subr.mxu0 0.0
      %5575 = vmatpush2.msra.mxu0 0.0
      %5576 = vmatprep.subr.mxu0 0.0
      %5577 = vmatpush2.msra.mxu0 0.0
      %5578 = vmatprep.subr.mxu0 0.0
      %5579 = vmatpush2.msra.mxu0 0.0
      %5580 = vmatprep.subr.mxu0 0.0
      %5581 = vmatpush2.msra.mxu0 0.0
      %5582 = vmatprep.subr.mxu0 0.0
      %5583 = vmatpush2.msra.mxu0 0.0
      %5584 = vmatprep.subr.mxu0 0.0
      %5585 = vmatpush2.msra.mxu0 0.0
      %5586 = vmatprep.subr.mxu0 0.0
      %5587 = vmatpush2.msra.mxu0 0.0
      %5588 = vmatprep.subr.mxu0 0.0
      %5589 = vmatpush2.msra.mxu0 0.0
      %5590 = vmatprep.subr.mxu0 0.0
      %5591 = vmatpush2.msra.mxu0 0.0
      %5592 = vmatprep.subr.mxu0 0.0
      %5593 = vmatpush2.msra.mxu0 0.0
      %5594 = vmatprep.subr.mxu0 0.0
      %5595 = vmatpush2.msra.mxu0 0.0
      %5596 = vmatprep.subr.mxu0 0.0
      %5597 = vmatpush2.msra.mxu0 0.0
      %5598 = vmatprep.subr.mxu0 0.0
      %5599 = vmatpush2.msra.mxu0 0.0
      %5600 = vmatprep.subr.mxu0 0.0
      %5601 = vmatpush2.msra.mxu0 0.0
      %5602 = vmatprep.mubr.f32.mxu0 0.0
      %5603 = vmatmul.mubr.f32.gmra.mxu0 %v5533
      %v5604 = vpop.f32.mrf.mxu0
      %v5605 = vadd.f32 0.0, %v5604
      %v5606 = vpop.f32.mrf.mxu0
      %v5607 = vadd.f32 0.0, %v5606
      %5608 = vmatprep.mubr.f32.mxu0 0.0
      %5609 = vmatmul.mubr.f32.gmra.mxu0 %v5536
      %v5610 = vpop.f32.mrf.mxu0
      %v5611 = vadd.f32 0.0, %v5610
      %v5612 = vpop.f32.mrf.mxu0
      %v5613 = vadd.f32 0.0, %v5612
      %5614 = vdwg.mxu0
      %5615 = vmatprep.subr.mxu0 0.0
      %5616 = vmatpush1.msra.mxu0 0.0
      %5617 = vmatprep.subr.mxu0 0.0
      %5618 = vmatpush1.msra.mxu0 0.0
      %5619 = vmatprep.subr.mxu0 0.0
      %5620 = vmatpush1.msra.mxu0 0.0
      %5621 = vmatprep.subr.mxu0 0.0
      %5622 = vmatpush1.msra.mxu0 0.0
      %5623 = vmatprep.subr.mxu0 0.0
      %5624 = vmatpush1.msra.mxu0 0.0
      %5625 = vmatprep.subr.mxu0 0.0
      %5626 = vmatpush1.msra.mxu0 0.0
      %5627 = vmatprep.subr.mxu0 0.0
      %5628 = vmatpush1.msra.mxu0 0.0
      %5629 = vmatprep.subr.mxu0 0.0
      %5630 = vmatpush1.msra.mxu0 0.0
      %5631 = vmatprep.subr.mxu0 0.0
      %5632 = vmatpush1.msra.mxu0 0.0
      %5633 = vmatprep.subr.mxu0 0.0
      %5634 = vmatpush1.msra.mxu0 0.0
      %5635 = vmatprep.subr.mxu0 0.0
      %5636 = vmatpush1.msra.mxu0 0.0
      %5637 = vmatprep.subr.mxu0 0.0
      %5638 = vmatpush1.msra.mxu0 0.0
      %5639 = vmatprep.subr.mxu0 0.0
      %5640 = vmatpush1.msra.mxu0 0.0
      %5641 = vmatprep.subr.mxu0 0.0
      %5642 = vmatpush1.msra.mxu0 0.0
      %5643 = vmatprep.subr.mxu0 0.0
      %5644 = vmatpush1.msra.mxu0 %v5525
      %5645 = vmatprep.subr.mxu0 0.0
      %5646 = vmatpush1.msra.mxu0 %v5522
      %5647 = vmatprep.subr.mxu0 0.0
      %5648 = vmatpush2.msra.mxu0 0.0
      %5649 = vmatprep.subr.mxu0 0.0
      %5650 = vmatpush2.msra.mxu0 0.0
      %5651 = vmatprep.subr.mxu0 0.0
      %5652 = vmatpush2.msra.mxu0 0.0
      %5653 = vmatprep.subr.mxu0 0.0
      %5654 = vmatpush2.msra.mxu0 0.0
      %5655 = vmatprep.subr.mxu0 0.0
      %5656 = vmatpush2.msra.mxu0 0.0
      %5657 = vmatprep.subr.mxu0 0.0
      %5658 = vmatpush2.msra.mxu0 0.0
      %5659 = vmatprep.subr.mxu0 0.0
      %5660 = vmatpush2.msra.mxu0 0.0
      %5661 = vmatprep.subr.mxu0 0.0
      %5662 = vmatpush2.msra.mxu0 0.0
      %5663 = vmatprep.subr.mxu0 0.0
      %5664 = vmatpush2.msra.mxu0 0.0
      %5665 = vmatprep.subr.mxu0 0.0
      %5666 = vmatpush2.msra.mxu0 0.0
      %5667 = vmatprep.subr.mxu0 0.0
      %5668 = vmatpush2.msra.mxu0 0.0
      %5669 = vmatprep.subr.mxu0 0.0
      %5670 = vmatpush2.msra.mxu0 0.0
      %5671 = vmatprep.subr.mxu0 0.0
      %5672 = vmatpush2.msra.mxu0 0.0
      %5673 = vmatprep.subr.mxu0 0.0
      %5674 = vmatpush2.msra.mxu0 0.0
      %5675 = vmatprep.subr.mxu0 0.0
      %5676 = vmatpush2.msra.mxu0 0.0
      %5677 = vmatprep.subr.mxu0 0.0
      %5678 = vmatpush2.msra.mxu0 0.0
      %5679 = vmatprep.mubr.f32.mxu0 0.0
      %5680 = vmatmul.mubr.f32.gmra.mxu0 %v5533
      %v5681 = vpop.f32.mrf.mxu0
      %v5682 = vadd.f32 0.0, %v5681
      %v5683 = vpop.f32.mrf.mxu0
      %5684 = vmatprep.mubr.f32.mxu0 0.0
      %5685 = vmatmul.mubr.f32.gmra.mxu0 %v5536
      %v5686 = vpop.f32.mrf.mxu0
      %v5687 = vadd.f32 0.0, %v5686
      %v5688 = vpop.f32.mrf.mxu0
      %5689 = vdwg.mxu0
      %5690 = vrot.lane.b32.xlu0 %v5485, 19
      %v5691 = vpop.permute.xlu0 %5690
      %5692 = vrot.lane.b32.xlu0 %v5486, 19
      %v5693 = vpop.permute.xlu0 %5692
      %5694 = vrot.lane.b32.xlu0 %v5487, 19
      %v5695 = vpop.permute.xlu0 %5694
      %5696 = vrot.lane.b32.xlu0 %v5488, 19
      %v5697 = vpop.permute.xlu0 %5696
      %5698 = vrot.lane.b32.xlu0 %v5489, 19
      %v5699 = vpop.permute.xlu0 %5698
      %5700 = vrot.lane.b32.xlu0 %v5490, 19
      %v5701 = vpop.permute.xlu0 %5700
      %5702 = vrot.lane.b32.xlu0 %v5491, 19
      %v5703 = vpop.permute.xlu0 %5702
      %5704 = vrot.lane.b32.xlu0 %v5492, 19
      %v5705 = vpop.permute.xlu0 %5704
      %v5706 = vsel %vm461, %v5691, %v5693
      %v5707 = vsel %vm461, %v5693, %v5695
      %v5708 = vsel %vm461, %v5695, %v5697
      %v5709 = vsel %vm461, %v5699, %v5701
      %v5710 = vsel %vm461, %v5701, %v5703
      %v5711 = vsel %vm461, %v5703, %v5705
      %v5719 = vsel %vm286, %v5483, 0
      %v5722 = vsel %vm286, %v5484, 0
      %5724 = vmatprep.subr.mxu0 0.0
      %5725 = vmatpush1.msra.mxu0 0.0
      %5726 = vmatprep.subr.mxu0 0.0
      %5727 = vmatpush1.msra.mxu0 0.0
      %5728 = vmatprep.subr.mxu0 0.0
      %5729 = vmatpush1.msra.mxu0 0.0
      %5730 = vmatprep.subr.mxu0 0.0
      %5731 = vmatpush1.msra.mxu0 0.0
      %5732 = vmatprep.subr.mxu0 0.0
      %5733 = vmatpush1.msra.mxu0 0.0
      %5734 = vmatprep.subr.mxu0 0.0
      %5735 = vmatpush1.msra.mxu0 0.0
      %5736 = vmatprep.subr.mxu0 0.0
      %5737 = vmatpush1.msra.mxu0 0.0
      %5738 = vmatprep.subr.mxu0 0.0
      %5739 = vmatpush1.msra.mxu0 0.0
      %5740 = vmatprep.subr.mxu0 0.0
      %5741 = vmatpush1.msra.mxu0 0.0
      %5742 = vmatprep.subr.mxu0 0.0
      %5743 = vmatpush1.msra.mxu0 0.0
      %5744 = vmatprep.subr.mxu0 0.0
      %5745 = vmatpush1.msra.mxu0 0.0
      %5746 = vmatprep.subr.mxu0 0.0
      %5747 = vmatpush1.msra.mxu0 0.0
      %5748 = vmatprep.subr.mxu0 0.0
      %5749 = vmatpush1.msra.mxu0 0.0
      %5750 = vmatprep.subr.mxu0 0.0
      %5751 = vmatpush1.msra.mxu0 0.0
      %5752 = vmatprep.subr.mxu0 %v5710
      %5753 = vmatpush1.msra.mxu0 %v5709
      %5754 = vmatprep.subr.mxu0 %v5707
      %5755 = vmatpush1.msra.mxu0 %v5706
      %5756 = vmatprep.subr.mxu0 0.0
      %5757 = vmatpush2.msra.mxu0 0.0
      %5758 = vmatprep.subr.mxu0 0.0
      %5759 = vmatpush2.msra.mxu0 0.0
      %5760 = vmatprep.subr.mxu0 0.0
      %5761 = vmatpush2.msra.mxu0 0.0
      %5762 = vmatprep.subr.mxu0 0.0
      %5763 = vmatpush2.msra.mxu0 0.0
      %5764 = vmatprep.subr.mxu0 0.0
      %5765 = vmatpush2.msra.mxu0 0.0
      %5766 = vmatprep.subr.mxu0 0.0
      %5767 = vmatpush2.msra.mxu0 0.0
      %5768 = vmatprep.subr.mxu0 0.0
      %5769 = vmatpush2.msra.mxu0 0.0
      %5770 = vmatprep.subr.mxu0 0.0
      %5771 = vmatpush2.msra.mxu0 0.0
      %5772 = vmatprep.subr.mxu0 0.0
      %5773 = vmatpush2.msra.mxu0 0.0
      %5774 = vmatprep.subr.mxu0 0.0
      %5775 = vmatpush2.msra.mxu0 0.0
      %5776 = vmatprep.subr.mxu0 0.0
      %5777 = vmatpush2.msra.mxu0 0.0
      %5778 = vmatprep.subr.mxu0 0.0
      %5779 = vmatpush2.msra.mxu0 0.0
      %5780 = vmatprep.subr.mxu0 0.0
      %5781 = vmatpush2.msra.mxu0 0.0
      %5782 = vmatprep.subr.mxu0 0.0
      %5783 = vmatpush2.msra.mxu0 0.0
      %5784 = vmatprep.subr.mxu0 0.0
      %5785 = vmatpush2.msra.mxu0 0.0
      %5786 = vmatprep.subr.mxu0 0.0
      %5787 = vmatpush2.msra.mxu0 0.0
      %5788 = vmatprep.mubr.f32.mxu0 0.0
      %5789 = vmatmul.mubr.f32.gmra.mxu0 %v5719
      %v5790 = vpop.f32.mrf.mxu0
      %v5791 = vadd.f32 %v5605, %v5790
      %v5792 = vpop.f32.mrf.mxu0
      %v5793 = vadd.f32 %v5607, %v5792
      %5794 = vmatprep.mubr.f32.mxu0 0.0
      %5795 = vmatmul.mubr.f32.gmra.mxu0 %v5722
      %v5796 = vpop.f32.mrf.mxu0
      %v5797 = vadd.f32 %v5611, %v5796
      %v5798 = vpop.f32.mrf.mxu0
      %v5799 = vadd.f32 %v5613, %v5798
      %5800 = vdwg.mxu0
      %5801 = vmatprep.subr.mxu0 0.0
      %5802 = vmatpush1.msra.mxu0 0.0
      %5803 = vmatprep.subr.mxu0 0.0
      %5804 = vmatpush1.msra.mxu0 0.0
      %5805 = vmatprep.subr.mxu0 0.0
      %5806 = vmatpush1.msra.mxu0 0.0
      %5807 = vmatprep.subr.mxu0 0.0
      %5808 = vmatpush1.msra.mxu0 0.0
      %5809 = vmatprep.subr.mxu0 0.0
      %5810 = vmatpush1.msra.mxu0 0.0
      %5811 = vmatprep.subr.mxu0 0.0
      %5812 = vmatpush1.msra.mxu0 0.0
      %5813 = vmatprep.subr.mxu0 0.0
      %5814 = vmatpush1.msra.mxu0 0.0
      %5815 = vmatprep.subr.mxu0 0.0
      %5816 = vmatpush1.msra.mxu0 0.0
      %5817 = vmatprep.subr.mxu0 0.0
      %5818 = vmatpush1.msra.mxu0 0.0
      %5819 = vmatprep.subr.mxu0 0.0
      %5820 = vmatpush1.msra.mxu0 0.0
      %5821 = vmatprep.subr.mxu0 0.0
      %5822 = vmatpush1.msra.mxu0 0.0
      %5823 = vmatprep.subr.mxu0 0.0
      %5824 = vmatpush1.msra.mxu0 0.0
      %5825 = vmatprep.subr.mxu0 0.0
      %5826 = vmatpush1.msra.mxu0 0.0
      %5827 = vmatprep.subr.mxu0 0.0
      %5828 = vmatpush1.msra.mxu0 0.0
      %5829 = vmatprep.subr.mxu0 0.0
      %5830 = vmatpush1.msra.mxu0 %v5711
      %5831 = vmatprep.subr.mxu0 0.0
      %5832 = vmatpush1.msra.mxu0 %v5708
      %5833 = vmatprep.subr.mxu0 0.0
      %5834 = vmatpush2.msra.mxu0 0.0
      %5835 = vmatprep.subr.mxu0 0.0
      %5836 = vmatpush2.msra.mxu0 0.0
      %5837 = vmatprep.subr.mxu0 0.0
      %5838 = vmatpush2.msra.mxu0 0.0
      %5839 = vmatprep.subr.mxu0 0.0
      %5840 = vmatpush2.msra.mxu0 0.0
      %5841 = vmatprep.subr.mxu0 0.0
      %5842 = vmatpush2.msra.mxu0 0.0
      %5843 = vmatprep.subr.mxu0 0.0
      %5844 = vmatpush2.msra.mxu0 0.0
      %5845 = vmatprep.subr.mxu0 0.0
      %5846 = vmatpush2.msra.mxu0 0.0
      %5847 = vmatprep.subr.mxu0 0.0
      %5848 = vmatpush2.msra.mxu0 0.0
      %5849 = vmatprep.subr.mxu0 0.0
      %5850 = vmatpush2.msra.mxu0 0.0
      %5851 = vmatprep.subr.mxu0 0.0
      %5852 = vmatpush2.msra.mxu0 0.0
      %5853 = vmatprep.subr.mxu0 0.0
      %5854 = vmatpush2.msra.mxu0 0.0
      %5855 = vmatprep.subr.mxu0 0.0
      %5856 = vmatpush2.msra.mxu0 0.0
      %5857 = vmatprep.subr.mxu0 0.0
      %5858 = vmatpush2.msra.mxu0 0.0
      %5859 = vmatprep.subr.mxu0 0.0
      %5860 = vmatpush2.msra.mxu0 0.0
      %5861 = vmatprep.subr.mxu0 0.0
      %5862 = vmatpush2.msra.mxu0 0.0
      %5863 = vmatprep.subr.mxu0 0.0
      %5864 = vmatpush2.msra.mxu0 0.0
      %5865 = vmatprep.mubr.f32.mxu0 0.0
      %5866 = vmatmul.mubr.f32.gmra.mxu0 %v5719
      %v5867 = vpop.f32.mrf.mxu0
      %v5868 = vadd.f32 %v5682, %v5867
      %v5869 = vpop.f32.mrf.mxu0
      %5870 = vmatprep.mubr.f32.mxu0 0.0
      %5871 = vmatmul.mubr.f32.gmra.mxu0 %v5722
      %v5872 = vpop.f32.mrf.mxu0
      %v5873 = vadd.f32 %v5687, %v5872
      %v5874 = vpop.f32.mrf.mxu0
      %5875 = vdwg.mxu0
      %s5876 = scalar_lea.vmem %s1, 464
      %v5877 = vld [vmem:[%s5876] sm:$0xff]
      %v5878 = vld [vmem:[%s5876 + $0x8] sm:$0xff]
      %5879 = vrot.lane.b32.xlu0 %v5485, 17
      %v5880 = vpop.permute.xlu0 %5879
      %5881 = vrot.lane.b32.xlu0 %v5486, 17
      %v5882 = vpop.permute.xlu0 %5881
      %5883 = vrot.lane.b32.xlu0 %v5487, 17
      %v5884 = vpop.permute.xlu0 %5883
      %5885 = vrot.lane.b32.xlu0 %v5488, 17
      %v5886 = vpop.permute.xlu0 %5885
      %5887 = vrot.lane.b32.xlu0 %v5489, 17
      %v5888 = vpop.permute.xlu0 %5887
      %5889 = vrot.lane.b32.xlu0 %v5490, 17
      %v5890 = vpop.permute.xlu0 %5889
      %5891 = vrot.lane.b32.xlu0 %v5491, 17
      %v5892 = vpop.permute.xlu0 %5891
      %5893 = vrot.lane.b32.xlu0 %v5492, 17
      %v5894 = vpop.permute.xlu0 %5893
      %v5895 = vsel %vm651, %v5880, %v5882
      %v5896 = vsel %vm651, %v5882, %v5884
      %v5897 = vsel %vm651, %v5884, %v5886
      %v5898 = vsel %vm651, %v5888, %v5890
      %v5899 = vsel %vm651, %v5890, %v5892
      %v5900 = vsel %vm651, %v5892, %v5894
      %v5908 = vsel %vm286, %v5877, 0
      %v5911 = vsel %vm286, %v5878, 0
      %5913 = vmatprep.subr.mxu0 0.0
      %5914 = vmatpush1.msra.mxu0 0.0
      %5915 = vmatprep.subr.mxu0 0.0
      %5916 = vmatpush1.msra.mxu0 0.0
      %5917 = vmatprep.subr.mxu0 0.0
      %5918 = vmatpush1.msra.mxu0 0.0
      %5919 = vmatprep.subr.mxu0 0.0
      %5920 = vmatpush1.msra.mxu0 0.0
      %5921 = vmatprep.subr.mxu0 0.0
      %5922 = vmatpush1.msra.mxu0 0.0
      %5923 = vmatprep.subr.mxu0 0.0
      %5924 = vmatpush1.msra.mxu0 0.0
      %5925 = vmatprep.subr.mxu0 0.0
      %5926 = vmatpush1.msra.mxu0 0.0
      %5927 = vmatprep.subr.mxu0 0.0
      %5928 = vmatpush1.msra.mxu0 0.0
      %5929 = vmatprep.subr.mxu0 0.0
      %5930 = vmatpush1.msra.mxu0 0.0
      %5931 = vmatprep.subr.mxu0 0.0
      %5932 = vmatpush1.msra.mxu0 0.0
      %5933 = vmatprep.subr.mxu0 0.0
      %5934 = vmatpush1.msra.mxu0 0.0
      %5935 = vmatprep.subr.mxu0 0.0
      %5936 = vmatpush1.msra.mxu0 0.0
      %5937 = vmatprep.subr.mxu0 0.0
      %5938 = vmatpush1.msra.mxu0 0.0
      %5939 = vmatprep.subr.mxu0 0.0
      %5940 = vmatpush1.msra.mxu0 0.0
      %5941 = vmatprep.subr.mxu0 %v5899
      %5942 = vmatpush1.msra.mxu0 %v5898
      %5943 = vmatprep.subr.mxu0 %v5896
      %5944 = vmatpush1.msra.mxu0 %v5895
      %5945 = vmatprep.subr.mxu0 0.0
      %5946 = vmatpush2.msra.mxu0 0.0
      %5947 = vmatprep.subr.mxu0 0.0
      %5948 = vmatpush2.msra.mxu0 0.0
      %5949 = vmatprep.subr.mxu0 0.0
      %5950 = vmatpush2.msra.mxu0 0.0
      %5951 = vmatprep.subr.mxu0 0.0
      %5952 = vmatpush2.msra.mxu0 0.0
      %5953 = vmatprep.subr.mxu0 0.0
      %5954 = vmatpush2.msra.mxu0 0.0
      %5955 = vmatprep.subr.mxu0 0.0
      %5956 = vmatpush2.msra.mxu0 0.0
      %5957 = vmatprep.subr.mxu0 0.0
      %5958 = vmatpush2.msra.mxu0 0.0
      %5959 = vmatprep.subr.mxu0 0.0
      %5960 = vmatpush2.msra.mxu0 0.0
      %5961 = vmatprep.subr.mxu0 0.0
      %5962 = vmatpush2.msra.mxu0 0.0
      %5963 = vmatprep.subr.mxu0 0.0
      %5964 = vmatpush2.msra.mxu0 0.0
      %5965 = vmatprep.subr.mxu0 0.0
      %5966 = vmatpush2.msra.mxu0 0.0
      %5967 = vmatprep.subr.mxu0 0.0
      %5968 = vmatpush2.msra.mxu0 0.0
      %5969 = vmatprep.subr.mxu0 0.0
      %5970 = vmatpush2.msra.mxu0 0.0
      %5971 = vmatprep.subr.mxu0 0.0
      %5972 = vmatpush2.msra.mxu0 0.0
      %5973 = vmatprep.subr.mxu0 0.0
      %5974 = vmatpush2.msra.mxu0 0.0
      %5975 = vmatprep.subr.mxu0 0.0
      %5976 = vmatpush2.msra.mxu0 0.0
      %5977 = vmatprep.mubr.f32.mxu0 0.0
      %5978 = vmatmul.mubr.f32.gmra.mxu0 %v5908
      %v5979 = vpop.f32.mrf.mxu0
      %v5980 = vadd.f32 0.0, %v5979
      %v5981 = vpop.f32.mrf.mxu0
      %v5982 = vadd.f32 0.0, %v5981
      %5983 = vmatprep.mubr.f32.mxu0 0.0
      %5984 = vmatmul.mubr.f32.gmra.mxu0 %v5911
      %v5985 = vpop.f32.mrf.mxu0
      %v5986 = vadd.f32 0.0, %v5985
      %v5987 = vpop.f32.mrf.mxu0
      %v5988 = vadd.f32 0.0, %v5987
      %5989 = vdwg.mxu0
      %5990 = vmatprep.subr.mxu0 0.0
      %5991 = vmatpush1.msra.mxu0 0.0
      %5992 = vmatprep.subr.mxu0 0.0
      %5993 = vmatpush1.msra.mxu0 0.0
      %5994 = vmatprep.subr.mxu0 0.0
      %5995 = vmatpush1.msra.mxu0 0.0
      %5996 = vmatprep.subr.mxu0 0.0
      %5997 = vmatpush1.msra.mxu0 0.0
      %5998 = vmatprep.subr.mxu0 0.0
      %5999 = vmatpush1.msra.mxu0 0.0
      %6000 = vmatprep.subr.mxu0 0.0
      %6001 = vmatpush1.msra.mxu0 0.0
      %6002 = vmatprep.subr.mxu0 0.0
      %6003 = vmatpush1.msra.mxu0 0.0
      %6004 = vmatprep.subr.mxu0 0.0
      %6005 = vmatpush1.msra.mxu0 0.0
      %6006 = vmatprep.subr.mxu0 0.0
      %6007 = vmatpush1.msra.mxu0 0.0
      %6008 = vmatprep.subr.mxu0 0.0
      %6009 = vmatpush1.msra.mxu0 0.0
      %6010 = vmatprep.subr.mxu0 0.0
      %6011 = vmatpush1.msra.mxu0 0.0
      %6012 = vmatprep.subr.mxu0 0.0
      %6013 = vmatpush1.msra.mxu0 0.0
      %6014 = vmatprep.subr.mxu0 0.0
      %6015 = vmatpush1.msra.mxu0 0.0
      %6016 = vmatprep.subr.mxu0 0.0
      %6017 = vmatpush1.msra.mxu0 0.0
      %6018 = vmatprep.subr.mxu0 0.0
      %6019 = vmatpush1.msra.mxu0 %v5900
      %6020 = vmatprep.subr.mxu0 0.0
      %6021 = vmatpush1.msra.mxu0 %v5897
      %6022 = vmatprep.subr.mxu0 0.0
      %6023 = vmatpush2.msra.mxu0 0.0
      %6024 = vmatprep.subr.mxu0 0.0
      %6025 = vmatpush2.msra.mxu0 0.0
      %6026 = vmatprep.subr.mxu0 0.0
      %6027 = vmatpush2.msra.mxu0 0.0
      %6028 = vmatprep.subr.mxu0 0.0
      %6029 = vmatpush2.msra.mxu0 0.0
      %6030 = vmatprep.subr.mxu0 0.0
      %6031 = vmatpush2.msra.mxu0 0.0
      %6032 = vmatprep.subr.mxu0 0.0
      %6033 = vmatpush2.msra.mxu0 0.0
      %6034 = vmatprep.subr.mxu0 0.0
      %6035 = vmatpush2.msra.mxu0 0.0
      %6036 = vmatprep.subr.mxu0 0.0
      %6037 = vmatpush2.msra.mxu0 0.0
      %6038 = vmatprep.subr.mxu0 0.0
      %6039 = vmatpush2.msra.mxu0 0.0
      %6040 = vmatprep.subr.mxu0 0.0
      %6041 = vmatpush2.msra.mxu0 0.0
      %6042 = vmatprep.subr.mxu0 0.0
      %6043 = vmatpush2.msra.mxu0 0.0
      %6044 = vmatprep.subr.mxu0 0.0
      %6045 = vmatpush2.msra.mxu0 0.0
      %6046 = vmatprep.subr.mxu0 0.0
      %6047 = vmatpush2.msra.mxu0 0.0
      %6048 = vmatprep.subr.mxu0 0.0
      %6049 = vmatpush2.msra.mxu0 0.0
      %6050 = vmatprep.subr.mxu0 0.0
      %6051 = vmatpush2.msra.mxu0 0.0
      %6052 = vmatprep.subr.mxu0 0.0
      %6053 = vmatpush2.msra.mxu0 0.0
      %6054 = vmatprep.mubr.f32.mxu0 0.0
      %6055 = vmatmul.mubr.f32.gmra.mxu0 %v5908
      %v6056 = vpop.f32.mrf.mxu0
      %v6057 = vadd.f32 0.0, %v6056
      %v6058 = vpop.f32.mrf.mxu0
      %6059 = vmatprep.mubr.f32.mxu0 0.0
      %6060 = vmatmul.mubr.f32.gmra.mxu0 %v5911
      %v6061 = vpop.f32.mrf.mxu0
      %v6062 = vadd.f32 0.0, %v6061
      %v6063 = vpop.f32.mrf.mxu0
      %6064 = vdwg.mxu0
      %v6065 = vadd.f32 %v5791, %v5980
      %v6066 = vadd.f32 %v5793, %v5982
      %v6067 = vadd.f32 %v5868, %v6057
      %v6068 = vadd.f32 %v5797, %v5986
      %v6069 = vadd.f32 %v5799, %v5988
      %v6070 = vadd.f32 %v5873, %v6062
      %s6071 = scalar_lea.vmem %s1, 480
      %v6072 = vld [vmem:[%s6071] sm:$0xff]
      %v6073 = vld [vmem:[%s6071 + $0x8] sm:$0xff]
      %6074 = vrot.lane.b32.xlu0 %v5485, 1
      %v6075 = vpop.permute.xlu0 %6074
      %6076 = vrot.lane.b32.xlu0 %v5486, 1
      %v6077 = vpop.permute.xlu0 %6076
      %6078 = vrot.lane.b32.xlu0 %v5487, 1
      %v6079 = vpop.permute.xlu0 %6078
      %6080 = vrot.lane.b32.xlu0 %v5488, 1
      %v6081 = vpop.permute.xlu0 %6080
      %6082 = vrot.lane.b32.xlu0 %v5489, 1
      %v6083 = vpop.permute.xlu0 %6082
      %6084 = vrot.lane.b32.xlu0 %v5490, 1
      %v6085 = vpop.permute.xlu0 %6084
      %6086 = vrot.lane.b32.xlu0 %v5491, 1
      %v6087 = vpop.permute.xlu0 %6086
      %6088 = vrot.lane.b32.xlu0 %v5492, 1
      %v6089 = vpop.permute.xlu0 %6088
      %v6090 = vsel %vm847, %v6075, %v6077
      %v6091 = vsel %vm847, %v6077, %v6079
      %v6092 = vsel %vm847, %v6079, %v6081
      %v6093 = vsel %vm847, %v6083, %v6085
      %v6094 = vsel %vm847, %v6085, %v6087
      %v6095 = vsel %vm847, %v6087, %v6089
      %v6103 = vsel %vm286, %v6072, 0
      %v6106 = vsel %vm286, %v6073, 0
      %6108 = vmatprep.subr.mxu0 0.0
      %6109 = vmatpush1.msra.mxu0 0.0
      %6110 = vmatprep.subr.mxu0 0.0
      %6111 = vmatpush1.msra.mxu0 0.0
      %6112 = vmatprep.subr.mxu0 0.0
      %6113 = vmatpush1.msra.mxu0 0.0
      %6114 = vmatprep.subr.mxu0 0.0
      %6115 = vmatpush1.msra.mxu0 0.0
      %6116 = vmatprep.subr.mxu0 0.0
      %6117 = vmatpush1.msra.mxu0 0.0
      %6118 = vmatprep.subr.mxu0 0.0
      %6119 = vmatpush1.msra.mxu0 0.0
      %6120 = vmatprep.subr.mxu0 0.0
      %6121 = vmatpush1.msra.mxu0 0.0
      %6122 = vmatprep.subr.mxu0 0.0
      %6123 = vmatpush1.msra.mxu0 0.0
      %6124 = vmatprep.subr.mxu0 0.0
      %6125 = vmatpush1.msra.mxu0 0.0
      %6126 = vmatprep.subr.mxu0 0.0
      %6127 = vmatpush1.msra.mxu0 0.0
      %6128 = vmatprep.subr.mxu0 0.0
      %6129 = vmatpush1.msra.mxu0 0.0
      %6130 = vmatprep.subr.mxu0 0.0
      %6131 = vmatpush1.msra.mxu0 0.0
      %6132 = vmatprep.subr.mxu0 0.0
      %6133 = vmatpush1.msra.mxu0 0.0
      %6134 = vmatprep.subr.mxu0 0.0
      %6135 = vmatpush1.msra.mxu0 0.0
      %6136 = vmatprep.subr.mxu0 %v6094
      %6137 = vmatpush1.msra.mxu0 %v6093
      %6138 = vmatprep.subr.mxu0 %v6091
      %6139 = vmatpush1.msra.mxu0 %v6090
      %6140 = vmatprep.subr.mxu0 0.0
      %6141 = vmatpush2.msra.mxu0 0.0
      %6142 = vmatprep.subr.mxu0 0.0
      %6143 = vmatpush2.msra.mxu0 0.0
      %6144 = vmatprep.subr.mxu0 0.0
      %6145 = vmatpush2.msra.mxu0 0.0
      %6146 = vmatprep.subr.mxu0 0.0
      %6147 = vmatpush2.msra.mxu0 0.0
      %6148 = vmatprep.subr.mxu0 0.0
      %6149 = vmatpush2.msra.mxu0 0.0
      %6150 = vmatprep.subr.mxu0 0.0
      %6151 = vmatpush2.msra.mxu0 0.0
      %6152 = vmatprep.subr.mxu0 0.0
      %6153 = vmatpush2.msra.mxu0 0.0
      %6154 = vmatprep.subr.mxu0 0.0
      %6155 = vmatpush2.msra.mxu0 0.0
      %6156 = vmatprep.subr.mxu0 0.0
      %6157 = vmatpush2.msra.mxu0 0.0
      %6158 = vmatprep.subr.mxu0 0.0
      %6159 = vmatpush2.msra.mxu0 0.0
      %6160 = vmatprep.subr.mxu0 0.0
      %6161 = vmatpush2.msra.mxu0 0.0
      %6162 = vmatprep.subr.mxu0 0.0
      %6163 = vmatpush2.msra.mxu0 0.0
      %6164 = vmatprep.subr.mxu0 0.0
      %6165 = vmatpush2.msra.mxu0 0.0
      %6166 = vmatprep.subr.mxu0 0.0
      %6167 = vmatpush2.msra.mxu0 0.0
      %6168 = vmatprep.subr.mxu0 0.0
      %6169 = vmatpush2.msra.mxu0 0.0
      %6170 = vmatprep.subr.mxu0 0.0
      %6171 = vmatpush2.msra.mxu0 0.0
      %6172 = vmatprep.mubr.f32.mxu0 0.0
      %6173 = vmatmul.mubr.f32.gmra.mxu0 %v6103
      %v6174 = vpop.f32.mrf.mxu0
      %v6175 = vadd.f32 0.0, %v6174
      %v6176 = vpop.f32.mrf.mxu0
      %v6177 = vadd.f32 0.0, %v6176
      %6178 = vmatprep.mubr.f32.mxu0 0.0
      %6179 = vmatmul.mubr.f32.gmra.mxu0 %v6106
      %v6180 = vpop.f32.mrf.mxu0
      %v6181 = vadd.f32 0.0, %v6180
      %v6182 = vpop.f32.mrf.mxu0
      %v6183 = vadd.f32 0.0, %v6182
      %6184 = vdwg.mxu0
      %6185 = vmatprep.subr.mxu0 0.0
      %6186 = vmatpush1.msra.mxu0 0.0
      %6187 = vmatprep.subr.mxu0 0.0
      %6188 = vmatpush1.msra.mxu0 0.0
      %6189 = vmatprep.subr.mxu0 0.0
      %6190 = vmatpush1.msra.mxu0 0.0
      %6191 = vmatprep.subr.mxu0 0.0
      %6192 = vmatpush1.msra.mxu0 0.0
      %6193 = vmatprep.subr.mxu0 0.0
      %6194 = vmatpush1.msra.mxu0 0.0
      %6195 = vmatprep.subr.mxu0 0.0
      %6196 = vmatpush1.msra.mxu0 0.0
      %6197 = vmatprep.subr.mxu0 0.0
      %6198 = vmatpush1.msra.mxu0 0.0
      %6199 = vmatprep.subr.mxu0 0.0
      %6200 = vmatpush1.msra.mxu0 0.0
      %6201 = vmatprep.subr.mxu0 0.0
      %6202 = vmatpush1.msra.mxu0 0.0
      %6203 = vmatprep.subr.mxu0 0.0
      %6204 = vmatpush1.msra.mxu0 0.0
      %6205 = vmatprep.subr.mxu0 0.0
      %6206 = vmatpush1.msra.mxu0 0.0
      %6207 = vmatprep.subr.mxu0 0.0
      %6208 = vmatpush1.msra.mxu0 0.0
      %6209 = vmatprep.subr.mxu0 0.0
      %6210 = vmatpush1.msra.mxu0 0.0
      %6211 = vmatprep.subr.mxu0 0.0
      %6212 = vmatpush1.msra.mxu0 0.0
      %6213 = vmatprep.subr.mxu0 0.0
      %6214 = vmatpush1.msra.mxu0 %v6095
      %6215 = vmatprep.subr.mxu0 0.0
      %6216 = vmatpush1.msra.mxu0 %v6092
      %6217 = vmatprep.subr.mxu0 0.0
      %6218 = vmatpush2.msra.mxu0 0.0
      %6219 = vmatprep.subr.mxu0 0.0
      %6220 = vmatpush2.msra.mxu0 0.0
      %6221 = vmatprep.subr.mxu0 0.0
      %6222 = vmatpush2.msra.mxu0 0.0
      %6223 = vmatprep.subr.mxu0 0.0
      %6224 = vmatpush2.msra.mxu0 0.0
      %6225 = vmatprep.subr.mxu0 0.0
      %6226 = vmatpush2.msra.mxu0 0.0
      %6227 = vmatprep.subr.mxu0 0.0
      %6228 = vmatpush2.msra.mxu0 0.0
      %6229 = vmatprep.subr.mxu0 0.0
      %6230 = vmatpush2.msra.mxu0 0.0
      %6231 = vmatprep.subr.mxu0 0.0
      %6232 = vmatpush2.msra.mxu0 0.0
      %6233 = vmatprep.subr.mxu0 0.0
      %6234 = vmatpush2.msra.mxu0 0.0
      %6235 = vmatprep.subr.mxu0 0.0
      %6236 = vmatpush2.msra.mxu0 0.0
      %6237 = vmatprep.subr.mxu0 0.0
      %6238 = vmatpush2.msra.mxu0 0.0
      %6239 = vmatprep.subr.mxu0 0.0
      %6240 = vmatpush2.msra.mxu0 0.0
      %6241 = vmatprep.subr.mxu0 0.0
      %6242 = vmatpush2.msra.mxu0 0.0
      %6243 = vmatprep.subr.mxu0 0.0
      %6244 = vmatpush2.msra.mxu0 0.0
      %6245 = vmatprep.subr.mxu0 0.0
      %6246 = vmatpush2.msra.mxu0 0.0
      %6247 = vmatprep.subr.mxu0 0.0
      %6248 = vmatpush2.msra.mxu0 0.0
      %6249 = vmatprep.mubr.f32.mxu0 0.0
      %6250 = vmatmul.mubr.f32.gmra.mxu0 %v6103
      %v6251 = vpop.f32.mrf.mxu0
      %v6252 = vadd.f32 0.0, %v6251
      %v6253 = vpop.f32.mrf.mxu0
      %6254 = vmatprep.mubr.f32.mxu0 0.0
      %6255 = vmatmul.mubr.f32.gmra.mxu0 %v6106
      %v6256 = vpop.f32.mrf.mxu0
      %v6257 = vadd.f32 0.0, %v6256
      %v6258 = vpop.f32.mrf.mxu0
      %6259 = vdwg.mxu0
      %v6260 = vadd.f32 %v6065, %v6175
      %v6261 = vadd.f32 %v6066, %v6177
      %v6262 = vadd.f32 %v6067, %v6252
      %v6263 = vadd.f32 %v6068, %v6181
      %v6264 = vadd.f32 %v6069, %v6183
      %v6265 = vadd.f32 %v6070, %v6257
      %s6266 = scalar_lea.vmem %s1, 496
      %v6267 = vld [vmem:[%s6266] sm:$0xff]
      %v6268 = vld [vmem:[%s6266 + $0x8] sm:$0xff]
      %v6270 = vsel %vm286, %v6267, 0
      %v6273 = vsel %vm286, %v6268, 0
      %6275 = vmatprep.subr.mxu0 0.0
      %6276 = vmatpush1.msra.mxu0 0.0
      %6277 = vmatprep.subr.mxu0 0.0
      %6278 = vmatpush1.msra.mxu0 0.0
      %6279 = vmatprep.subr.mxu0 0.0
      %6280 = vmatpush1.msra.mxu0 0.0
      %6281 = vmatprep.subr.mxu0 0.0
      %6282 = vmatpush1.msra.mxu0 0.0
      %6283 = vmatprep.subr.mxu0 0.0
      %6284 = vmatpush1.msra.mxu0 0.0
      %6285 = vmatprep.subr.mxu0 0.0
      %6286 = vmatpush1.msra.mxu0 0.0
      %6287 = vmatprep.subr.mxu0 0.0
      %6288 = vmatpush1.msra.mxu0 0.0
      %6289 = vmatprep.subr.mxu0 0.0
      %6290 = vmatpush1.msra.mxu0 0.0
      %6291 = vmatprep.subr.mxu0 0.0
      %6292 = vmatpush1.msra.mxu0 0.0
      %6293 = vmatprep.subr.mxu0 0.0
      %6294 = vmatpush1.msra.mxu0 0.0
      %6295 = vmatprep.subr.mxu0 0.0
      %6296 = vmatpush1.msra.mxu0 0.0
      %6297 = vmatprep.subr.mxu0 0.0
      %6298 = vmatpush1.msra.mxu0 0.0
      %6299 = vmatprep.subr.mxu0 0.0
      %6300 = vmatpush1.msra.mxu0 0.0
      %6301 = vmatprep.subr.mxu0 0.0
      %6302 = vmatpush1.msra.mxu0 0.0
      %6303 = vmatprep.subr.mxu0 %v5491
      %6304 = vmatpush1.msra.mxu0 %v5490
      %6305 = vmatprep.subr.mxu0 %v5487
      %6306 = vmatpush1.msra.mxu0 %v5486
      %6307 = vmatprep.subr.mxu0 0.0
      %6308 = vmatpush2.msra.mxu0 0.0
      %6309 = vmatprep.subr.mxu0 0.0
      %6310 = vmatpush2.msra.mxu0 0.0
      %6311 = vmatprep.subr.mxu0 0.0
      %6312 = vmatpush2.msra.mxu0 0.0
      %6313 = vmatprep.subr.mxu0 0.0
      %6314 = vmatpush2.msra.mxu0 0.0
      %6315 = vmatprep.subr.mxu0 0.0
      %6316 = vmatpush2.msra.mxu0 0.0
      %6317 = vmatprep.subr.mxu0 0.0
      %6318 = vmatpush2.msra.mxu0 0.0
      %6319 = vmatprep.subr.mxu0 0.0
      %6320 = vmatpush2.msra.mxu0 0.0
      %6321 = vmatprep.subr.mxu0 0.0
      %6322 = vmatpush2.msra.mxu0 0.0
      %6323 = vmatprep.subr.mxu0 0.0
      %6324 = vmatpush2.msra.mxu0 0.0
      %6325 = vmatprep.subr.mxu0 0.0
      %6326 = vmatpush2.msra.mxu0 0.0
      %6327 = vmatprep.subr.mxu0 0.0
      %6328 = vmatpush2.msra.mxu0 0.0
      %6329 = vmatprep.subr.mxu0 0.0
      %6330 = vmatpush2.msra.mxu0 0.0
      %6331 = vmatprep.subr.mxu0 0.0
      %6332 = vmatpush2.msra.mxu0 0.0
      %6333 = vmatprep.subr.mxu0 0.0
      %6334 = vmatpush2.msra.mxu0 0.0
      %6335 = vmatprep.subr.mxu0 0.0
      %6336 = vmatpush2.msra.mxu0 0.0
      %6337 = vmatprep.subr.mxu0 0.0
      %6338 = vmatpush2.msra.mxu0 0.0
      %6339 = vmatprep.mubr.f32.mxu0 0.0
      %6340 = vmatmul.mubr.f32.gmra.mxu0 %v6270
      %v6341 = vpop.f32.mrf.mxu0
      %v6342 = vadd.f32 0.0, %v6341
      %v6343 = vpop.f32.mrf.mxu0
      %v6344 = vadd.f32 0.0, %v6343
      %6345 = vmatprep.mubr.f32.mxu0 0.0
      %6346 = vmatmul.mubr.f32.gmra.mxu0 %v6273
      %v6347 = vpop.f32.mrf.mxu0
      %v6348 = vadd.f32 0.0, %v6347
      %v6349 = vpop.f32.mrf.mxu0
      %v6350 = vadd.f32 0.0, %v6349
      %6351 = vdwg.mxu0
      %6352 = vmatprep.subr.mxu0 0.0
      %6353 = vmatpush1.msra.mxu0 0.0
      %6354 = vmatprep.subr.mxu0 0.0
      %6355 = vmatpush1.msra.mxu0 0.0
      %6356 = vmatprep.subr.mxu0 0.0
      %6357 = vmatpush1.msra.mxu0 0.0
      %6358 = vmatprep.subr.mxu0 0.0
      %6359 = vmatpush1.msra.mxu0 0.0
      %6360 = vmatprep.subr.mxu0 0.0
      %6361 = vmatpush1.msra.mxu0 0.0
      %6362 = vmatprep.subr.mxu0 0.0
      %6363 = vmatpush1.msra.mxu0 0.0
      %6364 = vmatprep.subr.mxu0 0.0
      %6365 = vmatpush1.msra.mxu0 0.0
      %6366 = vmatprep.subr.mxu0 0.0
      %6367 = vmatpush1.msra.mxu0 0.0
      %6368 = vmatprep.subr.mxu0 0.0
      %6369 = vmatpush1.msra.mxu0 0.0
      %6370 = vmatprep.subr.mxu0 0.0
      %6371 = vmatpush1.msra.mxu0 0.0
      %6372 = vmatprep.subr.mxu0 0.0
      %6373 = vmatpush1.msra.mxu0 0.0
      %6374 = vmatprep.subr.mxu0 0.0
      %6375 = vmatpush1.msra.mxu0 0.0
      %6376 = vmatprep.subr.mxu0 0.0
      %6377 = vmatpush1.msra.mxu0 0.0
      %6378 = vmatprep.subr.mxu0 0.0
      %6379 = vmatpush1.msra.mxu0 0.0
      %6380 = vmatprep.subr.mxu0 0.0
      %6381 = vmatpush1.msra.mxu0 %v5492
      %6382 = vmatprep.subr.mxu0 0.0
      %6383 = vmatpush1.msra.mxu0 %v5488
      %6384 = vmatprep.subr.mxu0 0.0
      %6385 = vmatpush2.msra.mxu0 0.0
      %6386 = vmatprep.subr.mxu0 0.0
      %6387 = vmatpush2.msra.mxu0 0.0
      %6388 = vmatprep.subr.mxu0 0.0
      %6389 = vmatpush2.msra.mxu0 0.0
      %6390 = vmatprep.subr.mxu0 0.0
      %6391 = vmatpush2.msra.mxu0 0.0
      %6392 = vmatprep.subr.mxu0 0.0
      %6393 = vmatpush2.msra.mxu0 0.0
      %6394 = vmatprep.subr.mxu0 0.0
      %6395 = vmatpush2.msra.mxu0 0.0
      %6396 = vmatprep.subr.mxu0 0.0
      %6397 = vmatpush2.msra.mxu0 0.0
      %6398 = vmatprep.subr.mxu0 0.0
      %6399 = vmatpush2.msra.mxu0 0.0
      %6400 = vmatprep.subr.mxu0 0.0
      %6401 = vmatpush2.msra.mxu0 0.0
      %6402 = vmatprep.subr.mxu0 0.0
      %6403 = vmatpush2.msra.mxu0 0.0
      %6404 = vmatprep.subr.mxu0 0.0
      %6405 = vmatpush2.msra.mxu0 0.0
      %6406 = vmatprep.subr.mxu0 0.0
      %6407 = vmatpush2.msra.mxu0 0.0
      %6408 = vmatprep.subr.mxu0 0.0
      %6409 = vmatpush2.msra.mxu0 0.0
      %6410 = vmatprep.subr.mxu0 0.0
      %6411 = vmatpush2.msra.mxu0 0.0
      %6412 = vmatprep.subr.mxu0 0.0
      %6413 = vmatpush2.msra.mxu0 0.0
      %6414 = vmatprep.subr.mxu0 0.0
      %6415 = vmatpush2.msra.mxu0 0.0
      %6416 = vmatprep.mubr.f32.mxu0 0.0
      %6417 = vmatmul.mubr.f32.gmra.mxu0 %v6270
      %v6418 = vpop.f32.mrf.mxu0
      %v6419 = vadd.f32 0.0, %v6418
      %v6420 = vpop.f32.mrf.mxu0
      %6421 = vmatprep.mubr.f32.mxu0 0.0
      %6422 = vmatmul.mubr.f32.gmra.mxu0 %v6273
      %v6423 = vpop.f32.mrf.mxu0
      %v6424 = vadd.f32 0.0, %v6423
      %v6425 = vpop.f32.mrf.mxu0
      %6426 = vdwg.mxu0
      %v6427 = vadd.f32 %v6260, %v6342
      %v6428 = vadd.f32 %v6261, %v6344
      %v6429 = vadd.f32 %v6262, %v6419
      %v6430 = vadd.f32 %v6263, %v6348
      %v6431 = vadd.f32 %v6264, %v6350
      %v6432 = vadd.f32 %v6265, %v6424
      %s6433 = scalar_lea.vmem %s1, 512
      %v6434 = vld [vmem:[%s6433] sm:$0xff]
      %v6435 = vld [vmem:[%s6433 + $0x8] sm:$0xff]
      %6436 = vrot.lane.b32.xlu0 %v5486, 127
      %v6437 = vpop.permute.xlu0 %6436
      %6438 = vrot.lane.b32.xlu0 %v5487, 127
      %v6439 = vpop.permute.xlu0 %6438
      %6440 = vrot.lane.b32.xlu0 %v5488, 127
      %v6441 = vpop.permute.xlu0 %6440
      %6442 = vrot.lane.b32.xlu0 %v5490, 127
      %v6443 = vpop.permute.xlu0 %6442
      %6444 = vrot.lane.b32.xlu0 %v5491, 127
      %v6445 = vpop.permute.xlu0 %6444
      %6446 = vrot.lane.b32.xlu0 %v5492, 127
      %v6447 = vpop.permute.xlu0 %6446
      %v6448 = vsel %vm1206, %v6437, %v6439
      %v6449 = vsel %vm1206, %v6439, %v6441
      %v6450 = vsel %vm1206, %v6443, %v6445
      %v6451 = vsel %vm1206, %v6445, %v6447
      %v6459 = vsel %vm286, %v6434, 0
      %v6462 = vsel %vm286, %v6435, 0
      %6464 = vmatprep.subr.mxu0 0.0
      %6465 = vmatpush1.msra.mxu0 0.0
      %6466 = vmatprep.subr.mxu0 0.0
      %6467 = vmatpush1.msra.mxu0 0.0
      %6468 = vmatprep.subr.mxu0 0.0
      %6469 = vmatpush1.msra.mxu0 0.0
      %6470 = vmatprep.subr.mxu0 0.0
      %6471 = vmatpush1.msra.mxu0 0.0
      %6472 = vmatprep.subr.mxu0 0.0
      %6473 = vmatpush1.msra.mxu0 0.0
      %6474 = vmatprep.subr.mxu0 0.0
      %6475 = vmatpush1.msra.mxu0 0.0
      %6476 = vmatprep.subr.mxu0 0.0
      %6477 = vmatpush1.msra.mxu0 0.0
      %6478 = vmatprep.subr.mxu0 0.0
      %6479 = vmatpush1.msra.mxu0 0.0
      %6480 = vmatprep.subr.mxu0 0.0
      %6481 = vmatpush1.msra.mxu0 0.0
      %6482 = vmatprep.subr.mxu0 0.0
      %6483 = vmatpush1.msra.mxu0 0.0
      %6484 = vmatprep.subr.mxu0 0.0
      %6485 = vmatpush1.msra.mxu0 0.0
      %6486 = vmatprep.subr.mxu0 0.0
      %6487 = vmatpush1.msra.mxu0 0.0
      %6488 = vmatprep.subr.mxu0 0.0
      %6489 = vmatpush1.msra.mxu0 0.0
      %6490 = vmatprep.subr.mxu0 0.0
      %6491 = vmatpush1.msra.mxu0 0.0
      %6492 = vmatprep.subr.mxu0 %v6451
      %6493 = vmatpush1.msra.mxu0 %v6450
      %6494 = vmatprep.subr.mxu0 %v6449
      %6495 = vmatpush1.msra.mxu0 %v6448
      %6496 = vmatprep.subr.mxu0 0.0
      %6497 = vmatpush2.msra.mxu0 0.0
      %6498 = vmatprep.subr.mxu0 0.0
      %6499 = vmatpush2.msra.mxu0 0.0
      %6500 = vmatprep.subr.mxu0 0.0
      %6501 = vmatpush2.msra.mxu0 0.0
      %6502 = vmatprep.subr.mxu0 0.0
      %6503 = vmatpush2.msra.mxu0 0.0
      %6504 = vmatprep.subr.mxu0 0.0
      %6505 = vmatpush2.msra.mxu0 0.0
      %6506 = vmatprep.subr.mxu0 0.0
      %6507 = vmatpush2.msra.mxu0 0.0
      %6508 = vmatprep.subr.mxu0 0.0
      %6509 = vmatpush2.msra.mxu0 0.0
      %6510 = vmatprep.subr.mxu0 0.0
      %6511 = vmatpush2.msra.mxu0 0.0
      %6512 = vmatprep.subr.mxu0 0.0
      %6513 = vmatpush2.msra.mxu0 0.0
      %6514 = vmatprep.subr.mxu0 0.0
      %6515 = vmatpush2.msra.mxu0 0.0
      %6516 = vmatprep.subr.mxu0 0.0
      %6517 = vmatpush2.msra.mxu0 0.0
      %6518 = vmatprep.subr.mxu0 0.0
      %6519 = vmatpush2.msra.mxu0 0.0
      %6520 = vmatprep.subr.mxu0 0.0
      %6521 = vmatpush2.msra.mxu0 0.0
      %6522 = vmatprep.subr.mxu0 0.0
      %6523 = vmatpush2.msra.mxu0 0.0
      %6524 = vmatprep.subr.mxu0 0.0
      %6525 = vmatpush2.msra.mxu0 0.0
      %6526 = vmatprep.subr.mxu0 0.0
      %6527 = vmatpush2.msra.mxu0 0.0
      %6528 = vmatprep.mubr.f32.mxu0 0.0
      %6529 = vmatmul.mubr.f32.gmra.mxu0 %v6459
      %v6530 = vpop.f32.mrf.mxu0
      %v6531 = vadd.f32 0.0, %v6530
      %v6532 = vpop.f32.mrf.mxu0
      %v6533 = vadd.f32 0.0, %v6532
      %6534 = vmatprep.mubr.f32.mxu0 0.0
      %6535 = vmatmul.mubr.f32.gmra.mxu0 %v6462
      %v6536 = vpop.f32.mrf.mxu0
      %v6537 = vadd.f32 0.0, %v6536
      %v6538 = vpop.f32.mrf.mxu0
      %v6539 = vadd.f32 0.0, %v6538
      %6540 = vdwg.mxu0
      %6541 = vmatprep.subr.mxu0 0.0
      %6542 = vmatpush1.msra.mxu0 0.0
      %6543 = vmatprep.subr.mxu0 0.0
      %6544 = vmatpush1.msra.mxu0 0.0
      %6545 = vmatprep.subr.mxu0 0.0
      %6546 = vmatpush1.msra.mxu0 0.0
      %6547 = vmatprep.subr.mxu0 0.0
      %6548 = vmatpush1.msra.mxu0 0.0
      %6549 = vmatprep.subr.mxu0 0.0
      %6550 = vmatpush1.msra.mxu0 0.0
      %6551 = vmatprep.subr.mxu0 0.0
      %6552 = vmatpush1.msra.mxu0 0.0
      %6553 = vmatprep.subr.mxu0 0.0
      %6554 = vmatpush1.msra.mxu0 0.0
      %6555 = vmatprep.subr.mxu0 0.0
      %6556 = vmatpush1.msra.mxu0 0.0
      %6557 = vmatprep.subr.mxu0 0.0
      %6558 = vmatpush1.msra.mxu0 0.0
      %6559 = vmatprep.subr.mxu0 0.0
      %6560 = vmatpush1.msra.mxu0 0.0
      %6561 = vmatprep.subr.mxu0 0.0
      %6562 = vmatpush1.msra.mxu0 0.0
      %6563 = vmatprep.subr.mxu0 0.0
      %6564 = vmatpush1.msra.mxu0 0.0
      %6565 = vmatprep.subr.mxu0 0.0
      %6566 = vmatpush1.msra.mxu0 0.0
      %6567 = vmatprep.subr.mxu0 0.0
      %6568 = vmatpush1.msra.mxu0 0.0
      %6569 = vmatprep.subr.mxu0 0.0
      %6570 = vmatpush1.msra.mxu0 %v6447
      %6571 = vmatprep.subr.mxu0 0.0
      %6572 = vmatpush1.msra.mxu0 %v6441
      %6573 = vmatprep.subr.mxu0 0.0
      %6574 = vmatpush2.msra.mxu0 0.0
      %6575 = vmatprep.subr.mxu0 0.0
      %6576 = vmatpush2.msra.mxu0 0.0
      %6577 = vmatprep.subr.mxu0 0.0
      %6578 = vmatpush2.msra.mxu0 0.0
      %6579 = vmatprep.subr.mxu0 0.0
      %6580 = vmatpush2.msra.mxu0 0.0
      %6581 = vmatprep.subr.mxu0 0.0
      %6582 = vmatpush2.msra.mxu0 0.0
      %6583 = vmatprep.subr.mxu0 0.0
      %6584 = vmatpush2.msra.mxu0 0.0
      %6585 = vmatprep.subr.mxu0 0.0
      %6586 = vmatpush2.msra.mxu0 0.0
      %6587 = vmatprep.subr.mxu0 0.0
      %6588 = vmatpush2.msra.mxu0 0.0
      %6589 = vmatprep.subr.mxu0 0.0
      %6590 = vmatpush2.msra.mxu0 0.0
      %6591 = vmatprep.subr.mxu0 0.0
      %6592 = vmatpush2.msra.mxu0 0.0
      %6593 = vmatprep.subr.mxu0 0.0
      %6594 = vmatpush2.msra.mxu0 0.0
      %6595 = vmatprep.subr.mxu0 0.0
      %6596 = vmatpush2.msra.mxu0 0.0
      %6597 = vmatprep.subr.mxu0 0.0
      %6598 = vmatpush2.msra.mxu0 0.0
      %6599 = vmatprep.subr.mxu0 0.0
      %6600 = vmatpush2.msra.mxu0 0.0
      %6601 = vmatprep.subr.mxu0 0.0
      %6602 = vmatpush2.msra.mxu0 0.0
      %6603 = vmatprep.subr.mxu0 0.0
      %6604 = vmatpush2.msra.mxu0 0.0
      %6605 = vmatprep.mubr.f32.mxu0 0.0
      %6606 = vmatmul.mubr.f32.gmra.mxu0 %v6459
      %v6607 = vpop.f32.mrf.mxu0
      %v6608 = vadd.f32 0.0, %v6607
      %v6609 = vpop.f32.mrf.mxu0
      %6610 = vmatprep.mubr.f32.mxu0 0.0
      %6611 = vmatmul.mubr.f32.gmra.mxu0 %v6462
      %v6612 = vpop.f32.mrf.mxu0
      %v6613 = vadd.f32 0.0, %v6612
      %v6614 = vpop.f32.mrf.mxu0
      %6615 = vdwg.mxu0
      %v6616 = vadd.f32 %v6427, %v6531
      %v6617 = vadd.f32 %v6428, %v6533
      %v6618 = vadd.f32 %v6429, %v6608
      %v6619 = vadd.f32 %v6430, %v6537
      %v6620 = vadd.f32 %v6431, %v6539
      %v6621 = vadd.f32 %v6432, %v6613
      %s6622 = scalar_lea.vmem %s1, 528
      %v6623 = vld [vmem:[%s6622] sm:$0xff]
      %v6624 = vld [vmem:[%s6622 + $0x8] sm:$0xff]
      %6625 = vrot.lane.b32.xlu0 %v5486, 111
      %v6626 = vpop.permute.xlu0 %6625
      %6627 = vrot.lane.b32.xlu0 %v5487, 111
      %v6628 = vpop.permute.xlu0 %6627
      %6629 = vrot.lane.b32.xlu0 %v5488, 111
      %v6630 = vpop.permute.xlu0 %6629
      %6631 = vrot.lane.b32.xlu0 %v5490, 111
      %v6632 = vpop.permute.xlu0 %6631
      %6633 = vrot.lane.b32.xlu0 %v5491, 111
      %v6634 = vpop.permute.xlu0 %6633
      %6635 = vrot.lane.b32.xlu0 %v5492, 111
      %v6636 = vpop.permute.xlu0 %6635
      %v6637 = vsel %vm1396, %v6626, %v6628
      %v6638 = vsel %vm1396, %v6628, %v6630
      %v6639 = vsel %vm1396, %v6632, %v6634
      %v6640 = vsel %vm1396, %v6634, %v6636
      %v6648 = vsel %vm286, %v6623, 0
      %v6651 = vsel %vm286, %v6624, 0
      %6653 = vmatprep.subr.mxu0 0.0
      %6654 = vmatpush1.msra.mxu0 0.0
      %6655 = vmatprep.subr.mxu0 0.0
      %6656 = vmatpush1.msra.mxu0 0.0
      %6657 = vmatprep.subr.mxu0 0.0
      %6658 = vmatpush1.msra.mxu0 0.0
      %6659 = vmatprep.subr.mxu0 0.0
      %6660 = vmatpush1.msra.mxu0 0.0
      %6661 = vmatprep.subr.mxu0 0.0
      %6662 = vmatpush1.msra.mxu0 0.0
      %6663 = vmatprep.subr.mxu0 0.0
      %6664 = vmatpush1.msra.mxu0 0.0
      %6665 = vmatprep.subr.mxu0 0.0
      %6666 = vmatpush1.msra.mxu0 0.0
      %6667 = vmatprep.subr.mxu0 0.0
      %6668 = vmatpush1.msra.mxu0 0.0
      %6669 = vmatprep.subr.mxu0 0.0
      %6670 = vmatpush1.msra.mxu0 0.0
      %6671 = vmatprep.subr.mxu0 0.0
      %6672 = vmatpush1.msra.mxu0 0.0
      %6673 = vmatprep.subr.mxu0 0.0
      %6674 = vmatpush1.msra.mxu0 0.0
      %6675 = vmatprep.subr.mxu0 0.0
      %6676 = vmatpush1.msra.mxu0 0.0
      %6677 = vmatprep.subr.mxu0 0.0
      %6678 = vmatpush1.msra.mxu0 0.0
      %6679 = vmatprep.subr.mxu0 0.0
      %6680 = vmatpush1.msra.mxu0 0.0
      %6681 = vmatprep.subr.mxu0 %v6640
      %6682 = vmatpush1.msra.mxu0 %v6639
      %6683 = vmatprep.subr.mxu0 %v6638
      %6684 = vmatpush1.msra.mxu0 %v6637
      %6685 = vmatprep.subr.mxu0 0.0
      %6686 = vmatpush2.msra.mxu0 0.0
      %6687 = vmatprep.subr.mxu0 0.0
      %6688 = vmatpush2.msra.mxu0 0.0
      %6689 = vmatprep.subr.mxu0 0.0
      %6690 = vmatpush2.msra.mxu0 0.0
      %6691 = vmatprep.subr.mxu0 0.0
      %6692 = vmatpush2.msra.mxu0 0.0
      %6693 = vmatprep.subr.mxu0 0.0
      %6694 = vmatpush2.msra.mxu0 0.0
      %6695 = vmatprep.subr.mxu0 0.0
      %6696 = vmatpush2.msra.mxu0 0.0
      %6697 = vmatprep.subr.mxu0 0.0
      %6698 = vmatpush2.msra.mxu0 0.0
      %6699 = vmatprep.subr.mxu0 0.0
      %6700 = vmatpush2.msra.mxu0 0.0
      %6701 = vmatprep.subr.mxu0 0.0
      %6702 = vmatpush2.msra.mxu0 0.0
      %6703 = vmatprep.subr.mxu0 0.0
      %6704 = vmatpush2.msra.mxu0 0.0
      %6705 = vmatprep.subr.mxu0 0.0
      %6706 = vmatpush2.msra.mxu0 0.0
      %6707 = vmatprep.subr.mxu0 0.0
      %6708 = vmatpush2.msra.mxu0 0.0
      %6709 = vmatprep.subr.mxu0 0.0
      %6710 = vmatpush2.msra.mxu0 0.0
      %6711 = vmatprep.subr.mxu0 0.0
      %6712 = vmatpush2.msra.mxu0 0.0
      %6713 = vmatprep.subr.mxu0 0.0
      %6714 = vmatpush2.msra.mxu0 0.0
      %6715 = vmatprep.subr.mxu0 0.0
      %6716 = vmatpush2.msra.mxu0 0.0
      %6717 = vmatprep.mubr.f32.mxu0 0.0
      %6718 = vmatmul.mubr.f32.gmra.mxu0 %v6648
      %v6719 = vpop.f32.mrf.mxu0
      %v6720 = vadd.f32 0.0, %v6719
      %v6721 = vpop.f32.mrf.mxu0
      %v6722 = vadd.f32 0.0, %v6721
      %6723 = vmatprep.mubr.f32.mxu0 0.0
      %6724 = vmatmul.mubr.f32.gmra.mxu0 %v6651
      %v6725 = vpop.f32.mrf.mxu0
      %v6726 = vadd.f32 0.0, %v6725
      %v6727 = vpop.f32.mrf.mxu0
      %v6728 = vadd.f32 0.0, %v6727
      %6729 = vdwg.mxu0
      %6730 = vmatprep.subr.mxu0 0.0
      %6731 = vmatpush1.msra.mxu0 0.0
      %6732 = vmatprep.subr.mxu0 0.0
      %6733 = vmatpush1.msra.mxu0 0.0
      %6734 = vmatprep.subr.mxu0 0.0
      %6735 = vmatpush1.msra.mxu0 0.0
      %6736 = vmatprep.subr.mxu0 0.0
      %6737 = vmatpush1.msra.mxu0 0.0
      %6738 = vmatprep.subr.mxu0 0.0
      %6739 = vmatpush1.msra.mxu0 0.0
      %6740 = vmatprep.subr.mxu0 0.0
      %6741 = vmatpush1.msra.mxu0 0.0
      %6742 = vmatprep.subr.mxu0 0.0
      %6743 = vmatpush1.msra.mxu0 0.0
      %6744 = vmatprep.subr.mxu0 0.0
      %6745 = vmatpush1.msra.mxu0 0.0
      %6746 = vmatprep.subr.mxu0 0.0
      %6747 = vmatpush1.msra.mxu0 0.0
      %6748 = vmatprep.subr.mxu0 0.0
      %6749 = vmatpush1.msra.mxu0 0.0
      %6750 = vmatprep.subr.mxu0 0.0
      %6751 = vmatpush1.msra.mxu0 0.0
      %6752 = vmatprep.subr.mxu0 0.0
      %6753 = vmatpush1.msra.mxu0 0.0
      %6754 = vmatprep.subr.mxu0 0.0
      %6755 = vmatpush1.msra.mxu0 0.0
      %6756 = vmatprep.subr.mxu0 0.0
      %6757 = vmatpush1.msra.mxu0 0.0
      %6758 = vmatprep.subr.mxu0 0.0
      %6759 = vmatpush1.msra.mxu0 %v6636
      %6760 = vmatprep.subr.mxu0 0.0
      %6761 = vmatpush1.msra.mxu0 %v6630
      %6762 = vmatprep.subr.mxu0 0.0
      %6763 = vmatpush2.msra.mxu0 0.0
      %6764 = vmatprep.subr.mxu0 0.0
      %6765 = vmatpush2.msra.mxu0 0.0
      %6766 = vmatprep.subr.mxu0 0.0
      %6767 = vmatpush2.msra.mxu0 0.0
      %6768 = vmatprep.subr.mxu0 0.0
      %6769 = vmatpush2.msra.mxu0 0.0
      %6770 = vmatprep.subr.mxu0 0.0
      %6771 = vmatpush2.msra.mxu0 0.0
      %6772 = vmatprep.subr.mxu0 0.0
      %6773 = vmatpush2.msra.mxu0 0.0
      %6774 = vmatprep.subr.mxu0 0.0
      %6775 = vmatpush2.msra.mxu0 0.0
      %6776 = vmatprep.subr.mxu0 0.0
      %6777 = vmatpush2.msra.mxu0 0.0
      %6778 = vmatprep.subr.mxu0 0.0
      %6779 = vmatpush2.msra.mxu0 0.0
      %6780 = vmatprep.subr.mxu0 0.0
      %6781 = vmatpush2.msra.mxu0 0.0
      %6782 = vmatprep.subr.mxu0 0.0
      %6783 = vmatpush2.msra.mxu0 0.0
      %6784 = vmatprep.subr.mxu0 0.0
      %6785 = vmatpush2.msra.mxu0 0.0
      %6786 = vmatprep.subr.mxu0 0.0
      %6787 = vmatpush2.msra.mxu0 0.0
      %6788 = vmatprep.subr.mxu0 0.0
      %6789 = vmatpush2.msra.mxu0 0.0
      %6790 = vmatprep.subr.mxu0 0.0
      %6791 = vmatpush2.msra.mxu0 0.0
      %6792 = vmatprep.subr.mxu0 0.0
      %6793 = vmatpush2.msra.mxu0 0.0
      %6794 = vmatprep.mubr.f32.mxu0 0.0
      %6795 = vmatmul.mubr.f32.gmra.mxu0 %v6648
      %v6796 = vpop.f32.mrf.mxu0
      %v6797 = vadd.f32 0.0, %v6796
      %v6798 = vpop.f32.mrf.mxu0
      %6799 = vmatprep.mubr.f32.mxu0 0.0
      %6800 = vmatmul.mubr.f32.gmra.mxu0 %v6651
      %v6801 = vpop.f32.mrf.mxu0
      %v6802 = vadd.f32 0.0, %v6801
      %v6803 = vpop.f32.mrf.mxu0
      %6804 = vdwg.mxu0
      %v6805 = vadd.f32 %v6616, %v6720
      %v6806 = vadd.f32 %v6617, %v6722
      %v6807 = vadd.f32 %v6618, %v6797
      %v6808 = vadd.f32 %v6619, %v6726
      %v6809 = vadd.f32 %v6620, %v6728
      %v6810 = vadd.f32 %v6621, %v6802
      %s6811 = scalar_lea.vmem %s1, 544
      %v6812 = vld [vmem:[%s6811] sm:$0xff]
      %v6813 = vld [vmem:[%s6811 + $0x8] sm:$0xff]
      %6814 = vrot.lane.b32.xlu0 %v5486, 110
      %v6815 = vpop.permute.xlu0 %6814
      %6816 = vrot.lane.b32.xlu0 %v5487, 110
      %v6817 = vpop.permute.xlu0 %6816
      %6818 = vrot.lane.b32.xlu0 %v5488, 110
      %v6819 = vpop.permute.xlu0 %6818
      %6820 = vrot.lane.b32.xlu0 %v5490, 110
      %v6821 = vpop.permute.xlu0 %6820
      %6822 = vrot.lane.b32.xlu0 %v5491, 110
      %v6823 = vpop.permute.xlu0 %6822
      %6824 = vrot.lane.b32.xlu0 %v5492, 110
      %v6825 = vpop.permute.xlu0 %6824
      %v6826 = vsel %vm1586, %v6815, %v6817
      %v6827 = vsel %vm1586, %v6817, %v6819
      %v6828 = vsel %vm1586, %v6821, %v6823
      %v6829 = vsel %vm1586, %v6823, %v6825
      %v6837 = vsel %vm286, %v6812, 0
      %v6840 = vsel %vm286, %v6813, 0
      %6842 = vmatprep.subr.mxu0 0.0
      %6843 = vmatpush1.msra.mxu0 0.0
      %6844 = vmatprep.subr.mxu0 0.0
      %6845 = vmatpush1.msra.mxu0 0.0
      %6846 = vmatprep.subr.mxu0 0.0
      %6847 = vmatpush1.msra.mxu0 0.0
      %6848 = vmatprep.subr.mxu0 0.0
      %6849 = vmatpush1.msra.mxu0 0.0
      %6850 = vmatprep.subr.mxu0 0.0
      %6851 = vmatpush1.msra.mxu0 0.0
      %6852 = vmatprep.subr.mxu0 0.0
      %6853 = vmatpush1.msra.mxu0 0.0
      %6854 = vmatprep.subr.mxu0 0.0
      %6855 = vmatpush1.msra.mxu0 0.0
      %6856 = vmatprep.subr.mxu0 0.0
      %6857 = vmatpush1.msra.mxu0 0.0
      %6858 = vmatprep.subr.mxu0 0.0
      %6859 = vmatpush1.msra.mxu0 0.0
      %6860 = vmatprep.subr.mxu0 0.0
      %6861 = vmatpush1.msra.mxu0 0.0
      %6862 = vmatprep.subr.mxu0 0.0
      %6863 = vmatpush1.msra.mxu0 0.0
      %6864 = vmatprep.subr.mxu0 0.0
      %6865 = vmatpush1.msra.mxu0 0.0
      %6866 = vmatprep.subr.mxu0 0.0
      %6867 = vmatpush1.msra.mxu0 0.0
      %6868 = vmatprep.subr.mxu0 0.0
      %6869 = vmatpush1.msra.mxu0 0.0
      %6870 = vmatprep.subr.mxu0 %v6829
      %6871 = vmatpush1.msra.mxu0 %v6828
      %6872 = vmatprep.subr.mxu0 %v6827
      %6873 = vmatpush1.msra.mxu0 %v6826
      %6874 = vmatprep.subr.mxu0 0.0
      %6875 = vmatpush2.msra.mxu0 0.0
      %6876 = vmatprep.subr.mxu0 0.0
      %6877 = vmatpush2.msra.mxu0 0.0
      %6878 = vmatprep.subr.mxu0 0.0
      %6879 = vmatpush2.msra.mxu0 0.0
      %6880 = vmatprep.subr.mxu0 0.0
      %6881 = vmatpush2.msra.mxu0 0.0
      %6882 = vmatprep.subr.mxu0 0.0
      %6883 = vmatpush2.msra.mxu0 0.0
      %6884 = vmatprep.subr.mxu0 0.0
      %6885 = vmatpush2.msra.mxu0 0.0
      %6886 = vmatprep.subr.mxu0 0.0
      %6887 = vmatpush2.msra.mxu0 0.0
      %6888 = vmatprep.subr.mxu0 0.0
      %6889 = vmatpush2.msra.mxu0 0.0
      %6890 = vmatprep.subr.mxu0 0.0
      %6891 = vmatpush2.msra.mxu0 0.0
      %6892 = vmatprep.subr.mxu0 0.0
      %6893 = vmatpush2.msra.mxu0 0.0
      %6894 = vmatprep.subr.mxu0 0.0
      %6895 = vmatpush2.msra.mxu0 0.0
      %6896 = vmatprep.subr.mxu0 0.0
      %6897 = vmatpush2.msra.mxu0 0.0
      %6898 = vmatprep.subr.mxu0 0.0
      %6899 = vmatpush2.msra.mxu0 0.0
      %6900 = vmatprep.subr.mxu0 0.0
      %6901 = vmatpush2.msra.mxu0 0.0
      %6902 = vmatprep.subr.mxu0 0.0
      %6903 = vmatpush2.msra.mxu0 0.0
      %6904 = vmatprep.subr.mxu0 0.0
      %6905 = vmatpush2.msra.mxu0 0.0
      %6906 = vmatprep.mubr.f32.mxu0 0.0
      %6907 = vmatmul.mubr.f32.gmra.mxu0 %v6837
      %v6908 = vpop.f32.mrf.mxu0
      %v6909 = vadd.f32 0.0, %v6908
      %v6910 = vpop.f32.mrf.mxu0
      %v6911 = vadd.f32 0.0, %v6910
      %6912 = vmatprep.mubr.f32.mxu0 0.0
      %6913 = vmatmul.mubr.f32.gmra.mxu0 %v6840
      %v6914 = vpop.f32.mrf.mxu0
      %v6915 = vadd.f32 0.0, %v6914
      %v6916 = vpop.f32.mrf.mxu0
      %v6917 = vadd.f32 0.0, %v6916
      %6918 = vdwg.mxu0
      %6919 = vmatprep.subr.mxu0 0.0
      %6920 = vmatpush1.msra.mxu0 0.0
      %6921 = vmatprep.subr.mxu0 0.0
      %6922 = vmatpush1.msra.mxu0 0.0
      %6923 = vmatprep.subr.mxu0 0.0
      %6924 = vmatpush1.msra.mxu0 0.0
      %6925 = vmatprep.subr.mxu0 0.0
      %6926 = vmatpush1.msra.mxu0 0.0
      %6927 = vmatprep.subr.mxu0 0.0
      %6928 = vmatpush1.msra.mxu0 0.0
      %6929 = vmatprep.subr.mxu0 0.0
      %6930 = vmatpush1.msra.mxu0 0.0
      %6931 = vmatprep.subr.mxu0 0.0
      %6932 = vmatpush1.msra.mxu0 0.0
      %6933 = vmatprep.subr.mxu0 0.0
      %6934 = vmatpush1.msra.mxu0 0.0
      %6935 = vmatprep.subr.mxu0 0.0
      %6936 = vmatpush1.msra.mxu0 0.0
      %6937 = vmatprep.subr.mxu0 0.0
      %6938 = vmatpush1.msra.mxu0 0.0
      %6939 = vmatprep.subr.mxu0 0.0
      %6940 = vmatpush1.msra.mxu0 0.0
      %6941 = vmatprep.subr.mxu0 0.0
      %6942 = vmatpush1.msra.mxu0 0.0
      %6943 = vmatprep.subr.mxu0 0.0
      %6944 = vmatpush1.msra.mxu0 0.0
      %6945 = vmatprep.subr.mxu0 0.0
      %6946 = vmatpush1.msra.mxu0 0.0
      %6947 = vmatprep.subr.mxu0 0.0
      %6948 = vmatpush1.msra.mxu0 %v6825
      %6949 = vmatprep.subr.mxu0 0.0
      %6950 = vmatpush1.msra.mxu0 %v6819
      %6951 = vmatprep.subr.mxu0 0.0
      %6952 = vmatpush2.msra.mxu0 0.0
      %6953 = vmatprep.subr.mxu0 0.0
      %6954 = vmatpush2.msra.mxu0 0.0
      %6955 = vmatprep.subr.mxu0 0.0
      %6956 = vmatpush2.msra.mxu0 0.0
      %6957 = vmatprep.subr.mxu0 0.0
      %6958 = vmatpush2.msra.mxu0 0.0
      %6959 = vmatprep.subr.mxu0 0.0
      %6960 = vmatpush2.msra.mxu0 0.0
      %6961 = vmatprep.subr.mxu0 0.0
      %6962 = vmatpush2.msra.mxu0 0.0
      %6963 = vmatprep.subr.mxu0 0.0
      %6964 = vmatpush2.msra.mxu0 0.0
      %6965 = vmatprep.subr.mxu0 0.0
      %6966 = vmatpush2.msra.mxu0 0.0
      %6967 = vmatprep.subr.mxu0 0.0
      %6968 = vmatpush2.msra.mxu0 0.0
      %6969 = vmatprep.subr.mxu0 0.0
      %6970 = vmatpush2.msra.mxu0 0.0
      %6971 = vmatprep.subr.mxu0 0.0
      %6972 = vmatpush2.msra.mxu0 0.0
      %6973 = vmatprep.subr.mxu0 0.0
      %6974 = vmatpush2.msra.mxu0 0.0
      %6975 = vmatprep.subr.mxu0 0.0
      %6976 = vmatpush2.msra.mxu0 0.0
      %6977 = vmatprep.subr.mxu0 0.0
      %6978 = vmatpush2.msra.mxu0 0.0
      %6979 = vmatprep.subr.mxu0 0.0
      %6980 = vmatpush2.msra.mxu0 0.0
      %6981 = vmatprep.subr.mxu0 0.0
      %6982 = vmatpush2.msra.mxu0 0.0
      %6983 = vmatprep.mubr.f32.mxu0 0.0
      %6984 = vmatmul.mubr.f32.gmra.mxu0 %v6837
      %v6985 = vpop.f32.mrf.mxu0
      %v6986 = vadd.f32 0.0, %v6985
      %v6987 = vpop.f32.mrf.mxu0
      %6988 = vmatprep.mubr.f32.mxu0 0.0
      %6989 = vmatmul.mubr.f32.gmra.mxu0 %v6840
      %v6990 = vpop.f32.mrf.mxu0
      %v6991 = vadd.f32 0.0, %v6990
      %v6992 = vpop.f32.mrf.mxu0
      %6993 = vdwg.mxu0
      %v6994 = vadd.f32 %v6805, %v6909
      %v6995 = vadd.f32 %v6806, %v6911
      %v6996 = vadd.f32 %v6807, %v6986
      %v6997 = vadd.f32 %v6808, %v6915
      %v6998 = vadd.f32 %v6809, %v6917
      %v6999 = vadd.f32 %v6810, %v6991
      %s7000 = scalar_lea.vmem %s1, 560
      %v7001 = vld [vmem:[%s7000] sm:$0xff]
      %v7002 = vld [vmem:[%s7000 + $0x8] sm:$0xff]
      %7003 = vrot.lane.b32.xlu0 %v5486, 109
      %v7004 = vpop.permute.xlu0 %7003
      %7005 = vrot.lane.b32.xlu0 %v5487, 109
      %v7006 = vpop.permute.xlu0 %7005
      %7007 = vrot.lane.b32.xlu0 %v5488, 109
      %v7008 = vpop.permute.xlu0 %7007
      %7009 = vrot.lane.b32.xlu0 %v5490, 109
      %v7010 = vpop.permute.xlu0 %7009
      %7011 = vrot.lane.b32.xlu0 %v5491, 109
      %v7012 = vpop.permute.xlu0 %7011
      %7013 = vrot.lane.b32.xlu0 %v5492, 109
      %v7014 = vpop.permute.xlu0 %7013
      %v7015 = vsel %vm1776, %v7004, %v7006
      %v7016 = vsel %vm1776, %v7006, %v7008
      %v7017 = vsel %vm1776, %v7010, %v7012
      %v7018 = vsel %vm1776, %v7012, %v7014
      %v7026 = vsel %vm286, %v7001, 0
      %v7029 = vsel %vm286, %v7002, 0
      %7031 = vmatprep.subr.mxu0 0.0
      %7032 = vmatpush1.msra.mxu0 0.0
      %7033 = vmatprep.subr.mxu0 0.0
      %7034 = vmatpush1.msra.mxu0 0.0
      %7035 = vmatprep.subr.mxu0 0.0
      %7036 = vmatpush1.msra.mxu0 0.0
      %7037 = vmatprep.subr.mxu0 0.0
      %7038 = vmatpush1.msra.mxu0 0.0
      %7039 = vmatprep.subr.mxu0 0.0
      %7040 = vmatpush1.msra.mxu0 0.0
      %7041 = vmatprep.subr.mxu0 0.0
      %7042 = vmatpush1.msra.mxu0 0.0
      %7043 = vmatprep.subr.mxu0 0.0
      %7044 = vmatpush1.msra.mxu0 0.0
      %7045 = vmatprep.subr.mxu0 0.0
      %7046 = vmatpush1.msra.mxu0 0.0
      %7047 = vmatprep.subr.mxu0 0.0
      %7048 = vmatpush1.msra.mxu0 0.0
      %7049 = vmatprep.subr.mxu0 0.0
      %7050 = vmatpush1.msra.mxu0 0.0
      %7051 = vmatprep.subr.mxu0 0.0
      %7052 = vmatpush1.msra.mxu0 0.0
      %7053 = vmatprep.subr.mxu0 0.0
      %7054 = vmatpush1.msra.mxu0 0.0
      %7055 = vmatprep.subr.mxu0 0.0
      %7056 = vmatpush1.msra.mxu0 0.0
      %7057 = vmatprep.subr.mxu0 0.0
      %7058 = vmatpush1.msra.mxu0 0.0
      %7059 = vmatprep.subr.mxu0 %v7018
      %7060 = vmatpush1.msra.mxu0 %v7017
      %7061 = vmatprep.subr.mxu0 %v7016
      %7062 = vmatpush1.msra.mxu0 %v7015
      %7063 = vmatprep.subr.mxu0 0.0
      %7064 = vmatpush2.msra.mxu0 0.0
      %7065 = vmatprep.subr.mxu0 0.0
      %7066 = vmatpush2.msra.mxu0 0.0
      %7067 = vmatprep.subr.mxu0 0.0
      %7068 = vmatpush2.msra.mxu0 0.0
      %7069 = vmatprep.subr.mxu0 0.0
      %7070 = vmatpush2.msra.mxu0 0.0
      %7071 = vmatprep.subr.mxu0 0.0
      %7072 = vmatpush2.msra.mxu0 0.0
      %7073 = vmatprep.subr.mxu0 0.0
      %7074 = vmatpush2.msra.mxu0 0.0
      %7075 = vmatprep.subr.mxu0 0.0
      %7076 = vmatpush2.msra.mxu0 0.0
      %7077 = vmatprep.subr.mxu0 0.0
      %7078 = vmatpush2.msra.mxu0 0.0
      %7079 = vmatprep.subr.mxu0 0.0
      %7080 = vmatpush2.msra.mxu0 0.0
      %7081 = vmatprep.subr.mxu0 0.0
      %7082 = vmatpush2.msra.mxu0 0.0
      %7083 = vmatprep.subr.mxu0 0.0
      %7084 = vmatpush2.msra.mxu0 0.0
      %7085 = vmatprep.subr.mxu0 0.0
      %7086 = vmatpush2.msra.mxu0 0.0
      %7087 = vmatprep.subr.mxu0 0.0
      %7088 = vmatpush2.msra.mxu0 0.0
      %7089 = vmatprep.subr.mxu0 0.0
      %7090 = vmatpush2.msra.mxu0 0.0
      %7091 = vmatprep.subr.mxu0 0.0
      %7092 = vmatpush2.msra.mxu0 0.0
      %7093 = vmatprep.subr.mxu0 0.0
      %7094 = vmatpush2.msra.mxu0 0.0
      %7095 = vmatprep.mubr.f32.mxu0 0.0
      %7096 = vmatmul.mubr.f32.gmra.mxu0 %v7026
      %v7097 = vpop.f32.mrf.mxu0
      %v7098 = vadd.f32 0.0, %v7097
      %v7099 = vpop.f32.mrf.mxu0
      %v7100 = vadd.f32 0.0, %v7099
      %7101 = vmatprep.mubr.f32.mxu0 0.0
      %7102 = vmatmul.mubr.f32.gmra.mxu0 %v7029
      %v7103 = vpop.f32.mrf.mxu0
      %v7104 = vadd.f32 0.0, %v7103
      %v7105 = vpop.f32.mrf.mxu0
      %v7106 = vadd.f32 0.0, %v7105
      %7107 = vdwg.mxu0
      %7108 = vmatprep.subr.mxu0 0.0
      %7109 = vmatpush1.msra.mxu0 0.0
      %7110 = vmatprep.subr.mxu0 0.0
      %7111 = vmatpush1.msra.mxu0 0.0
      %7112 = vmatprep.subr.mxu0 0.0
      %7113 = vmatpush1.msra.mxu0 0.0
      %7114 = vmatprep.subr.mxu0 0.0
      %7115 = vmatpush1.msra.mxu0 0.0
      %7116 = vmatprep.subr.mxu0 0.0
      %7117 = vmatpush1.msra.mxu0 0.0
      %7118 = vmatprep.subr.mxu0 0.0
      %7119 = vmatpush1.msra.mxu0 0.0
      %7120 = vmatprep.subr.mxu0 0.0
      %7121 = vmatpush1.msra.mxu0 0.0
      %7122 = vmatprep.subr.mxu0 0.0
      %7123 = vmatpush1.msra.mxu0 0.0
      %7124 = vmatprep.subr.mxu0 0.0
      %7125 = vmatpush1.msra.mxu0 0.0
      %7126 = vmatprep.subr.mxu0 0.0
      %7127 = vmatpush1.msra.mxu0 0.0
      %7128 = vmatprep.subr.mxu0 0.0
      %7129 = vmatpush1.msra.mxu0 0.0
      %7130 = vmatprep.subr.mxu0 0.0
      %7131 = vmatpush1.msra.mxu0 0.0
      %7132 = vmatprep.subr.mxu0 0.0
      %7133 = vmatpush1.msra.mxu0 0.0
      %7134 = vmatprep.subr.mxu0 0.0
      %7135 = vmatpush1.msra.mxu0 0.0
      %7136 = vmatprep.subr.mxu0 0.0
      %7137 = vmatpush1.msra.mxu0 %v7014
      %7138 = vmatprep.subr.mxu0 0.0
      %7139 = vmatpush1.msra.mxu0 %v7008
      %7140 = vmatprep.subr.mxu0 0.0
      %7141 = vmatpush2.msra.mxu0 0.0
      %7142 = vmatprep.subr.mxu0 0.0
      %7143 = vmatpush2.msra.mxu0 0.0
      %7144 = vmatprep.subr.mxu0 0.0
      %7145 = vmatpush2.msra.mxu0 0.0
      %7146 = vmatprep.subr.mxu0 0.0
      %7147 = vmatpush2.msra.mxu0 0.0
      %7148 = vmatprep.subr.mxu0 0.0
      %7149 = vmatpush2.msra.mxu0 0.0
      %7150 = vmatprep.subr.mxu0 0.0
      %7151 = vmatpush2.msra.mxu0 0.0
      %7152 = vmatprep.subr.mxu0 0.0
      %7153 = vmatpush2.msra.mxu0 0.0
      %7154 = vmatprep.subr.mxu0 0.0
      %7155 = vmatpush2.msra.mxu0 0.0
      %7156 = vmatprep.subr.mxu0 0.0
      %7157 = vmatpush2.msra.mxu0 0.0
      %7158 = vmatprep.subr.mxu0 0.0
      %7159 = vmatpush2.msra.mxu0 0.0
      %7160 = vmatprep.subr.mxu0 0.0
      %7161 = vmatpush2.msra.mxu0 0.0
      %7162 = vmatprep.subr.mxu0 0.0
      %7163 = vmatpush2.msra.mxu0 0.0
      %7164 = vmatprep.subr.mxu0 0.0
      %7165 = vmatpush2.msra.mxu0 0.0
      %7166 = vmatprep.subr.mxu0 0.0
      %7167 = vmatpush2.msra.mxu0 0.0
      %7168 = vmatprep.subr.mxu0 0.0
      %7169 = vmatpush2.msra.mxu0 0.0
      %7170 = vmatprep.subr.mxu0 0.0
      %7171 = vmatpush2.msra.mxu0 0.0
      %7172 = vmatprep.mubr.f32.mxu0 0.0
      %7173 = vmatmul.mubr.f32.gmra.mxu0 %v7026
      %v7174 = vpop.f32.mrf.mxu0
      %v7175 = vadd.f32 0.0, %v7174
      %v7176 = vpop.f32.mrf.mxu0
      %7177 = vmatprep.mubr.f32.mxu0 0.0
      %7178 = vmatmul.mubr.f32.gmra.mxu0 %v7029
      %v7179 = vpop.f32.mrf.mxu0
      %v7180 = vadd.f32 0.0, %v7179
      %v7181 = vpop.f32.mrf.mxu0
      %7182 = vdwg.mxu0
      %v7183 = vadd.f32 %v6994, %v7098
      %v7184 = vadd.f32 %v6995, %v7100
      %v7185 = vadd.f32 %v6996, %v7175
      %v7186 = vadd.f32 %v6997, %v7104
      %v7187 = vadd.f32 %v6998, %v7106
      %v7188 = vadd.f32 %v6999, %v7180
      %s7189 = scalar_lea.vmem %s2, 48
      %v7190 = vld [vmem:[%s7189] sm:$0xff]
      %v7191 = vld [vmem:[%s7189 + $0x8] sm:$0xff]
      %7193 = vset.pattern.permute.xlu0 0
      %7194 = vperm.xlu0 %7193, %v7190
      %v7195 = vpop.permute.xlu0 %7194
      %7198 = vset.pattern.permute.xlu0 0
      %7199 = vperm.xlu0 %7198, %v7191
      %v7200 = vpop.permute.xlu0 %7199
      %v7202 = vadd.f32 %v7183, %v7195
      %v7203 = vadd.f32 %v7184, %v7195
      %v7204 = vadd.f32 %v7185, %v7195
      %v7205 = vadd.f32 %v7186, %v7200
      %v7206 = vadd.f32 %v7187, %v7200
      %v7207 = vadd.f32 %v7188, %v7200
      %v7208 = vld [vmem:[#allocation2 + $0x8] sm:$0xff]
      %v7209 = vld [vmem:[#allocation2 + $0x10] sm:$0xff]
      %v7210 = vld [vmem:[#allocation2 + $0x18] sm:$0xff]
      %v7211 = vld [vmem:[#allocation2 + $0x28] sm:$0xff]
      %v7212 = vld [vmem:[#allocation2 + $0x30] sm:$0xff]
      %v7213 = vld [vmem:[#allocation2 + $0x38] sm:$0xff]
      %v7214 = vadd.f32 %v7202, %v7208
      %v7215 = vadd.f32 %v7203, %v7209
      %v7216 = vadd.f32 %v7204, %v7210
      %v7217 = vadd.f32 %v7205, %v7211
      %v7218 = vadd.f32 %v7206, %v7212
      %v7219 = vadd.f32 %v7207, %v7213
      %v7220 = vmul.f32 %v7214, %v203
      %v7221 = vmul.f32 %v7215, %v207
      %v7222 = vmul.f32 %v7216, %v211
      %v7223 = vmul.f32 %v7217, %v203
      %v7224 = vmul.f32 %v7218, %v207
      %v7225 = vmul.f32 %v7219, %v211
      %7226 = vst [vmem:[#allocation2 + $0x8] sm:$0xff] %v7220
      %7227 = vst [vmem:[#allocation2 + $0x10] sm:$0xff] %v7221
      %7228 = vst.msk [vmem:[#allocation2 + $0x18] sm:$0xff] %vm1983, %v7222
      %7229 = vst [vmem:[#allocation2 + $0x28] sm:$0xff] %v7223
      %7230 = vst [vmem:[#allocation2 + $0x30] sm:$0xff] %v7224
      %7231 = vst.msk [vmem:[#allocation2 + $0x38] sm:$0xff] %vm1983, %v7225
      %s7232 = scalar_lea.vmem %s1, 576
      %v7233 = vld [vmem:[%s7232] sm:$0xff]
      %v7234 = vld [vmem:[%s7232 + $0x8] sm:$0xff]
      %v7235 = vld [vmem:[#allocation2] sm:$0xff]
      %v7236 = vld [vmem:[#allocation2 + $0x8] sm:$0xff]
      %v7237 = vld [vmem:[#allocation2 + $0x10] sm:$0xff]
      %v7238 = vld [vmem:[#allocation2 + $0x18] sm:$0xff]
      %v7239 = vld [vmem:[#allocation2 + $0x20] sm:$0xff]
      %v7240 = vld [vmem:[#allocation2 + $0x28] sm:$0xff]
      %v7241 = vld [vmem:[#allocation2 + $0x30] sm:$0xff]
      %v7242 = vld [vmem:[#allocation2 + $0x38] sm:$0xff]
      %s7243 = scalar_lea.vmem %s1, 592
      %v7244 = vld [vmem:[%s7243] sm:$0xff]
      %v7245 = vld [vmem:[%s7243 + $0x8] sm:$0xff]
      %7254 = vrot.lane.b32.xlu0 %v7235, 18
      %v7255 = vpop.permute.xlu0 %7254
      %7256 = vrot.lane.b32.xlu0 %v7236, 18
      %v7257 = vpop.permute.xlu0 %7256
      %7258 = vrot.lane.b32.xlu0 %v7237, 18
      %v7259 = vpop.permute.xlu0 %7258
      %7260 = vrot.lane.b32.xlu0 %v7238, 18
      %v7261 = vpop.permute.xlu0 %7260
      %7262 = vrot.lane.b32.xlu0 %v7239, 18
      %v7263 = vpop.permute.xlu0 %7262
      %7264 = vrot.lane.b32.xlu0 %v7240, 18
      %v7265 = vpop.permute.xlu0 %7264
      %7266 = vrot.lane.b32.xlu0 %v7241, 18
      %v7267 = vpop.permute.xlu0 %7266
      %7268 = vrot.lane.b32.xlu0 %v7242, 18
      %v7269 = vpop.permute.xlu0 %7268
      %v7270 = vsel %vm273, %v7255, %v7257
      %v7271 = vsel %vm273, %v7257, %v7259
      %v7272 = vsel %vm273, %v7259, %v7261
      %v7273 = vsel %vm273, %v7263, %v7265
      %v7274 = vsel %vm273, %v7265, %v7267
      %v7275 = vsel %vm273, %v7267, %v7269
      %v7283 = vsel %vm286, %v7244, 0
      %v7286 = vsel %vm286, %v7245, 0
      %7288 = vmatprep.subr.mxu0 0.0
      %7289 = vmatpush1.msra.mxu0 0.0
      %7290 = vmatprep.subr.mxu0 0.0
      %7291 = vmatpush1.msra.mxu0 0.0
      %7292 = vmatprep.subr.mxu0 0.0
      %7293 = vmatpush1.msra.mxu0 0.0
      %7294 = vmatprep.subr.mxu0 0.0
      %7295 = vmatpush1.msra.mxu0 0.0
      %7296 = vmatprep.subr.mxu0 0.0
      %7297 = vmatpush1.msra.mxu0 0.0
      %7298 = vmatprep.subr.mxu0 0.0
      %7299 = vmatpush1.msra.mxu0 0.0
      %7300 = vmatprep.subr.mxu0 0.0
      %7301 = vmatpush1.msra.mxu0 0.0
      %7302 = vmatprep.subr.mxu0 0.0
      %7303 = vmatpush1.msra.mxu0 0.0
      %7304 = vmatprep.subr.mxu0 0.0
      %7305 = vmatpush1.msra.mxu0 0.0
      %7306 = vmatprep.subr.mxu0 0.0
      %7307 = vmatpush1.msra.mxu0 0.0
      %7308 = vmatprep.subr.mxu0 0.0
      %7309 = vmatpush1.msra.mxu0 0.0
      %7310 = vmatprep.subr.mxu0 0.0
      %7311 = vmatpush1.msra.mxu0 0.0
      %7312 = vmatprep.subr.mxu0 0.0
      %7313 = vmatpush1.msra.mxu0 0.0
      %7314 = vmatprep.subr.mxu0 0.0
      %7315 = vmatpush1.msra.mxu0 0.0
      %7316 = vmatprep.subr.mxu0 %v7274
      %7317 = vmatpush1.msra.mxu0 %v7273
      %7318 = vmatprep.subr.mxu0 %v7271
      %7319 = vmatpush1.msra.mxu0 %v7270
      %7320 = vmatprep.subr.mxu0 0.0
      %7321 = vmatpush2.msra.mxu0 0.0
      %7322 = vmatprep.subr.mxu0 0.0
      %7323 = vmatpush2.msra.mxu0 0.0
      %7324 = vmatprep.subr.mxu0 0.0
      %7325 = vmatpush2.msra.mxu0 0.0
      %7326 = vmatprep.subr.mxu0 0.0
      %7327 = vmatpush2.msra.mxu0 0.0
      %7328 = vmatprep.subr.mxu0 0.0
      %7329 = vmatpush2.msra.mxu0 0.0
      %7330 = vmatprep.subr.mxu0 0.0
      %7331 = vmatpush2.msra.mxu0 0.0
      %7332 = vmatprep.subr.mxu0 0.0
      %7333 = vmatpush2.msra.mxu0 0.0
      %7334 = vmatprep.subr.mxu0 0.0
      %7335 = vmatpush2.msra.mxu0 0.0
      %7336 = vmatprep.subr.mxu0 0.0
      %7337 = vmatpush2.msra.mxu0 0.0
      %7338 = vmatprep.subr.mxu0 0.0
      %7339 = vmatpush2.msra.mxu0 0.0
      %7340 = vmatprep.subr.mxu0 0.0
      %7341 = vmatpush2.msra.mxu0 0.0
      %7342 = vmatprep.subr.mxu0 0.0
      %7343 = vmatpush2.msra.mxu0 0.0
      %7344 = vmatprep.subr.mxu0 0.0
      %7345 = vmatpush2.msra.mxu0 0.0
      %7346 = vmatprep.subr.mxu0 0.0
      %7347 = vmatpush2.msra.mxu0 0.0
      %7348 = vmatprep.subr.mxu0 0.0
      %7349 = vmatpush2.msra.mxu0 0.0
      %7350 = vmatprep.subr.mxu0 0.0
      %7351 = vmatpush2.msra.mxu0 0.0
      %7352 = vmatprep.mubr.f32.mxu0 0.0
      %7353 = vmatmul.mubr.f32.gmra.mxu0 %v7283
      %v7354 = vpop.f32.mrf.mxu0
      %v7355 = vadd.f32 0.0, %v7354
      %v7356 = vpop.f32.mrf.mxu0
      %v7357 = vadd.f32 0.0, %v7356
      %7358 = vmatprep.mubr.f32.mxu0 0.0
      %7359 = vmatmul.mubr.f32.gmra.mxu0 %v7286
      %v7360 = vpop.f32.mrf.mxu0
      %v7361 = vadd.f32 0.0, %v7360
      %v7362 = vpop.f32.mrf.mxu0
      %v7363 = vadd.f32 0.0, %v7362
      %7364 = vdwg.mxu0
      %7365 = vmatprep.subr.mxu0 0.0
      %7366 = vmatpush1.msra.mxu0 0.0
      %7367 = vmatprep.subr.mxu0 0.0
      %7368 = vmatpush1.msra.mxu0 0.0
      %7369 = vmatprep.subr.mxu0 0.0
      %7370 = vmatpush1.msra.mxu0 0.0
      %7371 = vmatprep.subr.mxu0 0.0
      %7372 = vmatpush1.msra.mxu0 0.0
      %7373 = vmatprep.subr.mxu0 0.0
      %7374 = vmatpush1.msra.mxu0 0.0
      %7375 = vmatprep.subr.mxu0 0.0
      %7376 = vmatpush1.msra.mxu0 0.0
      %7377 = vmatprep.subr.mxu0 0.0
      %7378 = vmatpush1.msra.mxu0 0.0
      %7379 = vmatprep.subr.mxu0 0.0
      %7380 = vmatpush1.msra.mxu0 0.0
      %7381 = vmatprep.subr.mxu0 0.0
      %7382 = vmatpush1.msra.mxu0 0.0
      %7383 = vmatprep.subr.mxu0 0.0
      %7384 = vmatpush1.msra.mxu0 0.0
      %7385 = vmatprep.subr.mxu0 0.0
      %7386 = vmatpush1.msra.mxu0 0.0
      %7387 = vmatprep.subr.mxu0 0.0
      %7388 = vmatpush1.msra.mxu0 0.0
      %7389 = vmatprep.subr.mxu0 0.0
      %7390 = vmatpush1.msra.mxu0 0.0
      %7391 = vmatprep.subr.mxu0 0.0
      %7392 = vmatpush1.msra.mxu0 0.0
      %7393 = vmatprep.subr.mxu0 0.0
      %7394 = vmatpush1.msra.mxu0 %v7275
      %7395 = vmatprep.subr.mxu0 0.0
      %7396 = vmatpush1.msra.mxu0 %v7272
      %7397 = vmatprep.subr.mxu0 0.0
      %7398 = vmatpush2.msra.mxu0 0.0
      %7399 = vmatprep.subr.mxu0 0.0
      %7400 = vmatpush2.msra.mxu0 0.0
      %7401 = vmatprep.subr.mxu0 0.0
      %7402 = vmatpush2.msra.mxu0 0.0
      %7403 = vmatprep.subr.mxu0 0.0
      %7404 = vmatpush2.msra.mxu0 0.0
      %7405 = vmatprep.subr.mxu0 0.0
      %7406 = vmatpush2.msra.mxu0 0.0
      %7407 = vmatprep.subr.mxu0 0.0
      %7408 = vmatpush2.msra.mxu0 0.0
      %7409 = vmatprep.subr.mxu0 0.0
      %7410 = vmatpush2.msra.mxu0 0.0
      %7411 = vmatprep.subr.mxu0 0.0
      %7412 = vmatpush2.msra.mxu0 0.0
      %7413 = vmatprep.subr.mxu0 0.0
      %7414 = vmatpush2.msra.mxu0 0.0
      %7415 = vmatprep.subr.mxu0 0.0
      %7416 = vmatpush2.msra.mxu0 0.0
      %7417 = vmatprep.subr.mxu0 0.0
      %7418 = vmatpush2.msra.mxu0 0.0
      %7419 = vmatprep.subr.mxu0 0.0
      %7420 = vmatpush2.msra.mxu0 0.0
      %7421 = vmatprep.subr.mxu0 0.0
      %7422 = vmatpush2.msra.mxu0 0.0
      %7423 = vmatprep.subr.mxu0 0.0
      %7424 = vmatpush2.msra.mxu0 0.0
      %7425 = vmatprep.subr.mxu0 0.0
      %7426 = vmatpush2.msra.mxu0 0.0
      %7427 = vmatprep.subr.mxu0 0.0
      %7428 = vmatpush2.msra.mxu0 0.0
      %7429 = vmatprep.mubr.f32.mxu0 0.0
      %7430 = vmatmul.mubr.f32.gmra.mxu0 %v7283
      %v7431 = vpop.f32.mrf.mxu0
      %v7432 = vadd.f32 0.0, %v7431
      %v7433 = vpop.f32.mrf.mxu0
      %7434 = vmatprep.mubr.f32.mxu0 0.0
      %7435 = vmatmul.mubr.f32.gmra.mxu0 %v7286
      %v7436 = vpop.f32.mrf.mxu0
      %v7437 = vadd.f32 0.0, %v7436
      %v7438 = vpop.f32.mrf.mxu0
      %7439 = vdwg.mxu0
      %7440 = vrot.lane.b32.xlu0 %v7235, 19
      %v7441 = vpop.permute.xlu0 %7440
      %7442 = vrot.lane.b32.xlu0 %v7236, 19
      %v7443 = vpop.permute.xlu0 %7442
      %7444 = vrot.lane.b32.xlu0 %v7237, 19
      %v7445 = vpop.permute.xlu0 %7444
      %7446 = vrot.lane.b32.xlu0 %v7238, 19
      %v7447 = vpop.permute.xlu0 %7446
      %7448 = vrot.lane.b32.xlu0 %v7239, 19
      %v7449 = vpop.permute.xlu0 %7448
      %7450 = vrot.lane.b32.xlu0 %v7240, 19
      %v7451 = vpop.permute.xlu0 %7450
      %7452 = vrot.lane.b32.xlu0 %v7241, 19
      %v7453 = vpop.permute.xlu0 %7452
      %7454 = vrot.lane.b32.xlu0 %v7242, 19
      %v7455 = vpop.permute.xlu0 %7454
      %v7456 = vsel %vm461, %v7441, %v7443
      %v7457 = vsel %vm461, %v7443, %v7445
      %v7458 = vsel %vm461, %v7445, %v7447
      %v7459 = vsel %vm461, %v7449, %v7451
      %v7460 = vsel %vm461, %v7451, %v7453
      %v7461 = vsel %vm461, %v7453, %v7455
      %v7469 = vsel %vm286, %v7233, 0
      %v7472 = vsel %vm286, %v7234, 0
      %7474 = vmatprep.subr.mxu0 0.0
      %7475 = vmatpush1.msra.mxu0 0.0
      %7476 = vmatprep.subr.mxu0 0.0
      %7477 = vmatpush1.msra.mxu0 0.0
      %7478 = vmatprep.subr.mxu0 0.0
      %7479 = vmatpush1.msra.mxu0 0.0
      %7480 = vmatprep.subr.mxu0 0.0
      %7481 = vmatpush1.msra.mxu0 0.0
      %7482 = vmatprep.subr.mxu0 0.0
      %7483 = vmatpush1.msra.mxu0 0.0
      %7484 = vmatprep.subr.mxu0 0.0
      %7485 = vmatpush1.msra.mxu0 0.0
      %7486 = vmatprep.subr.mxu0 0.0
      %7487 = vmatpush1.msra.mxu0 0.0
      %7488 = vmatprep.subr.mxu0 0.0
      %7489 = vmatpush1.msra.mxu0 0.0
      %7490 = vmatprep.subr.mxu0 0.0
      %7491 = vmatpush1.msra.mxu0 0.0
      %7492 = vmatprep.subr.mxu0 0.0
      %7493 = vmatpush1.msra.mxu0 0.0
      %7494 = vmatprep.subr.mxu0 0.0
      %7495 = vmatpush1.msra.mxu0 0.0
      %7496 = vmatprep.subr.mxu0 0.0
      %7497 = vmatpush1.msra.mxu0 0.0
      %7498 = vmatprep.subr.mxu0 0.0
      %7499 = vmatpush1.msra.mxu0 0.0
      %7500 = vmatprep.subr.mxu0 0.0
      %7501 = vmatpush1.msra.mxu0 0.0
      %7502 = vmatprep.subr.mxu0 %v7460
      %7503 = vmatpush1.msra.mxu0 %v7459
      %7504 = vmatprep.subr.mxu0 %v7457
      %7505 = vmatpush1.msra.mxu0 %v7456
      %7506 = vmatprep.subr.mxu0 0.0
      %7507 = vmatpush2.msra.mxu0 0.0
      %7508 = vmatprep.subr.mxu0 0.0
      %7509 = vmatpush2.msra.mxu0 0.0
      %7510 = vmatprep.subr.mxu0 0.0
      %7511 = vmatpush2.msra.mxu0 0.0
      %7512 = vmatprep.subr.mxu0 0.0
      %7513 = vmatpush2.msra.mxu0 0.0
      %7514 = vmatprep.subr.mxu0 0.0
      %7515 = vmatpush2.msra.mxu0 0.0
      %7516 = vmatprep.subr.mxu0 0.0
      %7517 = vmatpush2.msra.mxu0 0.0
      %7518 = vmatprep.subr.mxu0 0.0
      %7519 = vmatpush2.msra.mxu0 0.0
      %7520 = vmatprep.subr.mxu0 0.0
      %7521 = vmatpush2.msra.mxu0 0.0
      %7522 = vmatprep.subr.mxu0 0.0
      %7523 = vmatpush2.msra.mxu0 0.0
      %7524 = vmatprep.subr.mxu0 0.0
      %7525 = vmatpush2.msra.mxu0 0.0
      %7526 = vmatprep.subr.mxu0 0.0
      %7527 = vmatpush2.msra.mxu0 0.0
      %7528 = vmatprep.subr.mxu0 0.0
      %7529 = vmatpush2.msra.mxu0 0.0
      %7530 = vmatprep.subr.mxu0 0.0
      %7531 = vmatpush2.msra.mxu0 0.0
      %7532 = vmatprep.subr.mxu0 0.0
      %7533 = vmatpush2.msra.mxu0 0.0
      %7534 = vmatprep.subr.mxu0 0.0
      %7535 = vmatpush2.msra.mxu0 0.0
      %7536 = vmatprep.subr.mxu0 0.0
      %7537 = vmatpush2.msra.mxu0 0.0
      %7538 = vmatprep.mubr.f32.mxu0 0.0
      %7539 = vmatmul.mubr.f32.gmra.mxu0 %v7469
      %v7540 = vpop.f32.mrf.mxu0
      %v7541 = vadd.f32 %v7355, %v7540
      %v7542 = vpop.f32.mrf.mxu0
      %v7543 = vadd.f32 %v7357, %v7542
      %7544 = vmatprep.mubr.f32.mxu0 0.0
      %7545 = vmatmul.mubr.f32.gmra.mxu0 %v7472
      %v7546 = vpop.f32.mrf.mxu0
      %v7547 = vadd.f32 %v7361, %v7546
      %v7548 = vpop.f32.mrf.mxu0
      %v7549 = vadd.f32 %v7363, %v7548
      %7550 = vdwg.mxu0
      %7551 = vmatprep.subr.mxu0 0.0
      %7552 = vmatpush1.msra.mxu0 0.0
      %7553 = vmatprep.subr.mxu0 0.0
      %7554 = vmatpush1.msra.mxu0 0.0
      %7555 = vmatprep.subr.mxu0 0.0
      %7556 = vmatpush1.msra.mxu0 0.0
      %7557 = vmatprep.subr.mxu0 0.0
      %7558 = vmatpush1.msra.mxu0 0.0
      %7559 = vmatprep.subr.mxu0 0.0
      %7560 = vmatpush1.msra.mxu0 0.0
      %7561 = vmatprep.subr.mxu0 0.0
      %7562 = vmatpush1.msra.mxu0 0.0
      %7563 = vmatprep.subr.mxu0 0.0
      %7564 = vmatpush1.msra.mxu0 0.0
      %7565 = vmatprep.subr.mxu0 0.0
      %7566 = vmatpush1.msra.mxu0 0.0
      %7567 = vmatprep.subr.mxu0 0.0
      %7568 = vmatpush1.msra.mxu0 0.0
      %7569 = vmatprep.subr.mxu0 0.0
      %7570 = vmatpush1.msra.mxu0 0.0
      %7571 = vmatprep.subr.mxu0 0.0
      %7572 = vmatpush1.msra.mxu0 0.0
      %7573 = vmatprep.subr.mxu0 0.0
      %7574 = vmatpush1.msra.mxu0 0.0
      %7575 = vmatprep.subr.mxu0 0.0
      %7576 = vmatpush1.msra.mxu0 0.0
      %7577 = vmatprep.subr.mxu0 0.0
      %7578 = vmatpush1.msra.mxu0 0.0
      %7579 = vmatprep.subr.mxu0 0.0
      %7580 = vmatpush1.msra.mxu0 %v7461
      %7581 = vmatprep.subr.mxu0 0.0
      %7582 = vmatpush1.msra.mxu0 %v7458
      %7583 = vmatprep.subr.mxu0 0.0
      %7584 = vmatpush2.msra.mxu0 0.0
      %7585 = vmatprep.subr.mxu0 0.0
      %7586 = vmatpush2.msra.mxu0 0.0
      %7587 = vmatprep.subr.mxu0 0.0
      %7588 = vmatpush2.msra.mxu0 0.0
      %7589 = vmatprep.subr.mxu0 0.0
      %7590 = vmatpush2.msra.mxu0 0.0
      %7591 = vmatprep.subr.mxu0 0.0
      %7592 = vmatpush2.msra.mxu0 0.0
      %7593 = vmatprep.subr.mxu0 0.0
      %7594 = vmatpush2.msra.mxu0 0.0
      %7595 = vmatprep.subr.mxu0 0.0
      %7596 = vmatpush2.msra.mxu0 0.0
      %7597 = vmatprep.subr.mxu0 0.0
      %7598 = vmatpush2.msra.mxu0 0.0
      %7599 = vmatprep.subr.mxu0 0.0
      %7600 = vmatpush2.msra.mxu0 0.0
      %7601 = vmatprep.subr.mxu0 0.0
      %7602 = vmatpush2.msra.mxu0 0.0
      %7603 = vmatprep.subr.mxu0 0.0
      %7604 = vmatpush2.msra.mxu0 0.0
      %7605 = vmatprep.subr.mxu0 0.0
      %7606 = vmatpush2.msra.mxu0 0.0
      %7607 = vmatprep.subr.mxu0 0.0
      %7608 = vmatpush2.msra.mxu0 0.0
      %7609 = vmatprep.subr.mxu0 0.0
      %7610 = vmatpush2.msra.mxu0 0.0
      %7611 = vmatprep.subr.mxu0 0.0
      %7612 = vmatpush2.msra.mxu0 0.0
      %7613 = vmatprep.subr.mxu0 0.0
      %7614 = vmatpush2.msra.mxu0 0.0
      %7615 = vmatprep.mubr.f32.mxu0 0.0
      %7616 = vmatmul.mubr.f32.gmra.mxu0 %v7469
      %v7617 = vpop.f32.mrf.mxu0
      %v7618 = vadd.f32 %v7432, %v7617
      %v7619 = vpop.f32.mrf.mxu0
      %7620 = vmatprep.mubr.f32.mxu0 0.0
      %7621 = vmatmul.mubr.f32.gmra.mxu0 %v7472
      %v7622 = vpop.f32.mrf.mxu0
      %v7623 = vadd.f32 %v7437, %v7622
      %v7624 = vpop.f32.mrf.mxu0
      %7625 = vdwg.mxu0
      %s7626 = scalar_lea.vmem %s1, 608
      %v7627 = vld [vmem:[%s7626] sm:$0xff]
      %v7628 = vld [vmem:[%s7626 + $0x8] sm:$0xff]
      %7629 = vrot.lane.b32.xlu0 %v7235, 17
      %v7630 = vpop.permute.xlu0 %7629
      %7631 = vrot.lane.b32.xlu0 %v7236, 17
      %v7632 = vpop.permute.xlu0 %7631
      %7633 = vrot.lane.b32.xlu0 %v7237, 17
      %v7634 = vpop.permute.xlu0 %7633
      %7635 = vrot.lane.b32.xlu0 %v7238, 17
      %v7636 = vpop.permute.xlu0 %7635
      %7637 = vrot.lane.b32.xlu0 %v7239, 17
      %v7638 = vpop.permute.xlu0 %7637
      %7639 = vrot.lane.b32.xlu0 %v7240, 17
      %v7640 = vpop.permute.xlu0 %7639
      %7641 = vrot.lane.b32.xlu0 %v7241, 17
      %v7642 = vpop.permute.xlu0 %7641
      %7643 = vrot.lane.b32.xlu0 %v7242, 17
      %v7644 = vpop.permute.xlu0 %7643
      %v7645 = vsel %vm651, %v7630, %v7632
      %v7646 = vsel %vm651, %v7632, %v7634
      %v7647 = vsel %vm651, %v7634, %v7636
      %v7648 = vsel %vm651, %v7638, %v7640
      %v7649 = vsel %vm651, %v7640, %v7642
      %v7650 = vsel %vm651, %v7642, %v7644
      %v7658 = vsel %vm286, %v7627, 0
      %v7661 = vsel %vm286, %v7628, 0
      %7663 = vmatprep.subr.mxu0 0.0
      %7664 = vmatpush1.msra.mxu0 0.0
      %7665 = vmatprep.subr.mxu0 0.0
      %7666 = vmatpush1.msra.mxu0 0.0
      %7667 = vmatprep.subr.mxu0 0.0
      %7668 = vmatpush1.msra.mxu0 0.0
      %7669 = vmatprep.subr.mxu0 0.0
      %7670 = vmatpush1.msra.mxu0 0.0
      %7671 = vmatprep.subr.mxu0 0.0
      %7672 = vmatpush1.msra.mxu0 0.0
      %7673 = vmatprep.subr.mxu0 0.0
      %7674 = vmatpush1.msra.mxu0 0.0
      %7675 = vmatprep.subr.mxu0 0.0
      %7676 = vmatpush1.msra.mxu0 0.0
      %7677 = vmatprep.subr.mxu0 0.0
      %7678 = vmatpush1.msra.mxu0 0.0
      %7679 = vmatprep.subr.mxu0 0.0
      %7680 = vmatpush1.msra.mxu0 0.0
      %7681 = vmatprep.subr.mxu0 0.0
      %7682 = vmatpush1.msra.mxu0 0.0
      %7683 = vmatprep.subr.mxu0 0.0
      %7684 = vmatpush1.msra.mxu0 0.0
      %7685 = vmatprep.subr.mxu0 0.0
      %7686 = vmatpush1.msra.mxu0 0.0
      %7687 = vmatprep.subr.mxu0 0.0
      %7688 = vmatpush1.msra.mxu0 0.0
      %7689 = vmatprep.subr.mxu0 0.0
      %7690 = vmatpush1.msra.mxu0 0.0
      %7691 = vmatprep.subr.mxu0 %v7649
      %7692 = vmatpush1.msra.mxu0 %v7648
      %7693 = vmatprep.subr.mxu0 %v7646
      %7694 = vmatpush1.msra.mxu0 %v7645
      %7695 = vmatprep.subr.mxu0 0.0
      %7696 = vmatpush2.msra.mxu0 0.0
      %7697 = vmatprep.subr.mxu0 0.0
      %7698 = vmatpush2.msra.mxu0 0.0
      %7699 = vmatprep.subr.mxu0 0.0
      %7700 = vmatpush2.msra.mxu0 0.0
      %7701 = vmatprep.subr.mxu0 0.0
      %7702 = vmatpush2.msra.mxu0 0.0
      %7703 = vmatprep.subr.mxu0 0.0
      %7704 = vmatpush2.msra.mxu0 0.0
      %7705 = vmatprep.subr.mxu0 0.0
      %7706 = vmatpush2.msra.mxu0 0.0
      %7707 = vmatprep.subr.mxu0 0.0
      %7708 = vmatpush2.msra.mxu0 0.0
      %7709 = vmatprep.subr.mxu0 0.0
      %7710 = vmatpush2.msra.mxu0 0.0
      %7711 = vmatprep.subr.mxu0 0.0
      %7712 = vmatpush2.msra.mxu0 0.0
      %7713 = vmatprep.subr.mxu0 0.0
      %7714 = vmatpush2.msra.mxu0 0.0
      %7715 = vmatprep.subr.mxu0 0.0
      %7716 = vmatpush2.msra.mxu0 0.0
      %7717 = vmatprep.subr.mxu0 0.0
      %7718 = vmatpush2.msra.mxu0 0.0
      %7719 = vmatprep.subr.mxu0 0.0
      %7720 = vmatpush2.msra.mxu0 0.0
      %7721 = vmatprep.subr.mxu0 0.0
      %7722 = vmatpush2.msra.mxu0 0.0
      %7723 = vmatprep.subr.mxu0 0.0
      %7724 = vmatpush2.msra.mxu0 0.0
      %7725 = vmatprep.subr.mxu0 0.0
      %7726 = vmatpush2.msra.mxu0 0.0
      %7727 = vmatprep.mubr.f32.mxu0 0.0
      %7728 = vmatmul.mubr.f32.gmra.mxu0 %v7658
      %v7729 = vpop.f32.mrf.mxu0
      %v7730 = vadd.f32 0.0, %v7729
      %v7731 = vpop.f32.mrf.mxu0
      %v7732 = vadd.f32 0.0, %v7731
      %7733 = vmatprep.mubr.f32.mxu0 0.0
      %7734 = vmatmul.mubr.f32.gmra.mxu0 %v7661
      %v7735 = vpop.f32.mrf.mxu0
      %v7736 = vadd.f32 0.0, %v7735
      %v7737 = vpop.f32.mrf.mxu0
      %v7738 = vadd.f32 0.0, %v7737
      %7739 = vdwg.mxu0
      %7740 = vmatprep.subr.mxu0 0.0
      %7741 = vmatpush1.msra.mxu0 0.0
      %7742 = vmatprep.subr.mxu0 0.0
      %7743 = vmatpush1.msra.mxu0 0.0
      %7744 = vmatprep.subr.mxu0 0.0
      %7745 = vmatpush1.msra.mxu0 0.0
      %7746 = vmatprep.subr.mxu0 0.0
      %7747 = vmatpush1.msra.mxu0 0.0
      %7748 = vmatprep.subr.mxu0 0.0
      %7749 = vmatpush1.msra.mxu0 0.0
      %7750 = vmatprep.subr.mxu0 0.0
      %7751 = vmatpush1.msra.mxu0 0.0
      %7752 = vmatprep.subr.mxu0 0.0
      %7753 = vmatpush1.msra.mxu0 0.0
      %7754 = vmatprep.subr.mxu0 0.0
      %7755 = vmatpush1.msra.mxu0 0.0
      %7756 = vmatprep.subr.mxu0 0.0
      %7757 = vmatpush1.msra.mxu0 0.0
      %7758 = vmatprep.subr.mxu0 0.0
      %7759 = vmatpush1.msra.mxu0 0.0
      %7760 = vmatprep.subr.mxu0 0.0
      %7761 = vmatpush1.msra.mxu0 0.0
      %7762 = vmatprep.subr.mxu0 0.0
      %7763 = vmatpush1.msra.mxu0 0.0
      %7764 = vmatprep.subr.mxu0 0.0
      %7765 = vmatpush1.msra.mxu0 0.0
      %7766 = vmatprep.subr.mxu0 0.0
      %7767 = vmatpush1.msra.mxu0 0.0
      %7768 = vmatprep.subr.mxu0 0.0
      %7769 = vmatpush1.msra.mxu0 %v7650
      %7770 = vmatprep.subr.mxu0 0.0
      %7771 = vmatpush1.msra.mxu0 %v7647
      %7772 = vmatprep.subr.mxu0 0.0
      %7773 = vmatpush2.msra.mxu0 0.0
      %7774 = vmatprep.subr.mxu0 0.0
      %7775 = vmatpush2.msra.mxu0 0.0
      %7776 = vmatprep.subr.mxu0 0.0
      %7777 = vmatpush2.msra.mxu0 0.0
      %7778 = vmatprep.subr.mxu0 0.0
      %7779 = vmatpush2.msra.mxu0 0.0
      %7780 = vmatprep.subr.mxu0 0.0
      %7781 = vmatpush2.msra.mxu0 0.0
      %7782 = vmatprep.subr.mxu0 0.0
      %7783 = vmatpush2.msra.mxu0 0.0
      %7784 = vmatprep.subr.mxu0 0.0
      %7785 = vmatpush2.msra.mxu0 0.0
      %7786 = vmatprep.subr.mxu0 0.0
      %7787 = vmatpush2.msra.mxu0 0.0
      %7788 = vmatprep.subr.mxu0 0.0
      %7789 = vmatpush2.msra.mxu0 0.0
      %7790 = vmatprep.subr.mxu0 0.0
      %7791 = vmatpush2.msra.mxu0 0.0
      %7792 = vmatprep.subr.mxu0 0.0
      %7793 = vmatpush2.msra.mxu0 0.0
      %7794 = vmatprep.subr.mxu0 0.0
      %7795 = vmatpush2.msra.mxu0 0.0
      %7796 = vmatprep.subr.mxu0 0.0
      %7797 = vmatpush2.msra.mxu0 0.0
      %7798 = vmatprep.subr.mxu0 0.0
      %7799 = vmatpush2.msra.mxu0 0.0
      %7800 = vmatprep.subr.mxu0 0.0
      %7801 = vmatpush2.msra.mxu0 0.0
      %7802 = vmatprep.subr.mxu0 0.0
      %7803 = vmatpush2.msra.mxu0 0.0
      %7804 = vmatprep.mubr.f32.mxu0 0.0
      %7805 = vmatmul.mubr.f32.gmra.mxu0 %v7658
      %v7806 = vpop.f32.mrf.mxu0
      %v7807 = vadd.f32 0.0, %v7806
      %v7808 = vpop.f32.mrf.mxu0
      %7809 = vmatprep.mubr.f32.mxu0 0.0
      %7810 = vmatmul.mubr.f32.gmra.mxu0 %v7661
      %v7811 = vpop.f32.mrf.mxu0
      %v7812 = vadd.f32 0.0, %v7811
      %v7813 = vpop.f32.mrf.mxu0
      %7814 = vdwg.mxu0
      %v7815 = vadd.f32 %v7541, %v7730
      %v7816 = vadd.f32 %v7543, %v7732
      %v7817 = vadd.f32 %v7618, %v7807
      %v7818 = vadd.f32 %v7547, %v7736
      %v7819 = vadd.f32 %v7549, %v7738
      %v7820 = vadd.f32 %v7623, %v7812
      %s7821 = scalar_lea.vmem %s1, 624
      %v7822 = vld [vmem:[%s7821] sm:$0xff]
      %v7823 = vld [vmem:[%s7821 + $0x8] sm:$0xff]
      %7824 = vrot.lane.b32.xlu0 %v7235, 1
      %v7825 = vpop.permute.xlu0 %7824
      %7826 = vrot.lane.b32.xlu0 %v7236, 1
      %v7827 = vpop.permute.xlu0 %7826
      %7828 = vrot.lane.b32.xlu0 %v7237, 1
      %v7829 = vpop.permute.xlu0 %7828
      %7830 = vrot.lane.b32.xlu0 %v7238, 1
      %v7831 = vpop.permute.xlu0 %7830
      %7832 = vrot.lane.b32.xlu0 %v7239, 1
      %v7833 = vpop.permute.xlu0 %7832
      %7834 = vrot.lane.b32.xlu0 %v7240, 1
      %v7835 = vpop.permute.xlu0 %7834
      %7836 = vrot.lane.b32.xlu0 %v7241, 1
      %v7837 = vpop.permute.xlu0 %7836
      %7838 = vrot.lane.b32.xlu0 %v7242, 1
      %v7839 = vpop.permute.xlu0 %7838
      %v7840 = vsel %vm847, %v7825, %v7827
      %v7841 = vsel %vm847, %v7827, %v7829
      %v7842 = vsel %vm847, %v7829, %v7831
      %v7843 = vsel %vm847, %v7833, %v7835
      %v7844 = vsel %vm847, %v7835, %v7837
      %v7845 = vsel %vm847, %v7837, %v7839
      %v7853 = vsel %vm286, %v7822, 0
      %v7856 = vsel %vm286, %v7823, 0
      %7858 = vmatprep.subr.mxu0 0.0
      %7859 = vmatpush1.msra.mxu0 0.0
      %7860 = vmatprep.subr.mxu0 0.0
      %7861 = vmatpush1.msra.mxu0 0.0
      %7862 = vmatprep.subr.mxu0 0.0
      %7863 = vmatpush1.msra.mxu0 0.0
      %7864 = vmatprep.subr.mxu0 0.0
      %7865 = vmatpush1.msra.mxu0 0.0
      %7866 = vmatprep.subr.mxu0 0.0
      %7867 = vmatpush1.msra.mxu0 0.0
      %7868 = vmatprep.subr.mxu0 0.0
      %7869 = vmatpush1.msra.mxu0 0.0
      %7870 = vmatprep.subr.mxu0 0.0
      %7871 = vmatpush1.msra.mxu0 0.0
      %7872 = vmatprep.subr.mxu0 0.0
      %7873 = vmatpush1.msra.mxu0 0.0
      %7874 = vmatprep.subr.mxu0 0.0
      %7875 = vmatpush1.msra.mxu0 0.0
      %7876 = vmatprep.subr.mxu0 0.0
      %7877 = vmatpush1.msra.mxu0 0.0
      %7878 = vmatprep.subr.mxu0 0.0
      %7879 = vmatpush1.msra.mxu0 0.0
      %7880 = vmatprep.subr.mxu0 0.0
      %7881 = vmatpush1.msra.mxu0 0.0
      %7882 = vmatprep.subr.mxu0 0.0
      %7883 = vmatpush1.msra.mxu0 0.0
      %7884 = vmatprep.subr.mxu0 0.0
      %7885 = vmatpush1.msra.mxu0 0.0
      %7886 = vmatprep.subr.mxu0 %v7844
      %7887 = vmatpush1.msra.mxu0 %v7843
      %7888 = vmatprep.subr.mxu0 %v7841
      %7889 = vmatpush1.msra.mxu0 %v7840
      %7890 = vmatprep.subr.mxu0 0.0
      %7891 = vmatpush2.msra.mxu0 0.0
      %7892 = vmatprep.subr.mxu0 0.0
      %7893 = vmatpush2.msra.mxu0 0.0
      %7894 = vmatprep.subr.mxu0 0.0
      %7895 = vmatpush2.msra.mxu0 0.0
      %7896 = vmatprep.subr.mxu0 0.0
      %7897 = vmatpush2.msra.mxu0 0.0
      %7898 = vmatprep.subr.mxu0 0.0
      %7899 = vmatpush2.msra.mxu0 0.0
      %7900 = vmatprep.subr.mxu0 0.0
      %7901 = vmatpush2.msra.mxu0 0.0
      %7902 = vmatprep.subr.mxu0 0.0
      %7903 = vmatpush2.msra.mxu0 0.0
      %7904 = vmatprep.subr.mxu0 0.0
      %7905 = vmatpush2.msra.mxu0 0.0
      %7906 = vmatprep.subr.mxu0 0.0
      %7907 = vmatpush2.msra.mxu0 0.0
      %7908 = vmatprep.subr.mxu0 0.0
      %7909 = vmatpush2.msra.mxu0 0.0
      %7910 = vmatprep.subr.mxu0 0.0
      %7911 = vmatpush2.msra.mxu0 0.0
      %7912 = vmatprep.subr.mxu0 0.0
      %7913 = vmatpush2.msra.mxu0 0.0
      %7914 = vmatprep.subr.mxu0 0.0
      %7915 = vmatpush2.msra.mxu0 0.0
      %7916 = vmatprep.subr.mxu0 0.0
      %7917 = vmatpush2.msra.mxu0 0.0
      %7918 = vmatprep.subr.mxu0 0.0
      %7919 = vmatpush2.msra.mxu0 0.0
      %7920 = vmatprep.subr.mxu0 0.0
      %7921 = vmatpush2.msra.mxu0 0.0
      %7922 = vmatprep.mubr.f32.mxu0 0.0
      %7923 = vmatmul.mubr.f32.gmra.mxu0 %v7853
      %v7924 = vpop.f32.mrf.mxu0
      %v7925 = vadd.f32 0.0, %v7924
      %v7926 = vpop.f32.mrf.mxu0
      %v7927 = vadd.f32 0.0, %v7926
      %7928 = vmatprep.mubr.f32.mxu0 0.0
      %7929 = vmatmul.mubr.f32.gmra.mxu0 %v7856
      %v7930 = vpop.f32.mrf.mxu0
      %v7931 = vadd.f32 0.0, %v7930
      %v7932 = vpop.f32.mrf.mxu0
      %v7933 = vadd.f32 0.0, %v7932
      %7934 = vdwg.mxu0
      %7935 = vmatprep.subr.mxu0 0.0
      %7936 = vmatpush1.msra.mxu0 0.0
      %7937 = vmatprep.subr.mxu0 0.0
      %7938 = vmatpush1.msra.mxu0 0.0
      %7939 = vmatprep.subr.mxu0 0.0
      %7940 = vmatpush1.msra.mxu0 0.0
      %7941 = vmatprep.subr.mxu0 0.0
      %7942 = vmatpush1.msra.mxu0 0.0
      %7943 = vmatprep.subr.mxu0 0.0
      %7944 = vmatpush1.msra.mxu0 0.0
      %7945 = vmatprep.subr.mxu0 0.0
      %7946 = vmatpush1.msra.mxu0 0.0
      %7947 = vmatprep.subr.mxu0 0.0
      %7948 = vmatpush1.msra.mxu0 0.0
      %7949 = vmatprep.subr.mxu0 0.0
      %7950 = vmatpush1.msra.mxu0 0.0
      %7951 = vmatprep.subr.mxu0 0.0
      %7952 = vmatpush1.msra.mxu0 0.0
      %7953 = vmatprep.subr.mxu0 0.0
      %7954 = vmatpush1.msra.mxu0 0.0
      %7955 = vmatprep.subr.mxu0 0.0
      %7956 = vmatpush1.msra.mxu0 0.0
      %7957 = vmatprep.subr.mxu0 0.0
      %7958 = vmatpush1.msra.mxu0 0.0
      %7959 = vmatprep.subr.mxu0 0.0
      %7960 = vmatpush1.msra.mxu0 0.0
      %7961 = vmatprep.subr.mxu0 0.0
      %7962 = vmatpush1.msra.mxu0 0.0
      %7963 = vmatprep.subr.mxu0 0.0
      %7964 = vmatpush1.msra.mxu0 %v7845
      %7965 = vmatprep.subr.mxu0 0.0
      %7966 = vmatpush1.msra.mxu0 %v7842
      %7967 = vmatprep.subr.mxu0 0.0
      %7968 = vmatpush2.msra.mxu0 0.0
      %7969 = vmatprep.subr.mxu0 0.0
      %7970 = vmatpush2.msra.mxu0 0.0
      %7971 = vmatprep.subr.mxu0 0.0
      %7972 = vmatpush2.msra.mxu0 0.0
      %7973 = vmatprep.subr.mxu0 0.0
      %7974 = vmatpush2.msra.mxu0 0.0
      %7975 = vmatprep.subr.mxu0 0.0
      %7976 = vmatpush2.msra.mxu0 0.0
      %7977 = vmatprep.subr.mxu0 0.0
      %7978 = vmatpush2.msra.mxu0 0.0
      %7979 = vmatprep.subr.mxu0 0.0
      %7980 = vmatpush2.msra.mxu0 0.0
      %7981 = vmatprep.subr.mxu0 0.0
      %7982 = vmatpush2.msra.mxu0 0.0
      %7983 = vmatprep.subr.mxu0 0.0
      %7984 = vmatpush2.msra.mxu0 0.0
      %7985 = vmatprep.subr.mxu0 0.0
      %7986 = vmatpush2.msra.mxu0 0.0
      %7987 = vmatprep.subr.mxu0 0.0
      %7988 = vmatpush2.msra.mxu0 0.0
      %7989 = vmatprep.subr.mxu0 0.0
      %7990 = vmatpush2.msra.mxu0 0.0
      %7991 = vmatprep.subr.mxu0 0.0
      %7992 = vmatpush2.msra.mxu0 0.0
      %7993 = vmatprep.subr.mxu0 0.0
      %7994 = vmatpush2.msra.mxu0 0.0
      %7995 = vmatprep.subr.mxu0 0.0
      %7996 = vmatpush2.msra.mxu0 0.0
      %7997 = vmatprep.subr.mxu0 0.0
      %7998 = vmatpush2.msra.mxu0 0.0
      %7999 = vmatprep.mubr.f32.mxu0 0.0
      %8000 = vmatmul.mubr.f32.gmra.mxu0 %v7853
      %v8001 = vpop.f32.mrf.mxu0
      %v8002 = vadd.f32 0.0, %v8001
      %v8003 = vpop.f32.mrf.mxu0
      %8004 = vmatprep.mubr.f32.mxu0 0.0
      %8005 = vmatmul.mubr.f32.gmra.mxu0 %v7856
      %v8006 = vpop.f32.mrf.mxu0
      %v8007 = vadd.f32 0.0, %v8006
      %v8008 = vpop.f32.mrf.mxu0
      %8009 = vdwg.mxu0
      %v8010 = vadd.f32 %v7815, %v7925
      %v8011 = vadd.f32 %v7816, %v7927
      %v8012 = vadd.f32 %v7817, %v8002
      %v8013 = vadd.f32 %v7818, %v7931
      %v8014 = vadd.f32 %v7819, %v7933
      %v8015 = vadd.f32 %v7820, %v8007
      %s8016 = scalar_lea.vmem %s1, 640
      %v8017 = vld [vmem:[%s8016] sm:$0xff]
      %v8018 = vld [vmem:[%s8016 + $0x8] sm:$0xff]
      %v8020 = vsel %vm286, %v8017, 0
      %v8023 = vsel %vm286, %v8018, 0
      %8025 = vmatprep.subr.mxu0 0.0
      %8026 = vmatpush1.msra.mxu0 0.0
      %8027 = vmatprep.subr.mxu0 0.0
      %8028 = vmatpush1.msra.mxu0 0.0
      %8029 = vmatprep.subr.mxu0 0.0
      %8030 = vmatpush1.msra.mxu0 0.0
      %8031 = vmatprep.subr.mxu0 0.0
      %8032 = vmatpush1.msra.mxu0 0.0
      %8033 = vmatprep.subr.mxu0 0.0
      %8034 = vmatpush1.msra.mxu0 0.0
      %8035 = vmatprep.subr.mxu0 0.0
      %8036 = vmatpush1.msra.mxu0 0.0
      %8037 = vmatprep.subr.mxu0 0.0
      %8038 = vmatpush1.msra.mxu0 0.0
      %8039 = vmatprep.subr.mxu0 0.0
      %8040 = vmatpush1.msra.mxu0 0.0
      %8041 = vmatprep.subr.mxu0 0.0
      %8042 = vmatpush1.msra.mxu0 0.0
      %8043 = vmatprep.subr.mxu0 0.0
      %8044 = vmatpush1.msra.mxu0 0.0
      %8045 = vmatprep.subr.mxu0 0.0
      %8046 = vmatpush1.msra.mxu0 0.0
      %8047 = vmatprep.subr.mxu0 0.0
      %8048 = vmatpush1.msra.mxu0 0.0
      %8049 = vmatprep.subr.mxu0 0.0
      %8050 = vmatpush1.msra.mxu0 0.0
      %8051 = vmatprep.subr.mxu0 0.0
      %8052 = vmatpush1.msra.mxu0 0.0
      %8053 = vmatprep.subr.mxu0 %v7241
      %8054 = vmatpush1.msra.mxu0 %v7240
      %8055 = vmatprep.subr.mxu0 %v7237
      %8056 = vmatpush1.msra.mxu0 %v7236
      %8057 = vmatprep.subr.mxu0 0.0
      %8058 = vmatpush2.msra.mxu0 0.0
      %8059 = vmatprep.subr.mxu0 0.0
      %8060 = vmatpush2.msra.mxu0 0.0
      %8061 = vmatprep.subr.mxu0 0.0
      %8062 = vmatpush2.msra.mxu0 0.0
      %8063 = vmatprep.subr.mxu0 0.0
      %8064 = vmatpush2.msra.mxu0 0.0
      %8065 = vmatprep.subr.mxu0 0.0
      %8066 = vmatpush2.msra.mxu0 0.0
      %8067 = vmatprep.subr.mxu0 0.0
      %8068 = vmatpush2.msra.mxu0 0.0
      %8069 = vmatprep.subr.mxu0 0.0
      %8070 = vmatpush2.msra.mxu0 0.0
      %8071 = vmatprep.subr.mxu0 0.0
      %8072 = vmatpush2.msra.mxu0 0.0
      %8073 = vmatprep.subr.mxu0 0.0
      %8074 = vmatpush2.msra.mxu0 0.0
      %8075 = vmatprep.subr.mxu0 0.0
      %8076 = vmatpush2.msra.mxu0 0.0
      %8077 = vmatprep.subr.mxu0 0.0
      %8078 = vmatpush2.msra.mxu0 0.0
      %8079 = vmatprep.subr.mxu0 0.0
      %8080 = vmatpush2.msra.mxu0 0.0
      %8081 = vmatprep.subr.mxu0 0.0
      %8082 = vmatpush2.msra.mxu0 0.0
      %8083 = vmatprep.subr.mxu0 0.0
      %8084 = vmatpush2.msra.mxu0 0.0
      %8085 = vmatprep.subr.mxu0 0.0
      %8086 = vmatpush2.msra.mxu0 0.0
      %8087 = vmatprep.subr.mxu0 0.0
      %8088 = vmatpush2.msra.mxu0 0.0
      %8089 = vmatprep.mubr.f32.mxu0 0.0
      %8090 = vmatmul.mubr.f32.gmra.mxu0 %v8020
      %v8091 = vpop.f32.mrf.mxu0
      %v8092 = vadd.f32 0.0, %v8091
      %v8093 = vpop.f32.mrf.mxu0
      %v8094 = vadd.f32 0.0, %v8093
      %8095 = vmatprep.mubr.f32.mxu0 0.0
      %8096 = vmatmul.mubr.f32.gmra.mxu0 %v8023
      %v8097 = vpop.f32.mrf.mxu0
      %v8098 = vadd.f32 0.0, %v8097
      %v8099 = vpop.f32.mrf.mxu0
      %v8100 = vadd.f32 0.0, %v8099
      %8101 = vdwg.mxu0
      %8102 = vmatprep.subr.mxu0 0.0
      %8103 = vmatpush1.msra.mxu0 0.0
      %8104 = vmatprep.subr.mxu0 0.0
      %8105 = vmatpush1.msra.mxu0 0.0
      %8106 = vmatprep.subr.mxu0 0.0
      %8107 = vmatpush1.msra.mxu0 0.0
      %8108 = vmatprep.subr.mxu0 0.0
      %8109 = vmatpush1.msra.mxu0 0.0
      %8110 = vmatprep.subr.mxu0 0.0
      %8111 = vmatpush1.msra.mxu0 0.0
      %8112 = vmatprep.subr.mxu0 0.0
      %8113 = vmatpush1.msra.mxu0 0.0
      %8114 = vmatprep.subr.mxu0 0.0
      %8115 = vmatpush1.msra.mxu0 0.0
      %8116 = vmatprep.subr.mxu0 0.0
      %8117 = vmatpush1.msra.mxu0 0.0
      %8118 = vmatprep.subr.mxu0 0.0
      %8119 = vmatpush1.msra.mxu0 0.0
      %8120 = vmatprep.subr.mxu0 0.0
      %8121 = vmatpush1.msra.mxu0 0.0
      %8122 = vmatprep.subr.mxu0 0.0
      %8123 = vmatpush1.msra.mxu0 0.0
      %8124 = vmatprep.subr.mxu0 0.0
      %8125 = vmatpush1.msra.mxu0 0.0
      %8126 = vmatprep.subr.mxu0 0.0
      %8127 = vmatpush1.msra.mxu0 0.0
      %8128 = vmatprep.subr.mxu0 0.0
      %8129 = vmatpush1.msra.mxu0 0.0
      %8130 = vmatprep.subr.mxu0 0.0
      %8131 = vmatpush1.msra.mxu0 %v7242
      %8132 = vmatprep.subr.mxu0 0.0
      %8133 = vmatpush1.msra.mxu0 %v7238
      %8134 = vmatprep.subr.mxu0 0.0
      %8135 = vmatpush2.msra.mxu0 0.0
      %8136 = vmatprep.subr.mxu0 0.0
      %8137 = vmatpush2.msra.mxu0 0.0
      %8138 = vmatprep.subr.mxu0 0.0
      %8139 = vmatpush2.msra.mxu0 0.0
      %8140 = vmatprep.subr.mxu0 0.0
      %8141 = vmatpush2.msra.mxu0 0.0
      %8142 = vmatprep.subr.mxu0 0.0
      %8143 = vmatpush2.msra.mxu0 0.0
      %8144 = vmatprep.subr.mxu0 0.0
      %8145 = vmatpush2.msra.mxu0 0.0
      %8146 = vmatprep.subr.mxu0 0.0
      %8147 = vmatpush2.msra.mxu0 0.0
      %8148 = vmatprep.subr.mxu0 0.0
      %8149 = vmatpush2.msra.mxu0 0.0
      %8150 = vmatprep.subr.mxu0 0.0
      %8151 = vmatpush2.msra.mxu0 0.0
      %8152 = vmatprep.subr.mxu0 0.0
      %8153 = vmatpush2.msra.mxu0 0.0
      %8154 = vmatprep.subr.mxu0 0.0
      %8155 = vmatpush2.msra.mxu0 0.0
      %8156 = vmatprep.subr.mxu0 0.0
      %8157 = vmatpush2.msra.mxu0 0.0
      %8158 = vmatprep.subr.mxu0 0.0
      %8159 = vmatpush2.msra.mxu0 0.0
      %8160 = vmatprep.subr.mxu0 0.0
      %8161 = vmatpush2.msra.mxu0 0.0
      %8162 = vmatprep.subr.mxu0 0.0
      %8163 = vmatpush2.msra.mxu0 0.0
      %8164 = vmatprep.subr.mxu0 0.0
      %8165 = vmatpush2.msra.mxu0 0.0
      %8166 = vmatprep.mubr.f32.mxu0 0.0
      %8167 = vmatmul.mubr.f32.gmra.mxu0 %v8020
      %v8168 = vpop.f32.mrf.mxu0
      %v8169 = vadd.f32 0.0, %v8168
      %v8170 = vpop.f32.mrf.mxu0
      %8171 = vmatprep.mubr.f32.mxu0 0.0
      %8172 = vmatmul.mubr.f32.gmra.mxu0 %v8023
      %v8173 = vpop.f32.mrf.mxu0
      %v8174 = vadd.f32 0.0, %v8173
      %v8175 = vpop.f32.mrf.mxu0
      %8176 = vdwg.mxu0
      %v8177 = vadd.f32 %v8010, %v8092
      %v8178 = vadd.f32 %v8011, %v8094
      %v8179 = vadd.f32 %v8012, %v8169
      %v8180 = vadd.f32 %v8013, %v8098
      %v8181 = vadd.f32 %v8014, %v8100
      %v8182 = vadd.f32 %v8015, %v8174
      %s8183 = scalar_lea.vmem %s1, 656
      %v8184 = vld [vmem:[%s8183] sm:$0xff]
      %v8185 = vld [vmem:[%s8183 + $0x8] sm:$0xff]
      %8186 = vrot.lane.b32.xlu0 %v7236, 127
      %v8187 = vpop.permute.xlu0 %8186
      %8188 = vrot.lane.b32.xlu0 %v7237, 127
      %v8189 = vpop.permute.xlu0 %8188
      %8190 = vrot.lane.b32.xlu0 %v7238, 127
      %v8191 = vpop.permute.xlu0 %8190
      %8192 = vrot.lane.b32.xlu0 %v7240, 127
      %v8193 = vpop.permute.xlu0 %8192
      %8194 = vrot.lane.b32.xlu0 %v7241, 127
      %v8195 = vpop.permute.xlu0 %8194
      %8196 = vrot.lane.b32.xlu0 %v7242, 127
      %v8197 = vpop.permute.xlu0 %8196
      %v8198 = vsel %vm1206, %v8187, %v8189
      %v8199 = vsel %vm1206, %v8189, %v8191
      %v8200 = vsel %vm1206, %v8193, %v8195
      %v8201 = vsel %vm1206, %v8195, %v8197
      %v8209 = vsel %vm286, %v8184, 0
      %v8212 = vsel %vm286, %v8185, 0
      %8214 = vmatprep.subr.mxu0 0.0
      %8215 = vmatpush1.msra.mxu0 0.0
      %8216 = vmatprep.subr.mxu0 0.0
      %8217 = vmatpush1.msra.mxu0 0.0
      %8218 = vmatprep.subr.mxu0 0.0
      %8219 = vmatpush1.msra.mxu0 0.0
      %8220 = vmatprep.subr.mxu0 0.0
      %8221 = vmatpush1.msra.mxu0 0.0
      %8222 = vmatprep.subr.mxu0 0.0
      %8223 = vmatpush1.msra.mxu0 0.0
      %8224 = vmatprep.subr.mxu0 0.0
      %8225 = vmatpush1.msra.mxu0 0.0
      %8226 = vmatprep.subr.mxu0 0.0
      %8227 = vmatpush1.msra.mxu0 0.0
      %8228 = vmatprep.subr.mxu0 0.0
      %8229 = vmatpush1.msra.mxu0 0.0
      %8230 = vmatprep.subr.mxu0 0.0
      %8231 = vmatpush1.msra.mxu0 0.0
      %8232 = vmatprep.subr.mxu0 0.0
      %8233 = vmatpush1.msra.mxu0 0.0
      %8234 = vmatprep.subr.mxu0 0.0
      %8235 = vmatpush1.msra.mxu0 0.0
      %8236 = vmatprep.subr.mxu0 0.0
      %8237 = vmatpush1.msra.mxu0 0.0
      %8238 = vmatprep.subr.mxu0 0.0
      %8239 = vmatpush1.msra.mxu0 0.0
      %8240 = vmatprep.subr.mxu0 0.0
      %8241 = vmatpush1.msra.mxu0 0.0
      %8242 = vmatprep.subr.mxu0 %v8201
      %8243 = vmatpush1.msra.mxu0 %v8200
      %8244 = vmatprep.subr.mxu0 %v8199
      %8245 = vmatpush1.msra.mxu0 %v8198
      %8246 = vmatprep.subr.mxu0 0.0
      %8247 = vmatpush2.msra.mxu0 0.0
      %8248 = vmatprep.subr.mxu0 0.0
      %8249 = vmatpush2.msra.mxu0 0.0
      %8250 = vmatprep.subr.mxu0 0.0
      %8251 = vmatpush2.msra.mxu0 0.0
      %8252 = vmatprep.subr.mxu0 0.0
      %8253 = vmatpush2.msra.mxu0 0.0
      %8254 = vmatprep.subr.mxu0 0.0
      %8255 = vmatpush2.msra.mxu0 0.0
      %8256 = vmatprep.subr.mxu0 0.0
      %8257 = vmatpush2.msra.mxu0 0.0
      %8258 = vmatprep.subr.mxu0 0.0
      %8259 = vmatpush2.msra.mxu0 0.0
      %8260 = vmatprep.subr.mxu0 0.0
      %8261 = vmatpush2.msra.mxu0 0.0
      %8262 = vmatprep.subr.mxu0 0.0
      %8263 = vmatpush2.msra.mxu0 0.0
      %8264 = vmatprep.subr.mxu0 0.0
      %8265 = vmatpush2.msra.mxu0 0.0
      %8266 = vmatprep.subr.mxu0 0.0
      %8267 = vmatpush2.msra.mxu0 0.0
      %8268 = vmatprep.subr.mxu0 0.0
      %8269 = vmatpush2.msra.mxu0 0.0
      %8270 = vmatprep.subr.mxu0 0.0
      %8271 = vmatpush2.msra.mxu0 0.0
      %8272 = vmatprep.subr.mxu0 0.0
      %8273 = vmatpush2.msra.mxu0 0.0
      %8274 = vmatprep.subr.mxu0 0.0
      %8275 = vmatpush2.msra.mxu0 0.0
      %8276 = vmatprep.subr.mxu0 0.0
      %8277 = vmatpush2.msra.mxu0 0.0
      %8278 = vmatprep.mubr.f32.mxu0 0.0
      %8279 = vmatmul.mubr.f32.gmra.mxu0 %v8209
      %v8280 = vpop.f32.mrf.mxu0
      %v8281 = vadd.f32 0.0, %v8280
      %v8282 = vpop.f32.mrf.mxu0
      %v8283 = vadd.f32 0.0, %v8282
      %8284 = vmatprep.mubr.f32.mxu0 0.0
      %8285 = vmatmul.mubr.f32.gmra.mxu0 %v8212
      %v8286 = vpop.f32.mrf.mxu0
      %v8287 = vadd.f32 0.0, %v8286
      %v8288 = vpop.f32.mrf.mxu0
      %v8289 = vadd.f32 0.0, %v8288
      %8290 = vdwg.mxu0
      %8291 = vmatprep.subr.mxu0 0.0
      %8292 = vmatpush1.msra.mxu0 0.0
      %8293 = vmatprep.subr.mxu0 0.0
      %8294 = vmatpush1.msra.mxu0 0.0
      %8295 = vmatprep.subr.mxu0 0.0
      %8296 = vmatpush1.msra.mxu0 0.0
      %8297 = vmatprep.subr.mxu0 0.0
      %8298 = vmatpush1.msra.mxu0 0.0
      %8299 = vmatprep.subr.mxu0 0.0
      %8300 = vmatpush1.msra.mxu0 0.0
      %8301 = vmatprep.subr.mxu0 0.0
      %8302 = vmatpush1.msra.mxu0 0.0
      %8303 = vmatprep.subr.mxu0 0.0
      %8304 = vmatpush1.msra.mxu0 0.0
      %8305 = vmatprep.subr.mxu0 0.0
      %8306 = vmatpush1.msra.mxu0 0.0
      %8307 = vmatprep.subr.mxu0 0.0
      %8308 = vmatpush1.msra.mxu0 0.0
      %8309 = vmatprep.subr.mxu0 0.0
      %8310 = vmatpush1.msra.mxu0 0.0
      %8311 = vmatprep.subr.mxu0 0.0
      %8312 = vmatpush1.msra.mxu0 0.0
      %8313 = vmatprep.subr.mxu0 0.0
      %8314 = vmatpush1.msra.mxu0 0.0
      %8315 = vmatprep.subr.mxu0 0.0
      %8316 = vmatpush1.msra.mxu0 0.0
      %8317 = vmatprep.subr.mxu0 0.0
      %8318 = vmatpush1.msra.mxu0 0.0
      %8319 = vmatprep.subr.mxu0 0.0
      %8320 = vmatpush1.msra.mxu0 %v8197
      %8321 = vmatprep.subr.mxu0 0.0
      %8322 = vmatpush1.msra.mxu0 %v8191
      %8323 = vmatprep.subr.mxu0 0.0
      %8324 = vmatpush2.msra.mxu0 0.0
      %8325 = vmatprep.subr.mxu0 0.0
      %8326 = vmatpush2.msra.mxu0 0.0
      %8327 = vmatprep.subr.mxu0 0.0
      %8328 = vmatpush2.msra.mxu0 0.0
      %8329 = vmatprep.subr.mxu0 0.0
      %8330 = vmatpush2.msra.mxu0 0.0
      %8331 = vmatprep.subr.mxu0 0.0
      %8332 = vmatpush2.msra.mxu0 0.0
      %8333 = vmatprep.subr.mxu0 0.0
      %8334 = vmatpush2.msra.mxu0 0.0
      %8335 = vmatprep.subr.mxu0 0.0
      %8336 = vmatpush2.msra.mxu0 0.0
      %8337 = vmatprep.subr.mxu0 0.0
      %8338 = vmatpush2.msra.mxu0 0.0
      %8339 = vmatprep.subr.mxu0 0.0
      %8340 = vmatpush2.msra.mxu0 0.0
      %8341 = vmatprep.subr.mxu0 0.0
      %8342 = vmatpush2.msra.mxu0 0.0
      %8343 = vmatprep.subr.mxu0 0.0
      %8344 = vmatpush2.msra.mxu0 0.0
      %8345 = vmatprep.subr.mxu0 0.0
      %8346 = vmatpush2.msra.mxu0 0.0
      %8347 = vmatprep.subr.mxu0 0.0
      %8348 = vmatpush2.msra.mxu0 0.0
      %8349 = vmatprep.subr.mxu0 0.0
      %8350 = vmatpush2.msra.mxu0 0.0
      %8351 = vmatprep.subr.mxu0 0.0
      %8352 = vmatpush2.msra.mxu0 0.0
      %8353 = vmatprep.subr.mxu0 0.0
      %8354 = vmatpush2.msra.mxu0 0.0
      %8355 = vmatprep.mubr.f32.mxu0 0.0
      %8356 = vmatmul.mubr.f32.gmra.mxu0 %v8209
      %v8357 = vpop.f32.mrf.mxu0
      %v8358 = vadd.f32 0.0, %v8357
      %v8359 = vpop.f32.mrf.mxu0
      %8360 = vmatprep.mubr.f32.mxu0 0.0
      %8361 = vmatmul.mubr.f32.gmra.mxu0 %v8212
      %v8362 = vpop.f32.mrf.mxu0
      %v8363 = vadd.f32 0.0, %v8362
      %v8364 = vpop.f32.mrf.mxu0
      %8365 = vdwg.mxu0
      %v8366 = vadd.f32 %v8177, %v8281
      %v8367 = vadd.f32 %v8178, %v8283
      %v8368 = vadd.f32 %v8179, %v8358
      %v8369 = vadd.f32 %v8180, %v8287
      %v8370 = vadd.f32 %v8181, %v8289
      %v8371 = vadd.f32 %v8182, %v8363
      %s8372 = scalar_lea.vmem %s1, 672
      %v8373 = vld [vmem:[%s8372] sm:$0xff]
      %v8374 = vld [vmem:[%s8372 + $0x8] sm:$0xff]
      %8375 = vrot.lane.b32.xlu0 %v7236, 111
      %v8376 = vpop.permute.xlu0 %8375
      %8377 = vrot.lane.b32.xlu0 %v7237, 111
      %v8378 = vpop.permute.xlu0 %8377
      %8379 = vrot.lane.b32.xlu0 %v7238, 111
      %v8380 = vpop.permute.xlu0 %8379
      %8381 = vrot.lane.b32.xlu0 %v7240, 111
      %v8382 = vpop.permute.xlu0 %8381
      %8383 = vrot.lane.b32.xlu0 %v7241, 111
      %v8384 = vpop.permute.xlu0 %8383
      %8385 = vrot.lane.b32.xlu0 %v7242, 111
      %v8386 = vpop.permute.xlu0 %8385
      %v8387 = vsel %vm1396, %v8376, %v8378
      %v8388 = vsel %vm1396, %v8378, %v8380
      %v8389 = vsel %vm1396, %v8382, %v8384
      %v8390 = vsel %vm1396, %v8384, %v8386
      %v8398 = vsel %vm286, %v8373, 0
      %v8401 = vsel %vm286, %v8374, 0
      %8403 = vmatprep.subr.mxu0 0.0
      %8404 = vmatpush1.msra.mxu0 0.0
      %8405 = vmatprep.subr.mxu0 0.0
      %8406 = vmatpush1.msra.mxu0 0.0
      %8407 = vmatprep.subr.mxu0 0.0
      %8408 = vmatpush1.msra.mxu0 0.0
      %8409 = vmatprep.subr.mxu0 0.0
      %8410 = vmatpush1.msra.mxu0 0.0
      %8411 = vmatprep.subr.mxu0 0.0
      %8412 = vmatpush1.msra.mxu0 0.0
      %8413 = vmatprep.subr.mxu0 0.0
      %8414 = vmatpush1.msra.mxu0 0.0
      %8415 = vmatprep.subr.mxu0 0.0
      %8416 = vmatpush1.msra.mxu0 0.0
      %8417 = vmatprep.subr.mxu0 0.0
      %8418 = vmatpush1.msra.mxu0 0.0
      %8419 = vmatprep.subr.mxu0 0.0
      %8420 = vmatpush1.msra.mxu0 0.0
      %8421 = vmatprep.subr.mxu0 0.0
      %8422 = vmatpush1.msra.mxu0 0.0
      %8423 = vmatprep.subr.mxu0 0.0
      %8424 = vmatpush1.msra.mxu0 0.0
      %8425 = vmatprep.subr.mxu0 0.0
      %8426 = vmatpush1.msra.mxu0 0.0
      %8427 = vmatprep.subr.mxu0 0.0
      %8428 = vmatpush1.msra.mxu0 0.0
      %8429 = vmatprep.subr.mxu0 0.0
      %8430 = vmatpush1.msra.mxu0 0.0
      %8431 = vmatprep.subr.mxu0 %v8390
      %8432 = vmatpush1.msra.mxu0 %v8389
      %8433 = vmatprep.subr.mxu0 %v8388
      %8434 = vmatpush1.msra.mxu0 %v8387
      %8435 = vmatprep.subr.mxu0 0.0
      %8436 = vmatpush2.msra.mxu0 0.0
      %8437 = vmatprep.subr.mxu0 0.0
      %8438 = vmatpush2.msra.mxu0 0.0
      %8439 = vmatprep.subr.mxu0 0.0
      %8440 = vmatpush2.msra.mxu0 0.0
      %8441 = vmatprep.subr.mxu0 0.0
      %8442 = vmatpush2.msra.mxu0 0.0
      %8443 = vmatprep.subr.mxu0 0.0
      %8444 = vmatpush2.msra.mxu0 0.0
      %8445 = vmatprep.subr.mxu0 0.0
      %8446 = vmatpush2.msra.mxu0 0.0
      %8447 = vmatprep.subr.mxu0 0.0
      %8448 = vmatpush2.msra.mxu0 0.0
      %8449 = vmatprep.subr.mxu0 0.0
      %8450 = vmatpush2.msra.mxu0 0.0
      %8451 = vmatprep.subr.mxu0 0.0
      %8452 = vmatpush2.msra.mxu0 0.0
      %8453 = vmatprep.subr.mxu0 0.0
      %8454 = vmatpush2.msra.mxu0 0.0
      %8455 = vmatprep.subr.mxu0 0.0
      %8456 = vmatpush2.msra.mxu0 0.0
      %8457 = vmatprep.subr.mxu0 0.0
      %8458 = vmatpush2.msra.mxu0 0.0
      %8459 = vmatprep.subr.mxu0 0.0
      %8460 = vmatpush2.msra.mxu0 0.0
      %8461 = vmatprep.subr.mxu0 0.0
      %8462 = vmatpush2.msra.mxu0 0.0
      %8463 = vmatprep.subr.mxu0 0.0
      %8464 = vmatpush2.msra.mxu0 0.0
      %8465 = vmatprep.subr.mxu0 0.0
      %8466 = vmatpush2.msra.mxu0 0.0
      %8467 = vmatprep.mubr.f32.mxu0 0.0
      %8468 = vmatmul.mubr.f32.gmra.mxu0 %v8398
      %v8469 = vpop.f32.mrf.mxu0
      %v8470 = vadd.f32 0.0, %v8469
      %v8471 = vpop.f32.mrf.mxu0
      %v8472 = vadd.f32 0.0, %v8471
      %8473 = vmatprep.mubr.f32.mxu0 0.0
      %8474 = vmatmul.mubr.f32.gmra.mxu0 %v8401
      %v8475 = vpop.f32.mrf.mxu0
      %v8476 = vadd.f32 0.0, %v8475
      %v8477 = vpop.f32.mrf.mxu0
      %v8478 = vadd.f32 0.0, %v8477
      %8479 = vdwg.mxu0
      %8480 = vmatprep.subr.mxu0 0.0
      %8481 = vmatpush1.msra.mxu0 0.0
      %8482 = vmatprep.subr.mxu0 0.0
      %8483 = vmatpush1.msra.mxu0 0.0
      %8484 = vmatprep.subr.mxu0 0.0
      %8485 = vmatpush1.msra.mxu0 0.0
      %8486 = vmatprep.subr.mxu0 0.0
      %8487 = vmatpush1.msra.mxu0 0.0
      %8488 = vmatprep.subr.mxu0 0.0
      %8489 = vmatpush1.msra.mxu0 0.0
      %8490 = vmatprep.subr.mxu0 0.0
      %8491 = vmatpush1.msra.mxu0 0.0
      %8492 = vmatprep.subr.mxu0 0.0
      %8493 = vmatpush1.msra.mxu0 0.0
      %8494 = vmatprep.subr.mxu0 0.0
      %8495 = vmatpush1.msra.mxu0 0.0
      %8496 = vmatprep.subr.mxu0 0.0
      %8497 = vmatpush1.msra.mxu0 0.0
      %8498 = vmatprep.subr.mxu0 0.0
      %8499 = vmatpush1.msra.mxu0 0.0
      %8500 = vmatprep.subr.mxu0 0.0
      %8501 = vmatpush1.msra.mxu0 0.0
      %8502 = vmatprep.subr.mxu0 0.0
      %8503 = vmatpush1.msra.mxu0 0.0
      %8504 = vmatprep.subr.mxu0 0.0
      %8505 = vmatpush1.msra.mxu0 0.0
      %8506 = vmatprep.subr.mxu0 0.0
      %8507 = vmatpush1.msra.mxu0 0.0
      %8508 = vmatprep.subr.mxu0 0.0
      %8509 = vmatpush1.msra.mxu0 %v8386
      %8510 = vmatprep.subr.mxu0 0.0
      %8511 = vmatpush1.msra.mxu0 %v8380
      %8512 = vmatprep.subr.mxu0 0.0
      %8513 = vmatpush2.msra.mxu0 0.0
      %8514 = vmatprep.subr.mxu0 0.0
      %8515 = vmatpush2.msra.mxu0 0.0
      %8516 = vmatprep.subr.mxu0 0.0
      %8517 = vmatpush2.msra.mxu0 0.0
      %8518 = vmatprep.subr.mxu0 0.0
      %8519 = vmatpush2.msra.mxu0 0.0
      %8520 = vmatprep.subr.mxu0 0.0
      %8521 = vmatpush2.msra.mxu0 0.0
      %8522 = vmatprep.subr.mxu0 0.0
      %8523 = vmatpush2.msra.mxu0 0.0
      %8524 = vmatprep.subr.mxu0 0.0
      %8525 = vmatpush2.msra.mxu0 0.0
      %8526 = vmatprep.subr.mxu0 0.0
      %8527 = vmatpush2.msra.mxu0 0.0
      %8528 = vmatprep.subr.mxu0 0.0
      %8529 = vmatpush2.msra.mxu0 0.0
      %8530 = vmatprep.subr.mxu0 0.0
      %8531 = vmatpush2.msra.mxu0 0.0
      %8532 = vmatprep.subr.mxu0 0.0
      %8533 = vmatpush2.msra.mxu0 0.0
      %8534 = vmatprep.subr.mxu0 0.0
      %8535 = vmatpush2.msra.mxu0 0.0
      %8536 = vmatprep.subr.mxu0 0.0
      %8537 = vmatpush2.msra.mxu0 0.0
      %8538 = vmatprep.subr.mxu0 0.0
      %8539 = vmatpush2.msra.mxu0 0.0
      %8540 = vmatprep.subr.mxu0 0.0
      %8541 = vmatpush2.msra.mxu0 0.0
      %8542 = vmatprep.subr.mxu0 0.0
      %8543 = vmatpush2.msra.mxu0 0.0
      %8544 = vmatprep.mubr.f32.mxu0 0.0
      %8545 = vmatmul.mubr.f32.gmra.mxu0 %v8398
      %v8546 = vpop.f32.mrf.mxu0
      %v8547 = vadd.f32 0.0, %v8546
      %v8548 = vpop.f32.mrf.mxu0
      %8549 = vmatprep.mubr.f32.mxu0 0.0
      %8550 = vmatmul.mubr.f32.gmra.mxu0 %v8401
      %v8551 = vpop.f32.mrf.mxu0
      %v8552 = vadd.f32 0.0, %v8551
      %v8553 = vpop.f32.mrf.mxu0
      %8554 = vdwg.mxu0
      %v8555 = vadd.f32 %v8366, %v8470
      %v8556 = vadd.f32 %v8367, %v8472
      %v8557 = vadd.f32 %v8368, %v8547
      %v8558 = vadd.f32 %v8369, %v8476
      %v8559 = vadd.f32 %v8370, %v8478
      %v8560 = vadd.f32 %v8371, %v8552
      %s8561 = scalar_lea.vmem %s1, 688
      %v8562 = vld [vmem:[%s8561] sm:$0xff]
      %v8563 = vld [vmem:[%s8561 + $0x8] sm:$0xff]
      %8564 = vrot.lane.b32.xlu0 %v7236, 110
      %v8565 = vpop.permute.xlu0 %8564
      %8566 = vrot.lane.b32.xlu0 %v7237, 110
      %v8567 = vpop.permute.xlu0 %8566
      %8568 = vrot.lane.b32.xlu0 %v7238, 110
      %v8569 = vpop.permute.xlu0 %8568
      %8570 = vrot.lane.b32.xlu0 %v7240, 110
      %v8571 = vpop.permute.xlu0 %8570
      %8572 = vrot.lane.b32.xlu0 %v7241, 110
      %v8573 = vpop.permute.xlu0 %8572
      %8574 = vrot.lane.b32.xlu0 %v7242, 110
      %v8575 = vpop.permute.xlu0 %8574
      %v8576 = vsel %vm1586, %v8565, %v8567
      %v8577 = vsel %vm1586, %v8567, %v8569
      %v8578 = vsel %vm1586, %v8571, %v8573
      %v8579 = vsel %vm1586, %v8573, %v8575
      %v8587 = vsel %vm286, %v8562, 0
      %v8590 = vsel %vm286, %v8563, 0
      %8592 = vmatprep.subr.mxu0 0.0
      %8593 = vmatpush1.msra.mxu0 0.0
      %8594 = vmatprep.subr.mxu0 0.0
      %8595 = vmatpush1.msra.mxu0 0.0
      %8596 = vmatprep.subr.mxu0 0.0
      %8597 = vmatpush1.msra.mxu0 0.0
      %8598 = vmatprep.subr.mxu0 0.0
      %8599 = vmatpush1.msra.mxu0 0.0
      %8600 = vmatprep.subr.mxu0 0.0
      %8601 = vmatpush1.msra.mxu0 0.0
      %8602 = vmatprep.subr.mxu0 0.0
      %8603 = vmatpush1.msra.mxu0 0.0
      %8604 = vmatprep.subr.mxu0 0.0
      %8605 = vmatpush1.msra.mxu0 0.0
      %8606 = vmatprep.subr.mxu0 0.0
      %8607 = vmatpush1.msra.mxu0 0.0
      %8608 = vmatprep.subr.mxu0 0.0
      %8609 = vmatpush1.msra.mxu0 0.0
      %8610 = vmatprep.subr.mxu0 0.0
      %8611 = vmatpush1.msra.mxu0 0.0
      %8612 = vmatprep.subr.mxu0 0.0
      %8613 = vmatpush1.msra.mxu0 0.0
      %8614 = vmatprep.subr.mxu0 0.0
      %8615 = vmatpush1.msra.mxu0 0.0
      %8616 = vmatprep.subr.mxu0 0.0
      %8617 = vmatpush1.msra.mxu0 0.0
      %8618 = vmatprep.subr.mxu0 0.0
      %8619 = vmatpush1.msra.mxu0 0.0
      %8620 = vmatprep.subr.mxu0 %v8579
      %8621 = vmatpush1.msra.mxu0 %v8578
      %8622 = vmatprep.subr.mxu0 %v8577
      %8623 = vmatpush1.msra.mxu0 %v8576
      %8624 = vmatprep.subr.mxu0 0.0
      %8625 = vmatpush2.msra.mxu0 0.0
      %8626 = vmatprep.subr.mxu0 0.0
      %8627 = vmatpush2.msra.mxu0 0.0
      %8628 = vmatprep.subr.mxu0 0.0
      %8629 = vmatpush2.msra.mxu0 0.0
      %8630 = vmatprep.subr.mxu0 0.0
      %8631 = vmatpush2.msra.mxu0 0.0
      %8632 = vmatprep.subr.mxu0 0.0
      %8633 = vmatpush2.msra.mxu0 0.0
      %8634 = vmatprep.subr.mxu0 0.0
      %8635 = vmatpush2.msra.mxu0 0.0
      %8636 = vmatprep.subr.mxu0 0.0
      %8637 = vmatpush2.msra.mxu0 0.0
      %8638 = vmatprep.subr.mxu0 0.0
      %8639 = vmatpush2.msra.mxu0 0.0
      %8640 = vmatprep.subr.mxu0 0.0
      %8641 = vmatpush2.msra.mxu0 0.0
      %8642 = vmatprep.subr.mxu0 0.0
      %8643 = vmatpush2.msra.mxu0 0.0
      %8644 = vmatprep.subr.mxu0 0.0
      %8645 = vmatpush2.msra.mxu0 0.0
      %8646 = vmatprep.subr.mxu0 0.0
      %8647 = vmatpush2.msra.mxu0 0.0
      %8648 = vmatprep.subr.mxu0 0.0
      %8649 = vmatpush2.msra.mxu0 0.0
      %8650 = vmatprep.subr.mxu0 0.0
      %8651 = vmatpush2.msra.mxu0 0.0
      %8652 = vmatprep.subr.mxu0 0.0
      %8653 = vmatpush2.msra.mxu0 0.0
      %8654 = vmatprep.subr.mxu0 0.0
      %8655 = vmatpush2.msra.mxu0 0.0
      %8656 = vmatprep.mubr.f32.mxu0 0.0
      %8657 = vmatmul.mubr.f32.gmra.mxu0 %v8587
      %v8658 = vpop.f32.mrf.mxu0
      %v8659 = vadd.f32 0.0, %v8658
      %v8660 = vpop.f32.mrf.mxu0
      %v8661 = vadd.f32 0.0, %v8660
      %8662 = vmatprep.mubr.f32.mxu0 0.0
      %8663 = vmatmul.mubr.f32.gmra.mxu0 %v8590
      %v8664 = vpop.f32.mrf.mxu0
      %v8665 = vadd.f32 0.0, %v8664
      %v8666 = vpop.f32.mrf.mxu0
      %v8667 = vadd.f32 0.0, %v8666
      %8668 = vdwg.mxu0
      %8669 = vmatprep.subr.mxu0 0.0
      %8670 = vmatpush1.msra.mxu0 0.0
      %8671 = vmatprep.subr.mxu0 0.0
      %8672 = vmatpush1.msra.mxu0 0.0
      %8673 = vmatprep.subr.mxu0 0.0
      %8674 = vmatpush1.msra.mxu0 0.0
      %8675 = vmatprep.subr.mxu0 0.0
      %8676 = vmatpush1.msra.mxu0 0.0
      %8677 = vmatprep.subr.mxu0 0.0
      %8678 = vmatpush1.msra.mxu0 0.0
      %8679 = vmatprep.subr.mxu0 0.0
      %8680 = vmatpush1.msra.mxu0 0.0
      %8681 = vmatprep.subr.mxu0 0.0
      %8682 = vmatpush1.msra.mxu0 0.0
      %8683 = vmatprep.subr.mxu0 0.0
      %8684 = vmatpush1.msra.mxu0 0.0
      %8685 = vmatprep.subr.mxu0 0.0
      %8686 = vmatpush1.msra.mxu0 0.0
      %8687 = vmatprep.subr.mxu0 0.0
      %8688 = vmatpush1.msra.mxu0 0.0
      %8689 = vmatprep.subr.mxu0 0.0
      %8690 = vmatpush1.msra.mxu0 0.0
      %8691 = vmatprep.subr.mxu0 0.0
      %8692 = vmatpush1.msra.mxu0 0.0
      %8693 = vmatprep.subr.mxu0 0.0
      %8694 = vmatpush1.msra.mxu0 0.0
      %8695 = vmatprep.subr.mxu0 0.0
      %8696 = vmatpush1.msra.mxu0 0.0
      %8697 = vmatprep.subr.mxu0 0.0
      %8698 = vmatpush1.msra.mxu0 %v8575
      %8699 = vmatprep.subr.mxu0 0.0
      %8700 = vmatpush1.msra.mxu0 %v8569
      %8701 = vmatprep.subr.mxu0 0.0
      %8702 = vmatpush2.msra.mxu0 0.0
      %8703 = vmatprep.subr.mxu0 0.0
      %8704 = vmatpush2.msra.mxu0 0.0
      %8705 = vmatprep.subr.mxu0 0.0
      %8706 = vmatpush2.msra.mxu0 0.0
      %8707 = vmatprep.subr.mxu0 0.0
      %8708 = vmatpush2.msra.mxu0 0.0
      %8709 = vmatprep.subr.mxu0 0.0
      %8710 = vmatpush2.msra.mxu0 0.0
      %8711 = vmatprep.subr.mxu0 0.0
      %8712 = vmatpush2.msra.mxu0 0.0
      %8713 = vmatprep.subr.mxu0 0.0
      %8714 = vmatpush2.msra.mxu0 0.0
      %8715 = vmatprep.subr.mxu0 0.0
      %8716 = vmatpush2.msra.mxu0 0.0
      %8717 = vmatprep.subr.mxu0 0.0
      %8718 = vmatpush2.msra.mxu0 0.0
      %8719 = vmatprep.subr.mxu0 0.0
      %8720 = vmatpush2.msra.mxu0 0.0
      %8721 = vmatprep.subr.mxu0 0.0
      %8722 = vmatpush2.msra.mxu0 0.0
      %8723 = vmatprep.subr.mxu0 0.0
      %8724 = vmatpush2.msra.mxu0 0.0
      %8725 = vmatprep.subr.mxu0 0.0
      %8726 = vmatpush2.msra.mxu0 0.0
      %8727 = vmatprep.subr.mxu0 0.0
      %8728 = vmatpush2.msra.mxu0 0.0
      %8729 = vmatprep.subr.mxu0 0.0
      %8730 = vmatpush2.msra.mxu0 0.0
      %8731 = vmatprep.subr.mxu0 0.0
      %8732 = vmatpush2.msra.mxu0 0.0
      %8733 = vmatprep.mubr.f32.mxu0 0.0
      %8734 = vmatmul.mubr.f32.gmra.mxu0 %v8587
      %v8735 = vpop.f32.mrf.mxu0
      %v8736 = vadd.f32 0.0, %v8735
      %v8737 = vpop.f32.mrf.mxu0
      %8738 = vmatprep.mubr.f32.mxu0 0.0
      %8739 = vmatmul.mubr.f32.gmra.mxu0 %v8590
      %v8740 = vpop.f32.mrf.mxu0
      %v8741 = vadd.f32 0.0, %v8740
      %v8742 = vpop.f32.mrf.mxu0
      %8743 = vdwg.mxu0
      %v8744 = vadd.f32 %v8555, %v8659
      %v8745 = vadd.f32 %v8556, %v8661
      %v8746 = vadd.f32 %v8557, %v8736
      %v8747 = vadd.f32 %v8558, %v8665
      %v8748 = vadd.f32 %v8559, %v8667
      %v8749 = vadd.f32 %v8560, %v8741
      %s8750 = scalar_lea.vmem %s1, 704
      %v8751 = vld [vmem:[%s8750] sm:$0xff]
      %v8752 = vld [vmem:[%s8750 + $0x8] sm:$0xff]
      %8753 = vrot.lane.b32.xlu0 %v7236, 109
      %v8754 = vpop.permute.xlu0 %8753
      %8755 = vrot.lane.b32.xlu0 %v7237, 109
      %v8756 = vpop.permute.xlu0 %8755
      %8757 = vrot.lane.b32.xlu0 %v7238, 109
      %v8758 = vpop.permute.xlu0 %8757
      %8759 = vrot.lane.b32.xlu0 %v7240, 109
      %v8760 = vpop.permute.xlu0 %8759
      %8761 = vrot.lane.b32.xlu0 %v7241, 109
      %v8762 = vpop.permute.xlu0 %8761
      %8763 = vrot.lane.b32.xlu0 %v7242, 109
      %v8764 = vpop.permute.xlu0 %8763
      %v8765 = vsel %vm1776, %v8754, %v8756
      %v8766 = vsel %vm1776, %v8756, %v8758
      %v8767 = vsel %vm1776, %v8760, %v8762
      %v8768 = vsel %vm1776, %v8762, %v8764
      %v8776 = vsel %vm286, %v8751, 0
      %v8779 = vsel %vm286, %v8752, 0
      %8781 = vmatprep.subr.mxu0 0.0
      %8782 = vmatpush1.msra.mxu0 0.0
      %8783 = vmatprep.subr.mxu0 0.0
      %8784 = vmatpush1.msra.mxu0 0.0
      %8785 = vmatprep.subr.mxu0 0.0
      %8786 = vmatpush1.msra.mxu0 0.0
      %8787 = vmatprep.subr.mxu0 0.0
      %8788 = vmatpush1.msra.mxu0 0.0
      %8789 = vmatprep.subr.mxu0 0.0
      %8790 = vmatpush1.msra.mxu0 0.0
      %8791 = vmatprep.subr.mxu0 0.0
      %8792 = vmatpush1.msra.mxu0 0.0
      %8793 = vmatprep.subr.mxu0 0.0
      %8794 = vmatpush1.msra.mxu0 0.0
      %8795 = vmatprep.subr.mxu0 0.0
      %8796 = vmatpush1.msra.mxu0 0.0
      %8797 = vmatprep.subr.mxu0 0.0
      %8798 = vmatpush1.msra.mxu0 0.0
      %8799 = vmatprep.subr.mxu0 0.0
      %8800 = vmatpush1.msra.mxu0 0.0
      %8801 = vmatprep.subr.mxu0 0.0
      %8802 = vmatpush1.msra.mxu0 0.0
      %8803 = vmatprep.subr.mxu0 0.0
      %8804 = vmatpush1.msra.mxu0 0.0
      %8805 = vmatprep.subr.mxu0 0.0
      %8806 = vmatpush1.msra.mxu0 0.0
      %8807 = vmatprep.subr.mxu0 0.0
      %8808 = vmatpush1.msra.mxu0 0.0
      %8809 = vmatprep.subr.mxu0 %v8768
      %8810 = vmatpush1.msra.mxu0 %v8767
      %8811 = vmatprep.subr.mxu0 %v8766
      %8812 = vmatpush1.msra.mxu0 %v8765
      %8813 = vmatprep.subr.mxu0 0.0
      %8814 = vmatpush2.msra.mxu0 0.0
      %8815 = vmatprep.subr.mxu0 0.0
      %8816 = vmatpush2.msra.mxu0 0.0
      %8817 = vmatprep.subr.mxu0 0.0
      %8818 = vmatpush2.msra.mxu0 0.0
      %8819 = vmatprep.subr.mxu0 0.0
      %8820 = vmatpush2.msra.mxu0 0.0
      %8821 = vmatprep.subr.mxu0 0.0
      %8822 = vmatpush2.msra.mxu0 0.0
      %8823 = vmatprep.subr.mxu0 0.0
      %8824 = vmatpush2.msra.mxu0 0.0
      %8825 = vmatprep.subr.mxu0 0.0
      %8826 = vmatpush2.msra.mxu0 0.0
      %8827 = vmatprep.subr.mxu0 0.0
      %8828 = vmatpush2.msra.mxu0 0.0
      %8829 = vmatprep.subr.mxu0 0.0
      %8830 = vmatpush2.msra.mxu0 0.0
      %8831 = vmatprep.subr.mxu0 0.0
      %8832 = vmatpush2.msra.mxu0 0.0
      %8833 = vmatprep.subr.mxu0 0.0
      %8834 = vmatpush2.msra.mxu0 0.0
      %8835 = vmatprep.subr.mxu0 0.0
      %8836 = vmatpush2.msra.mxu0 0.0
      %8837 = vmatprep.subr.mxu0 0.0
      %8838 = vmatpush2.msra.mxu0 0.0
      %8839 = vmatprep.subr.mxu0 0.0
      %8840 = vmatpush2.msra.mxu0 0.0
      %8841 = vmatprep.subr.mxu0 0.0
      %8842 = vmatpush2.msra.mxu0 0.0
      %8843 = vmatprep.subr.mxu0 0.0
      %8844 = vmatpush2.msra.mxu0 0.0
      %8845 = vmatprep.mubr.f32.mxu0 0.0
      %8846 = vmatmul.mubr.f32.gmra.mxu0 %v8776
      %v8847 = vpop.f32.mrf.mxu0
      %v8848 = vadd.f32 0.0, %v8847
      %v8849 = vpop.f32.mrf.mxu0
      %v8850 = vadd.f32 0.0, %v8849
      %8851 = vmatprep.mubr.f32.mxu0 0.0
      %8852 = vmatmul.mubr.f32.gmra.mxu0 %v8779
      %v8853 = vpop.f32.mrf.mxu0
      %v8854 = vadd.f32 0.0, %v8853
      %v8855 = vpop.f32.mrf.mxu0
      %v8856 = vadd.f32 0.0, %v8855
      %8857 = vdwg.mxu0
      %8858 = vmatprep.subr.mxu0 0.0
      %8859 = vmatpush1.msra.mxu0 0.0
      %8860 = vmatprep.subr.mxu0 0.0
      %8861 = vmatpush1.msra.mxu0 0.0
      %8862 = vmatprep.subr.mxu0 0.0
      %8863 = vmatpush1.msra.mxu0 0.0
      %8864 = vmatprep.subr.mxu0 0.0
      %8865 = vmatpush1.msra.mxu0 0.0
      %8866 = vmatprep.subr.mxu0 0.0
      %8867 = vmatpush1.msra.mxu0 0.0
      %8868 = vmatprep.subr.mxu0 0.0
      %8869 = vmatpush1.msra.mxu0 0.0
      %8870 = vmatprep.subr.mxu0 0.0
      %8871 = vmatpush1.msra.mxu0 0.0
      %8872 = vmatprep.subr.mxu0 0.0
      %8873 = vmatpush1.msra.mxu0 0.0
      %8874 = vmatprep.subr.mxu0 0.0
      %8875 = vmatpush1.msra.mxu0 0.0
      %8876 = vmatprep.subr.mxu0 0.0
      %8877 = vmatpush1.msra.mxu0 0.0
      %8878 = vmatprep.subr.mxu0 0.0
      %8879 = vmatpush1.msra.mxu0 0.0
      %8880 = vmatprep.subr.mxu0 0.0
      %8881 = vmatpush1.msra.mxu0 0.0
      %8882 = vmatprep.subr.mxu0 0.0
      %8883 = vmatpush1.msra.mxu0 0.0
      %8884 = vmatprep.subr.mxu0 0.0
      %8885 = vmatpush1.msra.mxu0 0.0
      %8886 = vmatprep.subr.mxu0 0.0
      %8887 = vmatpush1.msra.mxu0 %v8764
      %8888 = vmatprep.subr.mxu0 0.0
      %8889 = vmatpush1.msra.mxu0 %v8758
      %8890 = vmatprep.subr.mxu0 0.0
      %8891 = vmatpush2.msra.mxu0 0.0
      %8892 = vmatprep.subr.mxu0 0.0
      %8893 = vmatpush2.msra.mxu0 0.0
      %8894 = vmatprep.subr.mxu0 0.0
      %8895 = vmatpush2.msra.mxu0 0.0
      %8896 = vmatprep.subr.mxu0 0.0
      %8897 = vmatpush2.msra.mxu0 0.0
      %8898 = vmatprep.subr.mxu0 0.0
      %8899 = vmatpush2.msra.mxu0 0.0
      %8900 = vmatprep.subr.mxu0 0.0
      %8901 = vmatpush2.msra.mxu0 0.0
      %8902 = vmatprep.subr.mxu0 0.0
      %8903 = vmatpush2.msra.mxu0 0.0
      %8904 = vmatprep.subr.mxu0 0.0
      %8905 = vmatpush2.msra.mxu0 0.0
      %8906 = vmatprep.subr.mxu0 0.0
      %8907 = vmatpush2.msra.mxu0 0.0
      %8908 = vmatprep.subr.mxu0 0.0
      %8909 = vmatpush2.msra.mxu0 0.0
      %8910 = vmatprep.subr.mxu0 0.0
      %8911 = vmatpush2.msra.mxu0 0.0
      %8912 = vmatprep.subr.mxu0 0.0
      %8913 = vmatpush2.msra.mxu0 0.0
      %8914 = vmatprep.subr.mxu0 0.0
      %8915 = vmatpush2.msra.mxu0 0.0
      %8916 = vmatprep.subr.mxu0 0.0
      %8917 = vmatpush2.msra.mxu0 0.0
      %8918 = vmatprep.subr.mxu0 0.0
      %8919 = vmatpush2.msra.mxu0 0.0
      %8920 = vmatprep.subr.mxu0 0.0
      %8921 = vmatpush2.msra.mxu0 0.0
      %8922 = vmatprep.mubr.f32.mxu0 0.0
      %8923 = vmatmul.mubr.f32.gmra.mxu0 %v8776
      %v8924 = vpop.f32.mrf.mxu0
      %v8925 = vadd.f32 0.0, %v8924
      %v8926 = vpop.f32.mrf.mxu0
      %8927 = vmatprep.mubr.f32.mxu0 0.0
      %8928 = vmatmul.mubr.f32.gmra.mxu0 %v8779
      %v8929 = vpop.f32.mrf.mxu0
      %v8930 = vadd.f32 0.0, %v8929
      %v8931 = vpop.f32.mrf.mxu0
      %8932 = vdwg.mxu0
      %v8933 = vadd.f32 %v8744, %v8848
      %v8934 = vadd.f32 %v8745, %v8850
      %v8935 = vadd.f32 %v8746, %v8925
      %v8936 = vadd.f32 %v8747, %v8854
      %v8937 = vadd.f32 %v8748, %v8856
      %v8938 = vadd.f32 %v8749, %v8930
      %s8939 = scalar_lea.vmem %s2, 64
      %v8940 = vld [vmem:[%s8939] sm:$0xff]
      %v8941 = vld [vmem:[%s8939 + $0x8] sm:$0xff]
      %8943 = vset.pattern.permute.xlu0 0
      %8944 = vperm.xlu0 %8943, %v8940
      %v8945 = vpop.permute.xlu0 %8944
      %8948 = vset.pattern.permute.xlu0 0
      %8949 = vperm.xlu0 %8948, %v8941
      %v8950 = vpop.permute.xlu0 %8949
      %v8952 = vadd.f32 %v8933, %v8945
      %v8953 = vadd.f32 %v8934, %v8945
      %v8954 = vadd.f32 %v8935, %v8945
      %v8955 = vadd.f32 %v8936, %v8950
      %v8956 = vadd.f32 %v8937, %v8950
      %v8957 = vadd.f32 %v8938, %v8950
      %v8958 = vld [vmem:[%s192 + $0x8] sm:$0xff]
      %v8959 = vld [vmem:[%s192 + $0x10] sm:$0xff]
      %v8960 = vld [vmem:[%s192 + $0x18] sm:$0xff]
      %v8961 = vld [vmem:[%s192 + $0x28] sm:$0xff]
      %v8962 = vld [vmem:[%s192 + $0x30] sm:$0xff]
      %v8963 = vld [vmem:[%s192 + $0x38] sm:$0xff]
      %v8964 = vadd.f32 %v8952, %v8958
      %v8965 = vadd.f32 %v8953, %v8959
      %v8966 = vadd.f32 %v8954, %v8960
      %v8967 = vadd.f32 %v8955, %v8961
      %v8968 = vadd.f32 %v8956, %v8962
      %v8969 = vadd.f32 %v8957, %v8963
      %v8970 = vmul.f32 %v8964, %v203
      %v8971 = vmul.f32 %v8965, %v207
      %v8972 = vmul.f32 %v8966, %v211
      %v8973 = vmul.f32 %v8967, %v203
      %v8974 = vmul.f32 %v8968, %v207
      %v8975 = vmul.f32 %v8969, %v211
      %8976 = vst [vmem:[%s197] sm:$0xff] %v8970
      %8977 = vst [vmem:[%s197 + $0x8] sm:$0xff] %v8971
      %8978 = vst.msk [vmem:[%s197 + $0x10] sm:$0xff] %vm1983, %v8972
      %8979 = vst [vmem:[%s197 + $0x18] sm:$0xff] %v8973
      %8980 = vst [vmem:[%s197 + $0x20] sm:$0xff] %v8974
      %8981 = vst.msk [vmem:[%s197 + $0x28] sm:$0xff] %vm1983, %v8975
      %p8982 = scmp.lt.s32.totalorder %s15, 1
      %s8983 = scalar_select %p8982, %s15, 1
      %s8984 = smul.addr %s8983, 6
      %s8985 = smul.addr %s8984, 8
      %s8986 = scalar_lea.vmem %s4, %s8985
      // Predicated region
      $region37: #{residual_group_forward.1} parent=35 // pred_check
        %p8987 = pneg %p122
      $region38: #{residual_group_forward.1} parent=35 // pred_check_branch
        %8989 = sbr.rel (%p8987) target = $region40
      $region39: #{residual_group_forward.1} parent=35 // pred_region
        _
      $region40: #{residual_group_forward.1} parent=35 // pred_fallthru
        _
    $region36: #{residual_group_forward.1} parent=5 // pred_fallthru
      _
    %p8990 = scmp.le.s32.totalorder 2, %s10
    // Predicated region
    $region41: #{residual_group_forward.1} parent=5 // pred_check
      %p8991 = pneg %p8990
    $region42: #{residual_group_forward.1} parent=5 // pred_check_branch
      %8993 = sbr.rel (%p8991) target = $region44
    $region43: #{residual_group_forward.1} parent=5 // pred_region
      %s8994 = ssub.s32 %s10, 2
      // Predicated region
      $region45: #{residual_group_forward.1} parent=43 // pred_check
        %p8995 = pneg %p128
      $region46: #{residual_group_forward.1} parent=43 // pred_check_branch
        %8997 = sbr.rel (%p8995) target = $region48
      $region47: #{residual_group_forward.1} parent=43 // pred_region
        %p8998 = scmp.lt.s32.totalorder %s16, 1
        %s8999 = scalar_select %p8998, %s16, 1
        %s9000 = smul.addr %s8999, 6
        %s9001 = smul.addr %s9000, 8
        %s9002 = scalar_lea.vmem %s4, %s9001
      $region48: #{residual_group_forward.1} parent=43 // pred_fallthru
        _
    $region44: #{residual_group_forward.1} parent=5 // pred_fallthru
      _
  $region6: #{residual_group_forward.1} parent=0 // loop_footer
    %s14 = sadd.s32 1, %s10
  $region7: #{residual_group_forward.1} parent=0 // loop_footer_branch
    %9 = sbr.rel target = $region3
  $region8: #{residual_group_forward.1} parent=0 // loop_exit
    _

</llo_original>
